<compile_context>
chip_gen: v7x
topology: tpu7x:2x2x1
jax: 0.10.0
libtpu: 0.0.40
codegen_flags: <defaults>
</compile_context>

<pallas_src>
import jax
import jax.numpy as jnp
from jax.experimental import pallas as pl
from jax.experimental.pallas import tpu as pltpu

LANE = 128


def _round_up(v, m):
    return ((v + m - 1) // m) * m


# ----------------------------- Pallas kernels ------------------------------

def _conv_pool_kernel(pa_ref, pb_ref, pc_ref, pd_ref, w_ref, b_ref, o_ref):
    """Fused conv-as-matmul + 2x2 max-pool + bias.

    pa..pd are im2col patch tiles for the four pixels of each 2x2 pooling
    window; max over the four f32 dot results implements MaxPool2d(2) with no
    extra kernel launch or HBM round trip."""
    w = w_ref[...]
    d0 = jnp.dot(pa_ref[...], w, preferred_element_type=jnp.float32)
    d1 = jnp.dot(pb_ref[...], w, preferred_element_type=jnp.float32)
    d2 = jnp.dot(pc_ref[...], w, preferred_element_type=jnp.float32)
    d3 = jnp.dot(pd_ref[...], w, preferred_element_type=jnp.float32)
    m = jnp.maximum(jnp.maximum(d0, d1), jnp.maximum(d2, d3))
    o_ref[...] = (m + b_ref[...]).astype(o_ref.dtype)


def _fc2_kernel(x_ref, w1_ref, b1_ref, w2_ref, b2_ref, o_ref):
    """Both Linear layers fused: two back-to-back MXU dots, f32 accumulation."""
    h = jnp.dot(x_ref[...], w1_ref[...], preferred_element_type=jnp.float32)
    h = h + b1_ref[...]
    o = jnp.dot(h.astype(jnp.bfloat16), w2_ref[...],
                preferred_element_type=jnp.float32)
    o_ref[...] = o + b2_ref[...]


# ----------------------------- layer wrappers -------------------------------

def _im2col_pool_views(x):
    """x: (N, H, W, C) NHWC. Returns 4 patch matrices (N*Ho*Wo, 25*C), one per
    position inside the 2x2 pooling window. K ordering is (kh, kw, c)."""
    N, H, W, C = x.shape
    Ho, Wo = H // 2, W // 2
    xp = jnp.pad(x, ((0, 0), (2, 2), (2, 2), (0, 0)))
    views = []
    for dy in range(2):
        for dx in range(2):
            cols = [xp[:, dy + kh:dy + kh + H:2, dx + kw:dx + kw + W:2, :]
                    for kh in range(5) for kw in range(5)]
            v = jnp.concatenate(cols, axis=-1)            # (N, Ho, Wo, 25*C)
            views.append(v.reshape(N * Ho * Wo, 25 * C))
    return views


def conv5x5_pool(x, w, b):
    """x: (N, H, W, Cin) NHWC bf16; w: (Cout, Cin, 5, 5) f32; b: (Cout,) f32.
    Returns Conv2d(5x5, pad=2) + bias + MaxPool2d(2) as (N, H/2, W/2, Cout) bf16."""
    N, H, W, Cin = x.shape
    Cout = w.shape[0]
    assert Cout <= LANE
    Ho, Wo = H // 2, W // 2
    Mo = N * Ho * Wo
    K = 25 * Cin
    # Sublane/lane-aligned reduction dim (75 -> 128 for conv1, 800 stays 800).
    Kp = _round_up(K, LANE) if K <= LANE else _round_up(K, 8)

    views = _im2col_pool_views(x)
    if Kp != K:
        views = [jnp.pad(v, ((0, 0), (0, Kp - K))) for v in views]

    # Weight as (K, Cout) with K order (kh, kw, cin); pad to lane-dense (Kp, 128).
    wmat = w.transpose(2, 3, 1, 0).reshape(K, Cout)
    wmat = jnp.pad(wmat, ((0, Kp - K), (0, LANE - Cout))).astype(jnp.bfloat16)
    bias = jnp.pad(b, (0, LANE - Cout)).reshape(1, LANE).astype(jnp.float32)

    # Two row blocks -> 'parallel' axis can shard across v7x's 2 TensorCores.
    tm = Mo // 2 if (Mo % 16 == 0) else Mo
    grid = (Mo // tm,)

    a_spec = pl.BlockSpec((tm, Kp), lambda i: (i, 0))
    out = pl.pallas_call(
        _conv_pool_kernel,
        out_shape=jax.ShapeDtypeStruct((Mo, LANE), jnp.bfloat16),
        grid_spec=pltpu.PrefetchScalarGridSpec(
            num_scalar_prefetch=0,
            grid=grid,
            in_specs=[a_spec, a_spec, a_spec, a_spec,
                      pl.BlockSpec((Kp, LANE), lambda i: (0, 0)),
                      pl.BlockSpec((1, LANE), lambda i: (0, 0))],
            out_specs=pl.BlockSpec((tm, LANE), lambda i: (i, 0)),
        ),
        compiler_params=pltpu.CompilerParams(
            dimension_semantics=("parallel",)),
    )(*views, wmat, bias)
    return out.reshape(N, Ho, Wo, LANE)[:, :, :, :Cout]


def fc_head(x_flat, wl1, bl1, wl2, bl2):
    """Fused Linear(1024,64) + Linear(64,10). x_flat: (N, 1024) bf16 in NHWC
    flatten order (wl1 columns already permuted to match). Returns (N, 10) f32."""
    Nb, Kin = x_flat.shape
    H1 = wl1.shape[0]      # 64
    Nout = wl2.shape[0]    # 10
    w1 = jnp.pad(wl1.T, ((0, 0), (0, LANE - H1))).astype(jnp.bfloat16)       # (Kin, 128)
    b1 = jnp.pad(bl1, (0, LANE - H1)).reshape(1, LANE).astype(jnp.float32)
    w2 = jnp.pad(wl2.T, ((0, LANE - H1), (0, LANE - Nout))).astype(jnp.bfloat16)  # (128,128)
    b2 = jnp.pad(bl2, (0, LANE - Nout)).reshape(1, LANE).astype(jnp.float32)

    out = pl.pallas_call(
        _fc2_kernel,
        out_shape=jax.ShapeDtypeStruct((Nb, LANE), jnp.float32),
        grid_spec=pltpu.PrefetchScalarGridSpec(
            num_scalar_prefetch=0,
            grid=(1,),
            in_specs=[pl.BlockSpec((Nb, Kin), lambda i: (0, 0)),
                      pl.BlockSpec((Kin, LANE), lambda i: (0, 0)),
                      pl.BlockSpec((1, LANE), lambda i: (0, 0)),
                      pl.BlockSpec((LANE, LANE), lambda i: (0, 0)),
                      pl.BlockSpec((1, LANE), lambda i: (0, 0))],
            out_specs=pl.BlockSpec((Nb, LANE), lambda i: (0, 0)),
        ),
        compiler_params=pltpu.CompilerParams(
            dimension_semantics=("arbitrary",)),
    )(x_flat, w1, b1, w2, b2)
    return out[:, :Nout]


def nn5_forward(x, p):
    """x: (N, 3, H, W) NCHW f32 (PyTorch layout)."""
    x = x.transpose(0, 2, 3, 1).astype(jnp.bfloat16)           # single entry transpose
    x = conv5x5_pool(x, p["w1"], p["b1"])                       # (N, 16, 16, 32)
    x = conv5x5_pool(x, p["w2"], p["b2"])                       # (N,  8,  8, 32)
    x = conv5x5_pool(x, p["w3"], p["b3"])                       # (N,  4,  4, 64)

    N, Hc, Wc, C = x.shape
    x_flat = x.reshape(N, Hc * Wc * C)                          # NHWC flatten

    # Permute wl1's input columns once so they match the NHWC flatten order
    # (PyTorch Flatten is NCHW: idx = c*Hc*Wc + h*Wc + w).
    h_i = jnp.arange(Hc)
    w_i = jnp.arange(Wc)
    c_i = jnp.arange(C)
    perm = (c_i[None, None, :] * (Hc * Wc)
            + h_i[:, None, None] * Wc
            + w_i[None, :, None]).reshape(-1)
    wl1_nhwc = p["wl1"][:, perm]

    return fc_head(x_flat, wl1_nhwc, p["bl1"], p["wl2"], p["bl2"])


# ----------------------------- parameter init -------------------------------

def init_params(key):
    ks = jax.random.split(key, 10)

    def nrm(k, shape, scale):
        return (scale * jax.random.normal(k, shape)).astype(jnp.float32)

    return {
        "w1": nrm(ks[0], (32, 3, 5, 5), 0.05),  "b1": nrm(ks[1], (32,), 0.05),
        "w2": nrm(ks[2], (32, 32, 5, 5), 0.05), "b2": nrm(ks[3], (32,), 0.05),
        "w3": nrm(ks[4], (64, 32, 5, 5), 0.05), "b3": nrm(ks[5], (64,), 0.05),
        "wl1": nrm(ks[6], (64, 1024), 0.05),    "bl1": nrm(ks[7], (64,), 0.05),
        "wl2": nrm(ks[8], (10, 64), 0.05),      "bl2": nrm(ks[9], (10,), 0.05),
    }


# ---------------------------------- main -------------------------------------

if __name__ == "__main__":
    key = jax.random.PRNGKey(0)
    kx, kp = jax.random.split(key)
    # Linear(1024, 64) after three 2x pools of 64 channels implies 32x32 input.
    x = jax.random.normal(kx, (2, 3, 32, 32), dtype=jnp.float32)
    params = init_params(kp)

    fwd = jax.jit(nn5_forward)
    out = jax.block_until_ready(fwd(x, params))
    assert out.shape == (2, 10), out.shape
    assert out.dtype == jnp.float32
    print("KERNEL_OK")
</pallas_src>

<mosaic_0001>
module attributes {stable_mosaic.version = 11 : i64} {
  func.func @_conv_pool_kernel(%arg0: i32, %arg1: memref<256x128xbf16, #tpu.memory_space<vmem>>, %arg2: memref<256x128xbf16, #tpu.memory_space<vmem>>, %arg3: memref<256x128xbf16, #tpu.memory_space<vmem>>, %arg4: memref<256x128xbf16, #tpu.memory_space<vmem>>, %arg5: memref<128x128xbf16, #tpu.memory_space<vmem>>, %arg6: memref<1x128xf32, #tpu.memory_space<vmem>>, %arg7: memref<256x128xbf16, #tpu.memory_space<vmem>>) attributes {dimension_semantics = [#tpu.dimension_semantics<parallel>], iteration_bounds = array<i64: 2>, scalar_prefetch = 0 : i64, scratch_operands = 0 : i64, tpu.core_type = #tpu.core_type<tc>, window_params = [{transform_indices = @transform_0, window_bounds = array<i64: 256, 128>}, {transform_indices = @transform_1, window_bounds = array<i64: 256, 128>}, {transform_indices = @transform_2, window_bounds = array<i64: 256, 128>}, {transform_indices = @transform_3, window_bounds = array<i64: 256, 128>}, {pipeline_mode = #tpu.pipeline_mode<synchronous>, transform_indices = @transform_4, window_bounds = array<i64: 128, 128>}, {pipeline_mode = #tpu.pipeline_mode<synchronous>, transform_indices = @transform_5, window_bounds = array<i64: 1, 128>}, {transform_indices = @transform_6, window_bounds = array<i64: 256, 128>}]} {
    %c0 = arith.constant 0 : index
    %c0_0 = arith.constant 0 : index
    %0 = vector.load %arg5[%c0, %c0_0] : memref<128x128xbf16, #tpu.memory_space<vmem>>, vector<128x128xbf16>
    %c0_1 = arith.constant 0 : index
    %c0_2 = arith.constant 0 : index
    %1 = vector.load %arg1[%c0_1, %c0_2] : memref<256x128xbf16, #tpu.memory_space<vmem>>, vector<256x128xbf16>
    %cst = arith.constant dense<0.000000e+00> : vector<256x128xf32>
    %2 = tpu.matmul %1, %0, %cst {dimension_numbers = #tpu.dot_dimension_numbers<[1], [0], [0], [1], [0, 0, 1, 1], [], []>} : vector<256x128xbf16>, vector<128x128xbf16>, vector<256x128xf32> -> vector<256x128xf32>
    %c0_3 = arith.constant 0 : index
    %c0_4 = arith.constant 0 : index
    %3 = vector.load %arg2[%c0_3, %c0_4] : memref<256x128xbf16, #tpu.memory_space<vmem>>, vector<256x128xbf16>
    %cst_5 = arith.constant dense<0.000000e+00> : vector<256x128xf32>
    %4 = tpu.matmul %3, %0, %cst_5 {dimension_numbers = #tpu.dot_dimension_numbers<[1], [0], [0], [1], [0, 0, 1, 1], [], []>} : vector<256x128xbf16>, vector<128x128xbf16>, vector<256x128xf32> -> vector<256x128xf32>
    %c0_6 = arith.constant 0 : index
    %c0_7 = arith.constant 0 : index
    %5 = vector.load %arg3[%c0_6, %c0_7] : memref<256x128xbf16, #tpu.memory_space<vmem>>, vector<256x128xbf16>
    %cst_8 = arith.constant dense<0.000000e+00> : vector<256x128xf32>
    %6 = tpu.matmul %5, %0, %cst_8 {dimension_numbers = #tpu.dot_dimension_numbers<[1], [0], [0], [1], [0, 0, 1, 1], [], []>} : vector<256x128xbf16>, vector<128x128xbf16>, vector<256x128xf32> -> vector<256x128xf32>
    %c0_9 = arith.constant 0 : index
    %c0_10 = arith.constant 0 : index
    %7 = vector.load %arg4[%c0_9, %c0_10] : memref<256x128xbf16, #tpu.memory_space<vmem>>, vector<256x128xbf16>
    %cst_11 = arith.constant dense<0.000000e+00> : vector<256x128xf32>
    %8 = tpu.matmul %7, %0, %cst_11 {dimension_numbers = #tpu.dot_dimension_numbers<[1], [0], [0], [1], [0, 0, 1, 1], [], []>} : vector<256x128xbf16>, vector<128x128xbf16>, vector<256x128xf32> -> vector<256x128xf32>
    %9 = arith.maximumf %2, %4 : vector<256x128xf32>
    %10 = arith.maximumf %6, %8 : vector<256x128xf32>
    %11 = arith.maximumf %9, %10 : vector<256x128xf32>
    %c0_12 = arith.constant 0 : index
    %c0_13 = arith.constant 0 : index
    %12 = vector.load %arg6[%c0_12, %c0_13] : memref<1x128xf32, #tpu.memory_space<vmem>>, vector<1x128xf32>
    %13 = vector.broadcast %12 : vector<1x128xf32> to vector<256x128xf32>
    %14 = arith.addf %11, %13 : vector<256x128xf32>
    %15 = arith.truncf %14 : vector<256x128xf32> to vector<256x128xbf16>
    %c0_14 = arith.constant 0 : index
    %c0_15 = arith.constant 0 : index
    %16 = vector.load %arg7[%c0_14, %c0_15] : memref<256x128xbf16, #tpu.memory_space<vmem>>, vector<256x128xbf16>
    tpu.vector_store %arg7[%c0_14, %c0_15], %15 {strides = array<i32>} : memref<256x128xbf16, #tpu.memory_space<vmem>>, vector<256x128xbf16>,
    return
  }
  func.func @transform_0(%arg0: i32) -> (i32, i32) {
    %c0_i32 = arith.constant 0 : i32
    %c0_i32_0 = arith.constant 0 : i32
    return %arg0, %c0_i32 : i32, i32
  }
  func.func @transform_1(%arg0: i32) -> (i32, i32) {
    %c0_i32 = arith.constant 0 : i32
    %c0_i32_0 = arith.constant 0 : i32
    return %arg0, %c0_i32 : i32, i32
  }
  func.func @transform_2(%arg0: i32) -> (i32, i32) {
    %c0_i32 = arith.constant 0 : i32
    %c0_i32_0 = arith.constant 0 : i32
    return %arg0, %c0_i32 : i32, i32
  }
  func.func @transform_3(%arg0: i32) -> (i32, i32) {
    %c0_i32 = arith.constant 0 : i32
    %c0_i32_0 = arith.constant 0 : i32
    return %arg0, %c0_i32 : i32, i32
  }
  func.func @transform_4(%arg0: i32) -> (i32, i32) {
    %c0_i32 = arith.constant 0 : i32
    %c0_i32_0 = arith.constant 0 : i32
    %c0_i32_1 = arith.constant 0 : i32
    return %c0_i32, %c0_i32_0 : i32, i32
  }
  func.func @transform_5(%arg0: i32) -> (i32, i32) {
    %c0_i32 = arith.constant 0 : i32
    %c0_i32_0 = arith.constant 0 : i32
    %c0_i32_1 = arith.constant 0 : i32
    return %c0_i32, %c0_i32_0 : i32, i32
  }
  func.func @transform_6(%arg0: i32) -> (i32, i32) {
    %c0_i32 = arith.constant 0 : i32
    %c0_i32_0 = arith.constant 0 : i32
    return %arg0, %c0_i32 : i32, i32
  }
}

module attributes {stable_mosaic.version = 11 : i64} {
  func.func @_conv_pool_kernel(%arg0: i32, %arg1: memref<64x800xbf16, #tpu.memory_space<vmem>>, %arg2: memref<64x800xbf16, #tpu.memory_space<vmem>>, %arg3: memref<64x800xbf16, #tpu.memory_space<vmem>>, %arg4: memref<64x800xbf16, #tpu.memory_space<vmem>>, %arg5: memref<800x128xbf16, #tpu.memory_space<vmem>>, %arg6: memref<1x128xf32, #tpu.memory_space<vmem>>, %arg7: memref<64x128xbf16, #tpu.memory_space<vmem>>) attributes {dimension_semantics = [#tpu.dimension_semantics<parallel>], iteration_bounds = array<i64: 2>, scalar_prefetch = 0 : i64, scratch_operands = 0 : i64, tpu.core_type = #tpu.core_type<tc>, window_params = [{transform_indices = @transform_0, window_bounds = array<i64: 64, 800>}, {transform_indices = @transform_1, window_bounds = array<i64: 64, 800>}, {transform_indices = @transform_2, window_bounds = array<i64: 64, 800>}, {transform_indices = @transform_3, window_bounds = array<i64: 64, 800>}, {pipeline_mode = #tpu.pipeline_mode<synchronous>, transform_indices = @transform_4, window_bounds = array<i64: 800, 128>}, {pipeline_mode = #tpu.pipeline_mode<synchronous>, transform_indices = @transform_5, window_bounds = array<i64: 1, 128>}, {transform_indices = @transform_6, window_bounds = array<i64: 64, 128>}]} {
    %c0 = arith.constant 0 : index
    %c0_0 = arith.constant 0 : index
    %0 = vector.load %arg5[%c0, %c0_0] : memref<800x128xbf16, #tpu.memory_space<vmem>>, vector<800x128xbf16>
    %c0_1 = arith.constant 0 : index
    %c0_2 = arith.constant 0 : index
    %1 = vector.load %arg1[%c0_1, %c0_2] : memref<64x800xbf16, #tpu.memory_space<vmem>>, vector<64x800xbf16>
    %cst = arith.constant dense<0.000000e+00> : vector<64x128xf32>
    %2 = tpu.matmul %1, %0, %cst {dimension_numbers = #tpu.dot_dimension_numbers<[1], [0], [0], [1], [0, 0, 1, 1], [], []>} : vector<64x800xbf16>, vector<800x128xbf16>, vector<64x128xf32> -> vector<64x128xf32>
    %c0_3 = arith.constant 0 : index
    %c0_4 = arith.constant 0 : index
    %3 = vector.load %arg2[%c0_3, %c0_4] : memref<64x800xbf16, #tpu.memory_space<vmem>>, vector<64x800xbf16>
    %cst_5 = arith.constant dense<0.000000e+00> : vector<64x128xf32>
    %4 = tpu.matmul %3, %0, %cst_5 {dimension_numbers = #tpu.dot_dimension_numbers<[1], [0], [0], [1], [0, 0, 1, 1], [], []>} : vector<64x800xbf16>, vector<800x128xbf16>, vector<64x128xf32> -> vector<64x128xf32>
    %c0_6 = arith.constant 0 : index
    %c0_7 = arith.constant 0 : index
    %5 = vector.load %arg3[%c0_6, %c0_7] : memref<64x800xbf16, #tpu.memory_space<vmem>>, vector<64x800xbf16>
    %cst_8 = arith.constant dense<0.000000e+00> : vector<64x128xf32>
    %6 = tpu.matmul %5, %0, %cst_8 {dimension_numbers = #tpu.dot_dimension_numbers<[1], [0], [0], [1], [0, 0, 1, 1], [], []>} : vector<64x800xbf16>, vector<800x128xbf16>, vector<64x128xf32> -> vector<64x128xf32>
    %c0_9 = arith.constant 0 : index
    %c0_10 = arith.constant 0 : index
    %7 = vector.load %arg4[%c0_9, %c0_10] : memref<64x800xbf16, #tpu.memory_space<vmem>>, vector<64x800xbf16>
    %cst_11 = arith.constant dense<0.000000e+00> : vector<64x128xf32>
    %8 = tpu.matmul %7, %0, %cst_11 {dimension_numbers = #tpu.dot_dimension_numbers<[1], [0], [0], [1], [0, 0, 1, 1], [], []>} : vector<64x800xbf16>, vector<800x128xbf16>, vector<64x128xf32> -> vector<64x128xf32>
    %9 = arith.maximumf %2, %4 : vector<64x128xf32>
    %10 = arith.maximumf %6, %8 : vector<64x128xf32>
    %11 = arith.maximumf %9, %10 : vector<64x128xf32>
    %c0_12 = arith.constant 0 : index
    %c0_13 = arith.constant 0 : index
    %12 = vector.load %arg6[%c0_12, %c0_13] : memref<1x128xf32, #tpu.memory_space<vmem>>, vector<1x128xf32>
    %13 = vector.broadcast %12 : vector<1x128xf32> to vector<64x128xf32>
    %14 = arith.addf %11, %13 : vector<64x128xf32>
    %15 = arith.truncf %14 : vector<64x128xf32> to vector<64x128xbf16>
    %c0_14 = arith.constant 0 : index
    %c0_15 = arith.constant 0 : index
    %16 = vector.load %arg7[%c0_14, %c0_15] : memref<64x128xbf16, #tpu.memory_space<vmem>>, vector<64x128xbf16>
    tpu.vector_store %arg7[%c0_14, %c0_15], %15 {strides = array<i32>} : memref<64x128xbf16, #tpu.memory_space<vmem>>, vector<64x128xbf16>,
    return
  }
  func.func @transform_0(%arg0: i32) -> (i32, i32) {
    %c0_i32 = arith.constant 0 : i32
    %c0_i32_0 = arith.constant 0 : i32
    return %arg0, %c0_i32 : i32, i32
  }
  func.func @transform_1(%arg0: i32) -> (i32, i32) {
    %c0_i32 = arith.constant 0 : i32
    %c0_i32_0 = arith.constant 0 : i32
    return %arg0, %c0_i32 : i32, i32
  }
  func.func @transform_2(%arg0: i32) -> (i32, i32) {
    %c0_i32 = arith.constant 0 : i32
    %c0_i32_0 = arith.constant 0 : i32
    return %arg0, %c0_i32 : i32, i32
  }
  func.func @transform_3(%arg0: i32) -> (i32, i32) {
    %c0_i32 = arith.constant 0 : i32
    %c0_i32_0 = arith.constant 0 : i32
    return %arg0, %c0_i32 : i32, i32
  }
  func.func @transform_4(%arg0: i32) -> (i32, i32) {
    %c0_i32 = arith.constant 0 : i32
    %c0_i32_0 = arith.constant 0 : i32
    %c0_i32_1 = arith.constant 0 : i32
    return %c0_i32, %c0_i32_0 : i32, i32
  }
  func.func @transform_5(%arg0: i32) -> (i32, i32) {
    %c0_i32 = arith.constant 0 : i32
    %c0_i32_0 = arith.constant 0 : i32
    %c0_i32_1 = arith.constant 0 : i32
    return %c0_i32, %c0_i32_0 : i32, i32
  }
  func.func @transform_6(%arg0: i32) -> (i32, i32) {
    %c0_i32 = arith.constant 0 : i32
    %c0_i32_0 = arith.constant 0 : i32
    return %arg0, %c0_i32 : i32, i32
  }
}

module attributes {stable_mosaic.version = 11 : i64} {
  func.func @_conv_pool_kernel(%arg0: i32, %arg1: memref<16x800xbf16, #tpu.memory_space<vmem>>, %arg2: memref<16x800xbf16, #tpu.memory_space<vmem>>, %arg3: memref<16x800xbf16, #tpu.memory_space<vmem>>, %arg4: memref<16x800xbf16, #tpu.memory_space<vmem>>, %arg5: memref<800x128xbf16, #tpu.memory_space<vmem>>, %arg6: memref<1x128xf32, #tpu.memory_space<vmem>>, %arg7: memref<16x128xbf16, #tpu.memory_space<vmem>>) attributes {dimension_semantics = [#tpu.dimension_semantics<parallel>], iteration_bounds = array<i64: 2>, scalar_prefetch = 0 : i64, scratch_operands = 0 : i64, tpu.core_type = #tpu.core_type<tc>, window_params = [{transform_indices = @transform_0, window_bounds = array<i64: 16, 800>}, {transform_indices = @transform_1, window_bounds = array<i64: 16, 800>}, {transform_indices = @transform_2, window_bounds = array<i64: 16, 800>}, {transform_indices = @transform_3, window_bounds = array<i64: 16, 800>}, {pipeline_mode = #tpu.pipeline_mode<synchronous>, transform_indices = @transform_4, window_bounds = array<i64: 800, 128>}, {pipeline_mode = #tpu.pipeline_mode<synchronous>, transform_indices = @transform_5, window_bounds = array<i64: 1, 128>}, {transform_indices = @transform_6, window_bounds = array<i64: 16, 128>}]} {
    %c0 = arith.constant 0 : index
    %c0_0 = arith.constant 0 : index
    %0 = vector.load %arg5[%c0, %c0_0] : memref<800x128xbf16, #tpu.memory_space<vmem>>, vector<800x128xbf16>
    %c0_1 = arith.constant 0 : index
    %c0_2 = arith.constant 0 : index
    %1 = vector.load %arg1[%c0_1, %c0_2] : memref<16x800xbf16, #tpu.memory_space<vmem>>, vector<16x800xbf16>
    %cst = arith.constant dense<0.000000e+00> : vector<16x128xf32>
    %2 = tpu.matmul %1, %0, %cst {dimension_numbers = #tpu.dot_dimension_numbers<[1], [0], [0], [1], [0, 0, 1, 1], [], []>} : vector<16x800xbf16>, vector<800x128xbf16>, vector<16x128xf32> -> vector<16x128xf32>
    %c0_3 = arith.constant 0 : index
    %c0_4 = arith.constant 0 : index
    %3 = vector.load %arg2[%c0_3, %c0_4] : memref<16x800xbf16, #tpu.memory_space<vmem>>, vector<16x800xbf16>
    %cst_5 = arith.constant dense<0.000000e+00> : vector<16x128xf32>
    %4 = tpu.matmul %3, %0, %cst_5 {dimension_numbers = #tpu.dot_dimension_numbers<[1], [0], [0], [1], [0, 0, 1, 1], [], []>} : vector<16x800xbf16>, vector<800x128xbf16>, vector<16x128xf32> -> vector<16x128xf32>
    %c0_6 = arith.constant 0 : index
    %c0_7 = arith.constant 0 : index
    %5 = vector.load %arg3[%c0_6, %c0_7] : memref<16x800xbf16, #tpu.memory_space<vmem>>, vector<16x800xbf16>
    %cst_8 = arith.constant dense<0.000000e+00> : vector<16x128xf32>
    %6 = tpu.matmul %5, %0, %cst_8 {dimension_numbers = #tpu.dot_dimension_numbers<[1], [0], [0], [1], [0, 0, 1, 1], [], []>} : vector<16x800xbf16>, vector<800x128xbf16>, vector<16x128xf32> -> vector<16x128xf32>
    %c0_9 = arith.constant 0 : index
    %c0_10 = arith.constant 0 : index
    %7 = vector.load %arg4[%c0_9, %c0_10] : memref<16x800xbf16, #tpu.memory_space<vmem>>, vector<16x800xbf16>
    %cst_11 = arith.constant dense<0.000000e+00> : vector<16x128xf32>
    %8 = tpu.matmul %7, %0, %cst_11 {dimension_numbers = #tpu.dot_dimension_numbers<[1], [0], [0], [1], [0, 0, 1, 1], [], []>} : vector<16x800xbf16>, vector<800x128xbf16>, vector<16x128xf32> -> vector<16x128xf32>
    %9 = arith.maximumf %2, %4 : vector<16x128xf32>
    %10 = arith.maximumf %6, %8 : vector<16x128xf32>
    %11 = arith.maximumf %9, %10 : vector<16x128xf32>
    %c0_12 = arith.constant 0 : index
    %c0_13 = arith.constant 0 : index
    %12 = vector.load %arg6[%c0_12, %c0_13] : memref<1x128xf32, #tpu.memory_space<vmem>>, vector<1x128xf32>
    %13 = vector.broadcast %12 : vector<1x128xf32> to vector<16x128xf32>
    %14 = arith.addf %11, %13 : vector<16x128xf32>
    %15 = arith.truncf %14 : vector<16x128xf32> to vector<16x128xbf16>
    %c0_14 = arith.constant 0 : index
    %c0_15 = arith.constant 0 : index
    %16 = vector.load %arg7[%c0_14, %c0_15] : memref<16x128xbf16, #tpu.memory_space<vmem>>, vector<16x128xbf16>
    tpu.vector_store %arg7[%c0_14, %c0_15], %15 {strides = array<i32>} : memref<16x128xbf16, #tpu.memory_space<vmem>>, vector<16x128xbf16>,
    return
  }
  func.func @transform_0(%arg0: i32) -> (i32, i32) {
    %c0_i32 = arith.constant 0 : i32
    %c0_i32_0 = arith.constant 0 : i32
    return %arg0, %c0_i32 : i32, i32
  }
  func.func @transform_1(%arg0: i32) -> (i32, i32) {
    %c0_i32 = arith.constant 0 : i32
    %c0_i32_0 = arith.constant 0 : i32
    return %arg0, %c0_i32 : i32, i32
  }
  func.func @transform_2(%arg0: i32) -> (i32, i32) {
    %c0_i32 = arith.constant 0 : i32
    %c0_i32_0 = arith.constant 0 : i32
    return %arg0, %c0_i32 : i32, i32
  }
  func.func @transform_3(%arg0: i32) -> (i32, i32) {
    %c0_i32 = arith.constant 0 : i32
    %c0_i32_0 = arith.constant 0 : i32
    return %arg0, %c0_i32 : i32, i32
  }
  func.func @transform_4(%arg0: i32) -> (i32, i32) {
    %c0_i32 = arith.constant 0 : i32
    %c0_i32_0 = arith.constant 0 : i32
    %c0_i32_1 = arith.constant 0 : i32
    return %c0_i32, %c0_i32_0 : i32, i32
  }
  func.func @transform_5(%arg0: i32) -> (i32, i32) {
    %c0_i32 = arith.constant 0 : i32
    %c0_i32_0 = arith.constant 0 : i32
    %c0_i32_1 = arith.constant 0 : i32
    return %c0_i32, %c0_i32_0 : i32, i32
  }
  func.func @transform_6(%arg0: i32) -> (i32, i32) {
    %c0_i32 = arith.constant 0 : i32
    %c0_i32_0 = arith.constant 0 : i32
    return %arg0, %c0_i32 : i32, i32
  }
}

module attributes {stable_mosaic.version = 11 : i64} {
  func.func @_fc2_kernel(%arg0: i32, %arg1: memref<2x1024xbf16, #tpu.memory_space<vmem>>, %arg2: memref<1024x128xbf16, #tpu.memory_space<vmem>>, %arg3: memref<1x128xf32, #tpu.memory_space<vmem>>, %arg4: memref<128x128xbf16, #tpu.memory_space<vmem>>, %arg5: memref<1x128xf32, #tpu.memory_space<vmem>>, %arg6: memref<2x128xf32, #tpu.memory_space<vmem>>) attributes {dimension_semantics = [#tpu.dimension_semantics<arbitrary>], iteration_bounds = array<i64: 1>, scalar_prefetch = 0 : i64, scratch_operands = 0 : i64, tpu.core_type = #tpu.core_type<tc>, window_params = [{pipeline_mode = #tpu.pipeline_mode<synchronous>, transform_indices = @transform_0, window_bounds = array<i64: 2, 1024>}, {pipeline_mode = #tpu.pipeline_mode<synchronous>, transform_indices = @transform_1, window_bounds = array<i64: 1024, 128>}, {pipeline_mode = #tpu.pipeline_mode<synchronous>, transform_indices = @transform_2, window_bounds = array<i64: 1, 128>}, {pipeline_mode = #tpu.pipeline_mode<synchronous>, transform_indices = @transform_3, window_bounds = array<i64: 128, 128>}, {pipeline_mode = #tpu.pipeline_mode<synchronous>, transform_indices = @transform_4, window_bounds = array<i64: 1, 128>}, {pipeline_mode = #tpu.pipeline_mode<synchronous>, transform_indices = @transform_5, window_bounds = array<i64: 2, 128>}]} {
    %c0 = arith.constant 0 : index
    %c0_0 = arith.constant 0 : index
    %0 = vector.load %arg1[%c0, %c0_0] : memref<2x1024xbf16, #tpu.memory_space<vmem>>, vector<2x1024xbf16>
    %c0_1 = arith.constant 0 : index
    %c0_2 = arith.constant 0 : index
    %1 = vector.load %arg2[%c0_1, %c0_2] : memref<1024x128xbf16, #tpu.memory_space<vmem>>, vector<1024x128xbf16>
    %cst = arith.constant dense<0.000000e+00> : vector<2x128xf32>
    %2 = tpu.matmul %0, %1, %cst {dimension_numbers = #tpu.dot_dimension_numbers<[1], [0], [0], [1], [0, 0, 1, 1], [], []>} : vector<2x1024xbf16>, vector<1024x128xbf16>, vector<2x128xf32> -> vector<2x128xf32>
    %c0_3 = arith.constant 0 : index
    %c0_4 = arith.constant 0 : index
    %3 = vector.load %arg3[%c0_3, %c0_4] : memref<1x128xf32, #tpu.memory_space<vmem>>, vector<1x128xf32>
    %4 = vector.broadcast %3 : vector<1x128xf32> to vector<2x128xf32>
    %5 = arith.addf %2, %4 : vector<2x128xf32>
    %6 = arith.truncf %5 : vector<2x128xf32> to vector<2x128xbf16>
    %c0_5 = arith.constant 0 : index
    %c0_6 = arith.constant 0 : index
    %7 = vector.load %arg4[%c0_5, %c0_6] : memref<128x128xbf16, #tpu.memory_space<vmem>>, vector<128x128xbf16>
    %cst_7 = arith.constant dense<0.000000e+00> : vector<2x128xf32>
    %8 = tpu.matmul %6, %7, %cst_7 {dimension_numbers = #tpu.dot_dimension_numbers<[1], [0], [0], [1], [0, 0, 1, 1], [], []>} : vector<2x128xbf16>, vector<128x128xbf16>, vector<2x128xf32> -> vector<2x128xf32>
    %c0_8 = arith.constant 0 : index
    %c0_9 = arith.constant 0 : index
    %9 = vector.load %arg5[%c0_8, %c0_9] : memref<1x128xf32, #tpu.memory_space<vmem>>, vector<1x128xf32>
    %10 = vector.broadcast %9 : vector<1x128xf32> to vector<2x128xf32>
    %11 = arith.addf %8, %10 : vector<2x128xf32>
    %c0_10 = arith.constant 0 : index
    %c0_11 = arith.constant 0 : index
    %12 = vector.load %arg6[%c0_10, %c0_11] : memref<2x128xf32, #tpu.memory_space<vmem>>, vector<2x128xf32>
    tpu.vector_store %arg6[%c0_10, %c0_11], %11 {strides = array<i32>} : memref<2x128xf32, #tpu.memory_space<vmem>>, vector<2x128xf32>,
    return
  }
  func.func @transform_0(%arg0: i32) -> (i32, i32) {
    %c0_i32 = arith.constant 0 : i32
    %c0_i32_0 = arith.constant 0 : i32
    %c0_i32_1 = arith.constant 0 : i32
    return %c0_i32, %c0_i32_0 : i32, i32
  }
  func.func @transform_1(%arg0: i32) -> (i32, i32) {
    %c0_i32 = arith.constant 0 : i32
    %c0_i32_0 = arith.constant 0 : i32
    %c0_i32_1 = arith.constant 0 : i32
    return %c0_i32, %c0_i32_0 : i32, i32
  }
  func.func @transform_2(%arg0: i32) -> (i32, i32) {
    %c0_i32 = arith.constant 0 : i32
    %c0_i32_0 = arith.constant 0 : i32
    %c0_i32_1 = arith.constant 0 : i32
    return %c0_i32, %c0_i32_0 : i32, i32
  }
  func.func @transform_3(%arg0: i32) -> (i32, i32) {
    %c0_i32 = arith.constant 0 : i32
    %c0_i32_0 = arith.constant 0 : i32
    %c0_i32_1 = arith.constant 0 : i32
    return %c0_i32, %c0_i32_0 : i32, i32
  }
  func.func @transform_4(%arg0: i32) -> (i32, i32) {
    %c0_i32 = arith.constant 0 : i32
    %c0_i32_0 = arith.constant 0 : i32
    %c0_i32_1 = arith.constant 0 : i32
    return %c0_i32, %c0_i32_0 : i32, i32
  }
  func.func @transform_5(%arg0: i32) -> (i32, i32) {
    %c0_i32 = arith.constant 0 : i32
    %c0_i32_0 = arith.constant 0 : i32
    %c0_i32_1 = arith.constant 0 : i32
    return %c0_i32, %c0_i32_0 : i32, i32
  }
}

</mosaic_0001>

<llo_original>
// kernel: nn5_forward.4
$region0: #{nn5_forward.4}
  #allocation0 [shape = 'u32[]', space=smem, size = 0x4, offset = 0x4, fixed_abs, tag = 'smem constant byte address 0x4 - core index']
  #allocation1 [shape = 'u32[144,128]{1,0:T(1,128)}', space=vmem, size = 0x12000, scoped, tag = 'internal scratch']
  %s0 = inlined_call_operand.vmem [shape: bf16[512,128], index: 0, kind: input, shape index: {}]
  %s1 = inlined_call_operand.vmem [shape: bf16[512,128], index: 1, kind: input, shape index: {}]
  %s2 = inlined_call_operand.vmem [shape: bf16[512,128], index: 2, kind: input, shape index: {}]
  %s3 = inlined_call_operand.vmem [shape: bf16[512,128], index: 3, kind: input, shape index: {}]
  %s4 = inlined_call_operand.vmem [shape: bf16[128,128], index: 4, kind: input, shape index: {}]
  %s5 = inlined_call_operand.vmem [shape: f32[1,128], index: 5, kind: input, shape index: {}]
  %s6 = inlined_call_operand.vmem [shape: bf16[512,128], index: 6, kind: output, shape index: {}]
  %s7 = sld [smem:[#allocation0]]
  $region57: #{nn5_forward.4} parent=0
    _
  %s9 = ssub.s32 1, %s7
  %s10 = scalar_select 0, %s9, %s7
  loop: start=0, step=1, limit=4
  $region2: #{nn5_forward.4} parent=0 // loop_pre_header
    _
  $region3: #{nn5_forward.4} parent=0 // loop_header
    %s12 = sphi 0, %s16
    %p13 = scmp.ge.s32.totalorder %s12, 4
    %s22 = sphi 0, %s24
    %s25 = sphi 0, %s22
    %s26 = sphi 0, %s25
    %s42 = sphi 0, %s26
    %s48 = sphi 0, %s50
    %s51 = sphi 0, %s48
    %s52 = sphi 0, %s51
    %s68 = sphi 0, %s52
    %s74 = sphi 0, %s76
    %s77 = sphi 0, %s74
    %s78 = sphi 0, %s77
    %s94 = sphi 0, %s78
    %s100 = sphi 0, %s102
    %s103 = sphi 0, %s100
    %s104 = sphi 0, %s103
    %s120 = sphi 0, %s104
    %s124 = sphi 0, %s124
    %s126 = sphi 0, %s124
    %s127 = sphi 0, %s126
    %s141 = sphi 0, %s127
    %s145 = sphi 0, %s145
    %s147 = sphi 0, %s145
    %s148 = sphi 0, %s147
    %s162 = sphi 0, %s148
    %s168 = sphi 0, %s170
    %s171 = sphi 0, %s168
    %s172 = sphi 0, %s171
    %s188 = sphi 0, %s172
  $region4: #{nn5_forward.4} parent=0 // loop_header_branch
    %15 = sbr.rel (%p13) target = $region8
  $region5: #{nn5_forward.4} parent=0 // loop_body
    %s17 = ssub.s32 %s12, 1
    %s18 = ssub.s32 %s12, 2
    %s19 = sadd.s32 %s12, 1
    %s20 = ssub.s32 %s12, %s19
    %p21 = scmp.eq.s32.totalorder %s20, 0
    %s23 = sadd.s32 %s22, 1
    %s24 = scalar_select %p21, %s22, %s23
    %p27 = pneg %p21
    %p28 = scmp.eq.s32.totalorder %s12, 1
    %p29 = por %p27, %p28
    %p30 = scmp.ne.s32.totalorder %s22, %s25
    %p31 = scmp.eq.s32.totalorder %s12, 0
    %p32 = por %p30, %p31
    %p33 = scmp.ne.s32.totalorder %s22, %s25
    %p34 = scmp.eq.s32.totalorder %s17, 1
    %p35 = por %p33, %p34
    %p36 = scmp.ne.s32.totalorder %s25, %s26
    %p37 = scmp.eq.s32.totalorder %s17, 0
    %p38 = por %p36, %p37
    %p39 = scmp.ne.s32.totalorder %s25, %s26
    %p40 = scmp.eq.s32.totalorder %s18, 1
    %p41 = por %p39, %p40
    %p43 = scmp.ne.s32.totalorder %s26, %s42
    %p44 = scmp.eq.s32.totalorder %s18, 0
    %p45 = por %p43, %p44
    %s46 = ssub.s32 %s12, %s19
    %p47 = scmp.eq.s32.totalorder %s46, 0
    %s49 = sadd.s32 %s48, 1
    %s50 = scalar_select %p47, %s48, %s49
    %p53 = pneg %p47
    %p54 = scmp.eq.s32.totalorder %s12, 1
    %p55 = por %p53, %p54
    %p56 = scmp.ne.s32.totalorder %s48, %s51
    %p57 = scmp.eq.s32.totalorder %s12, 0
    %p58 = por %p56, %p57
    %p59 = scmp.ne.s32.totalorder %s48, %s51
    %p60 = scmp.eq.s32.totalorder %s17, 1
    %p61 = por %p59, %p60
    %p62 = scmp.ne.s32.totalorder %s51, %s52
    %p63 = scmp.eq.s32.totalorder %s17, 0
    %p64 = por %p62, %p63
    %p65 = scmp.ne.s32.totalorder %s51, %s52
    %p66 = scmp.eq.s32.totalorder %s18, 1
    %p67 = por %p65, %p66
    %p69 = scmp.ne.s32.totalorder %s52, %s68
    %p70 = scmp.eq.s32.totalorder %s18, 0
    %p71 = por %p69, %p70
    %s72 = ssub.s32 %s12, %s19
    %p73 = scmp.eq.s32.totalorder %s72, 0
    %s75 = sadd.s32 %s74, 1
    %s76 = scalar_select %p73, %s74, %s75
    %p79 = pneg %p73
    %p80 = scmp.eq.s32.totalorder %s12, 1
    %p81 = por %p79, %p80
    %p82 = scmp.ne.s32.totalorder %s74, %s77
    %p83 = scmp.eq.s32.totalorder %s12, 0
    %p84 = por %p82, %p83
    %p85 = scmp.ne.s32.totalorder %s74, %s77
    %p86 = scmp.eq.s32.totalorder %s17, 1
    %p87 = por %p85, %p86
    %p88 = scmp.ne.s32.totalorder %s77, %s78
    %p89 = scmp.eq.s32.totalorder %s17, 0
    %p90 = por %p88, %p89
    %p91 = scmp.ne.s32.totalorder %s77, %s78
    %p92 = scmp.eq.s32.totalorder %s18, 1
    %p93 = por %p91, %p92
    %p95 = scmp.ne.s32.totalorder %s78, %s94
    %p96 = scmp.eq.s32.totalorder %s18, 0
    %p97 = por %p95, %p96
    %s98 = ssub.s32 %s12, %s19
    %p99 = scmp.eq.s32.totalorder %s98, 0
    %s101 = sadd.s32 %s100, 1
    %s102 = scalar_select %p99, %s100, %s101
    %p105 = pneg %p99
    %p106 = scmp.eq.s32.totalorder %s12, 1
    %p107 = por %p105, %p106
    %p108 = scmp.ne.s32.totalorder %s100, %s103
    %p109 = scmp.eq.s32.totalorder %s12, 0
    %p110 = por %p108, %p109
    %p111 = scmp.ne.s32.totalorder %s100, %s103
    %p112 = scmp.eq.s32.totalorder %s17, 1
    %p113 = por %p111, %p112
    %p114 = scmp.ne.s32.totalorder %s103, %s104
    %p115 = scmp.eq.s32.totalorder %s17, 0
    %p116 = por %p114, %p115
    %p117 = scmp.ne.s32.totalorder %s103, %s104
    %p118 = scmp.eq.s32.totalorder %s18, 1
    %p119 = por %p117, %p118
    %p121 = scmp.ne.s32.totalorder %s104, %s120
    %p122 = scmp.eq.s32.totalorder %s18, 0
    %p123 = por %p121, %p122
    %s125 = sadd.s32 %s124, 1
    %p128 = scmp.eq.s32.totalorder %s12, 1
    %p129 = scmp.ne.s32.totalorder %s124, %s126
    %p130 = scmp.eq.s32.totalorder %s12, 0
    %p131 = por %p129, %p130
    %p132 = scmp.ne.s32.totalorder %s124, %s126
    %p133 = scmp.eq.s32.totalorder %s17, 1
    %p134 = por %p132, %p133
    %p135 = scmp.ne.s32.totalorder %s126, %s127
    %p136 = scmp.eq.s32.totalorder %s17, 0
    %p137 = por %p135, %p136
    %p138 = scmp.ne.s32.totalorder %s126, %s127
    %p139 = scmp.eq.s32.totalorder %s18, 1
    %p140 = por %p138, %p139
    %p142 = scmp.ne.s32.totalorder %s127, %s141
    %p143 = scmp.eq.s32.totalorder %s18, 0
    %p144 = por %p142, %p143
    %s146 = sadd.s32 %s145, 1
    %p149 = scmp.eq.s32.totalorder %s12, 1
    %p150 = scmp.ne.s32.totalorder %s145, %s147
    %p151 = scmp.eq.s32.totalorder %s12, 0
    %p152 = por %p150, %p151
    %p153 = scmp.ne.s32.totalorder %s145, %s147
    %p154 = scmp.eq.s32.totalorder %s17, 1
    %p155 = por %p153, %p154
    %p156 = scmp.ne.s32.totalorder %s147, %s148
    %p157 = scmp.eq.s32.totalorder %s17, 0
    %p158 = por %p156, %p157
    %p159 = scmp.ne.s32.totalorder %s147, %s148
    %p160 = scmp.eq.s32.totalorder %s18, 1
    %p161 = por %p159, %p160
    %p163 = scmp.ne.s32.totalorder %s148, %s162
    %p164 = scmp.eq.s32.totalorder %s18, 0
    %p165 = por %p163, %p164
    %s166 = ssub.s32 %s12, %s19
    %p167 = scmp.eq.s32.totalorder %s166, 0
    %s169 = sadd.s32 %s168, 1
    %s170 = scalar_select %p167, %s168, %s169
    %p173 = pneg %p167
    %p174 = scmp.eq.s32.totalorder %s12, 1
    %p175 = por %p173, %p174
    %p176 = scmp.ne.s32.totalorder %s168, %s171
    %p177 = scmp.eq.s32.totalorder %s12, 0
    %p178 = por %p176, %p177
    %p179 = scmp.ne.s32.totalorder %s168, %s171
    %p180 = scmp.eq.s32.totalorder %s17, 1
    %p181 = por %p179, %p180
    %p182 = scmp.ne.s32.totalorder %s171, %s172
    %p183 = scmp.eq.s32.totalorder %s17, 0
    %p184 = por %p182, %p183
    %p185 = scmp.ne.s32.totalorder %s171, %s172
    %p186 = scmp.eq.s32.totalorder %s18, 1
    %p187 = por %p185, %p186
    %p189 = scmp.ne.s32.totalorder %s172, %s188
    %p190 = scmp.eq.s32.totalorder %s18, 0
    %p191 = por %p189, %p190
    %p192 = scmp.le.s32.totalorder 1, %s12
    %p193 = scmp.lt.s32.totalorder %s12, 3
    %p194 = pnand %p192, %p193
    %p195 = pneg %p194
    // Predicated region
    $region9: #{nn5_forward.4} parent=5 // pred_check
      _
    $region10: #{nn5_forward.4} parent=5 // pred_check_branch
      %197 = sbr.rel (%p194) target = $region12
    $region11: #{nn5_forward.4} parent=5 // pred_region
      %s198 = ssub.s32 %s12, 1
      // Predicated region
      $region13: #{nn5_forward.4} parent=11 // pred_check
        %p199 = pneg %p137
      $region14: #{nn5_forward.4} parent=11 // pred_check_branch
        %201 = sbr.rel (%p199) target = $region16
      $region15: #{nn5_forward.4} parent=11 // pred_region
        _
      $region16: #{nn5_forward.4} parent=11 // pred_fallthru
        _
      // Predicated region
      $region17: #{nn5_forward.4} parent=11 // pred_check
        %p202 = pneg %p158
      $region18: #{nn5_forward.4} parent=11 // pred_check_branch
        %204 = sbr.rel (%p202) target = $region20
      $region19: #{nn5_forward.4} parent=11 // pred_region
        _
      $region20: #{nn5_forward.4} parent=11 // pred_fallthru
        _
    $region12: #{nn5_forward.4} parent=5 // pred_fallthru
      _
    %p205 = scmp.lt.s32.totalorder %s12, 2
    // Predicated region
    $region21: #{nn5_forward.4} parent=5 // pred_check
      %p206 = pneg %p205
    $region22: #{nn5_forward.4} parent=5 // pred_check_branch
      %208 = sbr.rel (%p206) target = $region24
    $region23: #{nn5_forward.4} parent=5 // pred_region
      // Predicated region
      $region25: #{nn5_forward.4} parent=23 // pred_check
        %p209 = pneg %p32
      $region26: #{nn5_forward.4} parent=23 // pred_check_branch
        %211 = sbr.rel (%p209) target = $region28
      $region27: #{nn5_forward.4} parent=23 // pred_region
        %s212 = smul.u32 32, %s12
        %p213 = scmp.lt.s32.totalorder %s212, 63
        %s214 = scalar_select %p213, %s212, 63
        %s215 = smul.addr %s214, 4
        %s216 = scalar_lea.vmem %s0, %s215
        %s217 = smul.u32 32, %s12
      $region28: #{nn5_forward.4} parent=23 // pred_fallthru
        _
      // Predicated region
      $region29: #{nn5_forward.4} parent=23 // pred_check
        %p218 = pneg %p58
      $region30: #{nn5_forward.4} parent=23 // pred_check_branch
        %220 = sbr.rel (%p218) target = $region32
      $region31: #{nn5_forward.4} parent=23 // pred_region
        %s221 = smul.u32 32, %s12
        %p222 = scmp.lt.s32.totalorder %s221, 63
        %s223 = scalar_select %p222, %s221, 63
        %s224 = smul.addr %s223, 4
        %s225 = scalar_lea.vmem %s1, %s224
        %s226 = smul.u32 32, %s12
      $region32: #{nn5_forward.4} parent=23 // pred_fallthru
        _
      // Predicated region
      $region33: #{nn5_forward.4} parent=23 // pred_check
        %p227 = pneg %p84
      $region34: #{nn5_forward.4} parent=23 // pred_check_branch
        %229 = sbr.rel (%p227) target = $region36
      $region35: #{nn5_forward.4} parent=23 // pred_region
        %s230 = smul.u32 32, %s12
        %p231 = scmp.lt.s32.totalorder %s230, 63
        %s232 = scalar_select %p231, %s230, 63
        %s233 = smul.addr %s232, 4
        %s234 = scalar_lea.vmem %s2, %s233
        %s235 = smul.u32 32, %s12
      $region36: #{nn5_forward.4} parent=23 // pred_fallthru
        _
      // Predicated region
      $region37: #{nn5_forward.4} parent=23 // pred_check
        %p236 = pneg %p110
      $region38: #{nn5_forward.4} parent=23 // pred_check_branch
        %238 = sbr.rel (%p236) target = $region40
      $region39: #{nn5_forward.4} parent=23 // pred_region
        %s239 = smul.u32 32, %s12
        %p240 = scmp.lt.s32.totalorder %s239, 63
        %s241 = scalar_select %p240, %s239, 63
        %s242 = smul.addr %s241, 4
        %s243 = scalar_lea.vmem %s3, %s242
        %s244 = smul.u32 32, %s12
      $region40: #{nn5_forward.4} parent=23 // pred_fallthru
        _
    $region24: #{nn5_forward.4} parent=5 // pred_fallthru
      _
    %p245 = scmp.le.s32.totalorder 1, %s12
    %p246 = scmp.lt.s32.totalorder %s12, 3
    %p247 = pnand %p245, %p246
    %p248 = pneg %p247
    // Predicated region
    $region41: #{nn5_forward.4} parent=5 // pred_check
      _
    $region42: #{nn5_forward.4} parent=5 // pred_check_branch
      %250 = sbr.rel (%p247) target = $region44
    $region43: #{nn5_forward.4} parent=5 // pred_region
      %s251 = ssub.s32 %s12, 1
      %s252 = smul.u32 32, %s17
      %p253 = scmp.lt.s32.totalorder %s252, 63
      %s254 = scalar_select %p253, %s252, 63
      %s255 = smul.addr %s254, 4
      %s256 = scalar_lea.vmem %s0, %s255
      %p257 = pneg %p38
      %p258 = pneg %p35
      %s259 = smul.u32 32, %s17
      %p260 = scmp.lt.s32.totalorder %s259, 63
      %s261 = scalar_select %p260, %s259, 63
      %s262 = smul.addr %s261, 4
      %s263 = scalar_lea.vmem %s1, %s262
      %p264 = pneg %p64
      %p265 = pneg %p61
      %s266 = smul.u32 32, %s17
      %p267 = scmp.lt.s32.totalorder %s266, 63
      %s268 = scalar_select %p267, %s266, 63
      %s269 = smul.addr %s268, 4
      %s270 = scalar_lea.vmem %s2, %s269
      %p271 = pneg %p90
      %p272 = pneg %p87
      %s273 = smul.u32 32, %s17
      %p274 = scmp.lt.s32.totalorder %s273, 63
      %s275 = scalar_select %p274, %s273, 63
      %s276 = smul.addr %s275, 4
      %s277 = scalar_lea.vmem %s3, %s276
      %p278 = pneg %p116
      %p279 = pneg %p113
      %p280 = pneg %p137
      %p281 = pneg %p134
      %p282 = pneg %p158
      %p283 = pneg %p155
      %p284 = pneg %p184
      %p285 = pneg %p181
      %s286 = smul.u32 32, %s17
      %p287 = scmp.lt.s32.totalorder %s286, 63
      %s288 = scalar_select %p287, %s286, 63
      %s289 = smul.addr %s288, 4
      %s290 = scalar_lea.vmem %s6, %s289
      %s291 = smul.u32 32, %s17
      %p292 = scmp.lt.s32.totalorder %s291, 63
      %s293 = scalar_select %p292, %s291, 63
      %s294 = smul.addr %s293, 4
      %s295 = scalar_lea.vmem %s0, %s294
      %s296 = smul.u32 32, %s17
      %s297 = smul.u32 32, %s17
      %p298 = scmp.lt.s32.totalorder %s297, 63
      %s299 = scalar_select %p298, %s297, 63
      %s300 = smul.addr %s299, 4
      %s301 = scalar_lea.vmem %s1, %s300
      %s302 = smul.u32 32, %s17
      %s303 = smul.u32 32, %s17
      %p304 = scmp.lt.s32.totalorder %s303, 63
      %s305 = scalar_select %p304, %s303, 63
      %s306 = smul.addr %s305, 4
      %s307 = scalar_lea.vmem %s2, %s306
      %s308 = smul.u32 32, %s17
      %s309 = smul.u32 32, %s17
      %p310 = scmp.lt.s32.totalorder %s309, 63
      %s311 = scalar_select %p310, %s309, 63
      %s312 = smul.addr %s311, 4
      %s313 = scalar_lea.vmem %s3, %s312
      %s314 = smul.u32 32, %s17
      %s315 = smul.u32 32, %s17
      %p316 = scmp.lt.s32.totalorder %s315, 63
      %s317 = scalar_select %p316, %s315, 63
      %s318 = smul.addr %s317, 4
      %s319 = scalar_lea.vmem %s6, %s318
      %s320 = smul.u32 32, %s17
      %v322 = vld [vmem:[%s4] sm:$0xf]
      %v323 = vld [vmem:[%s4 + $0x4] sm:$0xf]
      %v324 = vld [vmem:[%s4 + $0x8] sm:$0xf]
      %v325 = vld [vmem:[%s4 + $0xc] sm:$0xf]
      %v326 = vld [vmem:[%s4 + $0x10] sm:$0xf]
      %v327 = vld [vmem:[%s4 + $0x14] sm:$0xf]
      %v328 = vld [vmem:[%s4 + $0x18] sm:$0xf]
      %v329 = vld [vmem:[%s4 + $0x1c] sm:$0xf]
      %v330 = vld [vmem:[%s4 + $0x20] sm:$0xf]
      %v331 = vld [vmem:[%s4 + $0x24] sm:$0xf]
      %v332 = vld [vmem:[%s4 + $0x28] sm:$0xf]
      %v333 = vld [vmem:[%s4 + $0x2c] sm:$0xf]
      %v334 = vld [vmem:[%s4 + $0x30] sm:$0xf]
      %v335 = vld [vmem:[%s4 + $0x34] sm:$0xf]
      %v336 = vld [vmem:[%s4 + $0x38] sm:$0xf]
      %v337 = vld [vmem:[%s4 + $0x3c] sm:$0xf]
      %v338 = vld [vmem:[%s295] sm:$0xf]
      %v339 = vld [vmem:[%s295 + $0x4] sm:$0xf]
      %v340 = vld [vmem:[%s295 + $0x8] sm:$0xf]
      %v341 = vld [vmem:[%s295 + $0xc] sm:$0xf]
      %v342 = vld [vmem:[%s295 + $0x10] sm:$0xf]
      %v343 = vld [vmem:[%s295 + $0x14] sm:$0xf]
      %v344 = vld [vmem:[%s295 + $0x18] sm:$0xf]
      %v345 = vld [vmem:[%s295 + $0x1c] sm:$0xf]
      %v346 = vld [vmem:[%s295 + $0x20] sm:$0xf]
      %v347 = vld [vmem:[%s295 + $0x24] sm:$0xf]
      %v348 = vld [vmem:[%s295 + $0x28] sm:$0xf]
      %v349 = vld [vmem:[%s295 + $0x2c] sm:$0xf]
      %v350 = vld [vmem:[%s295 + $0x30] sm:$0xf]
      %v351 = vld [vmem:[%s295 + $0x34] sm:$0xf]
      %v352 = vld [vmem:[%s295 + $0x38] sm:$0xf]
      %v353 = vld [vmem:[%s295 + $0x3c] sm:$0xf]
      %v354 = vld [vmem:[%s295 + $0x40] sm:$0xf]
      %v355 = vld [vmem:[%s295 + $0x44] sm:$0xf]
      %v356 = vld [vmem:[%s295 + $0x48] sm:$0xf]
      %v357 = vld [vmem:[%s295 + $0x4c] sm:$0xf]
      %v358 = vld [vmem:[%s295 + $0x50] sm:$0xf]
      %v359 = vld [vmem:[%s295 + $0x54] sm:$0xf]
      %v360 = vld [vmem:[%s295 + $0x58] sm:$0xf]
      %v361 = vld [vmem:[%s295 + $0x5c] sm:$0xf]
      %v362 = vld [vmem:[%s295 + $0x60] sm:$0xf]
      %v363 = vld [vmem:[%s295 + $0x64] sm:$0xf]
      %v364 = vld [vmem:[%s295 + $0x68] sm:$0xf]
      %v365 = vld [vmem:[%s295 + $0x6c] sm:$0xf]
      %v366 = vld [vmem:[%s295 + $0x70] sm:$0xf]
      %v367 = vld [vmem:[%s295 + $0x74] sm:$0xf]
      %v368 = vld [vmem:[%s295 + $0x78] sm:$0xf]
      %v369 = vld [vmem:[%s295 + $0x7c] sm:$0xf]
      %v402 = vunpack.c.l.b16 %v338
      %v403 = vunpack.c.l.b16 %v339
      %v404 = vunpack.c.l.b16 %v340
      %v405 = vunpack.c.l.b16 %v341
      %v406 = vunpack.c.l.b16 %v342
      %v407 = vunpack.c.l.b16 %v343
      %v408 = vunpack.c.l.b16 %v344
      %v409 = vunpack.c.l.b16 %v345
      %v410 = vunpack.c.l.b16 %v346
      %v411 = vunpack.c.l.b16 %v347
      %v412 = vunpack.c.l.b16 %v348
      %v413 = vunpack.c.l.b16 %v349
      %v414 = vunpack.c.l.b16 %v350
      %v415 = vunpack.c.l.b16 %v351
      %v416 = vunpack.c.l.b16 %v352
      %v417 = vunpack.c.l.b16 %v353
      %v418 = vunpack.c.l.b16 %v354
      %v419 = vunpack.c.l.b16 %v355
      %v420 = vunpack.c.l.b16 %v356
      %v421 = vunpack.c.l.b16 %v357
      %v422 = vunpack.c.l.b16 %v358
      %v423 = vunpack.c.l.b16 %v359
      %v424 = vunpack.c.l.b16 %v360
      %v425 = vunpack.c.l.b16 %v361
      %v426 = vunpack.c.l.b16 %v362
      %v427 = vunpack.c.l.b16 %v363
      %v428 = vunpack.c.l.b16 %v364
      %v429 = vunpack.c.l.b16 %v365
      %v430 = vunpack.c.l.b16 %v366
      %v431 = vunpack.c.l.b16 %v367
      %v432 = vunpack.c.l.b16 %v368
      %v433 = vunpack.c.l.b16 %v369
      %v434 = vpack.c.b16 %v403, %v402
      %v435 = vpack.c.b16 %v405, %v404
      %v436 = vpack.c.b16 %v407, %v406
      %v437 = vpack.c.b16 %v409, %v408
      %v438 = vpack.c.b16 %v411, %v410
      %v439 = vpack.c.b16 %v413, %v412
      %v440 = vpack.c.b16 %v415, %v414
      %v441 = vpack.c.b16 %v417, %v416
      %v442 = vpack.c.b16 %v419, %v418
      %v443 = vpack.c.b16 %v421, %v420
      %v444 = vpack.c.b16 %v423, %v422
      %v445 = vpack.c.b16 %v425, %v424
      %v446 = vpack.c.b16 %v427, %v426
      %v447 = vpack.c.b16 %v429, %v428
      %v448 = vpack.c.b16 %v431, %v430
      %v449 = vpack.c.b16 %v433, %v432
      %v482 = vunpack.c.l.b16 %v322
      %v483 = vunpack.c.l.b16 %v323
      %v484 = vunpack.c.l.b16 %v324
      %v485 = vunpack.c.l.b16 %v325
      %v486 = vunpack.c.l.b16 %v326
      %v487 = vunpack.c.l.b16 %v327
      %v488 = vunpack.c.l.b16 %v328
      %v489 = vunpack.c.l.b16 %v329
      %v490 = vunpack.c.l.b16 %v330
      %v491 = vunpack.c.l.b16 %v331
      %v492 = vunpack.c.l.b16 %v332
      %v493 = vunpack.c.l.b16 %v333
      %v494 = vunpack.c.l.b16 %v334
      %v495 = vunpack.c.l.b16 %v335
      %v496 = vunpack.c.l.b16 %v336
      %v497 = vunpack.c.l.b16 %v337
      %v498 = vpack.c.b16 %v483, %v482
      %v499 = vpack.c.b16 %v485, %v484
      %v500 = vpack.c.b16 %v487, %v486
      %v501 = vpack.c.b16 %v489, %v488
      %v502 = vpack.c.b16 %v491, %v490
      %v503 = vpack.c.b16 %v493, %v492
      %v504 = vpack.c.b16 %v495, %v494
      %v505 = vpack.c.b16 %v497, %v496
      %514 = vmatprep.subr.bf16.mxu0 0
      %515 = vmatpush1.bf16.msra.mxu0 %v498
      %516 = vmatprep.subr.bf16.mxu0 0
      %517 = vmatpush1.bf16.msra.mxu0 %v499
      %518 = vmatprep.subr.bf16.mxu0 0
      %519 = vmatpush1.bf16.msra.mxu0 %v500
      %520 = vmatprep.subr.bf16.mxu0 0
      %521 = vmatpush1.bf16.msra.mxu0 %v501
      %522 = vmatprep.subr.bf16.mxu0 0
      %523 = vmatpush1.bf16.msra.mxu0 %v502
      %524 = vmatprep.subr.bf16.mxu0 0
      %525 = vmatpush1.bf16.msra.mxu0 %v503
      %526 = vmatprep.subr.bf16.mxu0 0
      %527 = vmatpush1.bf16.msra.mxu0 %v504
      %528 = vmatprep.subr.bf16.mxu0 0
      %529 = vmatpush1.bf16.msra.mxu0 %v505
      %530 = vmatprep.subr.bf16.mxu0 0
      %531 = vmatpush1.bf16.msra.mxu0 0
      %532 = vmatprep.subr.bf16.mxu0 0
      %533 = vmatpush1.bf16.msra.mxu0 0
      %534 = vmatprep.subr.bf16.mxu0 0
      %535 = vmatpush1.bf16.msra.mxu0 0
      %536 = vmatprep.subr.bf16.mxu0 0
      %537 = vmatpush1.bf16.msra.mxu0 0
      %538 = vmatprep.subr.bf16.mxu0 0
      %539 = vmatpush1.bf16.msra.mxu0 0
      %540 = vmatprep.subr.bf16.mxu0 0
      %541 = vmatpush1.bf16.msra.mxu0 0
      %542 = vmatprep.subr.bf16.mxu0 0
      %543 = vmatpush1.bf16.msra.mxu0 0
      %544 = vmatprep.subr.bf16.mxu0 0
      %545 = vmatpush1.bf16.msra.mxu0 0
      %546 = vmatprep.mubr.bf16.mxu0 0
      %547 = vmatmul.mubr.bf16.gmra.mrb[0].mxu0 %v434
      %v548 = vpop.f32.mrb[0].mxu0
      %v549 = vadd.f32 0.0, %v548
      %v550 = vpop.f32.mrb[0].mxu0
      %v551 = vpop.f32.mrb[0].mxu0
      %v552 = vadd.f32 0.0, %v551
      %v553 = vpop.f32.mrb[0].mxu0
      %554 = vmatprep.mubr.bf16.mxu0 0
      %555 = vmatmul.mubr.bf16.gmra.mrb[0].mxu0 %v435
      %v556 = vpop.f32.mrb[0].mxu0
      %v557 = vadd.f32 0.0, %v556
      %v558 = vpop.f32.mrb[0].mxu0
      %v559 = vpop.f32.mrb[0].mxu0
      %v560 = vadd.f32 0.0, %v559
      %v561 = vpop.f32.mrb[0].mxu0
      %562 = vmatprep.mubr.bf16.mxu0 0
      %563 = vmatmul.mubr.bf16.gmra.mrb[0].mxu0 %v436
      %v564 = vpop.f32.mrb[0].mxu0
      %v565 = vadd.f32 0.0, %v564
      %v566 = vpop.f32.mrb[0].mxu0
      %v567 = vpop.f32.mrb[0].mxu0
      %v568 = vadd.f32 0.0, %v567
      %v569 = vpop.f32.mrb[0].mxu0
      %570 = vmatprep.mubr.bf16.mxu0 0
      %571 = vmatmul.mubr.bf16.gmra.mrb[0].mxu0 %v437
      %v572 = vpop.f32.mrb[0].mxu0
      %v573 = vadd.f32 0.0, %v572
      %v574 = vpop.f32.mrb[0].mxu0
      %v575 = vpop.f32.mrb[0].mxu0
      %v576 = vadd.f32 0.0, %v575
      %v577 = vpop.f32.mrb[0].mxu0
      %578 = vmatprep.mubr.bf16.mxu0 0
      %579 = vmatmul.mubr.bf16.gmra.mrb[0].mxu0 %v438
      %v580 = vpop.f32.mrb[0].mxu0
      %v581 = vadd.f32 0.0, %v580
      %v582 = vpop.f32.mrb[0].mxu0
      %v583 = vpop.f32.mrb[0].mxu0
      %v584 = vadd.f32 0.0, %v583
      %v585 = vpop.f32.mrb[0].mxu0
      %586 = vmatprep.mubr.bf16.mxu0 0
      %587 = vmatmul.mubr.bf16.gmra.mrb[0].mxu0 %v439
      %v588 = vpop.f32.mrb[0].mxu0
      %v589 = vadd.f32 0.0, %v588
      %v590 = vpop.f32.mrb[0].mxu0
      %v591 = vpop.f32.mrb[0].mxu0
      %v592 = vadd.f32 0.0, %v591
      %v593 = vpop.f32.mrb[0].mxu0
      %594 = vmatprep.mubr.bf16.mxu0 0
      %595 = vmatmul.mubr.bf16.gmra.mrb[0].mxu0 %v440
      %v596 = vpop.f32.mrb[0].mxu0
      %v597 = vadd.f32 0.0, %v596
      %v598 = vpop.f32.mrb[0].mxu0
      %v599 = vpop.f32.mrb[0].mxu0
      %v600 = vadd.f32 0.0, %v599
      %v601 = vpop.f32.mrb[0].mxu0
      %602 = vmatprep.mubr.bf16.mxu0 0
      %603 = vmatmul.mubr.bf16.gmra.mrb[0].mxu0 %v441
      %v604 = vpop.f32.mrb[0].mxu0
      %v605 = vadd.f32 0.0, %v604
      %v606 = vpop.f32.mrb[0].mxu0
      %v607 = vpop.f32.mrb[0].mxu0
      %v608 = vadd.f32 0.0, %v607
      %v609 = vpop.f32.mrb[0].mxu0
      %610 = vmatprep.mubr.bf16.mxu0 0
      %611 = vmatmul.mubr.bf16.gmra.mrb[0].mxu0 %v442
      %v612 = vpop.f32.mrb[0].mxu0
      %v613 = vadd.f32 0.0, %v612
      %v614 = vpop.f32.mrb[0].mxu0
      %v615 = vpop.f32.mrb[0].mxu0
      %v616 = vadd.f32 0.0, %v615
      %v617 = vpop.f32.mrb[0].mxu0
      %618 = vmatprep.mubr.bf16.mxu0 0
      %619 = vmatmul.mubr.bf16.gmra.mrb[0].mxu0 %v443
      %v620 = vpop.f32.mrb[0].mxu0
      %v621 = vadd.f32 0.0, %v620
      %v622 = vpop.f32.mrb[0].mxu0
      %v623 = vpop.f32.mrb[0].mxu0
      %v624 = vadd.f32 0.0, %v623
      %v625 = vpop.f32.mrb[0].mxu0
      %626 = vmatprep.mubr.bf16.mxu0 0
      %627 = vmatmul.mubr.bf16.gmra.mrb[0].mxu0 %v444
      %v628 = vpop.f32.mrb[0].mxu0
      %v629 = vadd.f32 0.0, %v628
      %v630 = vpop.f32.mrb[0].mxu0
      %v631 = vpop.f32.mrb[0].mxu0
      %v632 = vadd.f32 0.0, %v631
      %v633 = vpop.f32.mrb[0].mxu0
      %634 = vmatprep.mubr.bf16.mxu0 0
      %635 = vmatmul.mubr.bf16.gmra.mrb[0].mxu0 %v445
      %v636 = vpop.f32.mrb[0].mxu0
      %v637 = vadd.f32 0.0, %v636
      %v638 = vpop.f32.mrb[0].mxu0
      %v639 = vpop.f32.mrb[0].mxu0
      %v640 = vadd.f32 0.0, %v639
      %v641 = vpop.f32.mrb[0].mxu0
      %642 = vmatprep.mubr.bf16.mxu0 0
      %643 = vmatmul.mubr.bf16.gmra.mrb[0].mxu0 %v446
      %v644 = vpop.f32.mrb[0].mxu0
      %v645 = vadd.f32 0.0, %v644
      %v646 = vpop.f32.mrb[0].mxu0
      %v647 = vpop.f32.mrb[0].mxu0
      %v648 = vadd.f32 0.0, %v647
      %v649 = vpop.f32.mrb[0].mxu0
      %650 = vmatprep.mubr.bf16.mxu0 0
      %651 = vmatmul.mubr.bf16.gmra.mrb[0].mxu0 %v447
      %v652 = vpop.f32.mrb[0].mxu0
      %v653 = vadd.f32 0.0, %v652
      %v654 = vpop.f32.mrb[0].mxu0
      %v655 = vpop.f32.mrb[0].mxu0
      %v656 = vadd.f32 0.0, %v655
      %v657 = vpop.f32.mrb[0].mxu0
      %658 = vmatprep.mubr.bf16.mxu0 0
      %659 = vmatmul.mubr.bf16.gmra.mrb[0].mxu0 %v448
      %v660 = vpop.f32.mrb[0].mxu0
      %v661 = vadd.f32 0.0, %v660
      %v662 = vpop.f32.mrb[0].mxu0
      %v663 = vpop.f32.mrb[0].mxu0
      %v664 = vadd.f32 0.0, %v663
      %v665 = vpop.f32.mrb[0].mxu0
      %666 = vmatprep.mubr.bf16.mxu0 0
      %667 = vmatmul.mubr.bf16.gmra.mrb[0].mxu0 %v449
      %v668 = vpop.f32.mrb[0].mxu0
      %v669 = vadd.f32 0.0, %v668
      %v670 = vpop.f32.mrb[0].mxu0
      %v671 = vpop.f32.mrb[0].mxu0
      %v672 = vadd.f32 0.0, %v671
      %v673 = vpop.f32.mrb[0].mxu0
      %674 = vdwg.mxu0
      %v675 = vld [vmem:[%s301] sm:$0xf]
      %v676 = vld [vmem:[%s301 + $0x4] sm:$0xf]
      %v677 = vld [vmem:[%s301 + $0x8] sm:$0xf]
      %v678 = vld [vmem:[%s301 + $0xc] sm:$0xf]
      %v679 = vld [vmem:[%s301 + $0x10] sm:$0xf]
      %v680 = vld [vmem:[%s301 + $0x14] sm:$0xf]
      %v681 = vld [vmem:[%s301 + $0x18] sm:$0xf]
      %v682 = vld [vmem:[%s301 + $0x1c] sm:$0xf]
      %v683 = vld [vmem:[%s301 + $0x20] sm:$0xf]
      %v684 = vld [vmem:[%s301 + $0x24] sm:$0xf]
      %v685 = vld [vmem:[%s301 + $0x28] sm:$0xf]
      %v686 = vld [vmem:[%s301 + $0x2c] sm:$0xf]
      %v687 = vld [vmem:[%s301 + $0x30] sm:$0xf]
      %v688 = vld [vmem:[%s301 + $0x34] sm:$0xf]
      %v689 = vld [vmem:[%s301 + $0x38] sm:$0xf]
      %v690 = vld [vmem:[%s301 + $0x3c] sm:$0xf]
      %v691 = vld [vmem:[%s301 + $0x40] sm:$0xf]
      %v692 = vld [vmem:[%s301 + $0x44] sm:$0xf]
      %v693 = vld [vmem:[%s301 + $0x48] sm:$0xf]
      %v694 = vld [vmem:[%s301 + $0x4c] sm:$0xf]
      %v695 = vld [vmem:[%s301 + $0x50] sm:$0xf]
      %v696 = vld [vmem:[%s301 + $0x54] sm:$0xf]
      %v697 = vld [vmem:[%s301 + $0x58] sm:$0xf]
      %v698 = vld [vmem:[%s301 + $0x5c] sm:$0xf]
      %v699 = vld [vmem:[%s301 + $0x60] sm:$0xf]
      %v700 = vld [vmem:[%s301 + $0x64] sm:$0xf]
      %v701 = vld [vmem:[%s301 + $0x68] sm:$0xf]
      %v702 = vld [vmem:[%s301 + $0x6c] sm:$0xf]
      %v703 = vld [vmem:[%s301 + $0x70] sm:$0xf]
      %v704 = vld [vmem:[%s301 + $0x74] sm:$0xf]
      %v705 = vld [vmem:[%s301 + $0x78] sm:$0xf]
      %v706 = vld [vmem:[%s301 + $0x7c] sm:$0xf]
      %v739 = vunpack.c.l.b16 %v675
      %v740 = vunpack.c.l.b16 %v676
      %v741 = vunpack.c.l.b16 %v677
      %v742 = vunpack.c.l.b16 %v678
      %v743 = vunpack.c.l.b16 %v679
      %v744 = vunpack.c.l.b16 %v680
      %v745 = vunpack.c.l.b16 %v681
      %v746 = vunpack.c.l.b16 %v682
      %v747 = vunpack.c.l.b16 %v683
      %v748 = vunpack.c.l.b16 %v684
      %v749 = vunpack.c.l.b16 %v685
      %v750 = vunpack.c.l.b16 %v686
      %v751 = vunpack.c.l.b16 %v687
      %v752 = vunpack.c.l.b16 %v688
      %v753 = vunpack.c.l.b16 %v689
      %v754 = vunpack.c.l.b16 %v690
      %v755 = vunpack.c.l.b16 %v691
      %v756 = vunpack.c.l.b16 %v692
      %v757 = vunpack.c.l.b16 %v693
      %v758 = vunpack.c.l.b16 %v694
      %v759 = vunpack.c.l.b16 %v695
      %v760 = vunpack.c.l.b16 %v696
      %v761 = vunpack.c.l.b16 %v697
      %v762 = vunpack.c.l.b16 %v698
      %v763 = vunpack.c.l.b16 %v699
      %v764 = vunpack.c.l.b16 %v700
      %v765 = vunpack.c.l.b16 %v701
      %v766 = vunpack.c.l.b16 %v702
      %v767 = vunpack.c.l.b16 %v703
      %v768 = vunpack.c.l.b16 %v704
      %v769 = vunpack.c.l.b16 %v705
      %v770 = vunpack.c.l.b16 %v706
      %v771 = vpack.c.b16 %v740, %v739
      %v772 = vpack.c.b16 %v742, %v741
      %v773 = vpack.c.b16 %v744, %v743
      %v774 = vpack.c.b16 %v746, %v745
      %v775 = vpack.c.b16 %v748, %v747
      %v776 = vpack.c.b16 %v750, %v749
      %v777 = vpack.c.b16 %v752, %v751
      %v778 = vpack.c.b16 %v754, %v753
      %v779 = vpack.c.b16 %v756, %v755
      %v780 = vpack.c.b16 %v758, %v757
      %v781 = vpack.c.b16 %v760, %v759
      %v782 = vpack.c.b16 %v762, %v761
      %v783 = vpack.c.b16 %v764, %v763
      %v784 = vpack.c.b16 %v766, %v765
      %v785 = vpack.c.b16 %v768, %v767
      %v786 = vpack.c.b16 %v770, %v769
      %803 = vmatprep.subr.bf16.mxu0 0
      %804 = vmatpush1.bf16.msra.mxu0 %v498
      %805 = vmatprep.subr.bf16.mxu0 0
      %806 = vmatpush1.bf16.msra.mxu0 %v499
      %807 = vmatprep.subr.bf16.mxu0 0
      %808 = vmatpush1.bf16.msra.mxu0 %v500
      %809 = vmatprep.subr.bf16.mxu0 0
      %810 = vmatpush1.bf16.msra.mxu0 %v501
      %811 = vmatprep.subr.bf16.mxu0 0
      %812 = vmatpush1.bf16.msra.mxu0 %v502
      %813 = vmatprep.subr.bf16.mxu0 0
      %814 = vmatpush1.bf16.msra.mxu0 %v503
      %815 = vmatprep.subr.bf16.mxu0 0
      %816 = vmatpush1.bf16.msra.mxu0 %v504
      %817 = vmatprep.subr.bf16.mxu0 0
      %818 = vmatpush1.bf16.msra.mxu0 %v505
      %819 = vmatprep.subr.bf16.mxu0 0
      %820 = vmatpush1.bf16.msra.mxu0 0
      %821 = vmatprep.subr.bf16.mxu0 0
      %822 = vmatpush1.bf16.msra.mxu0 0
      %823 = vmatprep.subr.bf16.mxu0 0
      %824 = vmatpush1.bf16.msra.mxu0 0
      %825 = vmatprep.subr.bf16.mxu0 0
      %826 = vmatpush1.bf16.msra.mxu0 0
      %827 = vmatprep.subr.bf16.mxu0 0
      %828 = vmatpush1.bf16.msra.mxu0 0
      %829 = vmatprep.subr.bf16.mxu0 0
      %830 = vmatpush1.bf16.msra.mxu0 0
      %831 = vmatprep.subr.bf16.mxu0 0
      %832 = vmatpush1.bf16.msra.mxu0 0
      %833 = vmatprep.subr.bf16.mxu0 0
      %834 = vmatpush1.bf16.msra.mxu0 0
      %835 = vmatprep.mubr.bf16.mxu0 0
      %836 = vmatmul.mubr.bf16.gmra.mrb[0].mxu0 %v771
      %v837 = vpop.f32.mrb[0].mxu0
      %v838 = vadd.f32 0.0, %v837
      %v839 = vpop.f32.mrb[0].mxu0
      %v840 = vpop.f32.mrb[0].mxu0
      %v841 = vadd.f32 0.0, %v840
      %v842 = vpop.f32.mrb[0].mxu0
      %843 = vmatprep.mubr.bf16.mxu0 0
      %844 = vmatmul.mubr.bf16.gmra.mrb[0].mxu0 %v772
      %v845 = vpop.f32.mrb[0].mxu0
      %v846 = vadd.f32 0.0, %v845
      %v847 = vpop.f32.mrb[0].mxu0
      %v848 = vpop.f32.mrb[0].mxu0
      %v849 = vadd.f32 0.0, %v848
      %v850 = vpop.f32.mrb[0].mxu0
      %851 = vmatprep.mubr.bf16.mxu0 0
      %852 = vmatmul.mubr.bf16.gmra.mrb[0].mxu0 %v773
      %v853 = vpop.f32.mrb[0].mxu0
      %v854 = vadd.f32 0.0, %v853
      %v855 = vpop.f32.mrb[0].mxu0
      %v856 = vpop.f32.mrb[0].mxu0
      %v857 = vadd.f32 0.0, %v856
      %v858 = vpop.f32.mrb[0].mxu0
      %859 = vmatprep.mubr.bf16.mxu0 0
      %860 = vmatmul.mubr.bf16.gmra.mrb[0].mxu0 %v774
      %v861 = vpop.f32.mrb[0].mxu0
      %v862 = vadd.f32 0.0, %v861
      %v863 = vpop.f32.mrb[0].mxu0
      %v864 = vpop.f32.mrb[0].mxu0
      %v865 = vadd.f32 0.0, %v864
      %v866 = vpop.f32.mrb[0].mxu0
      %867 = vmatprep.mubr.bf16.mxu0 0
      %868 = vmatmul.mubr.bf16.gmra.mrb[0].mxu0 %v775
      %v869 = vpop.f32.mrb[0].mxu0
      %v870 = vadd.f32 0.0, %v869
      %v871 = vpop.f32.mrb[0].mxu0
      %v872 = vpop.f32.mrb[0].mxu0
      %v873 = vadd.f32 0.0, %v872
      %v874 = vpop.f32.mrb[0].mxu0
      %875 = vmatprep.mubr.bf16.mxu0 0
      %876 = vmatmul.mubr.bf16.gmra.mrb[0].mxu0 %v776
      %v877 = vpop.f32.mrb[0].mxu0
      %v878 = vadd.f32 0.0, %v877
      %v879 = vpop.f32.mrb[0].mxu0
      %v880 = vpop.f32.mrb[0].mxu0
      %v881 = vadd.f32 0.0, %v880
      %v882 = vpop.f32.mrb[0].mxu0
      %883 = vmatprep.mubr.bf16.mxu0 0
      %884 = vmatmul.mubr.bf16.gmra.mrb[0].mxu0 %v777
      %v885 = vpop.f32.mrb[0].mxu0
      %v886 = vadd.f32 0.0, %v885
      %v887 = vpop.f32.mrb[0].mxu0
      %v888 = vpop.f32.mrb[0].mxu0
      %v889 = vadd.f32 0.0, %v888
      %v890 = vpop.f32.mrb[0].mxu0
      %891 = vmatprep.mubr.bf16.mxu0 0
      %892 = vmatmul.mubr.bf16.gmra.mrb[0].mxu0 %v778
      %v893 = vpop.f32.mrb[0].mxu0
      %v894 = vadd.f32 0.0, %v893
      %v895 = vpop.f32.mrb[0].mxu0
      %v896 = vpop.f32.mrb[0].mxu0
      %v897 = vadd.f32 0.0, %v896
      %v898 = vpop.f32.mrb[0].mxu0
      %899 = vmatprep.mubr.bf16.mxu0 0
      %900 = vmatmul.mubr.bf16.gmra.mrb[0].mxu0 %v779
      %v901 = vpop.f32.mrb[0].mxu0
      %v902 = vadd.f32 0.0, %v901
      %v903 = vpop.f32.mrb[0].mxu0
      %v904 = vpop.f32.mrb[0].mxu0
      %v905 = vadd.f32 0.0, %v904
      %v906 = vpop.f32.mrb[0].mxu0
      %907 = vmatprep.mubr.bf16.mxu0 0
      %908 = vmatmul.mubr.bf16.gmra.mrb[0].mxu0 %v780
      %v909 = vpop.f32.mrb[0].mxu0
      %v910 = vadd.f32 0.0, %v909
      %v911 = vpop.f32.mrb[0].mxu0
      %v912 = vpop.f32.mrb[0].mxu0
      %v913 = vadd.f32 0.0, %v912
      %v914 = vpop.f32.mrb[0].mxu0
      %915 = vmatprep.mubr.bf16.mxu0 0
      %916 = vmatmul.mubr.bf16.gmra.mrb[0].mxu0 %v781
      %v917 = vpop.f32.mrb[0].mxu0
      %v918 = vadd.f32 0.0, %v917
      %v919 = vpop.f32.mrb[0].mxu0
      %v920 = vpop.f32.mrb[0].mxu0
      %v921 = vadd.f32 0.0, %v920
      %v922 = vpop.f32.mrb[0].mxu0
      %923 = vmatprep.mubr.bf16.mxu0 0
      %924 = vmatmul.mubr.bf16.gmra.mrb[0].mxu0 %v782
      %v925 = vpop.f32.mrb[0].mxu0
      %v926 = vadd.f32 0.0, %v925
      %v927 = vpop.f32.mrb[0].mxu0
      %v928 = vpop.f32.mrb[0].mxu0
      %v929 = vadd.f32 0.0, %v928
      %v930 = vpop.f32.mrb[0].mxu0
      %931 = vmatprep.mubr.bf16.mxu0 0
      %932 = vmatmul.mubr.bf16.gmra.mrb[0].mxu0 %v783
      %v933 = vpop.f32.mrb[0].mxu0
      %v934 = vadd.f32 0.0, %v933
      %v935 = vpop.f32.mrb[0].mxu0
      %v936 = vpop.f32.mrb[0].mxu0
      %v937 = vadd.f32 0.0, %v936
      %v938 = vpop.f32.mrb[0].mxu0
      %939 = vmatprep.mubr.bf16.mxu0 0
      %940 = vmatmul.mubr.bf16.gmra.mrb[0].mxu0 %v784
      %v941 = vpop.f32.mrb[0].mxu0
      %v942 = vadd.f32 0.0, %v941
      %v943 = vpop.f32.mrb[0].mxu0
      %v944 = vpop.f32.mrb[0].mxu0
      %v945 = vadd.f32 0.0, %v944
      %v946 = vpop.f32.mrb[0].mxu0
      %947 = vmatprep.mubr.bf16.mxu0 0
      %948 = vmatmul.mubr.bf16.gmra.mrb[0].mxu0 %v785
      %v949 = vpop.f32.mrb[0].mxu0
      %v950 = vadd.f32 0.0, %v949
      %v951 = vpop.f32.mrb[0].mxu0
      %v952 = vpop.f32.mrb[0].mxu0
      %v953 = vadd.f32 0.0, %v952
      %v954 = vpop.f32.mrb[0].mxu0
      %955 = vmatprep.mubr.bf16.mxu0 0
      %956 = vmatmul.mubr.bf16.gmra.mrb[0].mxu0 %v786
      %v957 = vpop.f32.mrb[0].mxu0
      %v958 = vadd.f32 0.0, %v957
      %v959 = vpop.f32.mrb[0].mxu0
      %v960 = vpop.f32.mrb[0].mxu0
      %v961 = vadd.f32 0.0, %v960
      %v962 = vpop.f32.mrb[0].mxu0
      %963 = vdwg.mxu0
      %v964 = vld [vmem:[%s307] sm:$0xf]
      %v965 = vld [vmem:[%s307 + $0x4] sm:$0xf]
      %v966 = vld [vmem:[%s307 + $0x8] sm:$0xf]
      %v967 = vld [vmem:[%s307 + $0xc] sm:$0xf]
      %v968 = vld [vmem:[%s307 + $0x10] sm:$0xf]
      %v969 = vld [vmem:[%s307 + $0x14] sm:$0xf]
      %v970 = vld [vmem:[%s307 + $0x18] sm:$0xf]
      %v971 = vld [vmem:[%s307 + $0x1c] sm:$0xf]
      %v972 = vld [vmem:[%s307 + $0x20] sm:$0xf]
      %v973 = vld [vmem:[%s307 + $0x24] sm:$0xf]
      %v974 = vld [vmem:[%s307 + $0x28] sm:$0xf]
      %v975 = vld [vmem:[%s307 + $0x2c] sm:$0xf]
      %v976 = vld [vmem:[%s307 + $0x30] sm:$0xf]
      %v977 = vld [vmem:[%s307 + $0x34] sm:$0xf]
      %v978 = vld [vmem:[%s307 + $0x38] sm:$0xf]
      %v979 = vld [vmem:[%s307 + $0x3c] sm:$0xf]
      %v980 = vld [vmem:[%s307 + $0x40] sm:$0xf]
      %v981 = vld [vmem:[%s307 + $0x44] sm:$0xf]
      %v982 = vld [vmem:[%s307 + $0x48] sm:$0xf]
      %v983 = vld [vmem:[%s307 + $0x4c] sm:$0xf]
      %v984 = vld [vmem:[%s307 + $0x50] sm:$0xf]
      %v985 = vld [vmem:[%s307 + $0x54] sm:$0xf]
      %v986 = vld [vmem:[%s307 + $0x58] sm:$0xf]
      %v987 = vld [vmem:[%s307 + $0x5c] sm:$0xf]
      %v988 = vld [vmem:[%s307 + $0x60] sm:$0xf]
      %v989 = vld [vmem:[%s307 + $0x64] sm:$0xf]
      %v990 = vld [vmem:[%s307 + $0x68] sm:$0xf]
      %v991 = vld [vmem:[%s307 + $0x6c] sm:$0xf]
      %v992 = vld [vmem:[%s307 + $0x70] sm:$0xf]
      %v993 = vld [vmem:[%s307 + $0x74] sm:$0xf]
      %v994 = vld [vmem:[%s307 + $0x78] sm:$0xf]
      %v995 = vld [vmem:[%s307 + $0x7c] sm:$0xf]
      %v1028 = vunpack.c.l.b16 %v964
      %v1029 = vunpack.c.l.b16 %v965
      %v1030 = vunpack.c.l.b16 %v966
      %v1031 = vunpack.c.l.b16 %v967
      %v1032 = vunpack.c.l.b16 %v968
      %v1033 = vunpack.c.l.b16 %v969
      %v1034 = vunpack.c.l.b16 %v970
      %v1035 = vunpack.c.l.b16 %v971
      %v1036 = vunpack.c.l.b16 %v972
      %v1037 = vunpack.c.l.b16 %v973
      %v1038 = vunpack.c.l.b16 %v974
      %v1039 = vunpack.c.l.b16 %v975
      %v1040 = vunpack.c.l.b16 %v976
      %v1041 = vunpack.c.l.b16 %v977
      %v1042 = vunpack.c.l.b16 %v978
      %v1043 = vunpack.c.l.b16 %v979
      %v1044 = vunpack.c.l.b16 %v980
      %v1045 = vunpack.c.l.b16 %v981
      %v1046 = vunpack.c.l.b16 %v982
      %v1047 = vunpack.c.l.b16 %v983
      %v1048 = vunpack.c.l.b16 %v984
      %v1049 = vunpack.c.l.b16 %v985
      %v1050 = vunpack.c.l.b16 %v986
      %v1051 = vunpack.c.l.b16 %v987
      %v1052 = vunpack.c.l.b16 %v988
      %v1053 = vunpack.c.l.b16 %v989
      %v1054 = vunpack.c.l.b16 %v990
      %v1055 = vunpack.c.l.b16 %v991
      %v1056 = vunpack.c.l.b16 %v992
      %v1057 = vunpack.c.l.b16 %v993
      %v1058 = vunpack.c.l.b16 %v994
      %v1059 = vunpack.c.l.b16 %v995
      %v1060 = vpack.c.b16 %v1029, %v1028
      %v1061 = vpack.c.b16 %v1031, %v1030
      %v1062 = vpack.c.b16 %v1033, %v1032
      %v1063 = vpack.c.b16 %v1035, %v1034
      %v1064 = vpack.c.b16 %v1037, %v1036
      %v1065 = vpack.c.b16 %v1039, %v1038
      %v1066 = vpack.c.b16 %v1041, %v1040
      %v1067 = vpack.c.b16 %v1043, %v1042
      %v1068 = vpack.c.b16 %v1045, %v1044
      %v1069 = vpack.c.b16 %v1047, %v1046
      %v1070 = vpack.c.b16 %v1049, %v1048
      %v1071 = vpack.c.b16 %v1051, %v1050
      %v1072 = vpack.c.b16 %v1053, %v1052
      %v1073 = vpack.c.b16 %v1055, %v1054
      %v1074 = vpack.c.b16 %v1057, %v1056
      %v1075 = vpack.c.b16 %v1059, %v1058
      %1092 = vmatprep.subr.bf16.mxu0 0
      %1093 = vmatpush1.bf16.msra.mxu0 %v498
      %1094 = vmatprep.subr.bf16.mxu0 0
      %1095 = vmatpush1.bf16.msra.mxu0 %v499
      %1096 = vmatprep.subr.bf16.mxu0 0
      %1097 = vmatpush1.bf16.msra.mxu0 %v500
      %1098 = vmatprep.subr.bf16.mxu0 0
      %1099 = vmatpush1.bf16.msra.mxu0 %v501
      %1100 = vmatprep.subr.bf16.mxu0 0
      %1101 = vmatpush1.bf16.msra.mxu0 %v502
      %1102 = vmatprep.subr.bf16.mxu0 0
      %1103 = vmatpush1.bf16.msra.mxu0 %v503
      %1104 = vmatprep.subr.bf16.mxu0 0
      %1105 = vmatpush1.bf16.msra.mxu0 %v504
      %1106 = vmatprep.subr.bf16.mxu0 0
      %1107 = vmatpush1.bf16.msra.mxu0 %v505
      %1108 = vmatprep.subr.bf16.mxu0 0
      %1109 = vmatpush1.bf16.msra.mxu0 0
      %1110 = vmatprep.subr.bf16.mxu0 0
      %1111 = vmatpush1.bf16.msra.mxu0 0
      %1112 = vmatprep.subr.bf16.mxu0 0
      %1113 = vmatpush1.bf16.msra.mxu0 0
      %1114 = vmatprep.subr.bf16.mxu0 0
      %1115 = vmatpush1.bf16.msra.mxu0 0
      %1116 = vmatprep.subr.bf16.mxu0 0
      %1117 = vmatpush1.bf16.msra.mxu0 0
      %1118 = vmatprep.subr.bf16.mxu0 0
      %1119 = vmatpush1.bf16.msra.mxu0 0
      %1120 = vmatprep.subr.bf16.mxu0 0
      %1121 = vmatpush1.bf16.msra.mxu0 0
      %1122 = vmatprep.subr.bf16.mxu0 0
      %1123 = vmatpush1.bf16.msra.mxu0 0
      %1124 = vmatprep.mubr.bf16.mxu0 0
      %1125 = vmatmul.mubr.bf16.gmra.mrb[0].mxu0 %v1060
      %v1126 = vpop.f32.mrb[0].mxu0
      %v1127 = vadd.f32 0.0, %v1126
      %v1128 = vpop.f32.mrb[0].mxu0
      %v1129 = vpop.f32.mrb[0].mxu0
      %v1130 = vadd.f32 0.0, %v1129
      %v1131 = vpop.f32.mrb[0].mxu0
      %1132 = vmatprep.mubr.bf16.mxu0 0
      %1133 = vmatmul.mubr.bf16.gmra.mrb[0].mxu0 %v1061
      %v1134 = vpop.f32.mrb[0].mxu0
      %v1135 = vadd.f32 0.0, %v1134
      %v1136 = vpop.f32.mrb[0].mxu0
      %v1137 = vpop.f32.mrb[0].mxu0
      %v1138 = vadd.f32 0.0, %v1137
      %v1139 = vpop.f32.mrb[0].mxu0
      %1140 = vmatprep.mubr.bf16.mxu0 0
      %1141 = vmatmul.mubr.bf16.gmra.mrb[0].mxu0 %v1062
      %v1142 = vpop.f32.mrb[0].mxu0
      %v1143 = vadd.f32 0.0, %v1142
      %v1144 = vpop.f32.mrb[0].mxu0
      %v1145 = vpop.f32.mrb[0].mxu0
      %v1146 = vadd.f32 0.0, %v1145
      %v1147 = vpop.f32.mrb[0].mxu0
      %1148 = vmatprep.mubr.bf16.mxu0 0
      %1149 = vmatmul.mubr.bf16.gmra.mrb[0].mxu0 %v1063
      %v1150 = vpop.f32.mrb[0].mxu0
      %v1151 = vadd.f32 0.0, %v1150
      %v1152 = vpop.f32.mrb[0].mxu0
      %v1153 = vpop.f32.mrb[0].mxu0
      %v1154 = vadd.f32 0.0, %v1153
      %v1155 = vpop.f32.mrb[0].mxu0
      %1156 = vmatprep.mubr.bf16.mxu0 0
      %1157 = vmatmul.mubr.bf16.gmra.mrb[0].mxu0 %v1064
      %v1158 = vpop.f32.mrb[0].mxu0
      %v1159 = vadd.f32 0.0, %v1158
      %v1160 = vpop.f32.mrb[0].mxu0
      %v1161 = vpop.f32.mrb[0].mxu0
      %v1162 = vadd.f32 0.0, %v1161
      %v1163 = vpop.f32.mrb[0].mxu0
      %1164 = vmatprep.mubr.bf16.mxu0 0
      %1165 = vmatmul.mubr.bf16.gmra.mrb[0].mxu0 %v1065
      %v1166 = vpop.f32.mrb[0].mxu0
      %v1167 = vadd.f32 0.0, %v1166
      %v1168 = vpop.f32.mrb[0].mxu0
      %v1169 = vpop.f32.mrb[0].mxu0
      %v1170 = vadd.f32 0.0, %v1169
      %v1171 = vpop.f32.mrb[0].mxu0
      %1172 = vmatprep.mubr.bf16.mxu0 0
      %1173 = vmatmul.mubr.bf16.gmra.mrb[0].mxu0 %v1066
      %v1174 = vpop.f32.mrb[0].mxu0
      %v1175 = vadd.f32 0.0, %v1174
      %v1176 = vpop.f32.mrb[0].mxu0
      %v1177 = vpop.f32.mrb[0].mxu0
      %v1178 = vadd.f32 0.0, %v1177
      %v1179 = vpop.f32.mrb[0].mxu0
      %1180 = vmatprep.mubr.bf16.mxu0 0
      %1181 = vmatmul.mubr.bf16.gmra.mrb[0].mxu0 %v1067
      %v1182 = vpop.f32.mrb[0].mxu0
      %v1183 = vadd.f32 0.0, %v1182
      %v1184 = vpop.f32.mrb[0].mxu0
      %v1185 = vpop.f32.mrb[0].mxu0
      %v1186 = vadd.f32 0.0, %v1185
      %v1187 = vpop.f32.mrb[0].mxu0
      %1188 = vmatprep.mubr.bf16.mxu0 0
      %1189 = vmatmul.mubr.bf16.gmra.mrb[0].mxu0 %v1068
      %v1190 = vpop.f32.mrb[0].mxu0
      %v1191 = vadd.f32 0.0, %v1190
      %v1192 = vpop.f32.mrb[0].mxu0
      %v1193 = vpop.f32.mrb[0].mxu0
      %v1194 = vadd.f32 0.0, %v1193
      %v1195 = vpop.f32.mrb[0].mxu0
      %1196 = vmatprep.mubr.bf16.mxu0 0
      %1197 = vmatmul.mubr.bf16.gmra.mrb[0].mxu0 %v1069
      %v1198 = vpop.f32.mrb[0].mxu0
      %v1199 = vadd.f32 0.0, %v1198
      %v1200 = vpop.f32.mrb[0].mxu0
      %v1201 = vpop.f32.mrb[0].mxu0
      %v1202 = vadd.f32 0.0, %v1201
      %v1203 = vpop.f32.mrb[0].mxu0
      %1204 = vmatprep.mubr.bf16.mxu0 0
      %1205 = vmatmul.mubr.bf16.gmra.mrb[0].mxu0 %v1070
      %v1206 = vpop.f32.mrb[0].mxu0
      %v1207 = vadd.f32 0.0, %v1206
      %v1208 = vpop.f32.mrb[0].mxu0
      %v1209 = vpop.f32.mrb[0].mxu0
      %v1210 = vadd.f32 0.0, %v1209
      %v1211 = vpop.f32.mrb[0].mxu0
      %1212 = vmatprep.mubr.bf16.mxu0 0
      %1213 = vmatmul.mubr.bf16.gmra.mrb[0].mxu0 %v1071
      %v1214 = vpop.f32.mrb[0].mxu0
      %v1215 = vadd.f32 0.0, %v1214
      %v1216 = vpop.f32.mrb[0].mxu0
      %v1217 = vpop.f32.mrb[0].mxu0
      %v1218 = vadd.f32 0.0, %v1217
      %v1219 = vpop.f32.mrb[0].mxu0
      %1220 = vmatprep.mubr.bf16.mxu0 0
      %1221 = vmatmul.mubr.bf16.gmra.mrb[0].mxu0 %v1072
      %v1222 = vpop.f32.mrb[0].mxu0
      %v1223 = vadd.f32 0.0, %v1222
      %v1224 = vpop.f32.mrb[0].mxu0
      %v1225 = vpop.f32.mrb[0].mxu0
      %v1226 = vadd.f32 0.0, %v1225
      %v1227 = vpop.f32.mrb[0].mxu0
      %1228 = vmatprep.mubr.bf16.mxu0 0
      %1229 = vmatmul.mubr.bf16.gmra.mrb[0].mxu0 %v1073
      %v1230 = vpop.f32.mrb[0].mxu0
      %v1231 = vadd.f32 0.0, %v1230
      %v1232 = vpop.f32.mrb[0].mxu0
      %v1233 = vpop.f32.mrb[0].mxu0
      %v1234 = vadd.f32 0.0, %v1233
      %v1235 = vpop.f32.mrb[0].mxu0
      %1236 = vmatprep.mubr.bf16.mxu0 0
      %1237 = vmatmul.mubr.bf16.gmra.mrb[0].mxu0 %v1074
      %v1238 = vpop.f32.mrb[0].mxu0
      %v1239 = vadd.f32 0.0, %v1238
      %v1240 = vpop.f32.mrb[0].mxu0
      %v1241 = vpop.f32.mrb[0].mxu0
      %v1242 = vadd.f32 0.0, %v1241
      %v1243 = vpop.f32.mrb[0].mxu0
      %1244 = vmatprep.mubr.bf16.mxu0 0
      %1245 = vmatmul.mubr.bf16.gmra.mrb[0].mxu0 %v1075
      %v1246 = vpop.f32.mrb[0].mxu0
      %v1247 = vadd.f32 0.0, %v1246
      %v1248 = vpop.f32.mrb[0].mxu0
      %v1249 = vpop.f32.mrb[0].mxu0
      %v1250 = vadd.f32 0.0, %v1249
      %v1251 = vpop.f32.mrb[0].mxu0
      %1252 = vdwg.mxu0
      %v1253 = vld [vmem:[%s313] sm:$0xf]
      %v1254 = vld [vmem:[%s313 + $0x4] sm:$0xf]
      %v1255 = vld [vmem:[%s313 + $0x8] sm:$0xf]
      %v1256 = vld [vmem:[%s313 + $0xc] sm:$0xf]
      %v1257 = vld [vmem:[%s313 + $0x10] sm:$0xf]
      %v1258 = vld [vmem:[%s313 + $0x14] sm:$0xf]
      %v1259 = vld [vmem:[%s313 + $0x18] sm:$0xf]
      %v1260 = vld [vmem:[%s313 + $0x1c] sm:$0xf]
      %v1261 = vld [vmem:[%s313 + $0x20] sm:$0xf]
      %v1262 = vld [vmem:[%s313 + $0x24] sm:$0xf]
      %v1263 = vld [vmem:[%s313 + $0x28] sm:$0xf]
      %v1264 = vld [vmem:[%s313 + $0x2c] sm:$0xf]
      %v1265 = vld [vmem:[%s313 + $0x30] sm:$0xf]
      %v1266 = vld [vmem:[%s313 + $0x34] sm:$0xf]
      %v1267 = vld [vmem:[%s313 + $0x38] sm:$0xf]
      %v1268 = vld [vmem:[%s313 + $0x3c] sm:$0xf]
      %v1269 = vld [vmem:[%s313 + $0x40] sm:$0xf]
      %v1270 = vld [vmem:[%s313 + $0x44] sm:$0xf]
      %v1271 = vld [vmem:[%s313 + $0x48] sm:$0xf]
      %v1272 = vld [vmem:[%s313 + $0x4c] sm:$0xf]
      %v1273 = vld [vmem:[%s313 + $0x50] sm:$0xf]
      %v1274 = vld [vmem:[%s313 + $0x54] sm:$0xf]
      %v1275 = vld [vmem:[%s313 + $0x58] sm:$0xf]
      %v1276 = vld [vmem:[%s313 + $0x5c] sm:$0xf]
      %v1277 = vld [vmem:[%s313 + $0x60] sm:$0xf]
      %v1278 = vld [vmem:[%s313 + $0x64] sm:$0xf]
      %v1279 = vld [vmem:[%s313 + $0x68] sm:$0xf]
      %v1280 = vld [vmem:[%s313 + $0x6c] sm:$0xf]
      %v1281 = vld [vmem:[%s313 + $0x70] sm:$0xf]
      %v1282 = vld [vmem:[%s313 + $0x74] sm:$0xf]
      %v1283 = vld [vmem:[%s313 + $0x78] sm:$0xf]
      %v1284 = vld [vmem:[%s313 + $0x7c] sm:$0xf]
      %v1317 = vunpack.c.l.b16 %v1253
      %v1318 = vunpack.c.l.b16 %v1254
      %v1319 = vunpack.c.l.b16 %v1255
      %v1320 = vunpack.c.l.b16 %v1256
      %v1321 = vunpack.c.l.b16 %v1257
      %v1322 = vunpack.c.l.b16 %v1258
      %v1323 = vunpack.c.l.b16 %v1259
      %v1324 = vunpack.c.l.b16 %v1260
      %v1325 = vunpack.c.l.b16 %v1261
      %v1326 = vunpack.c.l.b16 %v1262
      %v1327 = vunpack.c.l.b16 %v1263
      %v1328 = vunpack.c.l.b16 %v1264
      %v1329 = vunpack.c.l.b16 %v1265
      %v1330 = vunpack.c.l.b16 %v1266
      %v1331 = vunpack.c.l.b16 %v1267
      %v1332 = vunpack.c.l.b16 %v1268
      %v1333 = vunpack.c.l.b16 %v1269
      %v1334 = vunpack.c.l.b16 %v1270
      %v1335 = vunpack.c.l.b16 %v1271
      %v1336 = vunpack.c.l.b16 %v1272
      %v1337 = vunpack.c.l.b16 %v1273
      %v1338 = vunpack.c.l.b16 %v1274
      %v1339 = vunpack.c.l.b16 %v1275
      %v1340 = vunpack.c.l.b16 %v1276
      %v1341 = vunpack.c.l.b16 %v1277
      %v1342 = vunpack.c.l.b16 %v1278
      %v1343 = vunpack.c.l.b16 %v1279
      %v1344 = vunpack.c.l.b16 %v1280
      %v1345 = vunpack.c.l.b16 %v1281
      %v1346 = vunpack.c.l.b16 %v1282
      %v1347 = vunpack.c.l.b16 %v1283
      %v1348 = vunpack.c.l.b16 %v1284
      %v1349 = vpack.c.b16 %v1318, %v1317
      %v1350 = vpack.c.b16 %v1320, %v1319
      %v1351 = vpack.c.b16 %v1322, %v1321
      %v1352 = vpack.c.b16 %v1324, %v1323
      %v1353 = vpack.c.b16 %v1326, %v1325
      %v1354 = vpack.c.b16 %v1328, %v1327
      %v1355 = vpack.c.b16 %v1330, %v1329
      %v1356 = vpack.c.b16 %v1332, %v1331
      %v1357 = vpack.c.b16 %v1334, %v1333
      %v1358 = vpack.c.b16 %v1336, %v1335
      %v1359 = vpack.c.b16 %v1338, %v1337
      %v1360 = vpack.c.b16 %v1340, %v1339
      %v1361 = vpack.c.b16 %v1342, %v1341
      %v1362 = vpack.c.b16 %v1344, %v1343
      %v1363 = vpack.c.b16 %v1346, %v1345
      %v1364 = vpack.c.b16 %v1348, %v1347
      %1381 = vmatprep.subr.bf16.mxu0 0
      %1382 = vmatpush1.bf16.msra.mxu0 %v498
      %1383 = vmatprep.subr.bf16.mxu0 0
      %1384 = vmatpush1.bf16.msra.mxu0 %v499
      %1385 = vmatprep.subr.bf16.mxu0 0
      %1386 = vmatpush1.bf16.msra.mxu0 %v500
      %1387 = vmatprep.subr.bf16.mxu0 0
      %1388 = vmatpush1.bf16.msra.mxu0 %v501
      %1389 = vmatprep.subr.bf16.mxu0 0
      %1390 = vmatpush1.bf16.msra.mxu0 %v502
      %1391 = vmatprep.subr.bf16.mxu0 0
      %1392 = vmatpush1.bf16.msra.mxu0 %v503
      %1393 = vmatprep.subr.bf16.mxu0 0
      %1394 = vmatpush1.bf16.msra.mxu0 %v504
      %1395 = vmatprep.subr.bf16.mxu0 0
      %1396 = vmatpush1.bf16.msra.mxu0 %v505
      %1397 = vmatprep.subr.bf16.mxu0 0
      %1398 = vmatpush1.bf16.msra.mxu0 0
      %1399 = vmatprep.subr.bf16.mxu0 0
      %1400 = vmatpush1.bf16.msra.mxu0 0
      %1401 = vmatprep.subr.bf16.mxu0 0
      %1402 = vmatpush1.bf16.msra.mxu0 0
      %1403 = vmatprep.subr.bf16.mxu0 0
      %1404 = vmatpush1.bf16.msra.mxu0 0
      %1405 = vmatprep.subr.bf16.mxu0 0
      %1406 = vmatpush1.bf16.msra.mxu0 0
      %1407 = vmatprep.subr.bf16.mxu0 0
      %1408 = vmatpush1.bf16.msra.mxu0 0
      %1409 = vmatprep.subr.bf16.mxu0 0
      %1410 = vmatpush1.bf16.msra.mxu0 0
      %1411 = vmatprep.subr.bf16.mxu0 0
      %1412 = vmatpush1.bf16.msra.mxu0 0
      %1413 = vmatprep.mubr.bf16.mxu0 0
      %1414 = vmatmul.mubr.bf16.gmra.mrb[0].mxu0 %v1349
      %v1415 = vpop.f32.mrb[0].mxu0
      %v1416 = vadd.f32 0.0, %v1415
      %v1417 = vpop.f32.mrb[0].mxu0
      %v1418 = vpop.f32.mrb[0].mxu0
      %v1419 = vadd.f32 0.0, %v1418
      %v1420 = vpop.f32.mrb[0].mxu0
      %1421 = vmatprep.mubr.bf16.mxu0 0
      %1422 = vmatmul.mubr.bf16.gmra.mrb[0].mxu0 %v1350
      %v1423 = vpop.f32.mrb[0].mxu0
      %v1424 = vadd.f32 0.0, %v1423
      %v1425 = vpop.f32.mrb[0].mxu0
      %v1426 = vpop.f32.mrb[0].mxu0
      %v1427 = vadd.f32 0.0, %v1426
      %v1428 = vpop.f32.mrb[0].mxu0
      %1429 = vmatprep.mubr.bf16.mxu0 0
      %1430 = vmatmul.mubr.bf16.gmra.mrb[0].mxu0 %v1351
      %v1431 = vpop.f32.mrb[0].mxu0
      %v1432 = vadd.f32 0.0, %v1431
      %v1433 = vpop.f32.mrb[0].mxu0
      %v1434 = vpop.f32.mrb[0].mxu0
      %v1435 = vadd.f32 0.0, %v1434
      %v1436 = vpop.f32.mrb[0].mxu0
      %1437 = vmatprep.mubr.bf16.mxu0 0
      %1438 = vmatmul.mubr.bf16.gmra.mrb[0].mxu0 %v1352
      %v1439 = vpop.f32.mrb[0].mxu0
      %v1440 = vadd.f32 0.0, %v1439
      %v1441 = vpop.f32.mrb[0].mxu0
      %v1442 = vpop.f32.mrb[0].mxu0
      %v1443 = vadd.f32 0.0, %v1442
      %v1444 = vpop.f32.mrb[0].mxu0
      %1445 = vmatprep.mubr.bf16.mxu0 0
      %1446 = vmatmul.mubr.bf16.gmra.mrb[0].mxu0 %v1353
      %v1447 = vpop.f32.mrb[0].mxu0
      %v1448 = vadd.f32 0.0, %v1447
      %v1449 = vpop.f32.mrb[0].mxu0
      %v1450 = vpop.f32.mrb[0].mxu0
      %v1451 = vadd.f32 0.0, %v1450
      %v1452 = vpop.f32.mrb[0].mxu0
      %1453 = vmatprep.mubr.bf16.mxu0 0
      %1454 = vmatmul.mubr.bf16.gmra.mrb[0].mxu0 %v1354
      %v1455 = vpop.f32.mrb[0].mxu0
      %v1456 = vadd.f32 0.0, %v1455
      %v1457 = vpop.f32.mrb[0].mxu0
      %v1458 = vpop.f32.mrb[0].mxu0
      %v1459 = vadd.f32 0.0, %v1458
      %v1460 = vpop.f32.mrb[0].mxu0
      %1461 = vmatprep.mubr.bf16.mxu0 0
      %1462 = vmatmul.mubr.bf16.gmra.mrb[0].mxu0 %v1355
      %v1463 = vpop.f32.mrb[0].mxu0
      %v1464 = vadd.f32 0.0, %v1463
      %v1465 = vpop.f32.mrb[0].mxu0
      %v1466 = vpop.f32.mrb[0].mxu0
      %v1467 = vadd.f32 0.0, %v1466
      %v1468 = vpop.f32.mrb[0].mxu0
      %1469 = vmatprep.mubr.bf16.mxu0 0
      %1470 = vmatmul.mubr.bf16.gmra.mrb[0].mxu0 %v1356
      %v1471 = vpop.f32.mrb[0].mxu0
      %v1472 = vadd.f32 0.0, %v1471
      %v1473 = vpop.f32.mrb[0].mxu0
      %v1474 = vpop.f32.mrb[0].mxu0
      %v1475 = vadd.f32 0.0, %v1474
      %v1476 = vpop.f32.mrb[0].mxu0
      %1477 = vmatprep.mubr.bf16.mxu0 0
      %1478 = vmatmul.mubr.bf16.gmra.mrb[0].mxu0 %v1357
      %v1479 = vpop.f32.mrb[0].mxu0
      %v1480 = vadd.f32 0.0, %v1479
      %v1481 = vpop.f32.mrb[0].mxu0
      %v1482 = vpop.f32.mrb[0].mxu0
      %v1483 = vadd.f32 0.0, %v1482
      %v1484 = vpop.f32.mrb[0].mxu0
      %1485 = vmatprep.mubr.bf16.mxu0 0
      %1486 = vmatmul.mubr.bf16.gmra.mrb[0].mxu0 %v1358
      %v1487 = vpop.f32.mrb[0].mxu0
      %v1488 = vadd.f32 0.0, %v1487
      %v1489 = vpop.f32.mrb[0].mxu0
      %v1490 = vpop.f32.mrb[0].mxu0
      %v1491 = vadd.f32 0.0, %v1490
      %v1492 = vpop.f32.mrb[0].mxu0
      %1493 = vmatprep.mubr.bf16.mxu0 0
      %1494 = vmatmul.mubr.bf16.gmra.mrb[0].mxu0 %v1359
      %v1495 = vpop.f32.mrb[0].mxu0
      %v1496 = vadd.f32 0.0, %v1495
      %v1497 = vpop.f32.mrb[0].mxu0
      %v1498 = vpop.f32.mrb[0].mxu0
      %v1499 = vadd.f32 0.0, %v1498
      %v1500 = vpop.f32.mrb[0].mxu0
      %1501 = vmatprep.mubr.bf16.mxu0 0
      %1502 = vmatmul.mubr.bf16.gmra.mrb[0].mxu0 %v1360
      %v1503 = vpop.f32.mrb[0].mxu0
      %v1504 = vadd.f32 0.0, %v1503
      %v1505 = vpop.f32.mrb[0].mxu0
      %v1506 = vpop.f32.mrb[0].mxu0
      %v1507 = vadd.f32 0.0, %v1506
      %v1508 = vpop.f32.mrb[0].mxu0
      %1509 = vmatprep.mubr.bf16.mxu0 0
      %1510 = vmatmul.mubr.bf16.gmra.mrb[0].mxu0 %v1361
      %v1511 = vpop.f32.mrb[0].mxu0
      %v1512 = vadd.f32 0.0, %v1511
      %v1513 = vpop.f32.mrb[0].mxu0
      %v1514 = vpop.f32.mrb[0].mxu0
      %v1515 = vadd.f32 0.0, %v1514
      %v1516 = vpop.f32.mrb[0].mxu0
      %1517 = vmatprep.mubr.bf16.mxu0 0
      %1518 = vmatmul.mubr.bf16.gmra.mrb[0].mxu0 %v1362
      %v1519 = vpop.f32.mrb[0].mxu0
      %v1520 = vadd.f32 0.0, %v1519
      %v1521 = vpop.f32.mrb[0].mxu0
      %v1522 = vpop.f32.mrb[0].mxu0
      %v1523 = vadd.f32 0.0, %v1522
      %v1524 = vpop.f32.mrb[0].mxu0
      %1525 = vmatprep.mubr.bf16.mxu0 0
      %1526 = vmatmul.mubr.bf16.gmra.mrb[0].mxu0 %v1363
      %v1527 = vpop.f32.mrb[0].mxu0
      %v1528 = vadd.f32 0.0, %v1527
      %v1529 = vpop.f32.mrb[0].mxu0
      %v1530 = vpop.f32.mrb[0].mxu0
      %v1531 = vadd.f32 0.0, %v1530
      %v1532 = vpop.f32.mrb[0].mxu0
      %1533 = vmatprep.mubr.bf16.mxu0 0
      %1534 = vmatmul.mubr.bf16.gmra.mrb[0].mxu0 %v1364
      %v1535 = vpop.f32.mrb[0].mxu0
      %v1536 = vadd.f32 0.0, %v1535
      %v1537 = vpop.f32.mrb[0].mxu0
      %v1538 = vpop.f32.mrb[0].mxu0
      %v1539 = vadd.f32 0.0, %v1538
      %v1540 = vpop.f32.mrb[0].mxu0
      %1541 = vdwg.mxu0
      %v1542 = vmax.f32 %v549, %v838
      %v1543 = vmax.f32 %v552, %v841
      %v1544 = vmax.f32 %v557, %v846
      %v1545 = vmax.f32 %v560, %v849
      %v1546 = vmax.f32 %v565, %v854
      %v1547 = vmax.f32 %v568, %v857
      %v1548 = vmax.f32 %v573, %v862
      %v1549 = vmax.f32 %v576, %v865
      %v1550 = vmax.f32 %v581, %v870
      %v1551 = vmax.f32 %v584, %v873
      %v1552 = vmax.f32 %v589, %v878
      %v1553 = vmax.f32 %v592, %v881
      %v1554 = vmax.f32 %v597, %v886
      %v1555 = vmax.f32 %v600, %v889
      %v1556 = vmax.f32 %v605, %v894
      %v1557 = vmax.f32 %v608, %v897
      %v1558 = vmax.f32 %v613, %v902
      %v1559 = vmax.f32 %v616, %v905
      %v1560 = vmax.f32 %v621, %v910
      %v1561 = vmax.f32 %v624, %v913
      %v1562 = vmax.f32 %v629, %v918
      %v1563 = vmax.f32 %v632, %v921
      %v1564 = vmax.f32 %v637, %v926
      %v1565 = vmax.f32 %v640, %v929
      %v1566 = vmax.f32 %v645, %v934
      %v1567 = vmax.f32 %v648, %v937
      %v1568 = vmax.f32 %v653, %v942
      %v1569 = vmax.f32 %v656, %v945
      %v1570 = vmax.f32 %v661, %v950
      %v1571 = vmax.f32 %v664, %v953
      %v1572 = vmax.f32 %v669, %v958
      %v1573 = vmax.f32 %v672, %v961
      %v1574 = vmax.f32 %v1127, %v1416
      %v1575 = vmax.f32 %v1130, %v1419
      %v1576 = vmax.f32 %v1135, %v1424
      %v1577 = vmax.f32 %v1138, %v1427
      %v1578 = vmax.f32 %v1143, %v1432
      %v1579 = vmax.f32 %v1146, %v1435
      %v1580 = vmax.f32 %v1151, %v1440
      %v1581 = vmax.f32 %v1154, %v1443
      %v1582 = vmax.f32 %v1159, %v1448
      %v1583 = vmax.f32 %v1162, %v1451
      %v1584 = vmax.f32 %v1167, %v1456
      %v1585 = vmax.f32 %v1170, %v1459
      %v1586 = vmax.f32 %v1175, %v1464
      %v1587 = vmax.f32 %v1178, %v1467
      %v1588 = vmax.f32 %v1183, %v1472
      %v1589 = vmax.f32 %v1186, %v1475
      %v1590 = vmax.f32 %v1191, %v1480
      %v1591 = vmax.f32 %v1194, %v1483
      %v1592 = vmax.f32 %v1199, %v1488
      %v1593 = vmax.f32 %v1202, %v1491
      %v1594 = vmax.f32 %v1207, %v1496
      %v1595 = vmax.f32 %v1210, %v1499
      %v1596 = vmax.f32 %v1215, %v1504
      %v1597 = vmax.f32 %v1218, %v1507
      %v1598 = vmax.f32 %v1223, %v1512
      %v1599 = vmax.f32 %v1226, %v1515
      %v1600 = vmax.f32 %v1231, %v1520
      %v1601 = vmax.f32 %v1234, %v1523
      %v1602 = vmax.f32 %v1239, %v1528
      %v1603 = vmax.f32 %v1242, %v1531
      %v1604 = vmax.f32 %v1247, %v1536
      %v1605 = vmax.f32 %v1250, %v1539
      %v1606 = vmax.f32 %v1542, %v1574
      %v1607 = vmax.f32 %v1543, %v1575
      %v1608 = vmax.f32 %v1544, %v1576
      %v1609 = vmax.f32 %v1545, %v1577
      %v1610 = vmax.f32 %v1546, %v1578
      %v1611 = vmax.f32 %v1547, %v1579
      %v1612 = vmax.f32 %v1548, %v1580
      %v1613 = vmax.f32 %v1549, %v1581
      %v1614 = vmax.f32 %v1550, %v1582
      %v1615 = vmax.f32 %v1551, %v1583
      %v1616 = vmax.f32 %v1552, %v1584
      %v1617 = vmax.f32 %v1553, %v1585
      %v1618 = vmax.f32 %v1554, %v1586
      %v1619 = vmax.f32 %v1555, %v1587
      %v1620 = vmax.f32 %v1556, %v1588
      %v1621 = vmax.f32 %v1557, %v1589
      %v1622 = vmax.f32 %v1558, %v1590
      %v1623 = vmax.f32 %v1559, %v1591
      %v1624 = vmax.f32 %v1560, %v1592
      %v1625 = vmax.f32 %v1561, %v1593
      %v1626 = vmax.f32 %v1562, %v1594
      %v1627 = vmax.f32 %v1563, %v1595
      %v1628 = vmax.f32 %v1564, %v1596
      %v1629 = vmax.f32 %v1565, %v1597
      %v1630 = vmax.f32 %v1566, %v1598
      %v1631 = vmax.f32 %v1567, %v1599
      %v1632 = vmax.f32 %v1568, %v1600
      %v1633 = vmax.f32 %v1569, %v1601
      %v1634 = vmax.f32 %v1570, %v1602
      %v1635 = vmax.f32 %v1571, %v1603
      %v1636 = vmax.f32 %v1572, %v1604
      %v1637 = vmax.f32 %v1573, %v1605
      %v1638 = vld [vmem:[%s5] sm:$0x1]
      %v1640 = vlaneseq
      %v1641 = vshrl.u32 %v1640, 7
      %v1642 = vsub.s32 0, %v1641
      %v1643 = vrot.slane %v1638, %v1642
      %v1645 = vadd.f32 %v1606, %v1643
      %v1646 = vadd.f32 %v1607, %v1643
      %v1647 = vadd.f32 %v1608, %v1643
      %v1648 = vadd.f32 %v1609, %v1643
      %v1649 = vadd.f32 %v1610, %v1643
      %v1650 = vadd.f32 %v1611, %v1643
      %v1651 = vadd.f32 %v1612, %v1643
      %v1652 = vadd.f32 %v1613, %v1643
      %v1653 = vadd.f32 %v1614, %v1643
      %v1654 = vadd.f32 %v1615, %v1643
      %v1655 = vadd.f32 %v1616, %v1643
      %v1656 = vadd.f32 %v1617, %v1643
      %v1657 = vadd.f32 %v1618, %v1643
      %v1658 = vadd.f32 %v1619, %v1643
      %v1659 = vadd.f32 %v1620, %v1643
      %v1660 = vadd.f32 %v1621, %v1643
      %v1661 = vadd.f32 %v1622, %v1643
      %v1662 = vadd.f32 %v1623, %v1643
      %v1663 = vadd.f32 %v1624, %v1643
      %v1664 = vadd.f32 %v1625, %v1643
      %v1665 = vadd.f32 %v1626, %v1643
      %v1666 = vadd.f32 %v1627, %v1643
      %v1667 = vadd.f32 %v1628, %v1643
      %v1668 = vadd.f32 %v1629, %v1643
      %v1669 = vadd.f32 %v1630, %v1643
      %v1670 = vadd.f32 %v1631, %v1643
      %v1671 = vadd.f32 %v1632, %v1643
      %v1672 = vadd.f32 %v1633, %v1643
      %v1673 = vadd.f32 %v1634, %v1643
      %v1674 = vadd.f32 %v1635, %v1643
      %v1675 = vadd.f32 %v1636, %v1643
      %v1676 = vadd.f32 %v1637, %v1643
      %v1677 = vpack.c.bf16 %v1646, %v1645
      %v1678 = vpack.c.bf16 %v1648, %v1647
      %v1679 = vpack.c.bf16 %v1650, %v1649
      %v1680 = vpack.c.bf16 %v1652, %v1651
      %v1681 = vpack.c.bf16 %v1654, %v1653
      %v1682 = vpack.c.bf16 %v1656, %v1655
      %v1683 = vpack.c.bf16 %v1658, %v1657
      %v1684 = vpack.c.bf16 %v1660, %v1659
      %v1685 = vpack.c.bf16 %v1662, %v1661
      %v1686 = vpack.c.bf16 %v1664, %v1663
      %v1687 = vpack.c.bf16 %v1666, %v1665
      %v1688 = vpack.c.bf16 %v1668, %v1667
      %v1689 = vpack.c.bf16 %v1670, %v1669
      %v1690 = vpack.c.bf16 %v1672, %v1671
      %v1691 = vpack.c.bf16 %v1674, %v1673
      %v1692 = vpack.c.bf16 %v1676, %v1675
      %v1709 = vunpack.c.l.b16 %v1677
      %v1710 = vunpack.c.h.b16 %v1677
      %v1711 = vunpack.c.l.b16 %v1678
      %v1712 = vunpack.c.h.b16 %v1678
      %v1713 = vunpack.c.l.b16 %v1679
      %v1714 = vunpack.c.h.b16 %v1679
      %v1715 = vunpack.c.l.b16 %v1680
      %v1716 = vunpack.c.h.b16 %v1680
      %v1717 = vunpack.c.l.b16 %v1681
      %v1718 = vunpack.c.h.b16 %v1681
      %v1719 = vunpack.c.l.b16 %v1682
      %v1720 = vunpack.c.h.b16 %v1682
      %v1721 = vunpack.c.l.b16 %v1683
      %v1722 = vunpack.c.h.b16 %v1683
      %v1723 = vunpack.c.l.b16 %v1684
      %v1724 = vunpack.c.h.b16 %v1684
      %v1725 = vunpack.c.l.b16 %v1685
      %v1726 = vunpack.c.h.b16 %v1685
      %v1727 = vunpack.c.l.b16 %v1686
      %v1728 = vunpack.c.h.b16 %v1686
      %v1729 = vunpack.c.l.b16 %v1687
      %v1730 = vunpack.c.h.b16 %v1687
      %v1731 = vunpack.c.l.b16 %v1688
      %v1732 = vunpack.c.h.b16 %v1688
      %v1733 = vunpack.c.l.b16 %v1689
      %v1734 = vunpack.c.h.b16 %v1689
      %v1735 = vunpack.c.l.b16 %v1690
      %v1736 = vunpack.c.h.b16 %v1690
      %v1737 = vunpack.c.l.b16 %v1691
      %v1738 = vunpack.c.h.b16 %v1691
      %v1739 = vunpack.c.l.b16 %v1692
      %v1740 = vunpack.c.h.b16 %v1692
      %v1741 = vpack.c.b16 %v1709, %v1709
      %v1742 = vpack.c.b16 %v1710, %v1710
      %v1743 = vpack.c.b16 %v1711, %v1711
      %v1744 = vpack.c.b16 %v1712, %v1712
      %v1745 = vpack.c.b16 %v1713, %v1713
      %v1746 = vpack.c.b16 %v1714, %v1714
      %v1747 = vpack.c.b16 %v1715, %v1715
      %v1748 = vpack.c.b16 %v1716, %v1716
      %v1749 = vpack.c.b16 %v1717, %v1717
      %v1750 = vpack.c.b16 %v1718, %v1718
      %v1751 = vpack.c.b16 %v1719, %v1719
      %v1752 = vpack.c.b16 %v1720, %v1720
      %v1753 = vpack.c.b16 %v1721, %v1721
      %v1754 = vpack.c.b16 %v1722, %v1722
      %v1755 = vpack.c.b16 %v1723, %v1723
      %v1756 = vpack.c.b16 %v1724, %v1724
      %v1757 = vpack.c.b16 %v1725, %v1725
      %v1758 = vpack.c.b16 %v1726, %v1726
      %v1759 = vpack.c.b16 %v1727, %v1727
      %v1760 = vpack.c.b16 %v1728, %v1728
      %v1761 = vpack.c.b16 %v1729, %v1729
      %v1762 = vpack.c.b16 %v1730, %v1730
      %v1763 = vpack.c.b16 %v1731, %v1731
      %v1764 = vpack.c.b16 %v1732, %v1732
      %v1765 = vpack.c.b16 %v1733, %v1733
      %v1766 = vpack.c.b16 %v1734, %v1734
      %v1767 = vpack.c.b16 %v1735, %v1735
      %v1768 = vpack.c.b16 %v1736, %v1736
      %v1769 = vpack.c.b16 %v1737, %v1737
      %v1770 = vpack.c.b16 %v1738, %v1738
      %v1771 = vpack.c.b16 %v1739, %v1739
      %v1772 = vpack.c.b16 %v1740, %v1740
      %1805 = vst [vmem:[%s319] sm:$0xf] %v1741
      %1806 = vst [vmem:[%s319 + $0x4] sm:$0xf] %v1742
      %1807 = vst [vmem:[%s319 + $0x8] sm:$0xf] %v1743
      %1808 = vst [vmem:[%s319 + $0xc] sm:$0xf] %v1744
      %1809 = vst [vmem:[%s319 + $0x10] sm:$0xf] %v1745
      %1810 = vst [vmem:[%s319 + $0x14] sm:$0xf] %v1746
      %1811 = vst [vmem:[%s319 + $0x18] sm:$0xf] %v1747
      %1812 = vst [vmem:[%s319 + $0x1c] sm:$0xf] %v1748
      %1813 = vst [vmem:[%s319 + $0x20] sm:$0xf] %v1749
      %1814 = vst [vmem:[%s319 + $0x24] sm:$0xf] %v1750
      %1815 = vst [vmem:[%s319 + $0x28] sm:$0xf] %v1751
      %1816 = vst [vmem:[%s319 + $0x2c] sm:$0xf] %v1752
      %1817 = vst [vmem:[%s319 + $0x30] sm:$0xf] %v1753
      %1818 = vst [vmem:[%s319 + $0x34] sm:$0xf] %v1754
      %1819 = vst [vmem:[%s319 + $0x38] sm:$0xf] %v1755
      %1820 = vst [vmem:[%s319 + $0x3c] sm:$0xf] %v1756
      %1821 = vst [vmem:[%s319 + $0x40] sm:$0xf] %v1757
      %1822 = vst [vmem:[%s319 + $0x44] sm:$0xf] %v1758
      %1823 = vst [vmem:[%s319 + $0x48] sm:$0xf] %v1759
      %1824 = vst [vmem:[%s319 + $0x4c] sm:$0xf] %v1760
      %1825 = vst [vmem:[%s319 + $0x50] sm:$0xf] %v1761
      %1826 = vst [vmem:[%s319 + $0x54] sm:$0xf] %v1762
      %1827 = vst [vmem:[%s319 + $0x58] sm:$0xf] %v1763
      %1828 = vst [vmem:[%s319 + $0x5c] sm:$0xf] %v1764
      %1829 = vst [vmem:[%s319 + $0x60] sm:$0xf] %v1765
      %1830 = vst [vmem:[%s319 + $0x64] sm:$0xf] %v1766
      %1831 = vst [vmem:[%s319 + $0x68] sm:$0xf] %v1767
      %1832 = vst [vmem:[%s319 + $0x6c] sm:$0xf] %v1768
      %1833 = vst [vmem:[%s319 + $0x70] sm:$0xf] %v1769
      %1834 = vst [vmem:[%s319 + $0x74] sm:$0xf] %v1770
      %1835 = vst [vmem:[%s319 + $0x78] sm:$0xf] %v1771
      %1836 = vst [vmem:[%s319 + $0x7c] sm:$0xf] %v1772
      %s1837 = smul.u32 32, %s17
      %p1838 = scmp.lt.s32.totalorder %s1837, 63
      %s1839 = scalar_select %p1838, %s1837, 63
      %s1840 = smul.addr %s1839, 4
      %s1841 = scalar_lea.vmem %s6, %s1840
      // Predicated region
      $region45: #{nn5_forward.4} parent=43 // pred_check
        %p1842 = pneg %p181
      $region46: #{nn5_forward.4} parent=43 // pred_check_branch
        %1844 = sbr.rel (%p1842) target = $region48
      $region47: #{nn5_forward.4} parent=43 // pred_region
        %s1845 = smul.u32 32, %s17
      $region48: #{nn5_forward.4} parent=43 // pred_fallthru
        _
    $region44: #{nn5_forward.4} parent=5 // pred_fallthru
      _
    %p1846 = scmp.le.s32.totalorder 2, %s12
    // Predicated region
    $region49: #{nn5_forward.4} parent=5 // pred_check
      %p1847 = pneg %p1846
    $region50: #{nn5_forward.4} parent=5 // pred_check_branch
      %1849 = sbr.rel (%p1847) target = $region52
    $region51: #{nn5_forward.4} parent=5 // pred_region
      %s1850 = ssub.s32 %s12, 2
      // Predicated region
      $region53: #{nn5_forward.4} parent=51 // pred_check
        %p1851 = pneg %p187
      $region54: #{nn5_forward.4} parent=51 // pred_check_branch
        %1853 = sbr.rel (%p1851) target = $region56
      $region55: #{nn5_forward.4} parent=51 // pred_region
        %s1854 = smul.u32 32, %s18
        %p1855 = scmp.lt.s32.totalorder %s1854, 63
        %s1856 = scalar_select %p1855, %s1854, 63
        %s1857 = smul.addr %s1856, 4
        %s1858 = scalar_lea.vmem %s6, %s1857
      $region56: #{nn5_forward.4} parent=51 // pred_fallthru
        _
    $region52: #{nn5_forward.4} parent=5 // pred_fallthru
      _
  $region6: #{nn5_forward.4} parent=0 // loop_footer
    %s16 = sadd.s32 1, %s12
  $region7: #{nn5_forward.4} parent=0 // loop_footer_branch
    %11 = sbr.rel target = $region3
  $region8: #{nn5_forward.4} parent=0 // loop_exit
    _

// kernel: nn5_forward.5
$region0: #{nn5_forward.5}
  #allocation0 [shape = 'u32[]', space=smem, size = 0x4, offset = 0x4, fixed_abs, tag = 'smem constant byte address 0x4 - core index']
  #allocation1 [shape = 'u32[144,128]{1,0:T(1,128)}', space=vmem, size = 0x12000, scoped, tag = 'internal scratch']
  %s0 = inlined_call_operand.vmem [shape: bf16[128,800], index: 0, kind: input, shape index: {}]
  %s1 = inlined_call_operand.vmem [shape: bf16[128,800], index: 1, kind: input, shape index: {}]
  %s2 = inlined_call_operand.vmem [shape: bf16[128,800], index: 2, kind: input, shape index: {}]
  %s3 = inlined_call_operand.vmem [shape: bf16[128,800], index: 3, kind: input, shape index: {}]
  %s4 = inlined_call_operand.vmem [shape: bf16[800,128], index: 4, kind: input, shape index: {}]
  %s5 = inlined_call_operand.vmem [shape: f32[1,128], index: 5, kind: input, shape index: {}]
  %s6 = inlined_call_operand.vmem [shape: bf16[128,128], index: 6, kind: output, shape index: {}]
  %s7 = sld [smem:[#allocation0]]
  $region57: #{nn5_forward.5} parent=0
    _
  %s9 = ssub.s32 1, %s7
  %s10 = scalar_select 0, %s9, %s7
  loop: start=0, step=1, limit=4
  $region2: #{nn5_forward.5} parent=0 // loop_pre_header
    _
  $region3: #{nn5_forward.5} parent=0 // loop_header
    %s12 = sphi 0, %s16
    %p13 = scmp.ge.s32.totalorder %s12, 4
    %s22 = sphi 0, %s24
    %s25 = sphi 0, %s22
    %s26 = sphi 0, %s25
    %s42 = sphi 0, %s26
    %s48 = sphi 0, %s50
    %s51 = sphi 0, %s48
    %s52 = sphi 0, %s51
    %s68 = sphi 0, %s52
    %s74 = sphi 0, %s76
    %s77 = sphi 0, %s74
    %s78 = sphi 0, %s77
    %s94 = sphi 0, %s78
    %s100 = sphi 0, %s102
    %s103 = sphi 0, %s100
    %s104 = sphi 0, %s103
    %s120 = sphi 0, %s104
    %s124 = sphi 0, %s124
    %s126 = sphi 0, %s124
    %s127 = sphi 0, %s126
    %s141 = sphi 0, %s127
    %s145 = sphi 0, %s145
    %s147 = sphi 0, %s145
    %s148 = sphi 0, %s147
    %s162 = sphi 0, %s148
    %s168 = sphi 0, %s170
    %s171 = sphi 0, %s168
    %s172 = sphi 0, %s171
    %s188 = sphi 0, %s172
  $region4: #{nn5_forward.5} parent=0 // loop_header_branch
    %15 = sbr.rel (%p13) target = $region8
  $region5: #{nn5_forward.5} parent=0 // loop_body
    %s17 = ssub.s32 %s12, 1
    %s18 = ssub.s32 %s12, 2
    %s19 = sadd.s32 %s12, 1
    %s20 = ssub.s32 %s12, %s19
    %p21 = scmp.eq.s32.totalorder %s20, 0
    %s23 = sadd.s32 %s22, 1
    %s24 = scalar_select %p21, %s22, %s23
    %p27 = pneg %p21
    %p28 = scmp.eq.s32.totalorder %s12, 1
    %p29 = por %p27, %p28
    %p30 = scmp.ne.s32.totalorder %s22, %s25
    %p31 = scmp.eq.s32.totalorder %s12, 0
    %p32 = por %p30, %p31
    %p33 = scmp.ne.s32.totalorder %s22, %s25
    %p34 = scmp.eq.s32.totalorder %s17, 1
    %p35 = por %p33, %p34
    %p36 = scmp.ne.s32.totalorder %s25, %s26
    %p37 = scmp.eq.s32.totalorder %s17, 0
    %p38 = por %p36, %p37
    %p39 = scmp.ne.s32.totalorder %s25, %s26
    %p40 = scmp.eq.s32.totalorder %s18, 1
    %p41 = por %p39, %p40
    %p43 = scmp.ne.s32.totalorder %s26, %s42
    %p44 = scmp.eq.s32.totalorder %s18, 0
    %p45 = por %p43, %p44
    %s46 = ssub.s32 %s12, %s19
    %p47 = scmp.eq.s32.totalorder %s46, 0
    %s49 = sadd.s32 %s48, 1
    %s50 = scalar_select %p47, %s48, %s49
    %p53 = pneg %p47
    %p54 = scmp.eq.s32.totalorder %s12, 1
    %p55 = por %p53, %p54
    %p56 = scmp.ne.s32.totalorder %s48, %s51
    %p57 = scmp.eq.s32.totalorder %s12, 0
    %p58 = por %p56, %p57
    %p59 = scmp.ne.s32.totalorder %s48, %s51
    %p60 = scmp.eq.s32.totalorder %s17, 1
    %p61 = por %p59, %p60
    %p62 = scmp.ne.s32.totalorder %s51, %s52
    %p63 = scmp.eq.s32.totalorder %s17, 0
    %p64 = por %p62, %p63
    %p65 = scmp.ne.s32.totalorder %s51, %s52
    %p66 = scmp.eq.s32.totalorder %s18, 1
    %p67 = por %p65, %p66
    %p69 = scmp.ne.s32.totalorder %s52, %s68
    %p70 = scmp.eq.s32.totalorder %s18, 0
    %p71 = por %p69, %p70
    %s72 = ssub.s32 %s12, %s19
    %p73 = scmp.eq.s32.totalorder %s72, 0
    %s75 = sadd.s32 %s74, 1
    %s76 = scalar_select %p73, %s74, %s75
    %p79 = pneg %p73
    %p80 = scmp.eq.s32.totalorder %s12, 1
    %p81 = por %p79, %p80
    %p82 = scmp.ne.s32.totalorder %s74, %s77
    %p83 = scmp.eq.s32.totalorder %s12, 0
    %p84 = por %p82, %p83
    %p85 = scmp.ne.s32.totalorder %s74, %s77
    %p86 = scmp.eq.s32.totalorder %s17, 1
    %p87 = por %p85, %p86
    %p88 = scmp.ne.s32.totalorder %s77, %s78
    %p89 = scmp.eq.s32.totalorder %s17, 0
    %p90 = por %p88, %p89
    %p91 = scmp.ne.s32.totalorder %s77, %s78
    %p92 = scmp.eq.s32.totalorder %s18, 1
    %p93 = por %p91, %p92
    %p95 = scmp.ne.s32.totalorder %s78, %s94
    %p96 = scmp.eq.s32.totalorder %s18, 0
    %p97 = por %p95, %p96
    %s98 = ssub.s32 %s12, %s19
    %p99 = scmp.eq.s32.totalorder %s98, 0
    %s101 = sadd.s32 %s100, 1
    %s102 = scalar_select %p99, %s100, %s101
    %p105 = pneg %p99
    %p106 = scmp.eq.s32.totalorder %s12, 1
    %p107 = por %p105, %p106
    %p108 = scmp.ne.s32.totalorder %s100, %s103
    %p109 = scmp.eq.s32.totalorder %s12, 0
    %p110 = por %p108, %p109
    %p111 = scmp.ne.s32.totalorder %s100, %s103
    %p112 = scmp.eq.s32.totalorder %s17, 1
    %p113 = por %p111, %p112
    %p114 = scmp.ne.s32.totalorder %s103, %s104
    %p115 = scmp.eq.s32.totalorder %s17, 0
    %p116 = por %p114, %p115
    %p117 = scmp.ne.s32.totalorder %s103, %s104
    %p118 = scmp.eq.s32.totalorder %s18, 1
    %p119 = por %p117, %p118
    %p121 = scmp.ne.s32.totalorder %s104, %s120
    %p122 = scmp.eq.s32.totalorder %s18, 0
    %p123 = por %p121, %p122
    %s125 = sadd.s32 %s124, 1
    %p128 = scmp.eq.s32.totalorder %s12, 1
    %p129 = scmp.ne.s32.totalorder %s124, %s126
    %p130 = scmp.eq.s32.totalorder %s12, 0
    %p131 = por %p129, %p130
    %p132 = scmp.ne.s32.totalorder %s124, %s126
    %p133 = scmp.eq.s32.totalorder %s17, 1
    %p134 = por %p132, %p133
    %p135 = scmp.ne.s32.totalorder %s126, %s127
    %p136 = scmp.eq.s32.totalorder %s17, 0
    %p137 = por %p135, %p136
    %p138 = scmp.ne.s32.totalorder %s126, %s127
    %p139 = scmp.eq.s32.totalorder %s18, 1
    %p140 = por %p138, %p139
    %p142 = scmp.ne.s32.totalorder %s127, %s141
    %p143 = scmp.eq.s32.totalorder %s18, 0
    %p144 = por %p142, %p143
    %s146 = sadd.s32 %s145, 1
    %p149 = scmp.eq.s32.totalorder %s12, 1
    %p150 = scmp.ne.s32.totalorder %s145, %s147
    %p151 = scmp.eq.s32.totalorder %s12, 0
    %p152 = por %p150, %p151
    %p153 = scmp.ne.s32.totalorder %s145, %s147
    %p154 = scmp.eq.s32.totalorder %s17, 1
    %p155 = por %p153, %p154
    %p156 = scmp.ne.s32.totalorder %s147, %s148
    %p157 = scmp.eq.s32.totalorder %s17, 0
    %p158 = por %p156, %p157
    %p159 = scmp.ne.s32.totalorder %s147, %s148
    %p160 = scmp.eq.s32.totalorder %s18, 1
    %p161 = por %p159, %p160
    %p163 = scmp.ne.s32.totalorder %s148, %s162
    %p164 = scmp.eq.s32.totalorder %s18, 0
    %p165 = por %p163, %p164
    %s166 = ssub.s32 %s12, %s19
    %p167 = scmp.eq.s32.totalorder %s166, 0
    %s169 = sadd.s32 %s168, 1
    %s170 = scalar_select %p167, %s168, %s169
    %p173 = pneg %p167
    %p174 = scmp.eq.s32.totalorder %s12, 1
    %p175 = por %p173, %p174
    %p176 = scmp.ne.s32.totalorder %s168, %s171
    %p177 = scmp.eq.s32.totalorder %s12, 0
    %p178 = por %p176, %p177
    %p179 = scmp.ne.s32.totalorder %s168, %s171
    %p180 = scmp.eq.s32.totalorder %s17, 1
    %p181 = por %p179, %p180
    %p182 = scmp.ne.s32.totalorder %s171, %s172
    %p183 = scmp.eq.s32.totalorder %s17, 0
    %p184 = por %p182, %p183
    %p185 = scmp.ne.s32.totalorder %s171, %s172
    %p186 = scmp.eq.s32.totalorder %s18, 1
    %p187 = por %p185, %p186
    %p189 = scmp.ne.s32.totalorder %s172, %s188
    %p190 = scmp.eq.s32.totalorder %s18, 0
    %p191 = por %p189, %p190
    %p192 = scmp.le.s32.totalorder 1, %s12
    %p193 = scmp.lt.s32.totalorder %s12, 3
    %p194 = pnand %p192, %p193
    %p195 = pneg %p194
    // Predicated region
    $region9: #{nn5_forward.5} parent=5 // pred_check
      _
    $region10: #{nn5_forward.5} parent=5 // pred_check_branch
      %197 = sbr.rel (%p194) target = $region12
    $region11: #{nn5_forward.5} parent=5 // pred_region
      %s198 = ssub.s32 %s12, 1
      // Predicated region
      $region13: #{nn5_forward.5} parent=11 // pred_check
        %p199 = pneg %p137
      $region14: #{nn5_forward.5} parent=11 // pred_check_branch
        %201 = sbr.rel (%p199) target = $region16
      $region15: #{nn5_forward.5} parent=11 // pred_region
        _
      $region16: #{nn5_forward.5} parent=11 // pred_fallthru
        _
      // Predicated region
      $region17: #{nn5_forward.5} parent=11 // pred_check
        %p202 = pneg %p158
      $region18: #{nn5_forward.5} parent=11 // pred_check_branch
        %204 = sbr.rel (%p202) target = $region20
      $region19: #{nn5_forward.5} parent=11 // pred_region
        _
      $region20: #{nn5_forward.5} parent=11 // pred_fallthru
        _
    $region12: #{nn5_forward.5} parent=5 // pred_fallthru
      _
    %p205 = scmp.lt.s32.totalorder %s12, 2
    // Predicated region
    $region21: #{nn5_forward.5} parent=5 // pred_check
      %p206 = pneg %p205
    $region22: #{nn5_forward.5} parent=5 // pred_check_branch
      %208 = sbr.rel (%p206) target = $region24
    $region23: #{nn5_forward.5} parent=5 // pred_region
      // Predicated region
      $region25: #{nn5_forward.5} parent=23 // pred_check
        %p209 = pneg %p32
      $region26: #{nn5_forward.5} parent=23 // pred_check_branch
        %211 = sbr.rel (%p209) target = $region28
      $region27: #{nn5_forward.5} parent=23 // pred_region
        %s212 = smul.u32 8, %s12
        %p213 = scmp.lt.s32.totalorder %s212, 15
        %s214 = scalar_select %p213, %s212, 15
        %s215 = smul.addr %s214, 7
        %s216 = smul.addr %s215, 4
        %s217 = scalar_lea.vmem %s0, %s216
        %s218 = smul.u32 8, %s12
      $region28: #{nn5_forward.5} parent=23 // pred_fallthru
        _
      // Predicated region
      $region29: #{nn5_forward.5} parent=23 // pred_check
        %p219 = pneg %p58
      $region30: #{nn5_forward.5} parent=23 // pred_check_branch
        %221 = sbr.rel (%p219) target = $region32
      $region31: #{nn5_forward.5} parent=23 // pred_region
        %s222 = smul.u32 8, %s12
        %p223 = scmp.lt.s32.totalorder %s222, 15
        %s224 = scalar_select %p223, %s222, 15
        %s225 = smul.addr %s224, 7
        %s226 = smul.addr %s225, 4
        %s227 = scalar_lea.vmem %s1, %s226
        %s228 = smul.u32 8, %s12
      $region32: #{nn5_forward.5} parent=23 // pred_fallthru
        _
      // Predicated region
      $region33: #{nn5_forward.5} parent=23 // pred_check
        %p229 = pneg %p84
      $region34: #{nn5_forward.5} parent=23 // pred_check_branch
        %231 = sbr.rel (%p229) target = $region36
      $region35: #{nn5_forward.5} parent=23 // pred_region
        %s232 = smul.u32 8, %s12
        %p233 = scmp.lt.s32.totalorder %s232, 15
        %s234 = scalar_select %p233, %s232, 15
        %s235 = smul.addr %s234, 7
        %s236 = smul.addr %s235, 4
        %s237 = scalar_lea.vmem %s2, %s236
        %s238 = smul.u32 8, %s12
      $region36: #{nn5_forward.5} parent=23 // pred_fallthru
        _
      // Predicated region
      $region37: #{nn5_forward.5} parent=23 // pred_check
        %p239 = pneg %p110
      $region38: #{nn5_forward.5} parent=23 // pred_check_branch
        %241 = sbr.rel (%p239) target = $region40
      $region39: #{nn5_forward.5} parent=23 // pred_region
        %s242 = smul.u32 8, %s12
        %p243 = scmp.lt.s32.totalorder %s242, 15
        %s244 = scalar_select %p243, %s242, 15
        %s245 = smul.addr %s244, 7
        %s246 = smul.addr %s245, 4
        %s247 = scalar_lea.vmem %s3, %s246
        %s248 = smul.u32 8, %s12
      $region40: #{nn5_forward.5} parent=23 // pred_fallthru
        _
    $region24: #{nn5_forward.5} parent=5 // pred_fallthru
      _
    %p249 = scmp.le.s32.totalorder 1, %s12
    %p250 = scmp.lt.s32.totalorder %s12, 3
    %p251 = pnand %p249, %p250
    %p252 = pneg %p251
    // Predicated region
    $region41: #{nn5_forward.5} parent=5 // pred_check
      _
    $region42: #{nn5_forward.5} parent=5 // pred_check_branch
      %254 = sbr.rel (%p251) target = $region44
    $region43: #{nn5_forward.5} parent=5 // pred_region
      %s255 = ssub.s32 %s12, 1
      %s256 = smul.u32 8, %s17
      %p257 = scmp.lt.s32.totalorder %s256, 15
      %s258 = scalar_select %p257, %s256, 15
      %s259 = smul.addr %s258, 7
      %s260 = smul.addr %s259, 4
      %s261 = scalar_lea.vmem %s0, %s260
      %p262 = pneg %p38
      %p263 = pneg %p35
      %s264 = smul.u32 8, %s17
      %p265 = scmp.lt.s32.totalorder %s264, 15
      %s266 = scalar_select %p265, %s264, 15
      %s267 = smul.addr %s266, 7
      %s268 = smul.addr %s267, 4
      %s269 = scalar_lea.vmem %s1, %s268
      %p270 = pneg %p64
      %p271 = pneg %p61
      %s272 = smul.u32 8, %s17
      %p273 = scmp.lt.s32.totalorder %s272, 15
      %s274 = scalar_select %p273, %s272, 15
      %s275 = smul.addr %s274, 7
      %s276 = smul.addr %s275, 4
      %s277 = scalar_lea.vmem %s2, %s276
      %p278 = pneg %p90
      %p279 = pneg %p87
      %s280 = smul.u32 8, %s17
      %p281 = scmp.lt.s32.totalorder %s280, 15
      %s282 = scalar_select %p281, %s280, 15
      %s283 = smul.addr %s282, 7
      %s284 = smul.addr %s283, 4
      %s285 = scalar_lea.vmem %s3, %s284
      %p286 = pneg %p116
      %p287 = pneg %p113
      %p288 = pneg %p137
      %p289 = pneg %p134
      %p290 = pneg %p158
      %p291 = pneg %p155
      %p292 = pneg %p184
      %p293 = pneg %p181
      %s294 = smul.u32 8, %s17
      %p295 = scmp.lt.s32.totalorder %s294, 15
      %s296 = scalar_select %p295, %s294, 15
      %s297 = smul.addr %s296, 4
      %s298 = scalar_lea.vmem %s6, %s297
      %s299 = smul.u32 8, %s17
      %p300 = scmp.lt.s32.totalorder %s299, 15
      %s301 = scalar_select %p300, %s299, 15
      %s302 = smul.addr %s301, 7
      %s303 = smul.addr %s302, 4
      %s304 = scalar_lea.vmem %s0, %s303
      %s305 = smul.u32 8, %s17
      %s306 = smul.u32 8, %s17
      %p307 = scmp.lt.s32.totalorder %s306, 15
      %s308 = scalar_select %p307, %s306, 15
      %s309 = smul.addr %s308, 7
      %s310 = smul.addr %s309, 4
      %s311 = scalar_lea.vmem %s1, %s310
      %s312 = smul.u32 8, %s17
      %s313 = smul.u32 8, %s17
      %p314 = scmp.lt.s32.totalorder %s313, 15
      %s315 = scalar_select %p314, %s313, 15
      %s316 = smul.addr %s315, 7
      %s317 = smul.addr %s316, 4
      %s318 = scalar_lea.vmem %s2, %s317
      %s319 = smul.u32 8, %s17
      %s320 = smul.u32 8, %s17
      %p321 = scmp.lt.s32.totalorder %s320, 15
      %s322 = scalar_select %p321, %s320, 15
      %s323 = smul.addr %s322, 7
      %s324 = smul.addr %s323, 4
      %s325 = scalar_lea.vmem %s3, %s324
      %s326 = smul.u32 8, %s17
      %s327 = smul.u32 8, %s17
      %p328 = scmp.lt.s32.totalorder %s327, 15
      %s329 = scalar_select %p328, %s327, 15
      %s330 = smul.addr %s329, 4
      %s331 = scalar_lea.vmem %s6, %s330
      %s332 = smul.u32 8, %s17
      %v334 = vld [vmem:[%s4] sm:$0xf]
      %v335 = vld [vmem:[%s4 + $0x4] sm:$0xf]
      %v336 = vld [vmem:[%s4 + $0x8] sm:$0xf]
      %v337 = vld [vmem:[%s4 + $0xc] sm:$0xf]
      %v338 = vld [vmem:[%s4 + $0x10] sm:$0xf]
      %v339 = vld [vmem:[%s4 + $0x14] sm:$0xf]
      %v340 = vld [vmem:[%s4 + $0x18] sm:$0xf]
      %v341 = vld [vmem:[%s4 + $0x1c] sm:$0xf]
      %v342 = vld [vmem:[%s4 + $0x20] sm:$0xf]
      %v343 = vld [vmem:[%s4 + $0x24] sm:$0xf]
      %v344 = vld [vmem:[%s4 + $0x28] sm:$0xf]
      %v345 = vld [vmem:[%s4 + $0x2c] sm:$0xf]
      %v346 = vld [vmem:[%s4 + $0x30] sm:$0xf]
      %v347 = vld [vmem:[%s4 + $0x34] sm:$0xf]
      %v348 = vld [vmem:[%s4 + $0x38] sm:$0xf]
      %v349 = vld [vmem:[%s4 + $0x3c] sm:$0xf]
      %v350 = vld [vmem:[%s4 + $0x40] sm:$0xf]
      %v351 = vld [vmem:[%s4 + $0x44] sm:$0xf]
      %v352 = vld [vmem:[%s4 + $0x48] sm:$0xf]
      %v353 = vld [vmem:[%s4 + $0x4c] sm:$0xf]
      %v354 = vld [vmem:[%s4 + $0x50] sm:$0xf]
      %v355 = vld [vmem:[%s4 + $0x54] sm:$0xf]
      %v356 = vld [vmem:[%s4 + $0x58] sm:$0xf]
      %v357 = vld [vmem:[%s4 + $0x5c] sm:$0xf]
      %v358 = vld [vmem:[%s4 + $0x60] sm:$0xf]
      %v359 = vld [vmem:[%s4 + $0x64] sm:$0xf]
      %v360 = vld [vmem:[%s4 + $0x68] sm:$0xf]
      %v361 = vld [vmem:[%s4 + $0x6c] sm:$0xf]
      %v362 = vld [vmem:[%s4 + $0x70] sm:$0xf]
      %v363 = vld [vmem:[%s4 + $0x74] sm:$0xf]
      %v364 = vld [vmem:[%s4 + $0x78] sm:$0xf]
      %v365 = vld [vmem:[%s4 + $0x7c] sm:$0xf]
      %v366 = vld [vmem:[%s4 + $0x80] sm:$0xf]
      %v367 = vld [vmem:[%s4 + $0x84] sm:$0xf]
      %v368 = vld [vmem:[%s4 + $0x88] sm:$0xf]
      %v369 = vld [vmem:[%s4 + $0x8c] sm:$0xf]
      %v370 = vld [vmem:[%s4 + $0x90] sm:$0xf]
      %v371 = vld [vmem:[%s4 + $0x94] sm:$0xf]
      %v372 = vld [vmem:[%s4 + $0x98] sm:$0xf]
      %v373 = vld [vmem:[%s4 + $0x9c] sm:$0xf]
      %v374 = vld [vmem:[%s4 + $0xa0] sm:$0xf]
      %v375 = vld [vmem:[%s4 + $0xa4] sm:$0xf]
      %v376 = vld [vmem:[%s4 + $0xa8] sm:$0xf]
      %v377 = vld [vmem:[%s4 + $0xac] sm:$0xf]
      %v378 = vld [vmem:[%s4 + $0xb0] sm:$0xf]
      %v379 = vld [vmem:[%s4 + $0xb4] sm:$0xf]
      %v380 = vld [vmem:[%s4 + $0xb8] sm:$0xf]
      %v381 = vld [vmem:[%s4 + $0xbc] sm:$0xf]
      %v382 = vld [vmem:[%s4 + $0xc0] sm:$0xf]
      %v383 = vld [vmem:[%s4 + $0xc4] sm:$0xf]
      %v384 = vld [vmem:[%s4 + $0xc8] sm:$0xf]
      %v385 = vld [vmem:[%s4 + $0xcc] sm:$0xf]
      %v386 = vld [vmem:[%s4 + $0xd0] sm:$0xf]
      %v387 = vld [vmem:[%s4 + $0xd4] sm:$0xf]
      %v388 = vld [vmem:[%s4 + $0xd8] sm:$0xf]
      %v389 = vld [vmem:[%s4 + $0xdc] sm:$0xf]
      %v390 = vld [vmem:[%s4 + $0xe0] sm:$0xf]
      %v391 = vld [vmem:[%s4 + $0xe4] sm:$0xf]
      %v392 = vld [vmem:[%s4 + $0xe8] sm:$0xf]
      %v393 = vld [vmem:[%s4 + $0xec] sm:$0xf]
      %v394 = vld [vmem:[%s4 + $0xf0] sm:$0xf]
      %v395 = vld [vmem:[%s4 + $0xf4] sm:$0xf]
      %v396 = vld [vmem:[%s4 + $0xf8] sm:$0xf]
      %v397 = vld [vmem:[%s4 + $0xfc] sm:$0xf]
      %v398 = vld [vmem:[%s4 + $0x100] sm:$0xf]
      %v399 = vld [vmem:[%s4 + $0x104] sm:$0xf]
      %v400 = vld [vmem:[%s4 + $0x108] sm:$0xf]
      %v401 = vld [vmem:[%s4 + $0x10c] sm:$0xf]
      %v402 = vld [vmem:[%s4 + $0x110] sm:$0xf]
      %v403 = vld [vmem:[%s4 + $0x114] sm:$0xf]
      %v404 = vld [vmem:[%s4 + $0x118] sm:$0xf]
      %v405 = vld [vmem:[%s4 + $0x11c] sm:$0xf]
      %v406 = vld [vmem:[%s4 + $0x120] sm:$0xf]
      %v407 = vld [vmem:[%s4 + $0x124] sm:$0xf]
      %v408 = vld [vmem:[%s4 + $0x128] sm:$0xf]
      %v409 = vld [vmem:[%s4 + $0x12c] sm:$0xf]
      %v410 = vld [vmem:[%s4 + $0x130] sm:$0xf]
      %v411 = vld [vmem:[%s4 + $0x134] sm:$0xf]
      %v412 = vld [vmem:[%s4 + $0x138] sm:$0xf]
      %v413 = vld [vmem:[%s4 + $0x13c] sm:$0xf]
      %v414 = vld [vmem:[%s4 + $0x140] sm:$0xf]
      %v415 = vld [vmem:[%s4 + $0x144] sm:$0xf]
      %v416 = vld [vmem:[%s4 + $0x148] sm:$0xf]
      %v417 = vld [vmem:[%s4 + $0x14c] sm:$0xf]
      %v418 = vld [vmem:[%s4 + $0x150] sm:$0xf]
      %v419 = vld [vmem:[%s4 + $0x154] sm:$0xf]
      %v420 = vld [vmem:[%s4 + $0x158] sm:$0xf]
      %v421 = vld [vmem:[%s4 + $0x15c] sm:$0xf]
      %v422 = vld [vmem:[%s4 + $0x160] sm:$0xf]
      %v423 = vld [vmem:[%s4 + $0x164] sm:$0xf]
      %v424 = vld [vmem:[%s4 + $0x168] sm:$0xf]
      %v425 = vld [vmem:[%s4 + $0x16c] sm:$0xf]
      %v426 = vld [vmem:[%s4 + $0x170] sm:$0xf]
      %v427 = vld [vmem:[%s4 + $0x174] sm:$0xf]
      %v428 = vld [vmem:[%s4 + $0x178] sm:$0xf]
      %v429 = vld [vmem:[%s4 + $0x17c] sm:$0xf]
      %v430 = vld [vmem:[%s4 + $0x180] sm:$0xf]
      %v431 = vld [vmem:[%s4 + $0x184] sm:$0xf]
      %v432 = vld [vmem:[%s4 + $0x188] sm:$0xf]
      %v433 = vld [vmem:[%s4 + $0x18c] sm:$0xf]
      %v434 = vld [vmem:[%s304] sm:$0xff]
      %v435 = vld [vmem:[%s304 + $0x8] sm:$0xff]
      %v436 = vld [vmem:[%s304 + $0x10] sm:$0xff]
      %v437 = vld [vmem:[%s304 + $0x18] sm:$0xf]
      %v438 = vld [vmem:[%s304 + $0x1c] sm:$0xff]
      %v439 = vld [vmem:[%s304 + $0x24] sm:$0xff]
      %v440 = vld [vmem:[%s304 + $0x2c] sm:$0xff]
      %v441 = vld [vmem:[%s304 + $0x34] sm:$0xf]
      %v442 = vld [vmem:[%s304 + $0x38] sm:$0xff]
      %v443 = vld [vmem:[%s304 + $0x40] sm:$0xff]
      %v444 = vld [vmem:[%s304 + $0x48] sm:$0xff]
      %v445 = vld [vmem:[%s304 + $0x50] sm:$0xf]
      %v446 = vld [vmem:[%s304 + $0x54] sm:$0xff]
      %v447 = vld [vmem:[%s304 + $0x5c] sm:$0xff]
      %v448 = vld [vmem:[%s304 + $0x64] sm:$0xff]
      %v449 = vld [vmem:[%s304 + $0x6c] sm:$0xf]
      %v450 = vld [vmem:[%s304 + $0x70] sm:$0xff]
      %v451 = vld [vmem:[%s304 + $0x78] sm:$0xff]
      %v452 = vld [vmem:[%s304 + $0x80] sm:$0xff]
      %v453 = vld [vmem:[%s304 + $0x88] sm:$0xf]
      %v454 = vld [vmem:[%s304 + $0x8c] sm:$0xff]
      %v455 = vld [vmem:[%s304 + $0x94] sm:$0xff]
      %v456 = vld [vmem:[%s304 + $0x9c] sm:$0xff]
      %v457 = vld [vmem:[%s304 + $0xa4] sm:$0xf]
      %v458 = vld [vmem:[%s304 + $0xa8] sm:$0xff]
      %v459 = vld [vmem:[%s304 + $0xb0] sm:$0xff]
      %v460 = vld [vmem:[%s304 + $0xb8] sm:$0xff]
      %v461 = vld [vmem:[%s304 + $0xc0] sm:$0xf]
      %v462 = vld [vmem:[%s304 + $0xc4] sm:$0xff]
      %v463 = vld [vmem:[%s304 + $0xcc] sm:$0xff]
      %v464 = vld [vmem:[%s304 + $0xd4] sm:$0xff]
      %v465 = vld [vmem:[%s304 + $0xdc] sm:$0xf]
      %v498 = vunpack.c.l.b16 %v434
      %v499 = vunpack.c.h.b16 %v434
      %v500 = vunpack.c.l.b16 %v435
      %v501 = vunpack.c.h.b16 %v435
      %v502 = vunpack.c.l.b16 %v436
      %v503 = vunpack.c.h.b16 %v436
      %v504 = vunpack.c.l.b16 %v437
      %v505 = vunpack.c.l.b16 %v438
      %v506 = vunpack.c.h.b16 %v438
      %v507 = vunpack.c.l.b16 %v439
      %v508 = vunpack.c.h.b16 %v439
      %v509 = vunpack.c.l.b16 %v440
      %v510 = vunpack.c.h.b16 %v440
      %v511 = vunpack.c.l.b16 %v441
      %v512 = vunpack.c.l.b16 %v442
      %v513 = vunpack.c.h.b16 %v442
      %v514 = vunpack.c.l.b16 %v443
      %v515 = vunpack.c.h.b16 %v443
      %v516 = vunpack.c.l.b16 %v444
      %v517 = vunpack.c.h.b16 %v444
      %v518 = vunpack.c.l.b16 %v445
      %v519 = vunpack.c.l.b16 %v446
      %v520 = vunpack.c.h.b16 %v446
      %v521 = vunpack.c.l.b16 %v447
      %v522 = vunpack.c.h.b16 %v447
      %v523 = vunpack.c.l.b16 %v448
      %v524 = vunpack.c.h.b16 %v448
      %v525 = vunpack.c.l.b16 %v449
      %v526 = vunpack.c.l.b16 %v450
      %v527 = vunpack.c.h.b16 %v450
      %v528 = vunpack.c.l.b16 %v451
      %v529 = vunpack.c.h.b16 %v451
      %v530 = vunpack.c.l.b16 %v452
      %v531 = vunpack.c.h.b16 %v452
      %v532 = vunpack.c.l.b16 %v453
      %v533 = vunpack.c.l.b16 %v454
      %v534 = vunpack.c.h.b16 %v454
      %v535 = vunpack.c.l.b16 %v455
      %v536 = vunpack.c.h.b16 %v455
      %v537 = vunpack.c.l.b16 %v456
      %v538 = vunpack.c.h.b16 %v456
      %v539 = vunpack.c.l.b16 %v457
      %v540 = vunpack.c.l.b16 %v458
      %v541 = vunpack.c.h.b16 %v458
      %v542 = vunpack.c.l.b16 %v459
      %v543 = vunpack.c.h.b16 %v459
      %v544 = vunpack.c.l.b16 %v460
      %v545 = vunpack.c.h.b16 %v460
      %v546 = vunpack.c.l.b16 %v461
      %v547 = vunpack.c.l.b16 %v462
      %v548 = vunpack.c.h.b16 %v462
      %v549 = vunpack.c.l.b16 %v463
      %v550 = vunpack.c.h.b16 %v463
      %v551 = vunpack.c.l.b16 %v464
      %v552 = vunpack.c.h.b16 %v464
      %v553 = vunpack.c.l.b16 %v465
      %v554 = vpack.c.b16 %v505, %v498
      %v555 = vpack.c.b16 %v506, %v499
      %v556 = vpack.c.b16 %v507, %v500
      %v557 = vpack.c.b16 %v508, %v501
      %v558 = vpack.c.b16 %v509, %v502
      %v559 = vpack.c.b16 %v510, %v503
      %v560 = vpack.c.b16 %v511, %v504
      %v561 = vpack.c.b16 %v519, %v512
      %v562 = vpack.c.b16 %v520, %v513
      %v563 = vpack.c.b16 %v521, %v514
      %v564 = vpack.c.b16 %v522, %v515
      %v565 = vpack.c.b16 %v523, %v516
      %v566 = vpack.c.b16 %v524, %v517
      %v567 = vpack.c.b16 %v525, %v518
      %v568 = vpack.c.b16 %v533, %v526
      %v569 = vpack.c.b16 %v534, %v527
      %v570 = vpack.c.b16 %v535, %v528
      %v571 = vpack.c.b16 %v536, %v529
      %v572 = vpack.c.b16 %v537, %v530
      %v573 = vpack.c.b16 %v538, %v531
      %v574 = vpack.c.b16 %v539, %v532
      %v575 = vpack.c.b16 %v547, %v540
      %v576 = vpack.c.b16 %v548, %v541
      %v577 = vpack.c.b16 %v549, %v542
      %v578 = vpack.c.b16 %v550, %v543
      %v579 = vpack.c.b16 %v551, %v544
      %v580 = vpack.c.b16 %v552, %v545
      %v581 = vpack.c.b16 %v553, %v546
      %v706 = vunpack.c.l.b16 %v334
      %v707 = vunpack.c.l.b16 %v335
      %v708 = vunpack.c.l.b16 %v336
      %v709 = vunpack.c.l.b16 %v337
      %v710 = vunpack.c.l.b16 %v338
      %v711 = vunpack.c.l.b16 %v339
      %v712 = vunpack.c.l.b16 %v340
      %v713 = vunpack.c.l.b16 %v341
      %v714 = vunpack.c.l.b16 %v342
      %v715 = vunpack.c.l.b16 %v343
      %v716 = vunpack.c.l.b16 %v344
      %v717 = vunpack.c.l.b16 %v345
      %v718 = vunpack.c.l.b16 %v346
      %v719 = vunpack.c.l.b16 %v347
      %v720 = vunpack.c.l.b16 %v348
      %v721 = vunpack.c.l.b16 %v349
      %v722 = vunpack.c.l.b16 %v350
      %v723 = vunpack.c.l.b16 %v351
      %v724 = vunpack.c.l.b16 %v352
      %v725 = vunpack.c.l.b16 %v353
      %v726 = vunpack.c.l.b16 %v354
      %v727 = vunpack.c.l.b16 %v355
      %v728 = vunpack.c.l.b16 %v356
      %v729 = vunpack.c.l.b16 %v357
      %v730 = vunpack.c.l.b16 %v358
      %v731 = vunpack.c.l.b16 %v359
      %v732 = vunpack.c.l.b16 %v360
      %v733 = vunpack.c.l.b16 %v361
      %v734 = vunpack.c.l.b16 %v362
      %v735 = vunpack.c.l.b16 %v363
      %v736 = vunpack.c.l.b16 %v364
      %v737 = vunpack.c.l.b16 %v365
      %v738 = vunpack.c.l.b16 %v366
      %v739 = vunpack.c.l.b16 %v367
      %v740 = vunpack.c.l.b16 %v368
      %v741 = vunpack.c.l.b16 %v369
      %v742 = vunpack.c.l.b16 %v370
      %v743 = vunpack.c.l.b16 %v371
      %v744 = vunpack.c.l.b16 %v372
      %v745 = vunpack.c.l.b16 %v373
      %v746 = vunpack.c.l.b16 %v374
      %v747 = vunpack.c.l.b16 %v375
      %v748 = vunpack.c.l.b16 %v376
      %v749 = vunpack.c.l.b16 %v377
      %v750 = vunpack.c.l.b16 %v378
      %v751 = vunpack.c.l.b16 %v379
      %v752 = vunpack.c.l.b16 %v380
      %v753 = vunpack.c.l.b16 %v381
      %v754 = vunpack.c.l.b16 %v382
      %v755 = vunpack.c.l.b16 %v383
      %v756 = vunpack.c.l.b16 %v384
      %v757 = vunpack.c.l.b16 %v385
      %v758 = vunpack.c.l.b16 %v386
      %v759 = vunpack.c.l.b16 %v387
      %v760 = vunpack.c.l.b16 %v388
      %v761 = vunpack.c.l.b16 %v389
      %v762 = vunpack.c.l.b16 %v390
      %v763 = vunpack.c.l.b16 %v391
      %v764 = vunpack.c.l.b16 %v392
      %v765 = vunpack.c.l.b16 %v393
      %v766 = vunpack.c.l.b16 %v394
      %v767 = vunpack.c.l.b16 %v395
      %v768 = vunpack.c.l.b16 %v396
      %v769 = vunpack.c.l.b16 %v397
      %v770 = vunpack.c.l.b16 %v398
      %v771 = vunpack.c.l.b16 %v399
      %v772 = vunpack.c.l.b16 %v400
      %v773 = vunpack.c.l.b16 %v401
      %v774 = vunpack.c.l.b16 %v402
      %v775 = vunpack.c.l.b16 %v403
      %v776 = vunpack.c.l.b16 %v404
      %v777 = vunpack.c.l.b16 %v405
      %v778 = vunpack.c.l.b16 %v406
      %v779 = vunpack.c.l.b16 %v407
      %v780 = vunpack.c.l.b16 %v408
      %v781 = vunpack.c.l.b16 %v409
      %v782 = vunpack.c.l.b16 %v410
      %v783 = vunpack.c.l.b16 %v411
      %v784 = vunpack.c.l.b16 %v412
      %v785 = vunpack.c.l.b16 %v413
      %v786 = vunpack.c.l.b16 %v414
      %v787 = vunpack.c.l.b16 %v415
      %v788 = vunpack.c.l.b16 %v416
      %v789 = vunpack.c.l.b16 %v417
      %v790 = vunpack.c.l.b16 %v418
      %v791 = vunpack.c.l.b16 %v419
      %v792 = vunpack.c.l.b16 %v420
      %v793 = vunpack.c.l.b16 %v421
      %v794 = vunpack.c.l.b16 %v422
      %v795 = vunpack.c.l.b16 %v423
      %v796 = vunpack.c.l.b16 %v424
      %v797 = vunpack.c.l.b16 %v425
      %v798 = vunpack.c.l.b16 %v426
      %v799 = vunpack.c.l.b16 %v427
      %v800 = vunpack.c.l.b16 %v428
      %v801 = vunpack.c.l.b16 %v429
      %v802 = vunpack.c.l.b16 %v430
      %v803 = vunpack.c.l.b16 %v431
      %v804 = vunpack.c.l.b16 %v432
      %v805 = vunpack.c.l.b16 %v433
      %v806 = vpack.c.b16 %v707, %v706
      %v807 = vpack.c.b16 %v709, %v708
      %v808 = vpack.c.b16 %v711, %v710
      %v809 = vpack.c.b16 %v713, %v712
      %v810 = vpack.c.b16 %v715, %v714
      %v811 = vpack.c.b16 %v717, %v716
      %v812 = vpack.c.b16 %v719, %v718
      %v813 = vpack.c.b16 %v721, %v720
      %v814 = vpack.c.b16 %v723, %v722
      %v815 = vpack.c.b16 %v725, %v724
      %v816 = vpack.c.b16 %v727, %v726
      %v817 = vpack.c.b16 %v729, %v728
      %v818 = vpack.c.b16 %v731, %v730
      %v819 = vpack.c.b16 %v733, %v732
      %v820 = vpack.c.b16 %v735, %v734
      %v821 = vpack.c.b16 %v737, %v736
      %v822 = vpack.c.b16 %v739, %v738
      %v823 = vpack.c.b16 %v741, %v740
      %v824 = vpack.c.b16 %v743, %v742
      %v825 = vpack.c.b16 %v745, %v744
      %v826 = vpack.c.b16 %v747, %v746
      %v827 = vpack.c.b16 %v749, %v748
      %v828 = vpack.c.b16 %v751, %v750
      %v829 = vpack.c.b16 %v753, %v752
      %v830 = vpack.c.b16 %v755, %v754
      %v831 = vpack.c.b16 %v757, %v756
      %v832 = vpack.c.b16 %v759, %v758
      %v833 = vpack.c.b16 %v761, %v760
      %v834 = vpack.c.b16 %v763, %v762
      %v835 = vpack.c.b16 %v765, %v764
      %v836 = vpack.c.b16 %v767, %v766
      %v837 = vpack.c.b16 %v769, %v768
      %v838 = vpack.c.b16 %v771, %v770
      %v839 = vpack.c.b16 %v773, %v772
      %v840 = vpack.c.b16 %v775, %v774
      %v841 = vpack.c.b16 %v777, %v776
      %v842 = vpack.c.b16 %v779, %v778
      %v843 = vpack.c.b16 %v781, %v780
      %v844 = vpack.c.b16 %v783, %v782
      %v845 = vpack.c.b16 %v785, %v784
      %v846 = vpack.c.b16 %v787, %v786
      %v847 = vpack.c.b16 %v789, %v788
      %v848 = vpack.c.b16 %v791, %v790
      %v849 = vpack.c.b16 %v793, %v792
      %v850 = vpack.c.b16 %v795, %v794
      %v851 = vpack.c.b16 %v797, %v796
      %v852 = vpack.c.b16 %v799, %v798
      %v853 = vpack.c.b16 %v801, %v800
      %v854 = vpack.c.b16 %v803, %v802
      %v855 = vpack.c.b16 %v805, %v804
      %vm906 = vcmask 261120
      %v908 = vsel %vm906, %v560, 0
      %v911 = vsel %vm906, %v567, 0
      %v914 = vsel %vm906, %v574, 0
      %v917 = vsel %vm906, %v581, 0
      %919 = vmatprep.subr.bf16.mxu0 0
      %920 = vmatpush1.bf16.msra.mxu0 %v806
      %921 = vmatprep.subr.bf16.mxu0 0
      %922 = vmatpush1.bf16.msra.mxu0 %v807
      %923 = vmatprep.subr.bf16.mxu0 0
      %924 = vmatpush1.bf16.msra.mxu0 %v808
      %925 = vmatprep.subr.bf16.mxu0 0
      %926 = vmatpush1.bf16.msra.mxu0 %v809
      %927 = vmatprep.subr.bf16.mxu0 0
      %928 = vmatpush1.bf16.msra.mxu0 %v810
      %929 = vmatprep.subr.bf16.mxu0 0
      %930 = vmatpush1.bf16.msra.mxu0 %v811
      %931 = vmatprep.subr.bf16.mxu0 0
      %932 = vmatpush1.bf16.msra.mxu0 %v812
      %933 = vmatprep.subr.bf16.mxu0 0
      %934 = vmatpush1.bf16.msra.mxu0 %v813
      %935 = vmatprep.subr.bf16.mxu0 0
      %936 = vmatpush1.bf16.msra.mxu0 %v814
      %937 = vmatprep.subr.bf16.mxu0 0
      %938 = vmatpush1.bf16.msra.mxu0 %v815
      %939 = vmatprep.subr.bf16.mxu0 0
      %940 = vmatpush1.bf16.msra.mxu0 %v816
      %941 = vmatprep.subr.bf16.mxu0 0
      %942 = vmatpush1.bf16.msra.mxu0 %v817
      %943 = vmatprep.subr.bf16.mxu0 0
      %944 = vmatpush1.bf16.msra.mxu0 %v818
      %945 = vmatprep.subr.bf16.mxu0 0
      %946 = vmatpush1.bf16.msra.mxu0 %v819
      %947 = vmatprep.subr.bf16.mxu0 0
      %948 = vmatpush1.bf16.msra.mxu0 %v820
      %949 = vmatprep.subr.bf16.mxu0 0
      %950 = vmatpush1.bf16.msra.mxu0 %v821
      %951 = vmatprep.mubr.bf16.mxu0 %v555
      %952 = vmatmul.mubr.bf16.gmra.mrb[0].mxu0 %v554
      %v953 = vpop.f32.mrb[0].mxu0
      %v954 = vadd.f32 0.0, %v953
      %v955 = vpop.f32.mrb[0].mxu0
      %v956 = vpop.f32.mrb[0].mxu0
      %v957 = vadd.f32 0.0, %v956
      %v958 = vpop.f32.mrb[0].mxu0
      %959 = vmatprep.mubr.bf16.mxu0 %v562
      %960 = vmatmul.mubr.bf16.gmra.mrb[0].mxu0 %v561
      %v961 = vpop.f32.mrb[0].mxu0
      %v962 = vadd.f32 0.0, %v961
      %v963 = vpop.f32.mrb[0].mxu0
      %v964 = vpop.f32.mrb[0].mxu0
      %v965 = vadd.f32 0.0, %v964
      %v966 = vpop.f32.mrb[0].mxu0
      %967 = vmatprep.mubr.bf16.mxu0 %v569
      %968 = vmatmul.mubr.bf16.gmra.mrb[0].mxu0 %v568
      %v969 = vpop.f32.mrb[0].mxu0
      %v970 = vadd.f32 0.0, %v969
      %v971 = vpop.f32.mrb[0].mxu0
      %v972 = vpop.f32.mrb[0].mxu0
      %v973 = vadd.f32 0.0, %v972
      %v974 = vpop.f32.mrb[0].mxu0
      %975 = vmatprep.mubr.bf16.mxu0 %v576
      %976 = vmatmul.mubr.bf16.gmra.mrb[0].mxu0 %v575
      %v977 = vpop.f32.mrb[0].mxu0
      %v978 = vadd.f32 0.0, %v977
      %v979 = vpop.f32.mrb[0].mxu0
      %v980 = vpop.f32.mrb[0].mxu0
      %v981 = vadd.f32 0.0, %v980
      %v982 = vpop.f32.mrb[0].mxu0
      %983 = vdwg.mxu0
      %984 = vmatprep.subr.bf16.mxu0 0
      %985 = vmatpush1.bf16.msra.mxu0 %v822
      %986 = vmatprep.subr.bf16.mxu0 0
      %987 = vmatpush1.bf16.msra.mxu0 %v823
      %988 = vmatprep.subr.bf16.mxu0 0
      %989 = vmatpush1.bf16.msra.mxu0 %v824
      %990 = vmatprep.subr.bf16.mxu0 0
      %991 = vmatpush1.bf16.msra.mxu0 %v825
      %992 = vmatprep.subr.bf16.mxu0 0
      %993 = vmatpush1.bf16.msra.mxu0 %v826
      %994 = vmatprep.subr.bf16.mxu0 0
      %995 = vmatpush1.bf16.msra.mxu0 %v827
      %996 = vmatprep.subr.bf16.mxu0 0
      %997 = vmatpush1.bf16.msra.mxu0 %v828
      %998 = vmatprep.subr.bf16.mxu0 0
      %999 = vmatpush1.bf16.msra.mxu0 %v829
      %1000 = vmatprep.subr.bf16.mxu0 0
      %1001 = vmatpush1.bf16.msra.mxu0 %v830
      %1002 = vmatprep.subr.bf16.mxu0 0
      %1003 = vmatpush1.bf16.msra.mxu0 %v831
      %1004 = vmatprep.subr.bf16.mxu0 0
      %1005 = vmatpush1.bf16.msra.mxu0 %v832
      %1006 = vmatprep.subr.bf16.mxu0 0
      %1007 = vmatpush1.bf16.msra.mxu0 %v833
      %1008 = vmatprep.subr.bf16.mxu0 0
      %1009 = vmatpush1.bf16.msra.mxu0 %v834
      %1010 = vmatprep.subr.bf16.mxu0 0
      %1011 = vmatpush1.bf16.msra.mxu0 %v835
      %1012 = vmatprep.subr.bf16.mxu0 0
      %1013 = vmatpush1.bf16.msra.mxu0 %v836
      %1014 = vmatprep.subr.bf16.mxu0 0
      %1015 = vmatpush1.bf16.msra.mxu0 %v837
      %1016 = vmatprep.mubr.bf16.mxu0 %v557
      %1017 = vmatmul.mubr.bf16.gmra.mrb[0].mxu0 %v556
      %v1018 = vpop.f32.mrb[0].mxu0
      %v1019 = vadd.f32 %v954, %v1018
      %v1020 = vpop.f32.mrb[0].mxu0
      %v1021 = vpop.f32.mrb[0].mxu0
      %v1022 = vadd.f32 %v957, %v1021
      %v1023 = vpop.f32.mrb[0].mxu0
      %1024 = vmatprep.mubr.bf16.mxu0 %v564
      %1025 = vmatmul.mubr.bf16.gmra.mrb[0].mxu0 %v563
      %v1026 = vpop.f32.mrb[0].mxu0
      %v1027 = vadd.f32 %v962, %v1026
      %v1028 = vpop.f32.mrb[0].mxu0
      %v1029 = vpop.f32.mrb[0].mxu0
      %v1030 = vadd.f32 %v965, %v1029
      %v1031 = vpop.f32.mrb[0].mxu0
      %1032 = vmatprep.mubr.bf16.mxu0 %v571
      %1033 = vmatmul.mubr.bf16.gmra.mrb[0].mxu0 %v570
      %v1034 = vpop.f32.mrb[0].mxu0
      %v1035 = vadd.f32 %v970, %v1034
      %v1036 = vpop.f32.mrb[0].mxu0
      %v1037 = vpop.f32.mrb[0].mxu0
      %v1038 = vadd.f32 %v973, %v1037
      %v1039 = vpop.f32.mrb[0].mxu0
      %1040 = vmatprep.mubr.bf16.mxu0 %v578
      %1041 = vmatmul.mubr.bf16.gmra.mrb[0].mxu0 %v577
      %v1042 = vpop.f32.mrb[0].mxu0
      %v1043 = vadd.f32 %v978, %v1042
      %v1044 = vpop.f32.mrb[0].mxu0
      %v1045 = vpop.f32.mrb[0].mxu0
      %v1046 = vadd.f32 %v981, %v1045
      %v1047 = vpop.f32.mrb[0].mxu0
      %1048 = vdwg.mxu0
      %1049 = vmatprep.subr.bf16.mxu0 0
      %1050 = vmatpush1.bf16.msra.mxu0 %v838
      %1051 = vmatprep.subr.bf16.mxu0 0
      %1052 = vmatpush1.bf16.msra.mxu0 %v839
      %1053 = vmatprep.subr.bf16.mxu0 0
      %1054 = vmatpush1.bf16.msra.mxu0 %v840
      %1055 = vmatprep.subr.bf16.mxu0 0
      %1056 = vmatpush1.bf16.msra.mxu0 %v841
      %1057 = vmatprep.subr.bf16.mxu0 0
      %1058 = vmatpush1.bf16.msra.mxu0 %v842
      %1059 = vmatprep.subr.bf16.mxu0 0
      %1060 = vmatpush1.bf16.msra.mxu0 %v843
      %1061 = vmatprep.subr.bf16.mxu0 0
      %1062 = vmatpush1.bf16.msra.mxu0 %v844
      %1063 = vmatprep.subr.bf16.mxu0 0
      %1064 = vmatpush1.bf16.msra.mxu0 %v845
      %1065 = vmatprep.subr.bf16.mxu0 0
      %1066 = vmatpush1.bf16.msra.mxu0 %v846
      %1067 = vmatprep.subr.bf16.mxu0 0
      %1068 = vmatpush1.bf16.msra.mxu0 %v847
      %1069 = vmatprep.subr.bf16.mxu0 0
      %1070 = vmatpush1.bf16.msra.mxu0 %v848
      %1071 = vmatprep.subr.bf16.mxu0 0
      %1072 = vmatpush1.bf16.msra.mxu0 %v849
      %1073 = vmatprep.subr.bf16.mxu0 0
      %1074 = vmatpush1.bf16.msra.mxu0 %v850
      %1075 = vmatprep.subr.bf16.mxu0 0
      %1076 = vmatpush1.bf16.msra.mxu0 %v851
      %1077 = vmatprep.subr.bf16.mxu0 0
      %1078 = vmatpush1.bf16.msra.mxu0 %v852
      %1079 = vmatprep.subr.bf16.mxu0 0
      %1080 = vmatpush1.bf16.msra.mxu0 %v853
      %1081 = vmatprep.mubr.bf16.mxu0 %v559
      %1082 = vmatmul.mubr.bf16.gmra.mrb[0].mxu0 %v558
      %v1083 = vpop.f32.mrb[0].mxu0
      %v1084 = vadd.f32 %v1019, %v1083
      %v1085 = vpop.f32.mrb[0].mxu0
      %v1086 = vpop.f32.mrb[0].mxu0
      %v1087 = vadd.f32 %v1022, %v1086
      %v1088 = vpop.f32.mrb[0].mxu0
      %1089 = vmatprep.mubr.bf16.mxu0 %v566
      %1090 = vmatmul.mubr.bf16.gmra.mrb[0].mxu0 %v565
      %v1091 = vpop.f32.mrb[0].mxu0
      %v1092 = vadd.f32 %v1027, %v1091
      %v1093 = vpop.f32.mrb[0].mxu0
      %v1094 = vpop.f32.mrb[0].mxu0
      %v1095 = vadd.f32 %v1030, %v1094
      %v1096 = vpop.f32.mrb[0].mxu0
      %1097 = vmatprep.mubr.bf16.mxu0 %v573
      %1098 = vmatmul.mubr.bf16.gmra.mrb[0].mxu0 %v572
      %v1099 = vpop.f32.mrb[0].mxu0
      %v1100 = vadd.f32 %v1035, %v1099
      %v1101 = vpop.f32.mrb[0].mxu0
      %v1102 = vpop.f32.mrb[0].mxu0
      %v1103 = vadd.f32 %v1038, %v1102
      %v1104 = vpop.f32.mrb[0].mxu0
      %1105 = vmatprep.mubr.bf16.mxu0 %v580
      %1106 = vmatmul.mubr.bf16.gmra.mrb[0].mxu0 %v579
      %v1107 = vpop.f32.mrb[0].mxu0
      %v1108 = vadd.f32 %v1043, %v1107
      %v1109 = vpop.f32.mrb[0].mxu0
      %v1110 = vpop.f32.mrb[0].mxu0
      %v1111 = vadd.f32 %v1046, %v1110
      %v1112 = vpop.f32.mrb[0].mxu0
      %1113 = vdwg.mxu0
      %1114 = vmatprep.subr.bf16.mxu0 0
      %1115 = vmatpush1.bf16.msra.mxu0 %v854
      %1116 = vmatprep.subr.bf16.mxu0 0
      %1117 = vmatpush1.bf16.msra.mxu0 %v855
      %1118 = vmatprep.subr.bf16.mxu0 0
      %1119 = vmatpush1.bf16.msra.mxu0 0
      %1120 = vmatprep.subr.bf16.mxu0 0
      %1121 = vmatpush1.bf16.msra.mxu0 0
      %1122 = vmatprep.subr.bf16.mxu0 0
      %1123 = vmatpush1.bf16.msra.mxu0 0
      %1124 = vmatprep.subr.bf16.mxu0 0
      %1125 = vmatpush1.bf16.msra.mxu0 0
      %1126 = vmatprep.subr.bf16.mxu0 0
      %1127 = vmatpush1.bf16.msra.mxu0 0
      %1128 = vmatprep.subr.bf16.mxu0 0
      %1129 = vmatpush1.bf16.msra.mxu0 0
      %1130 = vmatprep.subr.bf16.mxu0 0
      %1131 = vmatpush1.bf16.msra.mxu0 0
      %1132 = vmatprep.subr.bf16.mxu0 0
      %1133 = vmatpush1.bf16.msra.mxu0 0
      %1134 = vmatprep.subr.bf16.mxu0 0
      %1135 = vmatpush1.bf16.msra.mxu0 0
      %1136 = vmatprep.subr.bf16.mxu0 0
      %1137 = vmatpush1.bf16.msra.mxu0 0
      %1138 = vmatprep.subr.bf16.mxu0 0
      %1139 = vmatpush1.bf16.msra.mxu0 0
      %1140 = vmatprep.subr.bf16.mxu0 0
      %1141 = vmatpush1.bf16.msra.mxu0 0
      %1142 = vmatprep.subr.bf16.mxu0 0
      %1143 = vmatpush1.bf16.msra.mxu0 0
      %1144 = vmatprep.subr.bf16.mxu0 0
      %1145 = vmatpush1.bf16.msra.mxu0 0
      %1146 = vmatprep.mubr.bf16.mxu0 0
      %1147 = vmatmul.mubr.bf16.gmra.mrb[0].mxu0 %v908
      %v1148 = vpop.f32.mrb[0].mxu0
      %v1149 = vadd.f32 %v1084, %v1148
      %v1150 = vpop.f32.mrb[0].mxu0
      %v1151 = vpop.f32.mrb[0].mxu0
      %v1152 = vadd.f32 %v1087, %v1151
      %v1153 = vpop.f32.mrb[0].mxu0
      %1154 = vmatprep.mubr.bf16.mxu0 0
      %1155 = vmatmul.mubr.bf16.gmra.mrb[0].mxu0 %v911
      %v1156 = vpop.f32.mrb[0].mxu0
      %v1157 = vadd.f32 %v1092, %v1156
      %v1158 = vpop.f32.mrb[0].mxu0
      %v1159 = vpop.f32.mrb[0].mxu0
      %v1160 = vadd.f32 %v1095, %v1159
      %v1161 = vpop.f32.mrb[0].mxu0
      %1162 = vmatprep.mubr.bf16.mxu0 0
      %1163 = vmatmul.mubr.bf16.gmra.mrb[0].mxu0 %v914
      %v1164 = vpop.f32.mrb[0].mxu0
      %v1165 = vadd.f32 %v1100, %v1164
      %v1166 = vpop.f32.mrb[0].mxu0
      %v1167 = vpop.f32.mrb[0].mxu0
      %v1168 = vadd.f32 %v1103, %v1167
      %v1169 = vpop.f32.mrb[0].mxu0
      %1170 = vmatprep.mubr.bf16.mxu0 0
      %1171 = vmatmul.mubr.bf16.gmra.mrb[0].mxu0 %v917
      %v1172 = vpop.f32.mrb[0].mxu0
      %v1173 = vadd.f32 %v1108, %v1172
      %v1174 = vpop.f32.mrb[0].mxu0
      %v1175 = vpop.f32.mrb[0].mxu0
      %v1176 = vadd.f32 %v1111, %v1175
      %v1177 = vpop.f32.mrb[0].mxu0
      %1178 = vdwg.mxu0
      %v1179 = vld [vmem:[%s311] sm:$0xff]
      %v1180 = vld [vmem:[%s311 + $0x8] sm:$0xff]
      %v1181 = vld [vmem:[%s311 + $0x10] sm:$0xff]
      %v1182 = vld [vmem:[%s311 + $0x18] sm:$0xf]
      %v1183 = vld [vmem:[%s311 + $0x1c] sm:$0xff]
      %v1184 = vld [vmem:[%s311 + $0x24] sm:$0xff]
      %v1185 = vld [vmem:[%s311 + $0x2c] sm:$0xff]
      %v1186 = vld [vmem:[%s311 + $0x34] sm:$0xf]
      %v1187 = vld [vmem:[%s311 + $0x38] sm:$0xff]
      %v1188 = vld [vmem:[%s311 + $0x40] sm:$0xff]
      %v1189 = vld [vmem:[%s311 + $0x48] sm:$0xff]
      %v1190 = vld [vmem:[%s311 + $0x50] sm:$0xf]
      %v1191 = vld [vmem:[%s311 + $0x54] sm:$0xff]
      %v1192 = vld [vmem:[%s311 + $0x5c] sm:$0xff]
      %v1193 = vld [vmem:[%s311 + $0x64] sm:$0xff]
      %v1194 = vld [vmem:[%s311 + $0x6c] sm:$0xf]
      %v1195 = vld [vmem:[%s311 + $0x70] sm:$0xff]
      %v1196 = vld [vmem:[%s311 + $0x78] sm:$0xff]
      %v1197 = vld [vmem:[%s311 + $0x80] sm:$0xff]
      %v1198 = vld [vmem:[%s311 + $0x88] sm:$0xf]
      %v1199 = vld [vmem:[%s311 + $0x8c] sm:$0xff]
      %v1200 = vld [vmem:[%s311 + $0x94] sm:$0xff]
      %v1201 = vld [vmem:[%s311 + $0x9c] sm:$0xff]
      %v1202 = vld [vmem:[%s311 + $0xa4] sm:$0xf]
      %v1203 = vld [vmem:[%s311 + $0xa8] sm:$0xff]
      %v1204 = vld [vmem:[%s311 + $0xb0] sm:$0xff]
      %v1205 = vld [vmem:[%s311 + $0xb8] sm:$0xff]
      %v1206 = vld [vmem:[%s311 + $0xc0] sm:$0xf]
      %v1207 = vld [vmem:[%s311 + $0xc4] sm:$0xff]
      %v1208 = vld [vmem:[%s311 + $0xcc] sm:$0xff]
      %v1209 = vld [vmem:[%s311 + $0xd4] sm:$0xff]
      %v1210 = vld [vmem:[%s311 + $0xdc] sm:$0xf]
      %v1243 = vunpack.c.l.b16 %v1179
      %v1244 = vunpack.c.h.b16 %v1179
      %v1245 = vunpack.c.l.b16 %v1180
      %v1246 = vunpack.c.h.b16 %v1180
      %v1247 = vunpack.c.l.b16 %v1181
      %v1248 = vunpack.c.h.b16 %v1181
      %v1249 = vunpack.c.l.b16 %v1182
      %v1250 = vunpack.c.l.b16 %v1183
      %v1251 = vunpack.c.h.b16 %v1183
      %v1252 = vunpack.c.l.b16 %v1184
      %v1253 = vunpack.c.h.b16 %v1184
      %v1254 = vunpack.c.l.b16 %v1185
      %v1255 = vunpack.c.h.b16 %v1185
      %v1256 = vunpack.c.l.b16 %v1186
      %v1257 = vunpack.c.l.b16 %v1187
      %v1258 = vunpack.c.h.b16 %v1187
      %v1259 = vunpack.c.l.b16 %v1188
      %v1260 = vunpack.c.h.b16 %v1188
      %v1261 = vunpack.c.l.b16 %v1189
      %v1262 = vunpack.c.h.b16 %v1189
      %v1263 = vunpack.c.l.b16 %v1190
      %v1264 = vunpack.c.l.b16 %v1191
      %v1265 = vunpack.c.h.b16 %v1191
      %v1266 = vunpack.c.l.b16 %v1192
      %v1267 = vunpack.c.h.b16 %v1192
      %v1268 = vunpack.c.l.b16 %v1193
      %v1269 = vunpack.c.h.b16 %v1193
      %v1270 = vunpack.c.l.b16 %v1194
      %v1271 = vunpack.c.l.b16 %v1195
      %v1272 = vunpack.c.h.b16 %v1195
      %v1273 = vunpack.c.l.b16 %v1196
      %v1274 = vunpack.c.h.b16 %v1196
      %v1275 = vunpack.c.l.b16 %v1197
      %v1276 = vunpack.c.h.b16 %v1197
      %v1277 = vunpack.c.l.b16 %v1198
      %v1278 = vunpack.c.l.b16 %v1199
      %v1279 = vunpack.c.h.b16 %v1199
      %v1280 = vunpack.c.l.b16 %v1200
      %v1281 = vunpack.c.h.b16 %v1200
      %v1282 = vunpack.c.l.b16 %v1201
      %v1283 = vunpack.c.h.b16 %v1201
      %v1284 = vunpack.c.l.b16 %v1202
      %v1285 = vunpack.c.l.b16 %v1203
      %v1286 = vunpack.c.h.b16 %v1203
      %v1287 = vunpack.c.l.b16 %v1204
      %v1288 = vunpack.c.h.b16 %v1204
      %v1289 = vunpack.c.l.b16 %v1205
      %v1290 = vunpack.c.h.b16 %v1205
      %v1291 = vunpack.c.l.b16 %v1206
      %v1292 = vunpack.c.l.b16 %v1207
      %v1293 = vunpack.c.h.b16 %v1207
      %v1294 = vunpack.c.l.b16 %v1208
      %v1295 = vunpack.c.h.b16 %v1208
      %v1296 = vunpack.c.l.b16 %v1209
      %v1297 = vunpack.c.h.b16 %v1209
      %v1298 = vunpack.c.l.b16 %v1210
      %v1299 = vpack.c.b16 %v1250, %v1243
      %v1300 = vpack.c.b16 %v1251, %v1244
      %v1301 = vpack.c.b16 %v1252, %v1245
      %v1302 = vpack.c.b16 %v1253, %v1246
      %v1303 = vpack.c.b16 %v1254, %v1247
      %v1304 = vpack.c.b16 %v1255, %v1248
      %v1305 = vpack.c.b16 %v1256, %v1249
      %v1306 = vpack.c.b16 %v1264, %v1257
      %v1307 = vpack.c.b16 %v1265, %v1258
      %v1308 = vpack.c.b16 %v1266, %v1259
      %v1309 = vpack.c.b16 %v1267, %v1260
      %v1310 = vpack.c.b16 %v1268, %v1261
      %v1311 = vpack.c.b16 %v1269, %v1262
      %v1312 = vpack.c.b16 %v1270, %v1263
      %v1313 = vpack.c.b16 %v1278, %v1271
      %v1314 = vpack.c.b16 %v1279, %v1272
      %v1315 = vpack.c.b16 %v1280, %v1273
      %v1316 = vpack.c.b16 %v1281, %v1274
      %v1317 = vpack.c.b16 %v1282, %v1275
      %v1318 = vpack.c.b16 %v1283, %v1276
      %v1319 = vpack.c.b16 %v1284, %v1277
      %v1320 = vpack.c.b16 %v1292, %v1285
      %v1321 = vpack.c.b16 %v1293, %v1286
      %v1322 = vpack.c.b16 %v1294, %v1287
      %v1323 = vpack.c.b16 %v1295, %v1288
      %v1324 = vpack.c.b16 %v1296, %v1289
      %v1325 = vpack.c.b16 %v1297, %v1290
      %v1326 = vpack.c.b16 %v1298, %v1291
      %v1352 = vsel %vm906, %v1305, 0
      %v1355 = vsel %vm906, %v1312, 0
      %v1358 = vsel %vm906, %v1319, 0
      %v1361 = vsel %vm906, %v1326, 0
      %1363 = vmatprep.subr.bf16.mxu0 0
      %1364 = vmatpush1.bf16.msra.mxu0 %v806
      %1365 = vmatprep.subr.bf16.mxu0 0
      %1366 = vmatpush1.bf16.msra.mxu0 %v807
      %1367 = vmatprep.subr.bf16.mxu0 0
      %1368 = vmatpush1.bf16.msra.mxu0 %v808
      %1369 = vmatprep.subr.bf16.mxu0 0
      %1370 = vmatpush1.bf16.msra.mxu0 %v809
      %1371 = vmatprep.subr.bf16.mxu0 0
      %1372 = vmatpush1.bf16.msra.mxu0 %v810
      %1373 = vmatprep.subr.bf16.mxu0 0
      %1374 = vmatpush1.bf16.msra.mxu0 %v811
      %1375 = vmatprep.subr.bf16.mxu0 0
      %1376 = vmatpush1.bf16.msra.mxu0 %v812
      %1377 = vmatprep.subr.bf16.mxu0 0
      %1378 = vmatpush1.bf16.msra.mxu0 %v813
      %1379 = vmatprep.subr.bf16.mxu0 0
      %1380 = vmatpush1.bf16.msra.mxu0 %v814
      %1381 = vmatprep.subr.bf16.mxu0 0
      %1382 = vmatpush1.bf16.msra.mxu0 %v815
      %1383 = vmatprep.subr.bf16.mxu0 0
      %1384 = vmatpush1.bf16.msra.mxu0 %v816
      %1385 = vmatprep.subr.bf16.mxu0 0
      %1386 = vmatpush1.bf16.msra.mxu0 %v817
      %1387 = vmatprep.subr.bf16.mxu0 0
      %1388 = vmatpush1.bf16.msra.mxu0 %v818
      %1389 = vmatprep.subr.bf16.mxu0 0
      %1390 = vmatpush1.bf16.msra.mxu0 %v819
      %1391 = vmatprep.subr.bf16.mxu0 0
      %1392 = vmatpush1.bf16.msra.mxu0 %v820
      %1393 = vmatprep.subr.bf16.mxu0 0
      %1394 = vmatpush1.bf16.msra.mxu0 %v821
      %1395 = vmatprep.mubr.bf16.mxu0 %v1300
      %1396 = vmatmul.mubr.bf16.gmra.mrb[0].mxu0 %v1299
      %v1397 = vpop.f32.mrb[0].mxu0
      %v1398 = vadd.f32 0.0, %v1397
      %v1399 = vpop.f32.mrb[0].mxu0
      %v1400 = vpop.f32.mrb[0].mxu0
      %v1401 = vadd.f32 0.0, %v1400
      %v1402 = vpop.f32.mrb[0].mxu0
      %1403 = vmatprep.mubr.bf16.mxu0 %v1307
      %1404 = vmatmul.mubr.bf16.gmra.mrb[0].mxu0 %v1306
      %v1405 = vpop.f32.mrb[0].mxu0
      %v1406 = vadd.f32 0.0, %v1405
      %v1407 = vpop.f32.mrb[0].mxu0
      %v1408 = vpop.f32.mrb[0].mxu0
      %v1409 = vadd.f32 0.0, %v1408
      %v1410 = vpop.f32.mrb[0].mxu0
      %1411 = vmatprep.mubr.bf16.mxu0 %v1314
      %1412 = vmatmul.mubr.bf16.gmra.mrb[0].mxu0 %v1313
      %v1413 = vpop.f32.mrb[0].mxu0
      %v1414 = vadd.f32 0.0, %v1413
      %v1415 = vpop.f32.mrb[0].mxu0
      %v1416 = vpop.f32.mrb[0].mxu0
      %v1417 = vadd.f32 0.0, %v1416
      %v1418 = vpop.f32.mrb[0].mxu0
      %1419 = vmatprep.mubr.bf16.mxu0 %v1321
      %1420 = vmatmul.mubr.bf16.gmra.mrb[0].mxu0 %v1320
      %v1421 = vpop.f32.mrb[0].mxu0
      %v1422 = vadd.f32 0.0, %v1421
      %v1423 = vpop.f32.mrb[0].mxu0
      %v1424 = vpop.f32.mrb[0].mxu0
      %v1425 = vadd.f32 0.0, %v1424
      %v1426 = vpop.f32.mrb[0].mxu0
      %1427 = vdwg.mxu0
      %1428 = vmatprep.subr.bf16.mxu0 0
      %1429 = vmatpush1.bf16.msra.mxu0 %v822
      %1430 = vmatprep.subr.bf16.mxu0 0
      %1431 = vmatpush1.bf16.msra.mxu0 %v823
      %1432 = vmatprep.subr.bf16.mxu0 0
      %1433 = vmatpush1.bf16.msra.mxu0 %v824
      %1434 = vmatprep.subr.bf16.mxu0 0
      %1435 = vmatpush1.bf16.msra.mxu0 %v825
      %1436 = vmatprep.subr.bf16.mxu0 0
      %1437 = vmatpush1.bf16.msra.mxu0 %v826
      %1438 = vmatprep.subr.bf16.mxu0 0
      %1439 = vmatpush1.bf16.msra.mxu0 %v827
      %1440 = vmatprep.subr.bf16.mxu0 0
      %1441 = vmatpush1.bf16.msra.mxu0 %v828
      %1442 = vmatprep.subr.bf16.mxu0 0
      %1443 = vmatpush1.bf16.msra.mxu0 %v829
      %1444 = vmatprep.subr.bf16.mxu0 0
      %1445 = vmatpush1.bf16.msra.mxu0 %v830
      %1446 = vmatprep.subr.bf16.mxu0 0
      %1447 = vmatpush1.bf16.msra.mxu0 %v831
      %1448 = vmatprep.subr.bf16.mxu0 0
      %1449 = vmatpush1.bf16.msra.mxu0 %v832
      %1450 = vmatprep.subr.bf16.mxu0 0
      %1451 = vmatpush1.bf16.msra.mxu0 %v833
      %1452 = vmatprep.subr.bf16.mxu0 0
      %1453 = vmatpush1.bf16.msra.mxu0 %v834
      %1454 = vmatprep.subr.bf16.mxu0 0
      %1455 = vmatpush1.bf16.msra.mxu0 %v835
      %1456 = vmatprep.subr.bf16.mxu0 0
      %1457 = vmatpush1.bf16.msra.mxu0 %v836
      %1458 = vmatprep.subr.bf16.mxu0 0
      %1459 = vmatpush1.bf16.msra.mxu0 %v837
      %1460 = vmatprep.mubr.bf16.mxu0 %v1302
      %1461 = vmatmul.mubr.bf16.gmra.mrb[0].mxu0 %v1301
      %v1462 = vpop.f32.mrb[0].mxu0
      %v1463 = vadd.f32 %v1398, %v1462
      %v1464 = vpop.f32.mrb[0].mxu0
      %v1465 = vpop.f32.mrb[0].mxu0
      %v1466 = vadd.f32 %v1401, %v1465
      %v1467 = vpop.f32.mrb[0].mxu0
      %1468 = vmatprep.mubr.bf16.mxu0 %v1309
      %1469 = vmatmul.mubr.bf16.gmra.mrb[0].mxu0 %v1308
      %v1470 = vpop.f32.mrb[0].mxu0
      %v1471 = vadd.f32 %v1406, %v1470
      %v1472 = vpop.f32.mrb[0].mxu0
      %v1473 = vpop.f32.mrb[0].mxu0
      %v1474 = vadd.f32 %v1409, %v1473
      %v1475 = vpop.f32.mrb[0].mxu0
      %1476 = vmatprep.mubr.bf16.mxu0 %v1316
      %1477 = vmatmul.mubr.bf16.gmra.mrb[0].mxu0 %v1315
      %v1478 = vpop.f32.mrb[0].mxu0
      %v1479 = vadd.f32 %v1414, %v1478
      %v1480 = vpop.f32.mrb[0].mxu0
      %v1481 = vpop.f32.mrb[0].mxu0
      %v1482 = vadd.f32 %v1417, %v1481
      %v1483 = vpop.f32.mrb[0].mxu0
      %1484 = vmatprep.mubr.bf16.mxu0 %v1323
      %1485 = vmatmul.mubr.bf16.gmra.mrb[0].mxu0 %v1322
      %v1486 = vpop.f32.mrb[0].mxu0
      %v1487 = vadd.f32 %v1422, %v1486
      %v1488 = vpop.f32.mrb[0].mxu0
      %v1489 = vpop.f32.mrb[0].mxu0
      %v1490 = vadd.f32 %v1425, %v1489
      %v1491 = vpop.f32.mrb[0].mxu0
      %1492 = vdwg.mxu0
      %1493 = vmatprep.subr.bf16.mxu0 0
      %1494 = vmatpush1.bf16.msra.mxu0 %v838
      %1495 = vmatprep.subr.bf16.mxu0 0
      %1496 = vmatpush1.bf16.msra.mxu0 %v839
      %1497 = vmatprep.subr.bf16.mxu0 0
      %1498 = vmatpush1.bf16.msra.mxu0 %v840
      %1499 = vmatprep.subr.bf16.mxu0 0
      %1500 = vmatpush1.bf16.msra.mxu0 %v841
      %1501 = vmatprep.subr.bf16.mxu0 0
      %1502 = vmatpush1.bf16.msra.mxu0 %v842
      %1503 = vmatprep.subr.bf16.mxu0 0
      %1504 = vmatpush1.bf16.msra.mxu0 %v843
      %1505 = vmatprep.subr.bf16.mxu0 0
      %1506 = vmatpush1.bf16.msra.mxu0 %v844
      %1507 = vmatprep.subr.bf16.mxu0 0
      %1508 = vmatpush1.bf16.msra.mxu0 %v845
      %1509 = vmatprep.subr.bf16.mxu0 0
      %1510 = vmatpush1.bf16.msra.mxu0 %v846
      %1511 = vmatprep.subr.bf16.mxu0 0
      %1512 = vmatpush1.bf16.msra.mxu0 %v847
      %1513 = vmatprep.subr.bf16.mxu0 0
      %1514 = vmatpush1.bf16.msra.mxu0 %v848
      %1515 = vmatprep.subr.bf16.mxu0 0
      %1516 = vmatpush1.bf16.msra.mxu0 %v849
      %1517 = vmatprep.subr.bf16.mxu0 0
      %1518 = vmatpush1.bf16.msra.mxu0 %v850
      %1519 = vmatprep.subr.bf16.mxu0 0
      %1520 = vmatpush1.bf16.msra.mxu0 %v851
      %1521 = vmatprep.subr.bf16.mxu0 0
      %1522 = vmatpush1.bf16.msra.mxu0 %v852
      %1523 = vmatprep.subr.bf16.mxu0 0
      %1524 = vmatpush1.bf16.msra.mxu0 %v853
      %1525 = vmatprep.mubr.bf16.mxu0 %v1304
      %1526 = vmatmul.mubr.bf16.gmra.mrb[0].mxu0 %v1303
      %v1527 = vpop.f32.mrb[0].mxu0
      %v1528 = vadd.f32 %v1463, %v1527
      %v1529 = vpop.f32.mrb[0].mxu0
      %v1530 = vpop.f32.mrb[0].mxu0
      %v1531 = vadd.f32 %v1466, %v1530
      %v1532 = vpop.f32.mrb[0].mxu0
      %1533 = vmatprep.mubr.bf16.mxu0 %v1311
      %1534 = vmatmul.mubr.bf16.gmra.mrb[0].mxu0 %v1310
      %v1535 = vpop.f32.mrb[0].mxu0
      %v1536 = vadd.f32 %v1471, %v1535
      %v1537 = vpop.f32.mrb[0].mxu0
      %v1538 = vpop.f32.mrb[0].mxu0
      %v1539 = vadd.f32 %v1474, %v1538
      %v1540 = vpop.f32.mrb[0].mxu0
      %1541 = vmatprep.mubr.bf16.mxu0 %v1318
      %1542 = vmatmul.mubr.bf16.gmra.mrb[0].mxu0 %v1317
      %v1543 = vpop.f32.mrb[0].mxu0
      %v1544 = vadd.f32 %v1479, %v1543
      %v1545 = vpop.f32.mrb[0].mxu0
      %v1546 = vpop.f32.mrb[0].mxu0
      %v1547 = vadd.f32 %v1482, %v1546
      %v1548 = vpop.f32.mrb[0].mxu0
      %1549 = vmatprep.mubr.bf16.mxu0 %v1325
      %1550 = vmatmul.mubr.bf16.gmra.mrb[0].mxu0 %v1324
      %v1551 = vpop.f32.mrb[0].mxu0
      %v1552 = vadd.f32 %v1487, %v1551
      %v1553 = vpop.f32.mrb[0].mxu0
      %v1554 = vpop.f32.mrb[0].mxu0
      %v1555 = vadd.f32 %v1490, %v1554
      %v1556 = vpop.f32.mrb[0].mxu0
      %1557 = vdwg.mxu0
      %1558 = vmatprep.subr.bf16.mxu0 0
      %1559 = vmatpush1.bf16.msra.mxu0 %v854
      %1560 = vmatprep.subr.bf16.mxu0 0
      %1561 = vmatpush1.bf16.msra.mxu0 %v855
      %1562 = vmatprep.subr.bf16.mxu0 0
      %1563 = vmatpush1.bf16.msra.mxu0 0
      %1564 = vmatprep.subr.bf16.mxu0 0
      %1565 = vmatpush1.bf16.msra.mxu0 0
      %1566 = vmatprep.subr.bf16.mxu0 0
      %1567 = vmatpush1.bf16.msra.mxu0 0
      %1568 = vmatprep.subr.bf16.mxu0 0
      %1569 = vmatpush1.bf16.msra.mxu0 0
      %1570 = vmatprep.subr.bf16.mxu0 0
      %1571 = vmatpush1.bf16.msra.mxu0 0
      %1572 = vmatprep.subr.bf16.mxu0 0
      %1573 = vmatpush1.bf16.msra.mxu0 0
      %1574 = vmatprep.subr.bf16.mxu0 0
      %1575 = vmatpush1.bf16.msra.mxu0 0
      %1576 = vmatprep.subr.bf16.mxu0 0
      %1577 = vmatpush1.bf16.msra.mxu0 0
      %1578 = vmatprep.subr.bf16.mxu0 0
      %1579 = vmatpush1.bf16.msra.mxu0 0
      %1580 = vmatprep.subr.bf16.mxu0 0
      %1581 = vmatpush1.bf16.msra.mxu0 0
      %1582 = vmatprep.subr.bf16.mxu0 0
      %1583 = vmatpush1.bf16.msra.mxu0 0
      %1584 = vmatprep.subr.bf16.mxu0 0
      %1585 = vmatpush1.bf16.msra.mxu0 0
      %1586 = vmatprep.subr.bf16.mxu0 0
      %1587 = vmatpush1.bf16.msra.mxu0 0
      %1588 = vmatprep.subr.bf16.mxu0 0
      %1589 = vmatpush1.bf16.msra.mxu0 0
      %1590 = vmatprep.mubr.bf16.mxu0 0
      %1591 = vmatmul.mubr.bf16.gmra.mrb[0].mxu0 %v1352
      %v1592 = vpop.f32.mrb[0].mxu0
      %v1593 = vadd.f32 %v1528, %v1592
      %v1594 = vpop.f32.mrb[0].mxu0
      %v1595 = vpop.f32.mrb[0].mxu0
      %v1596 = vadd.f32 %v1531, %v1595
      %v1597 = vpop.f32.mrb[0].mxu0
      %1598 = vmatprep.mubr.bf16.mxu0 0
      %1599 = vmatmul.mubr.bf16.gmra.mrb[0].mxu0 %v1355
      %v1600 = vpop.f32.mrb[0].mxu0
      %v1601 = vadd.f32 %v1536, %v1600
      %v1602 = vpop.f32.mrb[0].mxu0
      %v1603 = vpop.f32.mrb[0].mxu0
      %v1604 = vadd.f32 %v1539, %v1603
      %v1605 = vpop.f32.mrb[0].mxu0
      %1606 = vmatprep.mubr.bf16.mxu0 0
      %1607 = vmatmul.mubr.bf16.gmra.mrb[0].mxu0 %v1358
      %v1608 = vpop.f32.mrb[0].mxu0
      %v1609 = vadd.f32 %v1544, %v1608
      %v1610 = vpop.f32.mrb[0].mxu0
      %v1611 = vpop.f32.mrb[0].mxu0
      %v1612 = vadd.f32 %v1547, %v1611
      %v1613 = vpop.f32.mrb[0].mxu0
      %1614 = vmatprep.mubr.bf16.mxu0 0
      %1615 = vmatmul.mubr.bf16.gmra.mrb[0].mxu0 %v1361
      %v1616 = vpop.f32.mrb[0].mxu0
      %v1617 = vadd.f32 %v1552, %v1616
      %v1618 = vpop.f32.mrb[0].mxu0
      %v1619 = vpop.f32.mrb[0].mxu0
      %v1620 = vadd.f32 %v1555, %v1619
      %v1621 = vpop.f32.mrb[0].mxu0
      %1622 = vdwg.mxu0
      %v1623 = vld [vmem:[%s318] sm:$0xff]
      %v1624 = vld [vmem:[%s318 + $0x8] sm:$0xff]
      %v1625 = vld [vmem:[%s318 + $0x10] sm:$0xff]
      %v1626 = vld [vmem:[%s318 + $0x18] sm:$0xf]
      %v1627 = vld [vmem:[%s318 + $0x1c] sm:$0xff]
      %v1628 = vld [vmem:[%s318 + $0x24] sm:$0xff]
      %v1629 = vld [vmem:[%s318 + $0x2c] sm:$0xff]
      %v1630 = vld [vmem:[%s318 + $0x34] sm:$0xf]
      %v1631 = vld [vmem:[%s318 + $0x38] sm:$0xff]
      %v1632 = vld [vmem:[%s318 + $0x40] sm:$0xff]
      %v1633 = vld [vmem:[%s318 + $0x48] sm:$0xff]
      %v1634 = vld [vmem:[%s318 + $0x50] sm:$0xf]
      %v1635 = vld [vmem:[%s318 + $0x54] sm:$0xff]
      %v1636 = vld [vmem:[%s318 + $0x5c] sm:$0xff]
      %v1637 = vld [vmem:[%s318 + $0x64] sm:$0xff]
      %v1638 = vld [vmem:[%s318 + $0x6c] sm:$0xf]
      %v1639 = vld [vmem:[%s318 + $0x70] sm:$0xff]
      %v1640 = vld [vmem:[%s318 + $0x78] sm:$0xff]
      %v1641 = vld [vmem:[%s318 + $0x80] sm:$0xff]
      %v1642 = vld [vmem:[%s318 + $0x88] sm:$0xf]
      %v1643 = vld [vmem:[%s318 + $0x8c] sm:$0xff]
      %v1644 = vld [vmem:[%s318 + $0x94] sm:$0xff]
      %v1645 = vld [vmem:[%s318 + $0x9c] sm:$0xff]
      %v1646 = vld [vmem:[%s318 + $0xa4] sm:$0xf]
      %v1647 = vld [vmem:[%s318 + $0xa8] sm:$0xff]
      %v1648 = vld [vmem:[%s318 + $0xb0] sm:$0xff]
      %v1649 = vld [vmem:[%s318 + $0xb8] sm:$0xff]
      %v1650 = vld [vmem:[%s318 + $0xc0] sm:$0xf]
      %v1651 = vld [vmem:[%s318 + $0xc4] sm:$0xff]
      %v1652 = vld [vmem:[%s318 + $0xcc] sm:$0xff]
      %v1653 = vld [vmem:[%s318 + $0xd4] sm:$0xff]
      %v1654 = vld [vmem:[%s318 + $0xdc] sm:$0xf]
      %v1687 = vunpack.c.l.b16 %v1623
      %v1688 = vunpack.c.h.b16 %v1623
      %v1689 = vunpack.c.l.b16 %v1624
      %v1690 = vunpack.c.h.b16 %v1624
      %v1691 = vunpack.c.l.b16 %v1625
      %v1692 = vunpack.c.h.b16 %v1625
      %v1693 = vunpack.c.l.b16 %v1626
      %v1694 = vunpack.c.l.b16 %v1627
      %v1695 = vunpack.c.h.b16 %v1627
      %v1696 = vunpack.c.l.b16 %v1628
      %v1697 = vunpack.c.h.b16 %v1628
      %v1698 = vunpack.c.l.b16 %v1629
      %v1699 = vunpack.c.h.b16 %v1629
      %v1700 = vunpack.c.l.b16 %v1630
      %v1701 = vunpack.c.l.b16 %v1631
      %v1702 = vunpack.c.h.b16 %v1631
      %v1703 = vunpack.c.l.b16 %v1632
      %v1704 = vunpack.c.h.b16 %v1632
      %v1705 = vunpack.c.l.b16 %v1633
      %v1706 = vunpack.c.h.b16 %v1633
      %v1707 = vunpack.c.l.b16 %v1634
      %v1708 = vunpack.c.l.b16 %v1635
      %v1709 = vunpack.c.h.b16 %v1635
      %v1710 = vunpack.c.l.b16 %v1636
      %v1711 = vunpack.c.h.b16 %v1636
      %v1712 = vunpack.c.l.b16 %v1637
      %v1713 = vunpack.c.h.b16 %v1637
      %v1714 = vunpack.c.l.b16 %v1638
      %v1715 = vunpack.c.l.b16 %v1639
      %v1716 = vunpack.c.h.b16 %v1639
      %v1717 = vunpack.c.l.b16 %v1640
      %v1718 = vunpack.c.h.b16 %v1640
      %v1719 = vunpack.c.l.b16 %v1641
      %v1720 = vunpack.c.h.b16 %v1641
      %v1721 = vunpack.c.l.b16 %v1642
      %v1722 = vunpack.c.l.b16 %v1643
      %v1723 = vunpack.c.h.b16 %v1643
      %v1724 = vunpack.c.l.b16 %v1644
      %v1725 = vunpack.c.h.b16 %v1644
      %v1726 = vunpack.c.l.b16 %v1645
      %v1727 = vunpack.c.h.b16 %v1645
      %v1728 = vunpack.c.l.b16 %v1646
      %v1729 = vunpack.c.l.b16 %v1647
      %v1730 = vunpack.c.h.b16 %v1647
      %v1731 = vunpack.c.l.b16 %v1648
      %v1732 = vunpack.c.h.b16 %v1648
      %v1733 = vunpack.c.l.b16 %v1649
      %v1734 = vunpack.c.h.b16 %v1649
      %v1735 = vunpack.c.l.b16 %v1650
      %v1736 = vunpack.c.l.b16 %v1651
      %v1737 = vunpack.c.h.b16 %v1651
      %v1738 = vunpack.c.l.b16 %v1652
      %v1739 = vunpack.c.h.b16 %v1652
      %v1740 = vunpack.c.l.b16 %v1653
      %v1741 = vunpack.c.h.b16 %v1653
      %v1742 = vunpack.c.l.b16 %v1654
      %v1743 = vpack.c.b16 %v1694, %v1687
      %v1744 = vpack.c.b16 %v1695, %v1688
      %v1745 = vpack.c.b16 %v1696, %v1689
      %v1746 = vpack.c.b16 %v1697, %v1690
      %v1747 = vpack.c.b16 %v1698, %v1691
      %v1748 = vpack.c.b16 %v1699, %v1692
      %v1749 = vpack.c.b16 %v1700, %v1693
      %v1750 = vpack.c.b16 %v1708, %v1701
      %v1751 = vpack.c.b16 %v1709, %v1702
      %v1752 = vpack.c.b16 %v1710, %v1703
      %v1753 = vpack.c.b16 %v1711, %v1704
      %v1754 = vpack.c.b16 %v1712, %v1705
      %v1755 = vpack.c.b16 %v1713, %v1706
      %v1756 = vpack.c.b16 %v1714, %v1707
      %v1757 = vpack.c.b16 %v1722, %v1715
      %v1758 = vpack.c.b16 %v1723, %v1716
      %v1759 = vpack.c.b16 %v1724, %v1717
      %v1760 = vpack.c.b16 %v1725, %v1718
      %v1761 = vpack.c.b16 %v1726, %v1719
      %v1762 = vpack.c.b16 %v1727, %v1720
      %v1763 = vpack.c.b16 %v1728, %v1721
      %v1764 = vpack.c.b16 %v1736, %v1729
      %v1765 = vpack.c.b16 %v1737, %v1730
      %v1766 = vpack.c.b16 %v1738, %v1731
      %v1767 = vpack.c.b16 %v1739, %v1732
      %v1768 = vpack.c.b16 %v1740, %v1733
      %v1769 = vpack.c.b16 %v1741, %v1734
      %v1770 = vpack.c.b16 %v1742, %v1735
      %v1796 = vsel %vm906, %v1749, 0
      %v1799 = vsel %vm906, %v1756, 0
      %v1802 = vsel %vm906, %v1763, 0
      %v1805 = vsel %vm906, %v1770, 0
      %1807 = vmatprep.subr.bf16.mxu0 0
      %1808 = vmatpush1.bf16.msra.mxu0 %v806
      %1809 = vmatprep.subr.bf16.mxu0 0
      %1810 = vmatpush1.bf16.msra.mxu0 %v807
      %1811 = vmatprep.subr.bf16.mxu0 0
      %1812 = vmatpush1.bf16.msra.mxu0 %v808
      %1813 = vmatprep.subr.bf16.mxu0 0
      %1814 = vmatpush1.bf16.msra.mxu0 %v809
      %1815 = vmatprep.subr.bf16.mxu0 0
      %1816 = vmatpush1.bf16.msra.mxu0 %v810
      %1817 = vmatprep.subr.bf16.mxu0 0
      %1818 = vmatpush1.bf16.msra.mxu0 %v811
      %1819 = vmatprep.subr.bf16.mxu0 0
      %1820 = vmatpush1.bf16.msra.mxu0 %v812
      %1821 = vmatprep.subr.bf16.mxu0 0
      %1822 = vmatpush1.bf16.msra.mxu0 %v813
      %1823 = vmatprep.subr.bf16.mxu0 0
      %1824 = vmatpush1.bf16.msra.mxu0 %v814
      %1825 = vmatprep.subr.bf16.mxu0 0
      %1826 = vmatpush1.bf16.msra.mxu0 %v815
      %1827 = vmatprep.subr.bf16.mxu0 0
      %1828 = vmatpush1.bf16.msra.mxu0 %v816
      %1829 = vmatprep.subr.bf16.mxu0 0
      %1830 = vmatpush1.bf16.msra.mxu0 %v817
      %1831 = vmatprep.subr.bf16.mxu0 0
      %1832 = vmatpush1.bf16.msra.mxu0 %v818
      %1833 = vmatprep.subr.bf16.mxu0 0
      %1834 = vmatpush1.bf16.msra.mxu0 %v819
      %1835 = vmatprep.subr.bf16.mxu0 0
      %1836 = vmatpush1.bf16.msra.mxu0 %v820
      %1837 = vmatprep.subr.bf16.mxu0 0
      %1838 = vmatpush1.bf16.msra.mxu0 %v821
      %1839 = vmatprep.mubr.bf16.mxu0 %v1744
      %1840 = vmatmul.mubr.bf16.gmra.mrb[0].mxu0 %v1743
      %v1841 = vpop.f32.mrb[0].mxu0
      %v1842 = vadd.f32 0.0, %v1841
      %v1843 = vpop.f32.mrb[0].mxu0
      %v1844 = vpop.f32.mrb[0].mxu0
      %v1845 = vadd.f32 0.0, %v1844
      %v1846 = vpop.f32.mrb[0].mxu0
      %1847 = vmatprep.mubr.bf16.mxu0 %v1751
      %1848 = vmatmul.mubr.bf16.gmra.mrb[0].mxu0 %v1750
      %v1849 = vpop.f32.mrb[0].mxu0
      %v1850 = vadd.f32 0.0, %v1849
      %v1851 = vpop.f32.mrb[0].mxu0
      %v1852 = vpop.f32.mrb[0].mxu0
      %v1853 = vadd.f32 0.0, %v1852
      %v1854 = vpop.f32.mrb[0].mxu0
      %1855 = vmatprep.mubr.bf16.mxu0 %v1758
      %1856 = vmatmul.mubr.bf16.gmra.mrb[0].mxu0 %v1757
      %v1857 = vpop.f32.mrb[0].mxu0
      %v1858 = vadd.f32 0.0, %v1857
      %v1859 = vpop.f32.mrb[0].mxu0
      %v1860 = vpop.f32.mrb[0].mxu0
      %v1861 = vadd.f32 0.0, %v1860
      %v1862 = vpop.f32.mrb[0].mxu0
      %1863 = vmatprep.mubr.bf16.mxu0 %v1765
      %1864 = vmatmul.mubr.bf16.gmra.mrb[0].mxu0 %v1764
      %v1865 = vpop.f32.mrb[0].mxu0
      %v1866 = vadd.f32 0.0, %v1865
      %v1867 = vpop.f32.mrb[0].mxu0
      %v1868 = vpop.f32.mrb[0].mxu0
      %v1869 = vadd.f32 0.0, %v1868
      %v1870 = vpop.f32.mrb[0].mxu0
      %1871 = vdwg.mxu0
      %1872 = vmatprep.subr.bf16.mxu0 0
      %1873 = vmatpush1.bf16.msra.mxu0 %v822
      %1874 = vmatprep.subr.bf16.mxu0 0
      %1875 = vmatpush1.bf16.msra.mxu0 %v823
      %1876 = vmatprep.subr.bf16.mxu0 0
      %1877 = vmatpush1.bf16.msra.mxu0 %v824
      %1878 = vmatprep.subr.bf16.mxu0 0
      %1879 = vmatpush1.bf16.msra.mxu0 %v825
      %1880 = vmatprep.subr.bf16.mxu0 0
      %1881 = vmatpush1.bf16.msra.mxu0 %v826
      %1882 = vmatprep.subr.bf16.mxu0 0
      %1883 = vmatpush1.bf16.msra.mxu0 %v827
      %1884 = vmatprep.subr.bf16.mxu0 0
      %1885 = vmatpush1.bf16.msra.mxu0 %v828
      %1886 = vmatprep.subr.bf16.mxu0 0
      %1887 = vmatpush1.bf16.msra.mxu0 %v829
      %1888 = vmatprep.subr.bf16.mxu0 0
      %1889 = vmatpush1.bf16.msra.mxu0 %v830
      %1890 = vmatprep.subr.bf16.mxu0 0
      %1891 = vmatpush1.bf16.msra.mxu0 %v831
      %1892 = vmatprep.subr.bf16.mxu0 0
      %1893 = vmatpush1.bf16.msra.mxu0 %v832
      %1894 = vmatprep.subr.bf16.mxu0 0
      %1895 = vmatpush1.bf16.msra.mxu0 %v833
      %1896 = vmatprep.subr.bf16.mxu0 0
      %1897 = vmatpush1.bf16.msra.mxu0 %v834
      %1898 = vmatprep.subr.bf16.mxu0 0
      %1899 = vmatpush1.bf16.msra.mxu0 %v835
      %1900 = vmatprep.subr.bf16.mxu0 0
      %1901 = vmatpush1.bf16.msra.mxu0 %v836
      %1902 = vmatprep.subr.bf16.mxu0 0
      %1903 = vmatpush1.bf16.msra.mxu0 %v837
      %1904 = vmatprep.mubr.bf16.mxu0 %v1746
      %1905 = vmatmul.mubr.bf16.gmra.mrb[0].mxu0 %v1745
      %v1906 = vpop.f32.mrb[0].mxu0
      %v1907 = vadd.f32 %v1842, %v1906
      %v1908 = vpop.f32.mrb[0].mxu0
      %v1909 = vpop.f32.mrb[0].mxu0
      %v1910 = vadd.f32 %v1845, %v1909
      %v1911 = vpop.f32.mrb[0].mxu0
      %1912 = vmatprep.mubr.bf16.mxu0 %v1753
      %1913 = vmatmul.mubr.bf16.gmra.mrb[0].mxu0 %v1752
      %v1914 = vpop.f32.mrb[0].mxu0
      %v1915 = vadd.f32 %v1850, %v1914
      %v1916 = vpop.f32.mrb[0].mxu0
      %v1917 = vpop.f32.mrb[0].mxu0
      %v1918 = vadd.f32 %v1853, %v1917
      %v1919 = vpop.f32.mrb[0].mxu0
      %1920 = vmatprep.mubr.bf16.mxu0 %v1760
      %1921 = vmatmul.mubr.bf16.gmra.mrb[0].mxu0 %v1759
      %v1922 = vpop.f32.mrb[0].mxu0
      %v1923 = vadd.f32 %v1858, %v1922
      %v1924 = vpop.f32.mrb[0].mxu0
      %v1925 = vpop.f32.mrb[0].mxu0
      %v1926 = vadd.f32 %v1861, %v1925
      %v1927 = vpop.f32.mrb[0].mxu0
      %1928 = vmatprep.mubr.bf16.mxu0 %v1767
      %1929 = vmatmul.mubr.bf16.gmra.mrb[0].mxu0 %v1766
      %v1930 = vpop.f32.mrb[0].mxu0
      %v1931 = vadd.f32 %v1866, %v1930
      %v1932 = vpop.f32.mrb[0].mxu0
      %v1933 = vpop.f32.mrb[0].mxu0
      %v1934 = vadd.f32 %v1869, %v1933
      %v1935 = vpop.f32.mrb[0].mxu0
      %1936 = vdwg.mxu0
      %1937 = vmatprep.subr.bf16.mxu0 0
      %1938 = vmatpush1.bf16.msra.mxu0 %v838
      %1939 = vmatprep.subr.bf16.mxu0 0
      %1940 = vmatpush1.bf16.msra.mxu0 %v839
      %1941 = vmatprep.subr.bf16.mxu0 0
      %1942 = vmatpush1.bf16.msra.mxu0 %v840
      %1943 = vmatprep.subr.bf16.mxu0 0
      %1944 = vmatpush1.bf16.msra.mxu0 %v841
      %1945 = vmatprep.subr.bf16.mxu0 0
      %1946 = vmatpush1.bf16.msra.mxu0 %v842
      %1947 = vmatprep.subr.bf16.mxu0 0
      %1948 = vmatpush1.bf16.msra.mxu0 %v843
      %1949 = vmatprep.subr.bf16.mxu0 0
      %1950 = vmatpush1.bf16.msra.mxu0 %v844
      %1951 = vmatprep.subr.bf16.mxu0 0
      %1952 = vmatpush1.bf16.msra.mxu0 %v845
      %1953 = vmatprep.subr.bf16.mxu0 0
      %1954 = vmatpush1.bf16.msra.mxu0 %v846
      %1955 = vmatprep.subr.bf16.mxu0 0
      %1956 = vmatpush1.bf16.msra.mxu0 %v847
      %1957 = vmatprep.subr.bf16.mxu0 0
      %1958 = vmatpush1.bf16.msra.mxu0 %v848
      %1959 = vmatprep.subr.bf16.mxu0 0
      %1960 = vmatpush1.bf16.msra.mxu0 %v849
      %1961 = vmatprep.subr.bf16.mxu0 0
      %1962 = vmatpush1.bf16.msra.mxu0 %v850
      %1963 = vmatprep.subr.bf16.mxu0 0
      %1964 = vmatpush1.bf16.msra.mxu0 %v851
      %1965 = vmatprep.subr.bf16.mxu0 0
      %1966 = vmatpush1.bf16.msra.mxu0 %v852
      %1967 = vmatprep.subr.bf16.mxu0 0
      %1968 = vmatpush1.bf16.msra.mxu0 %v853
      %1969 = vmatprep.mubr.bf16.mxu0 %v1748
      %1970 = vmatmul.mubr.bf16.gmra.mrb[0].mxu0 %v1747
      %v1971 = vpop.f32.mrb[0].mxu0
      %v1972 = vadd.f32 %v1907, %v1971
      %v1973 = vpop.f32.mrb[0].mxu0
      %v1974 = vpop.f32.mrb[0].mxu0
      %v1975 = vadd.f32 %v1910, %v1974
      %v1976 = vpop.f32.mrb[0].mxu0
      %1977 = vmatprep.mubr.bf16.mxu0 %v1755
      %1978 = vmatmul.mubr.bf16.gmra.mrb[0].mxu0 %v1754
      %v1979 = vpop.f32.mrb[0].mxu0
      %v1980 = vadd.f32 %v1915, %v1979
      %v1981 = vpop.f32.mrb[0].mxu0
      %v1982 = vpop.f32.mrb[0].mxu0
      %v1983 = vadd.f32 %v1918, %v1982
      %v1984 = vpop.f32.mrb[0].mxu0
      %1985 = vmatprep.mubr.bf16.mxu0 %v1762
      %1986 = vmatmul.mubr.bf16.gmra.mrb[0].mxu0 %v1761
      %v1987 = vpop.f32.mrb[0].mxu0
      %v1988 = vadd.f32 %v1923, %v1987
      %v1989 = vpop.f32.mrb[0].mxu0
      %v1990 = vpop.f32.mrb[0].mxu0
      %v1991 = vadd.f32 %v1926, %v1990
      %v1992 = vpop.f32.mrb[0].mxu0
      %1993 = vmatprep.mubr.bf16.mxu0 %v1769
      %1994 = vmatmul.mubr.bf16.gmra.mrb[0].mxu0 %v1768
      %v1995 = vpop.f32.mrb[0].mxu0
      %v1996 = vadd.f32 %v1931, %v1995
      %v1997 = vpop.f32.mrb[0].mxu0
      %v1998 = vpop.f32.mrb[0].mxu0
      %v1999 = vadd.f32 %v1934, %v1998
      %v2000 = vpop.f32.mrb[0].mxu0
      %2001 = vdwg.mxu0
      %2002 = vmatprep.subr.bf16.mxu0 0
      %2003 = vmatpush1.bf16.msra.mxu0 %v854
      %2004 = vmatprep.subr.bf16.mxu0 0
      %2005 = vmatpush1.bf16.msra.mxu0 %v855
      %2006 = vmatprep.subr.bf16.mxu0 0
      %2007 = vmatpush1.bf16.msra.mxu0 0
      %2008 = vmatprep.subr.bf16.mxu0 0
      %2009 = vmatpush1.bf16.msra.mxu0 0
      %2010 = vmatprep.subr.bf16.mxu0 0
      %2011 = vmatpush1.bf16.msra.mxu0 0
      %2012 = vmatprep.subr.bf16.mxu0 0
      %2013 = vmatpush1.bf16.msra.mxu0 0
      %2014 = vmatprep.subr.bf16.mxu0 0
      %2015 = vmatpush1.bf16.msra.mxu0 0
      %2016 = vmatprep.subr.bf16.mxu0 0
      %2017 = vmatpush1.bf16.msra.mxu0 0
      %2018 = vmatprep.subr.bf16.mxu0 0
      %2019 = vmatpush1.bf16.msra.mxu0 0
      %2020 = vmatprep.subr.bf16.mxu0 0
      %2021 = vmatpush1.bf16.msra.mxu0 0
      %2022 = vmatprep.subr.bf16.mxu0 0
      %2023 = vmatpush1.bf16.msra.mxu0 0
      %2024 = vmatprep.subr.bf16.mxu0 0
      %2025 = vmatpush1.bf16.msra.mxu0 0
      %2026 = vmatprep.subr.bf16.mxu0 0
      %2027 = vmatpush1.bf16.msra.mxu0 0
      %2028 = vmatprep.subr.bf16.mxu0 0
      %2029 = vmatpush1.bf16.msra.mxu0 0
      %2030 = vmatprep.subr.bf16.mxu0 0
      %2031 = vmatpush1.bf16.msra.mxu0 0
      %2032 = vmatprep.subr.bf16.mxu0 0
      %2033 = vmatpush1.bf16.msra.mxu0 0
      %2034 = vmatprep.mubr.bf16.mxu0 0
      %2035 = vmatmul.mubr.bf16.gmra.mrb[0].mxu0 %v1796
      %v2036 = vpop.f32.mrb[0].mxu0
      %v2037 = vadd.f32 %v1972, %v2036
      %v2038 = vpop.f32.mrb[0].mxu0
      %v2039 = vpop.f32.mrb[0].mxu0
      %v2040 = vadd.f32 %v1975, %v2039
      %v2041 = vpop.f32.mrb[0].mxu0
      %2042 = vmatprep.mubr.bf16.mxu0 0
      %2043 = vmatmul.mubr.bf16.gmra.mrb[0].mxu0 %v1799
      %v2044 = vpop.f32.mrb[0].mxu0
      %v2045 = vadd.f32 %v1980, %v2044
      %v2046 = vpop.f32.mrb[0].mxu0
      %v2047 = vpop.f32.mrb[0].mxu0
      %v2048 = vadd.f32 %v1983, %v2047
      %v2049 = vpop.f32.mrb[0].mxu0
      %2050 = vmatprep.mubr.bf16.mxu0 0
      %2051 = vmatmul.mubr.bf16.gmra.mrb[0].mxu0 %v1802
      %v2052 = vpop.f32.mrb[0].mxu0
      %v2053 = vadd.f32 %v1988, %v2052
      %v2054 = vpop.f32.mrb[0].mxu0
      %v2055 = vpop.f32.mrb[0].mxu0
      %v2056 = vadd.f32 %v1991, %v2055
      %v2057 = vpop.f32.mrb[0].mxu0
      %2058 = vmatprep.mubr.bf16.mxu0 0
      %2059 = vmatmul.mubr.bf16.gmra.mrb[0].mxu0 %v1805
      %v2060 = vpop.f32.mrb[0].mxu0
      %v2061 = vadd.f32 %v1996, %v2060
      %v2062 = vpop.f32.mrb[0].mxu0
      %v2063 = vpop.f32.mrb[0].mxu0
      %v2064 = vadd.f32 %v1999, %v2063
      %v2065 = vpop.f32.mrb[0].mxu0
      %2066 = vdwg.mxu0
      %v2067 = vld [vmem:[%s325] sm:$0xff]
      %v2068 = vld [vmem:[%s325 + $0x8] sm:$0xff]
      %v2069 = vld [vmem:[%s325 + $0x10] sm:$0xff]
      %v2070 = vld [vmem:[%s325 + $0x18] sm:$0xf]
      %v2071 = vld [vmem:[%s325 + $0x1c] sm:$0xff]
      %v2072 = vld [vmem:[%s325 + $0x24] sm:$0xff]
      %v2073 = vld [vmem:[%s325 + $0x2c] sm:$0xff]
      %v2074 = vld [vmem:[%s325 + $0x34] sm:$0xf]
      %v2075 = vld [vmem:[%s325 + $0x38] sm:$0xff]
      %v2076 = vld [vmem:[%s325 + $0x40] sm:$0xff]
      %v2077 = vld [vmem:[%s325 + $0x48] sm:$0xff]
      %v2078 = vld [vmem:[%s325 + $0x50] sm:$0xf]
      %v2079 = vld [vmem:[%s325 + $0x54] sm:$0xff]
      %v2080 = vld [vmem:[%s325 + $0x5c] sm:$0xff]
      %v2081 = vld [vmem:[%s325 + $0x64] sm:$0xff]
      %v2082 = vld [vmem:[%s325 + $0x6c] sm:$0xf]
      %v2083 = vld [vmem:[%s325 + $0x70] sm:$0xff]
      %v2084 = vld [vmem:[%s325 + $0x78] sm:$0xff]
      %v2085 = vld [vmem:[%s325 + $0x80] sm:$0xff]
      %v2086 = vld [vmem:[%s325 + $0x88] sm:$0xf]
      %v2087 = vld [vmem:[%s325 + $0x8c] sm:$0xff]
      %v2088 = vld [vmem:[%s325 + $0x94] sm:$0xff]
      %v2089 = vld [vmem:[%s325 + $0x9c] sm:$0xff]
      %v2090 = vld [vmem:[%s325 + $0xa4] sm:$0xf]
      %v2091 = vld [vmem:[%s325 + $0xa8] sm:$0xff]
      %v2092 = vld [vmem:[%s325 + $0xb0] sm:$0xff]
      %v2093 = vld [vmem:[%s325 + $0xb8] sm:$0xff]
      %v2094 = vld [vmem:[%s325 + $0xc0] sm:$0xf]
      %v2095 = vld [vmem:[%s325 + $0xc4] sm:$0xff]
      %v2096 = vld [vmem:[%s325 + $0xcc] sm:$0xff]
      %v2097 = vld [vmem:[%s325 + $0xd4] sm:$0xff]
      %v2098 = vld [vmem:[%s325 + $0xdc] sm:$0xf]
      %v2131 = vunpack.c.l.b16 %v2067
      %v2132 = vunpack.c.h.b16 %v2067
      %v2133 = vunpack.c.l.b16 %v2068
      %v2134 = vunpack.c.h.b16 %v2068
      %v2135 = vunpack.c.l.b16 %v2069
      %v2136 = vunpack.c.h.b16 %v2069
      %v2137 = vunpack.c.l.b16 %v2070
      %v2138 = vunpack.c.l.b16 %v2071
      %v2139 = vunpack.c.h.b16 %v2071
      %v2140 = vunpack.c.l.b16 %v2072
      %v2141 = vunpack.c.h.b16 %v2072
      %v2142 = vunpack.c.l.b16 %v2073
      %v2143 = vunpack.c.h.b16 %v2073
      %v2144 = vunpack.c.l.b16 %v2074
      %v2145 = vunpack.c.l.b16 %v2075
      %v2146 = vunpack.c.h.b16 %v2075
      %v2147 = vunpack.c.l.b16 %v2076
      %v2148 = vunpack.c.h.b16 %v2076
      %v2149 = vunpack.c.l.b16 %v2077
      %v2150 = vunpack.c.h.b16 %v2077
      %v2151 = vunpack.c.l.b16 %v2078
      %v2152 = vunpack.c.l.b16 %v2079
      %v2153 = vunpack.c.h.b16 %v2079
      %v2154 = vunpack.c.l.b16 %v2080
      %v2155 = vunpack.c.h.b16 %v2080
      %v2156 = vunpack.c.l.b16 %v2081
      %v2157 = vunpack.c.h.b16 %v2081
      %v2158 = vunpack.c.l.b16 %v2082
      %v2159 = vunpack.c.l.b16 %v2083
      %v2160 = vunpack.c.h.b16 %v2083
      %v2161 = vunpack.c.l.b16 %v2084
      %v2162 = vunpack.c.h.b16 %v2084
      %v2163 = vunpack.c.l.b16 %v2085
      %v2164 = vunpack.c.h.b16 %v2085
      %v2165 = vunpack.c.l.b16 %v2086
      %v2166 = vunpack.c.l.b16 %v2087
      %v2167 = vunpack.c.h.b16 %v2087
      %v2168 = vunpack.c.l.b16 %v2088
      %v2169 = vunpack.c.h.b16 %v2088
      %v2170 = vunpack.c.l.b16 %v2089
      %v2171 = vunpack.c.h.b16 %v2089
      %v2172 = vunpack.c.l.b16 %v2090
      %v2173 = vunpack.c.l.b16 %v2091
      %v2174 = vunpack.c.h.b16 %v2091
      %v2175 = vunpack.c.l.b16 %v2092
      %v2176 = vunpack.c.h.b16 %v2092
      %v2177 = vunpack.c.l.b16 %v2093
      %v2178 = vunpack.c.h.b16 %v2093
      %v2179 = vunpack.c.l.b16 %v2094
      %v2180 = vunpack.c.l.b16 %v2095
      %v2181 = vunpack.c.h.b16 %v2095
      %v2182 = vunpack.c.l.b16 %v2096
      %v2183 = vunpack.c.h.b16 %v2096
      %v2184 = vunpack.c.l.b16 %v2097
      %v2185 = vunpack.c.h.b16 %v2097
      %v2186 = vunpack.c.l.b16 %v2098
      %v2187 = vpack.c.b16 %v2138, %v2131
      %v2188 = vpack.c.b16 %v2139, %v2132
      %v2189 = vpack.c.b16 %v2140, %v2133
      %v2190 = vpack.c.b16 %v2141, %v2134
      %v2191 = vpack.c.b16 %v2142, %v2135
      %v2192 = vpack.c.b16 %v2143, %v2136
      %v2193 = vpack.c.b16 %v2144, %v2137
      %v2194 = vpack.c.b16 %v2152, %v2145
      %v2195 = vpack.c.b16 %v2153, %v2146
      %v2196 = vpack.c.b16 %v2154, %v2147
      %v2197 = vpack.c.b16 %v2155, %v2148
      %v2198 = vpack.c.b16 %v2156, %v2149
      %v2199 = vpack.c.b16 %v2157, %v2150
      %v2200 = vpack.c.b16 %v2158, %v2151
      %v2201 = vpack.c.b16 %v2166, %v2159
      %v2202 = vpack.c.b16 %v2167, %v2160
      %v2203 = vpack.c.b16 %v2168, %v2161
      %v2204 = vpack.c.b16 %v2169, %v2162
      %v2205 = vpack.c.b16 %v2170, %v2163
      %v2206 = vpack.c.b16 %v2171, %v2164
      %v2207 = vpack.c.b16 %v2172, %v2165
      %v2208 = vpack.c.b16 %v2180, %v2173
      %v2209 = vpack.c.b16 %v2181, %v2174
      %v2210 = vpack.c.b16 %v2182, %v2175
      %v2211 = vpack.c.b16 %v2183, %v2176
      %v2212 = vpack.c.b16 %v2184, %v2177
      %v2213 = vpack.c.b16 %v2185, %v2178
      %v2214 = vpack.c.b16 %v2186, %v2179
      %v2240 = vsel %vm906, %v2193, 0
      %v2243 = vsel %vm906, %v2200, 0
      %v2246 = vsel %vm906, %v2207, 0
      %v2249 = vsel %vm906, %v2214, 0
      %2251 = vmatprep.subr.bf16.mxu0 0
      %2252 = vmatpush1.bf16.msra.mxu0 %v806
      %2253 = vmatprep.subr.bf16.mxu0 0
      %2254 = vmatpush1.bf16.msra.mxu0 %v807
      %2255 = vmatprep.subr.bf16.mxu0 0
      %2256 = vmatpush1.bf16.msra.mxu0 %v808
      %2257 = vmatprep.subr.bf16.mxu0 0
      %2258 = vmatpush1.bf16.msra.mxu0 %v809
      %2259 = vmatprep.subr.bf16.mxu0 0
      %2260 = vmatpush1.bf16.msra.mxu0 %v810
      %2261 = vmatprep.subr.bf16.mxu0 0
      %2262 = vmatpush1.bf16.msra.mxu0 %v811
      %2263 = vmatprep.subr.bf16.mxu0 0
      %2264 = vmatpush1.bf16.msra.mxu0 %v812
      %2265 = vmatprep.subr.bf16.mxu0 0
      %2266 = vmatpush1.bf16.msra.mxu0 %v813
      %2267 = vmatprep.subr.bf16.mxu0 0
      %2268 = vmatpush1.bf16.msra.mxu0 %v814
      %2269 = vmatprep.subr.bf16.mxu0 0
      %2270 = vmatpush1.bf16.msra.mxu0 %v815
      %2271 = vmatprep.subr.bf16.mxu0 0
      %2272 = vmatpush1.bf16.msra.mxu0 %v816
      %2273 = vmatprep.subr.bf16.mxu0 0
      %2274 = vmatpush1.bf16.msra.mxu0 %v817
      %2275 = vmatprep.subr.bf16.mxu0 0
      %2276 = vmatpush1.bf16.msra.mxu0 %v818
      %2277 = vmatprep.subr.bf16.mxu0 0
      %2278 = vmatpush1.bf16.msra.mxu0 %v819
      %2279 = vmatprep.subr.bf16.mxu0 0
      %2280 = vmatpush1.bf16.msra.mxu0 %v820
      %2281 = vmatprep.subr.bf16.mxu0 0
      %2282 = vmatpush1.bf16.msra.mxu0 %v821
      %2283 = vmatprep.mubr.bf16.mxu0 %v2188
      %2284 = vmatmul.mubr.bf16.gmra.mrb[0].mxu0 %v2187
      %v2285 = vpop.f32.mrb[0].mxu0
      %v2286 = vadd.f32 0.0, %v2285
      %v2287 = vpop.f32.mrb[0].mxu0
      %v2288 = vpop.f32.mrb[0].mxu0
      %v2289 = vadd.f32 0.0, %v2288
      %v2290 = vpop.f32.mrb[0].mxu0
      %2291 = vmatprep.mubr.bf16.mxu0 %v2195
      %2292 = vmatmul.mubr.bf16.gmra.mrb[0].mxu0 %v2194
      %v2293 = vpop.f32.mrb[0].mxu0
      %v2294 = vadd.f32 0.0, %v2293
      %v2295 = vpop.f32.mrb[0].mxu0
      %v2296 = vpop.f32.mrb[0].mxu0
      %v2297 = vadd.f32 0.0, %v2296
      %v2298 = vpop.f32.mrb[0].mxu0
      %2299 = vmatprep.mubr.bf16.mxu0 %v2202
      %2300 = vmatmul.mubr.bf16.gmra.mrb[0].mxu0 %v2201
      %v2301 = vpop.f32.mrb[0].mxu0
      %v2302 = vadd.f32 0.0, %v2301
      %v2303 = vpop.f32.mrb[0].mxu0
      %v2304 = vpop.f32.mrb[0].mxu0
      %v2305 = vadd.f32 0.0, %v2304
      %v2306 = vpop.f32.mrb[0].mxu0
      %2307 = vmatprep.mubr.bf16.mxu0 %v2209
      %2308 = vmatmul.mubr.bf16.gmra.mrb[0].mxu0 %v2208
      %v2309 = vpop.f32.mrb[0].mxu0
      %v2310 = vadd.f32 0.0, %v2309
      %v2311 = vpop.f32.mrb[0].mxu0
      %v2312 = vpop.f32.mrb[0].mxu0
      %v2313 = vadd.f32 0.0, %v2312
      %v2314 = vpop.f32.mrb[0].mxu0
      %2315 = vdwg.mxu0
      %2316 = vmatprep.subr.bf16.mxu0 0
      %2317 = vmatpush1.bf16.msra.mxu0 %v822
      %2318 = vmatprep.subr.bf16.mxu0 0
      %2319 = vmatpush1.bf16.msra.mxu0 %v823
      %2320 = vmatprep.subr.bf16.mxu0 0
      %2321 = vmatpush1.bf16.msra.mxu0 %v824
      %2322 = vmatprep.subr.bf16.mxu0 0
      %2323 = vmatpush1.bf16.msra.mxu0 %v825
      %2324 = vmatprep.subr.bf16.mxu0 0
      %2325 = vmatpush1.bf16.msra.mxu0 %v826
      %2326 = vmatprep.subr.bf16.mxu0 0
      %2327 = vmatpush1.bf16.msra.mxu0 %v827
      %2328 = vmatprep.subr.bf16.mxu0 0
      %2329 = vmatpush1.bf16.msra.mxu0 %v828
      %2330 = vmatprep.subr.bf16.mxu0 0
      %2331 = vmatpush1.bf16.msra.mxu0 %v829
      %2332 = vmatprep.subr.bf16.mxu0 0
      %2333 = vmatpush1.bf16.msra.mxu0 %v830
      %2334 = vmatprep.subr.bf16.mxu0 0
      %2335 = vmatpush1.bf16.msra.mxu0 %v831
      %2336 = vmatprep.subr.bf16.mxu0 0
      %2337 = vmatpush1.bf16.msra.mxu0 %v832
      %2338 = vmatprep.subr.bf16.mxu0 0
      %2339 = vmatpush1.bf16.msra.mxu0 %v833
      %2340 = vmatprep.subr.bf16.mxu0 0
      %2341 = vmatpush1.bf16.msra.mxu0 %v834
      %2342 = vmatprep.subr.bf16.mxu0 0
      %2343 = vmatpush1.bf16.msra.mxu0 %v835
      %2344 = vmatprep.subr.bf16.mxu0 0
      %2345 = vmatpush1.bf16.msra.mxu0 %v836
      %2346 = vmatprep.subr.bf16.mxu0 0
      %2347 = vmatpush1.bf16.msra.mxu0 %v837
      %2348 = vmatprep.mubr.bf16.mxu0 %v2190
      %2349 = vmatmul.mubr.bf16.gmra.mrb[0].mxu0 %v2189
      %v2350 = vpop.f32.mrb[0].mxu0
      %v2351 = vadd.f32 %v2286, %v2350
      %v2352 = vpop.f32.mrb[0].mxu0
      %v2353 = vpop.f32.mrb[0].mxu0
      %v2354 = vadd.f32 %v2289, %v2353
      %v2355 = vpop.f32.mrb[0].mxu0
      %2356 = vmatprep.mubr.bf16.mxu0 %v2197
      %2357 = vmatmul.mubr.bf16.gmra.mrb[0].mxu0 %v2196
      %v2358 = vpop.f32.mrb[0].mxu0
      %v2359 = vadd.f32 %v2294, %v2358
      %v2360 = vpop.f32.mrb[0].mxu0
      %v2361 = vpop.f32.mrb[0].mxu0
      %v2362 = vadd.f32 %v2297, %v2361
      %v2363 = vpop.f32.mrb[0].mxu0
      %2364 = vmatprep.mubr.bf16.mxu0 %v2204
      %2365 = vmatmul.mubr.bf16.gmra.mrb[0].mxu0 %v2203
      %v2366 = vpop.f32.mrb[0].mxu0
      %v2367 = vadd.f32 %v2302, %v2366
      %v2368 = vpop.f32.mrb[0].mxu0
      %v2369 = vpop.f32.mrb[0].mxu0
      %v2370 = vadd.f32 %v2305, %v2369
      %v2371 = vpop.f32.mrb[0].mxu0
      %2372 = vmatprep.mubr.bf16.mxu0 %v2211
      %2373 = vmatmul.mubr.bf16.gmra.mrb[0].mxu0 %v2210
      %v2374 = vpop.f32.mrb[0].mxu0
      %v2375 = vadd.f32 %v2310, %v2374
      %v2376 = vpop.f32.mrb[0].mxu0
      %v2377 = vpop.f32.mrb[0].mxu0
      %v2378 = vadd.f32 %v2313, %v2377
      %v2379 = vpop.f32.mrb[0].mxu0
      %2380 = vdwg.mxu0
      %2381 = vmatprep.subr.bf16.mxu0 0
      %2382 = vmatpush1.bf16.msra.mxu0 %v838
      %2383 = vmatprep.subr.bf16.mxu0 0
      %2384 = vmatpush1.bf16.msra.mxu0 %v839
      %2385 = vmatprep.subr.bf16.mxu0 0
      %2386 = vmatpush1.bf16.msra.mxu0 %v840
      %2387 = vmatprep.subr.bf16.mxu0 0
      %2388 = vmatpush1.bf16.msra.mxu0 %v841
      %2389 = vmatprep.subr.bf16.mxu0 0
      %2390 = vmatpush1.bf16.msra.mxu0 %v842
      %2391 = vmatprep.subr.bf16.mxu0 0
      %2392 = vmatpush1.bf16.msra.mxu0 %v843
      %2393 = vmatprep.subr.bf16.mxu0 0
      %2394 = vmatpush1.bf16.msra.mxu0 %v844
      %2395 = vmatprep.subr.bf16.mxu0 0
      %2396 = vmatpush1.bf16.msra.mxu0 %v845
      %2397 = vmatprep.subr.bf16.mxu0 0
      %2398 = vmatpush1.bf16.msra.mxu0 %v846
      %2399 = vmatprep.subr.bf16.mxu0 0
      %2400 = vmatpush1.bf16.msra.mxu0 %v847
      %2401 = vmatprep.subr.bf16.mxu0 0
      %2402 = vmatpush1.bf16.msra.mxu0 %v848
      %2403 = vmatprep.subr.bf16.mxu0 0
      %2404 = vmatpush1.bf16.msra.mxu0 %v849
      %2405 = vmatprep.subr.bf16.mxu0 0
      %2406 = vmatpush1.bf16.msra.mxu0 %v850
      %2407 = vmatprep.subr.bf16.mxu0 0
      %2408 = vmatpush1.bf16.msra.mxu0 %v851
      %2409 = vmatprep.subr.bf16.mxu0 0
      %2410 = vmatpush1.bf16.msra.mxu0 %v852
      %2411 = vmatprep.subr.bf16.mxu0 0
      %2412 = vmatpush1.bf16.msra.mxu0 %v853
      %2413 = vmatprep.mubr.bf16.mxu0 %v2192
      %2414 = vmatmul.mubr.bf16.gmra.mrb[0].mxu0 %v2191
      %v2415 = vpop.f32.mrb[0].mxu0
      %v2416 = vadd.f32 %v2351, %v2415
      %v2417 = vpop.f32.mrb[0].mxu0
      %v2418 = vpop.f32.mrb[0].mxu0
      %v2419 = vadd.f32 %v2354, %v2418
      %v2420 = vpop.f32.mrb[0].mxu0
      %2421 = vmatprep.mubr.bf16.mxu0 %v2199
      %2422 = vmatmul.mubr.bf16.gmra.mrb[0].mxu0 %v2198
      %v2423 = vpop.f32.mrb[0].mxu0
      %v2424 = vadd.f32 %v2359, %v2423
      %v2425 = vpop.f32.mrb[0].mxu0
      %v2426 = vpop.f32.mrb[0].mxu0
      %v2427 = vadd.f32 %v2362, %v2426
      %v2428 = vpop.f32.mrb[0].mxu0
      %2429 = vmatprep.mubr.bf16.mxu0 %v2206
      %2430 = vmatmul.mubr.bf16.gmra.mrb[0].mxu0 %v2205
      %v2431 = vpop.f32.mrb[0].mxu0
      %v2432 = vadd.f32 %v2367, %v2431
      %v2433 = vpop.f32.mrb[0].mxu0
      %v2434 = vpop.f32.mrb[0].mxu0
      %v2435 = vadd.f32 %v2370, %v2434
      %v2436 = vpop.f32.mrb[0].mxu0
      %2437 = vmatprep.mubr.bf16.mxu0 %v2213
      %2438 = vmatmul.mubr.bf16.gmra.mrb[0].mxu0 %v2212
      %v2439 = vpop.f32.mrb[0].mxu0
      %v2440 = vadd.f32 %v2375, %v2439
      %v2441 = vpop.f32.mrb[0].mxu0
      %v2442 = vpop.f32.mrb[0].mxu0
      %v2443 = vadd.f32 %v2378, %v2442
      %v2444 = vpop.f32.mrb[0].mxu0
      %2445 = vdwg.mxu0
      %2446 = vmatprep.subr.bf16.mxu0 0
      %2447 = vmatpush1.bf16.msra.mxu0 %v854
      %2448 = vmatprep.subr.bf16.mxu0 0
      %2449 = vmatpush1.bf16.msra.mxu0 %v855
      %2450 = vmatprep.subr.bf16.mxu0 0
      %2451 = vmatpush1.bf16.msra.mxu0 0
      %2452 = vmatprep.subr.bf16.mxu0 0
      %2453 = vmatpush1.bf16.msra.mxu0 0
      %2454 = vmatprep.subr.bf16.mxu0 0
      %2455 = vmatpush1.bf16.msra.mxu0 0
      %2456 = vmatprep.subr.bf16.mxu0 0
      %2457 = vmatpush1.bf16.msra.mxu0 0
      %2458 = vmatprep.subr.bf16.mxu0 0
      %2459 = vmatpush1.bf16.msra.mxu0 0
      %2460 = vmatprep.subr.bf16.mxu0 0
      %2461 = vmatpush1.bf16.msra.mxu0 0
      %2462 = vmatprep.subr.bf16.mxu0 0
      %2463 = vmatpush1.bf16.msra.mxu0 0
      %2464 = vmatprep.subr.bf16.mxu0 0
      %2465 = vmatpush1.bf16.msra.mxu0 0
      %2466 = vmatprep.subr.bf16.mxu0 0
      %2467 = vmatpush1.bf16.msra.mxu0 0
      %2468 = vmatprep.subr.bf16.mxu0 0
      %2469 = vmatpush1.bf16.msra.mxu0 0
      %2470 = vmatprep.subr.bf16.mxu0 0
      %2471 = vmatpush1.bf16.msra.mxu0 0
      %2472 = vmatprep.subr.bf16.mxu0 0
      %2473 = vmatpush1.bf16.msra.mxu0 0
      %2474 = vmatprep.subr.bf16.mxu0 0
      %2475 = vmatpush1.bf16.msra.mxu0 0
      %2476 = vmatprep.subr.bf16.mxu0 0
      %2477 = vmatpush1.bf16.msra.mxu0 0
      %2478 = vmatprep.mubr.bf16.mxu0 0
      %2479 = vmatmul.mubr.bf16.gmra.mrb[0].mxu0 %v2240
      %v2480 = vpop.f32.mrb[0].mxu0
      %v2481 = vadd.f32 %v2416, %v2480
      %v2482 = vpop.f32.mrb[0].mxu0
      %v2483 = vpop.f32.mrb[0].mxu0
      %v2484 = vadd.f32 %v2419, %v2483
      %v2485 = vpop.f32.mrb[0].mxu0
      %2486 = vmatprep.mubr.bf16.mxu0 0
      %2487 = vmatmul.mubr.bf16.gmra.mrb[0].mxu0 %v2243
      %v2488 = vpop.f32.mrb[0].mxu0
      %v2489 = vadd.f32 %v2424, %v2488
      %v2490 = vpop.f32.mrb[0].mxu0
      %v2491 = vpop.f32.mrb[0].mxu0
      %v2492 = vadd.f32 %v2427, %v2491
      %v2493 = vpop.f32.mrb[0].mxu0
      %2494 = vmatprep.mubr.bf16.mxu0 0
      %2495 = vmatmul.mubr.bf16.gmra.mrb[0].mxu0 %v2246
      %v2496 = vpop.f32.mrb[0].mxu0
      %v2497 = vadd.f32 %v2432, %v2496
      %v2498 = vpop.f32.mrb[0].mxu0
      %v2499 = vpop.f32.mrb[0].mxu0
      %v2500 = vadd.f32 %v2435, %v2499
      %v2501 = vpop.f32.mrb[0].mxu0
      %2502 = vmatprep.mubr.bf16.mxu0 0
      %2503 = vmatmul.mubr.bf16.gmra.mrb[0].mxu0 %v2249
      %v2504 = vpop.f32.mrb[0].mxu0
      %v2505 = vadd.f32 %v2440, %v2504
      %v2506 = vpop.f32.mrb[0].mxu0
      %v2507 = vpop.f32.mrb[0].mxu0
      %v2508 = vadd.f32 %v2443, %v2507
      %v2509 = vpop.f32.mrb[0].mxu0
      %2510 = vdwg.mxu0
      %v2511 = vmax.f32 %v1149, %v1593
      %v2512 = vmax.f32 %v1152, %v1596
      %v2513 = vmax.f32 %v1157, %v1601
      %v2514 = vmax.f32 %v1160, %v1604
      %v2515 = vmax.f32 %v1165, %v1609
      %v2516 = vmax.f32 %v1168, %v1612
      %v2517 = vmax.f32 %v1173, %v1617
      %v2518 = vmax.f32 %v1176, %v1620
      %v2519 = vmax.f32 %v2037, %v2481
      %v2520 = vmax.f32 %v2040, %v2484
      %v2521 = vmax.f32 %v2045, %v2489
      %v2522 = vmax.f32 %v2048, %v2492
      %v2523 = vmax.f32 %v2053, %v2497
      %v2524 = vmax.f32 %v2056, %v2500
      %v2525 = vmax.f32 %v2061, %v2505
      %v2526 = vmax.f32 %v2064, %v2508
      %v2527 = vmax.f32 %v2511, %v2519
      %v2528 = vmax.f32 %v2512, %v2520
      %v2529 = vmax.f32 %v2513, %v2521
      %v2530 = vmax.f32 %v2514, %v2522
      %v2531 = vmax.f32 %v2515, %v2523
      %v2532 = vmax.f32 %v2516, %v2524
      %v2533 = vmax.f32 %v2517, %v2525
      %v2534 = vmax.f32 %v2518, %v2526
      %v2535 = vld [vmem:[%s5] sm:$0x1]
      %v2537 = vlaneseq
      %v2538 = vshrl.u32 %v2537, 7
      %v2539 = vsub.s32 0, %v2538
      %v2540 = vrot.slane %v2535, %v2539
      %v2542 = vadd.f32 %v2527, %v2540
      %v2543 = vadd.f32 %v2528, %v2540
      %v2544 = vadd.f32 %v2529, %v2540
      %v2545 = vadd.f32 %v2530, %v2540
      %v2546 = vadd.f32 %v2531, %v2540
      %v2547 = vadd.f32 %v2532, %v2540
      %v2548 = vadd.f32 %v2533, %v2540
      %v2549 = vadd.f32 %v2534, %v2540
      %v2550 = vpack.c.bf16 %v2543, %v2542
      %v2551 = vpack.c.bf16 %v2545, %v2544
      %v2552 = vpack.c.bf16 %v2547, %v2546
      %v2553 = vpack.c.bf16 %v2549, %v2548
      %v2558 = vunpack.c.l.b16 %v2550
      %v2559 = vunpack.c.h.b16 %v2550
      %v2560 = vunpack.c.l.b16 %v2551
      %v2561 = vunpack.c.h.b16 %v2551
      %v2562 = vunpack.c.l.b16 %v2552
      %v2563 = vunpack.c.h.b16 %v2552
      %v2564 = vunpack.c.l.b16 %v2553
      %v2565 = vunpack.c.h.b16 %v2553
      %v2566 = vpack.c.b16 %v2558, %v2558
      %v2567 = vpack.c.b16 %v2559, %v2559
      %v2568 = vpack.c.b16 %v2560, %v2560
      %v2569 = vpack.c.b16 %v2561, %v2561
      %v2570 = vpack.c.b16 %v2562, %v2562
      %v2571 = vpack.c.b16 %v2563, %v2563
      %v2572 = vpack.c.b16 %v2564, %v2564
      %v2573 = vpack.c.b16 %v2565, %v2565
      %2582 = vst [vmem:[%s331] sm:$0xf] %v2566
      %2583 = vst [vmem:[%s331 + $0x4] sm:$0xf] %v2567
      %2584 = vst [vmem:[%s331 + $0x8] sm:$0xf] %v2568
      %2585 = vst [vmem:[%s331 + $0xc] sm:$0xf] %v2569
      %2586 = vst [vmem:[%s331 + $0x10] sm:$0xf] %v2570
      %2587 = vst [vmem:[%s331 + $0x14] sm:$0xf] %v2571
      %2588 = vst [vmem:[%s331 + $0x18] sm:$0xf] %v2572
      %2589 = vst [vmem:[%s331 + $0x1c] sm:$0xf] %v2573
      %s2590 = smul.u32 8, %s17
      %p2591 = scmp.lt.s32.totalorder %s2590, 15
      %s2592 = scalar_select %p2591, %s2590, 15
      %s2593 = smul.addr %s2592, 4
      %s2594 = scalar_lea.vmem %s6, %s2593
      // Predicated region
      $region45: #{nn5_forward.5} parent=43 // pred_check
        %p2595 = pneg %p181
      $region46: #{nn5_forward.5} parent=43 // pred_check_branch
        %2597 = sbr.rel (%p2595) target = $region48
      $region47: #{nn5_forward.5} parent=43 // pred_region
        %s2598 = smul.u32 8, %s17
      $region48: #{nn5_forward.5} parent=43 // pred_fallthru
        _
    $region44: #{nn5_forward.5} parent=5 // pred_fallthru
      _
    %p2599 = scmp.le.s32.totalorder 2, %s12
    // Predicated region
    $region49: #{nn5_forward.5} parent=5 // pred_check
      %p2600 = pneg %p2599
    $region50: #{nn5_forward.5} parent=5 // pred_check_branch
      %2602 = sbr.rel (%p2600) target = $region52
    $region51: #{nn5_forward.5} parent=5 // pred_region
      %s2603 = ssub.s32 %s12, 2
      // Predicated region
      $region53: #{nn5_forward.5} parent=51 // pred_check
        %p2604 = pneg %p187
      $region54: #{nn5_forward.5} parent=51 // pred_check_branch
        %2606 = sbr.rel (%p2604) target = $region56
      $region55: #{nn5_forward.5} parent=51 // pred_region
        %s2607 = smul.u32 8, %s18
        %p2608 = scmp.lt.s32.totalorder %s2607, 15
        %s2609 = scalar_select %p2608, %s2607, 15
        %s2610 = smul.addr %s2609, 4
        %s2611 = scalar_lea.vmem %s6, %s2610
      $region56: #{nn5_forward.5} parent=51 // pred_fallthru
        _
    $region52: #{nn5_forward.5} parent=5 // pred_fallthru
      _
  $region6: #{nn5_forward.5} parent=0 // loop_footer
    %s16 = sadd.s32 1, %s12
  $region7: #{nn5_forward.5} parent=0 // loop_footer_branch
    %11 = sbr.rel target = $region3
  $region8: #{nn5_forward.5} parent=0 // loop_exit
    _

// kernel: nn5_forward.6
$region0: #{nn5_forward.6}
  #allocation0 [shape = 'u32[]', space=smem, size = 0x4, offset = 0x4, fixed_abs, tag = 'smem constant byte address 0x4 - core index']
  #allocation1 [shape = 'u32[144,128]{1,0:T(1,128)}', space=vmem, size = 0x12000, scoped, tag = 'internal scratch']
  %s0 = inlined_call_operand.vmem [shape: bf16[32,800], index: 0, kind: input, shape index: {}]
  %s1 = inlined_call_operand.vmem [shape: bf16[32,800], index: 1, kind: input, shape index: {}]
  %s2 = inlined_call_operand.vmem [shape: bf16[32,800], index: 2, kind: input, shape index: {}]
  %s3 = inlined_call_operand.vmem [shape: bf16[32,800], index: 3, kind: input, shape index: {}]
  %s4 = inlined_call_operand.vmem [shape: bf16[800,128], index: 4, kind: input, shape index: {}]
  %s5 = inlined_call_operand.vmem [shape: f32[1,128], index: 5, kind: input, shape index: {}]
  %s6 = inlined_call_operand.vmem [shape: bf16[32,128], index: 6, kind: output, shape index: {}]
  %s7 = sld [smem:[#allocation0]]
  $region57: #{nn5_forward.6} parent=0
    _
  %s9 = ssub.s32 1, %s7
  %s10 = scalar_select 0, %s9, %s7
  loop: start=0, step=1, limit=4
  $region2: #{nn5_forward.6} parent=0 // loop_pre_header
    _
  $region3: #{nn5_forward.6} parent=0 // loop_header
    %s12 = sphi 0, %s16
    %p13 = scmp.ge.s32.totalorder %s12, 4
    %s22 = sphi 0, %s24
    %s25 = sphi 0, %s22
    %s26 = sphi 0, %s25
    %s42 = sphi 0, %s26
    %s48 = sphi 0, %s50
    %s51 = sphi 0, %s48
    %s52 = sphi 0, %s51
    %s68 = sphi 0, %s52
    %s74 = sphi 0, %s76
    %s77 = sphi 0, %s74
    %s78 = sphi 0, %s77
    %s94 = sphi 0, %s78
    %s100 = sphi 0, %s102
    %s103 = sphi 0, %s100
    %s104 = sphi 0, %s103
    %s120 = sphi 0, %s104
    %s124 = sphi 0, %s124
    %s126 = sphi 0, %s124
    %s127 = sphi 0, %s126
    %s141 = sphi 0, %s127
    %s145 = sphi 0, %s145
    %s147 = sphi 0, %s145
    %s148 = sphi 0, %s147
    %s162 = sphi 0, %s148
    %s168 = sphi 0, %s170
    %s171 = sphi 0, %s168
    %s172 = sphi 0, %s171
    %s188 = sphi 0, %s172
  $region4: #{nn5_forward.6} parent=0 // loop_header_branch
    %15 = sbr.rel (%p13) target = $region8
  $region5: #{nn5_forward.6} parent=0 // loop_body
    %s17 = ssub.s32 %s12, 1
    %s18 = ssub.s32 %s12, 2
    %s19 = sadd.s32 %s12, 1
    %s20 = ssub.s32 %s12, %s19
    %p21 = scmp.eq.s32.totalorder %s20, 0
    %s23 = sadd.s32 %s22, 1
    %s24 = scalar_select %p21, %s22, %s23
    %p27 = pneg %p21
    %p28 = scmp.eq.s32.totalorder %s12, 1
    %p29 = por %p27, %p28
    %p30 = scmp.ne.s32.totalorder %s22, %s25
    %p31 = scmp.eq.s32.totalorder %s12, 0
    %p32 = por %p30, %p31
    %p33 = scmp.ne.s32.totalorder %s22, %s25
    %p34 = scmp.eq.s32.totalorder %s17, 1
    %p35 = por %p33, %p34
    %p36 = scmp.ne.s32.totalorder %s25, %s26
    %p37 = scmp.eq.s32.totalorder %s17, 0
    %p38 = por %p36, %p37
    %p39 = scmp.ne.s32.totalorder %s25, %s26
    %p40 = scmp.eq.s32.totalorder %s18, 1
    %p41 = por %p39, %p40
    %p43 = scmp.ne.s32.totalorder %s26, %s42
    %p44 = scmp.eq.s32.totalorder %s18, 0
    %p45 = por %p43, %p44
    %s46 = ssub.s32 %s12, %s19
    %p47 = scmp.eq.s32.totalorder %s46, 0
    %s49 = sadd.s32 %s48, 1
    %s50 = scalar_select %p47, %s48, %s49
    %p53 = pneg %p47
    %p54 = scmp.eq.s32.totalorder %s12, 1
    %p55 = por %p53, %p54
    %p56 = scmp.ne.s32.totalorder %s48, %s51
    %p57 = scmp.eq.s32.totalorder %s12, 0
    %p58 = por %p56, %p57
    %p59 = scmp.ne.s32.totalorder %s48, %s51
    %p60 = scmp.eq.s32.totalorder %s17, 1
    %p61 = por %p59, %p60
    %p62 = scmp.ne.s32.totalorder %s51, %s52
    %p63 = scmp.eq.s32.totalorder %s17, 0
    %p64 = por %p62, %p63
    %p65 = scmp.ne.s32.totalorder %s51, %s52
    %p66 = scmp.eq.s32.totalorder %s18, 1
    %p67 = por %p65, %p66
    %p69 = scmp.ne.s32.totalorder %s52, %s68
    %p70 = scmp.eq.s32.totalorder %s18, 0
    %p71 = por %p69, %p70
    %s72 = ssub.s32 %s12, %s19
    %p73 = scmp.eq.s32.totalorder %s72, 0
    %s75 = sadd.s32 %s74, 1
    %s76 = scalar_select %p73, %s74, %s75
    %p79 = pneg %p73
    %p80 = scmp.eq.s32.totalorder %s12, 1
    %p81 = por %p79, %p80
    %p82 = scmp.ne.s32.totalorder %s74, %s77
    %p83 = scmp.eq.s32.totalorder %s12, 0
    %p84 = por %p82, %p83
    %p85 = scmp.ne.s32.totalorder %s74, %s77
    %p86 = scmp.eq.s32.totalorder %s17, 1
    %p87 = por %p85, %p86
    %p88 = scmp.ne.s32.totalorder %s77, %s78
    %p89 = scmp.eq.s32.totalorder %s17, 0
    %p90 = por %p88, %p89
    %p91 = scmp.ne.s32.totalorder %s77, %s78
    %p92 = scmp.eq.s32.totalorder %s18, 1
    %p93 = por %p91, %p92
    %p95 = scmp.ne.s32.totalorder %s78, %s94
    %p96 = scmp.eq.s32.totalorder %s18, 0
    %p97 = por %p95, %p96
    %s98 = ssub.s32 %s12, %s19
    %p99 = scmp.eq.s32.totalorder %s98, 0
    %s101 = sadd.s32 %s100, 1
    %s102 = scalar_select %p99, %s100, %s101
    %p105 = pneg %p99
    %p106 = scmp.eq.s32.totalorder %s12, 1
    %p107 = por %p105, %p106
    %p108 = scmp.ne.s32.totalorder %s100, %s103
    %p109 = scmp.eq.s32.totalorder %s12, 0
    %p110 = por %p108, %p109
    %p111 = scmp.ne.s32.totalorder %s100, %s103
    %p112 = scmp.eq.s32.totalorder %s17, 1
    %p113 = por %p111, %p112
    %p114 = scmp.ne.s32.totalorder %s103, %s104
    %p115 = scmp.eq.s32.totalorder %s17, 0
    %p116 = por %p114, %p115
    %p117 = scmp.ne.s32.totalorder %s103, %s104
    %p118 = scmp.eq.s32.totalorder %s18, 1
    %p119 = por %p117, %p118
    %p121 = scmp.ne.s32.totalorder %s104, %s120
    %p122 = scmp.eq.s32.totalorder %s18, 0
    %p123 = por %p121, %p122
    %s125 = sadd.s32 %s124, 1
    %p128 = scmp.eq.s32.totalorder %s12, 1
    %p129 = scmp.ne.s32.totalorder %s124, %s126
    %p130 = scmp.eq.s32.totalorder %s12, 0
    %p131 = por %p129, %p130
    %p132 = scmp.ne.s32.totalorder %s124, %s126
    %p133 = scmp.eq.s32.totalorder %s17, 1
    %p134 = por %p132, %p133
    %p135 = scmp.ne.s32.totalorder %s126, %s127
    %p136 = scmp.eq.s32.totalorder %s17, 0
    %p137 = por %p135, %p136
    %p138 = scmp.ne.s32.totalorder %s126, %s127
    %p139 = scmp.eq.s32.totalorder %s18, 1
    %p140 = por %p138, %p139
    %p142 = scmp.ne.s32.totalorder %s127, %s141
    %p143 = scmp.eq.s32.totalorder %s18, 0
    %p144 = por %p142, %p143
    %s146 = sadd.s32 %s145, 1
    %p149 = scmp.eq.s32.totalorder %s12, 1
    %p150 = scmp.ne.s32.totalorder %s145, %s147
    %p151 = scmp.eq.s32.totalorder %s12, 0
    %p152 = por %p150, %p151
    %p153 = scmp.ne.s32.totalorder %s145, %s147
    %p154 = scmp.eq.s32.totalorder %s17, 1
    %p155 = por %p153, %p154
    %p156 = scmp.ne.s32.totalorder %s147, %s148
    %p157 = scmp.eq.s32.totalorder %s17, 0
    %p158 = por %p156, %p157
    %p159 = scmp.ne.s32.totalorder %s147, %s148
    %p160 = scmp.eq.s32.totalorder %s18, 1
    %p161 = por %p159, %p160
    %p163 = scmp.ne.s32.totalorder %s148, %s162
    %p164 = scmp.eq.s32.totalorder %s18, 0
    %p165 = por %p163, %p164
    %s166 = ssub.s32 %s12, %s19
    %p167 = scmp.eq.s32.totalorder %s166, 0
    %s169 = sadd.s32 %s168, 1
    %s170 = scalar_select %p167, %s168, %s169
    %p173 = pneg %p167
    %p174 = scmp.eq.s32.totalorder %s12, 1
    %p175 = por %p173, %p174
    %p176 = scmp.ne.s32.totalorder %s168, %s171
    %p177 = scmp.eq.s32.totalorder %s12, 0
    %p178 = por %p176, %p177
    %p179 = scmp.ne.s32.totalorder %s168, %s171
    %p180 = scmp.eq.s32.totalorder %s17, 1
    %p181 = por %p179, %p180
    %p182 = scmp.ne.s32.totalorder %s171, %s172
    %p183 = scmp.eq.s32.totalorder %s17, 0
    %p184 = por %p182, %p183
    %p185 = scmp.ne.s32.totalorder %s171, %s172
    %p186 = scmp.eq.s32.totalorder %s18, 1
    %p187 = por %p185, %p186
    %p189 = scmp.ne.s32.totalorder %s172, %s188
    %p190 = scmp.eq.s32.totalorder %s18, 0
    %p191 = por %p189, %p190
    %p192 = scmp.le.s32.totalorder 1, %s12
    %p193 = scmp.lt.s32.totalorder %s12, 3
    %p194 = pnand %p192, %p193
    %p195 = pneg %p194
    // Predicated region
    $region9: #{nn5_forward.6} parent=5 // pred_check
      _
    $region10: #{nn5_forward.6} parent=5 // pred_check_branch
      %197 = sbr.rel (%p194) target = $region12
    $region11: #{nn5_forward.6} parent=5 // pred_region
      %s198 = ssub.s32 %s12, 1
      // Predicated region
      $region13: #{nn5_forward.6} parent=11 // pred_check
        %p199 = pneg %p137
      $region14: #{nn5_forward.6} parent=11 // pred_check_branch
        %201 = sbr.rel (%p199) target = $region16
      $region15: #{nn5_forward.6} parent=11 // pred_region
        _
      $region16: #{nn5_forward.6} parent=11 // pred_fallthru
        _
      // Predicated region
      $region17: #{nn5_forward.6} parent=11 // pred_check
        %p202 = pneg %p158
      $region18: #{nn5_forward.6} parent=11 // pred_check_branch
        %204 = sbr.rel (%p202) target = $region20
      $region19: #{nn5_forward.6} parent=11 // pred_region
        _
      $region20: #{nn5_forward.6} parent=11 // pred_fallthru
        _
    $region12: #{nn5_forward.6} parent=5 // pred_fallthru
      _
    %p205 = scmp.lt.s32.totalorder %s12, 2
    // Predicated region
    $region21: #{nn5_forward.6} parent=5 // pred_check
      %p206 = pneg %p205
    $region22: #{nn5_forward.6} parent=5 // pred_check_branch
      %208 = sbr.rel (%p206) target = $region24
    $region23: #{nn5_forward.6} parent=5 // pred_region
      // Predicated region
      $region25: #{nn5_forward.6} parent=23 // pred_check
        %p209 = pneg %p32
      $region26: #{nn5_forward.6} parent=23 // pred_check_branch
        %211 = sbr.rel (%p209) target = $region28
      $region27: #{nn5_forward.6} parent=23 // pred_region
        %s212 = smul.u32 2, %s12
        %p213 = scmp.lt.s32.totalorder %s212, 3
        %s214 = scalar_select %p213, %s212, 3
        %s215 = smul.addr %s214, 7
        %s216 = smul.addr %s215, 4
        %s217 = scalar_lea.vmem %s0, %s216
        %s218 = smul.u32 2, %s12
      $region28: #{nn5_forward.6} parent=23 // pred_fallthru
        _
      // Predicated region
      $region29: #{nn5_forward.6} parent=23 // pred_check
        %p219 = pneg %p58
      $region30: #{nn5_forward.6} parent=23 // pred_check_branch
        %221 = sbr.rel (%p219) target = $region32
      $region31: #{nn5_forward.6} parent=23 // pred_region
        %s222 = smul.u32 2, %s12
        %p223 = scmp.lt.s32.totalorder %s222, 3
        %s224 = scalar_select %p223, %s222, 3
        %s225 = smul.addr %s224, 7
        %s226 = smul.addr %s225, 4
        %s227 = scalar_lea.vmem %s1, %s226
        %s228 = smul.u32 2, %s12
      $region32: #{nn5_forward.6} parent=23 // pred_fallthru
        _
      // Predicated region
      $region33: #{nn5_forward.6} parent=23 // pred_check
        %p229 = pneg %p84
      $region34: #{nn5_forward.6} parent=23 // pred_check_branch
        %231 = sbr.rel (%p229) target = $region36
      $region35: #{nn5_forward.6} parent=23 // pred_region
        %s232 = smul.u32 2, %s12
        %p233 = scmp.lt.s32.totalorder %s232, 3
        %s234 = scalar_select %p233, %s232, 3
        %s235 = smul.addr %s234, 7
        %s236 = smul.addr %s235, 4
        %s237 = scalar_lea.vmem %s2, %s236
        %s238 = smul.u32 2, %s12
      $region36: #{nn5_forward.6} parent=23 // pred_fallthru
        _
      // Predicated region
      $region37: #{nn5_forward.6} parent=23 // pred_check
        %p239 = pneg %p110
      $region38: #{nn5_forward.6} parent=23 // pred_check_branch
        %241 = sbr.rel (%p239) target = $region40
      $region39: #{nn5_forward.6} parent=23 // pred_region
        %s242 = smul.u32 2, %s12
        %p243 = scmp.lt.s32.totalorder %s242, 3
        %s244 = scalar_select %p243, %s242, 3
        %s245 = smul.addr %s244, 7
        %s246 = smul.addr %s245, 4
        %s247 = scalar_lea.vmem %s3, %s246
        %s248 = smul.u32 2, %s12
      $region40: #{nn5_forward.6} parent=23 // pred_fallthru
        _
    $region24: #{nn5_forward.6} parent=5 // pred_fallthru
      _
    %p249 = scmp.le.s32.totalorder 1, %s12
    %p250 = scmp.lt.s32.totalorder %s12, 3
    %p251 = pnand %p249, %p250
    %p252 = pneg %p251
    // Predicated region
    $region41: #{nn5_forward.6} parent=5 // pred_check
      _
    $region42: #{nn5_forward.6} parent=5 // pred_check_branch
      %254 = sbr.rel (%p251) target = $region44
    $region43: #{nn5_forward.6} parent=5 // pred_region
      %s255 = ssub.s32 %s12, 1
      %s256 = smul.u32 2, %s17
      %p257 = scmp.lt.s32.totalorder %s256, 3
      %s258 = scalar_select %p257, %s256, 3
      %s259 = smul.addr %s258, 7
      %s260 = smul.addr %s259, 4
      %s261 = scalar_lea.vmem %s0, %s260
      %p262 = pneg %p38
      %p263 = pneg %p35
      %s264 = smul.u32 2, %s17
      %p265 = scmp.lt.s32.totalorder %s264, 3
      %s266 = scalar_select %p265, %s264, 3
      %s267 = smul.addr %s266, 7
      %s268 = smul.addr %s267, 4
      %s269 = scalar_lea.vmem %s1, %s268
      %p270 = pneg %p64
      %p271 = pneg %p61
      %s272 = smul.u32 2, %s17
      %p273 = scmp.lt.s32.totalorder %s272, 3
      %s274 = scalar_select %p273, %s272, 3
      %s275 = smul.addr %s274, 7
      %s276 = smul.addr %s275, 4
      %s277 = scalar_lea.vmem %s2, %s276
      %p278 = pneg %p90
      %p279 = pneg %p87
      %s280 = smul.u32 2, %s17
      %p281 = scmp.lt.s32.totalorder %s280, 3
      %s282 = scalar_select %p281, %s280, 3
      %s283 = smul.addr %s282, 7
      %s284 = smul.addr %s283, 4
      %s285 = scalar_lea.vmem %s3, %s284
      %p286 = pneg %p116
      %p287 = pneg %p113
      %p288 = pneg %p137
      %p289 = pneg %p134
      %p290 = pneg %p158
      %p291 = pneg %p155
      %p292 = pneg %p184
      %p293 = pneg %p181
      %s294 = smul.u32 2, %s17
      %p295 = scmp.lt.s32.totalorder %s294, 3
      %s296 = scalar_select %p295, %s294, 3
      %s297 = smul.addr %s296, 4
      %s298 = scalar_lea.vmem %s6, %s297
      %s299 = smul.u32 2, %s17
      %p300 = scmp.lt.s32.totalorder %s299, 3
      %s301 = scalar_select %p300, %s299, 3
      %s302 = smul.addr %s301, 7
      %s303 = smul.addr %s302, 4
      %s304 = scalar_lea.vmem %s0, %s303
      %s305 = smul.u32 2, %s17
      %s306 = smul.u32 2, %s17
      %p307 = scmp.lt.s32.totalorder %s306, 3
      %s308 = scalar_select %p307, %s306, 3
      %s309 = smul.addr %s308, 7
      %s310 = smul.addr %s309, 4
      %s311 = scalar_lea.vmem %s1, %s310
      %s312 = smul.u32 2, %s17
      %s313 = smul.u32 2, %s17
      %p314 = scmp.lt.s32.totalorder %s313, 3
      %s315 = scalar_select %p314, %s313, 3
      %s316 = smul.addr %s315, 7
      %s317 = smul.addr %s316, 4
      %s318 = scalar_lea.vmem %s2, %s317
      %s319 = smul.u32 2, %s17
      %s320 = smul.u32 2, %s17
      %p321 = scmp.lt.s32.totalorder %s320, 3
      %s322 = scalar_select %p321, %s320, 3
      %s323 = smul.addr %s322, 7
      %s324 = smul.addr %s323, 4
      %s325 = scalar_lea.vmem %s3, %s324
      %s326 = smul.u32 2, %s17
      %s327 = smul.u32 2, %s17
      %p328 = scmp.lt.s32.totalorder %s327, 3
      %s329 = scalar_select %p328, %s327, 3
      %s330 = smul.addr %s329, 4
      %s331 = scalar_lea.vmem %s6, %s330
      %s332 = smul.u32 2, %s17
      %v334 = vld [vmem:[%s4] sm:$0xf]
      %v335 = vld [vmem:[%s4 + $0x4] sm:$0xf]
      %v336 = vld [vmem:[%s4 + $0x8] sm:$0xf]
      %v337 = vld [vmem:[%s4 + $0xc] sm:$0xf]
      %v338 = vld [vmem:[%s4 + $0x10] sm:$0xf]
      %v339 = vld [vmem:[%s4 + $0x14] sm:$0xf]
      %v340 = vld [vmem:[%s4 + $0x18] sm:$0xf]
      %v341 = vld [vmem:[%s4 + $0x1c] sm:$0xf]
      %v342 = vld [vmem:[%s4 + $0x20] sm:$0xf]
      %v343 = vld [vmem:[%s4 + $0x24] sm:$0xf]
      %v344 = vld [vmem:[%s4 + $0x28] sm:$0xf]
      %v345 = vld [vmem:[%s4 + $0x2c] sm:$0xf]
      %v346 = vld [vmem:[%s4 + $0x30] sm:$0xf]
      %v347 = vld [vmem:[%s4 + $0x34] sm:$0xf]
      %v348 = vld [vmem:[%s4 + $0x38] sm:$0xf]
      %v349 = vld [vmem:[%s4 + $0x3c] sm:$0xf]
      %v350 = vld [vmem:[%s4 + $0x40] sm:$0xf]
      %v351 = vld [vmem:[%s4 + $0x44] sm:$0xf]
      %v352 = vld [vmem:[%s4 + $0x48] sm:$0xf]
      %v353 = vld [vmem:[%s4 + $0x4c] sm:$0xf]
      %v354 = vld [vmem:[%s4 + $0x50] sm:$0xf]
      %v355 = vld [vmem:[%s4 + $0x54] sm:$0xf]
      %v356 = vld [vmem:[%s4 + $0x58] sm:$0xf]
      %v357 = vld [vmem:[%s4 + $0x5c] sm:$0xf]
      %v358 = vld [vmem:[%s4 + $0x60] sm:$0xf]
      %v359 = vld [vmem:[%s4 + $0x64] sm:$0xf]
      %v360 = vld [vmem:[%s4 + $0x68] sm:$0xf]
      %v361 = vld [vmem:[%s4 + $0x6c] sm:$0xf]
      %v362 = vld [vmem:[%s4 + $0x70] sm:$0xf]
      %v363 = vld [vmem:[%s4 + $0x74] sm:$0xf]
      %v364 = vld [vmem:[%s4 + $0x78] sm:$0xf]
      %v365 = vld [vmem:[%s4 + $0x7c] sm:$0xf]
      %v366 = vld [vmem:[%s4 + $0x80] sm:$0xf]
      %v367 = vld [vmem:[%s4 + $0x84] sm:$0xf]
      %v368 = vld [vmem:[%s4 + $0x88] sm:$0xf]
      %v369 = vld [vmem:[%s4 + $0x8c] sm:$0xf]
      %v370 = vld [vmem:[%s4 + $0x90] sm:$0xf]
      %v371 = vld [vmem:[%s4 + $0x94] sm:$0xf]
      %v372 = vld [vmem:[%s4 + $0x98] sm:$0xf]
      %v373 = vld [vmem:[%s4 + $0x9c] sm:$0xf]
      %v374 = vld [vmem:[%s4 + $0xa0] sm:$0xf]
      %v375 = vld [vmem:[%s4 + $0xa4] sm:$0xf]
      %v376 = vld [vmem:[%s4 + $0xa8] sm:$0xf]
      %v377 = vld [vmem:[%s4 + $0xac] sm:$0xf]
      %v378 = vld [vmem:[%s4 + $0xb0] sm:$0xf]
      %v379 = vld [vmem:[%s4 + $0xb4] sm:$0xf]
      %v380 = vld [vmem:[%s4 + $0xb8] sm:$0xf]
      %v381 = vld [vmem:[%s4 + $0xbc] sm:$0xf]
      %v382 = vld [vmem:[%s4 + $0xc0] sm:$0xf]
      %v383 = vld [vmem:[%s4 + $0xc4] sm:$0xf]
      %v384 = vld [vmem:[%s4 + $0xc8] sm:$0xf]
      %v385 = vld [vmem:[%s4 + $0xcc] sm:$0xf]
      %v386 = vld [vmem:[%s4 + $0xd0] sm:$0xf]
      %v387 = vld [vmem:[%s4 + $0xd4] sm:$0xf]
      %v388 = vld [vmem:[%s4 + $0xd8] sm:$0xf]
      %v389 = vld [vmem:[%s4 + $0xdc] sm:$0xf]
      %v390 = vld [vmem:[%s4 + $0xe0] sm:$0xf]
      %v391 = vld [vmem:[%s4 + $0xe4] sm:$0xf]
      %v392 = vld [vmem:[%s4 + $0xe8] sm:$0xf]
      %v393 = vld [vmem:[%s4 + $0xec] sm:$0xf]
      %v394 = vld [vmem:[%s4 + $0xf0] sm:$0xf]
      %v395 = vld [vmem:[%s4 + $0xf4] sm:$0xf]
      %v396 = vld [vmem:[%s4 + $0xf8] sm:$0xf]
      %v397 = vld [vmem:[%s4 + $0xfc] sm:$0xf]
      %v398 = vld [vmem:[%s4 + $0x100] sm:$0xf]
      %v399 = vld [vmem:[%s4 + $0x104] sm:$0xf]
      %v400 = vld [vmem:[%s4 + $0x108] sm:$0xf]
      %v401 = vld [vmem:[%s4 + $0x10c] sm:$0xf]
      %v402 = vld [vmem:[%s4 + $0x110] sm:$0xf]
      %v403 = vld [vmem:[%s4 + $0x114] sm:$0xf]
      %v404 = vld [vmem:[%s4 + $0x118] sm:$0xf]
      %v405 = vld [vmem:[%s4 + $0x11c] sm:$0xf]
      %v406 = vld [vmem:[%s4 + $0x120] sm:$0xf]
      %v407 = vld [vmem:[%s4 + $0x124] sm:$0xf]
      %v408 = vld [vmem:[%s4 + $0x128] sm:$0xf]
      %v409 = vld [vmem:[%s4 + $0x12c] sm:$0xf]
      %v410 = vld [vmem:[%s4 + $0x130] sm:$0xf]
      %v411 = vld [vmem:[%s4 + $0x134] sm:$0xf]
      %v412 = vld [vmem:[%s4 + $0x138] sm:$0xf]
      %v413 = vld [vmem:[%s4 + $0x13c] sm:$0xf]
      %v414 = vld [vmem:[%s4 + $0x140] sm:$0xf]
      %v415 = vld [vmem:[%s4 + $0x144] sm:$0xf]
      %v416 = vld [vmem:[%s4 + $0x148] sm:$0xf]
      %v417 = vld [vmem:[%s4 + $0x14c] sm:$0xf]
      %v418 = vld [vmem:[%s4 + $0x150] sm:$0xf]
      %v419 = vld [vmem:[%s4 + $0x154] sm:$0xf]
      %v420 = vld [vmem:[%s4 + $0x158] sm:$0xf]
      %v421 = vld [vmem:[%s4 + $0x15c] sm:$0xf]
      %v422 = vld [vmem:[%s4 + $0x160] sm:$0xf]
      %v423 = vld [vmem:[%s4 + $0x164] sm:$0xf]
      %v424 = vld [vmem:[%s4 + $0x168] sm:$0xf]
      %v425 = vld [vmem:[%s4 + $0x16c] sm:$0xf]
      %v426 = vld [vmem:[%s4 + $0x170] sm:$0xf]
      %v427 = vld [vmem:[%s4 + $0x174] sm:$0xf]
      %v428 = vld [vmem:[%s4 + $0x178] sm:$0xf]
      %v429 = vld [vmem:[%s4 + $0x17c] sm:$0xf]
      %v430 = vld [vmem:[%s4 + $0x180] sm:$0xf]
      %v431 = vld [vmem:[%s4 + $0x184] sm:$0xf]
      %v432 = vld [vmem:[%s4 + $0x188] sm:$0xf]
      %v433 = vld [vmem:[%s4 + $0x18c] sm:$0xf]
      %v434 = vld [vmem:[%s304] sm:$0xff]
      %v435 = vld [vmem:[%s304 + $0x8] sm:$0xff]
      %v436 = vld [vmem:[%s304 + $0x10] sm:$0xff]
      %v437 = vld [vmem:[%s304 + $0x18] sm:$0xf]
      %v438 = vld [vmem:[%s304 + $0x1c] sm:$0xff]
      %v439 = vld [vmem:[%s304 + $0x24] sm:$0xff]
      %v440 = vld [vmem:[%s304 + $0x2c] sm:$0xff]
      %v441 = vld [vmem:[%s304 + $0x34] sm:$0xf]
      %v450 = vunpack.c.l.b16 %v434
      %v451 = vunpack.c.h.b16 %v434
      %v452 = vunpack.c.l.b16 %v435
      %v453 = vunpack.c.h.b16 %v435
      %v454 = vunpack.c.l.b16 %v436
      %v455 = vunpack.c.h.b16 %v436
      %v456 = vunpack.c.l.b16 %v437
      %v457 = vunpack.c.l.b16 %v438
      %v458 = vunpack.c.h.b16 %v438
      %v459 = vunpack.c.l.b16 %v439
      %v460 = vunpack.c.h.b16 %v439
      %v461 = vunpack.c.l.b16 %v440
      %v462 = vunpack.c.h.b16 %v440
      %v463 = vunpack.c.l.b16 %v441
      %v464 = vpack.c.b16 %v457, %v450
      %v465 = vpack.c.b16 %v458, %v451
      %v466 = vpack.c.b16 %v459, %v452
      %v467 = vpack.c.b16 %v460, %v453
      %v468 = vpack.c.b16 %v461, %v454
      %v469 = vpack.c.b16 %v462, %v455
      %v470 = vpack.c.b16 %v463, %v456
      %v577 = vunpack.c.l.b16 %v334
      %v578 = vunpack.c.l.b16 %v335
      %v579 = vunpack.c.l.b16 %v336
      %v580 = vunpack.c.l.b16 %v337
      %v581 = vunpack.c.l.b16 %v338
      %v582 = vunpack.c.l.b16 %v339
      %v583 = vunpack.c.l.b16 %v340
      %v584 = vunpack.c.l.b16 %v341
      %v585 = vunpack.c.l.b16 %v342
      %v586 = vunpack.c.l.b16 %v343
      %v587 = vunpack.c.l.b16 %v344
      %v588 = vunpack.c.l.b16 %v345
      %v589 = vunpack.c.l.b16 %v346
      %v590 = vunpack.c.l.b16 %v347
      %v591 = vunpack.c.l.b16 %v348
      %v592 = vunpack.c.l.b16 %v349
      %v593 = vunpack.c.l.b16 %v350
      %v594 = vunpack.c.l.b16 %v351
      %v595 = vunpack.c.l.b16 %v352
      %v596 = vunpack.c.l.b16 %v353
      %v597 = vunpack.c.l.b16 %v354
      %v598 = vunpack.c.l.b16 %v355
      %v599 = vunpack.c.l.b16 %v356
      %v600 = vunpack.c.l.b16 %v357
      %v601 = vunpack.c.l.b16 %v358
      %v602 = vunpack.c.l.b16 %v359
      %v603 = vunpack.c.l.b16 %v360
      %v604 = vunpack.c.l.b16 %v361
      %v605 = vunpack.c.l.b16 %v362
      %v606 = vunpack.c.l.b16 %v363
      %v607 = vunpack.c.l.b16 %v364
      %v608 = vunpack.c.l.b16 %v365
      %v609 = vunpack.c.l.b16 %v366
      %v610 = vunpack.c.l.b16 %v367
      %v611 = vunpack.c.l.b16 %v368
      %v612 = vunpack.c.l.b16 %v369
      %v613 = vunpack.c.l.b16 %v370
      %v614 = vunpack.c.l.b16 %v371
      %v615 = vunpack.c.l.b16 %v372
      %v616 = vunpack.c.l.b16 %v373
      %v617 = vunpack.c.l.b16 %v374
      %v618 = vunpack.c.l.b16 %v375
      %v619 = vunpack.c.l.b16 %v376
      %v620 = vunpack.c.l.b16 %v377
      %v621 = vunpack.c.l.b16 %v378
      %v622 = vunpack.c.l.b16 %v379
      %v623 = vunpack.c.l.b16 %v380
      %v624 = vunpack.c.l.b16 %v381
      %v625 = vunpack.c.l.b16 %v382
      %v626 = vunpack.c.l.b16 %v383
      %v627 = vunpack.c.l.b16 %v384
      %v628 = vunpack.c.l.b16 %v385
      %v629 = vunpack.c.l.b16 %v386
      %v630 = vunpack.c.l.b16 %v387
      %v631 = vunpack.c.l.b16 %v388
      %v632 = vunpack.c.l.b16 %v389
      %v633 = vunpack.c.l.b16 %v390
      %v634 = vunpack.c.l.b16 %v391
      %v635 = vunpack.c.l.b16 %v392
      %v636 = vunpack.c.l.b16 %v393
      %v637 = vunpack.c.l.b16 %v394
      %v638 = vunpack.c.l.b16 %v395
      %v639 = vunpack.c.l.b16 %v396
      %v640 = vunpack.c.l.b16 %v397
      %v641 = vunpack.c.l.b16 %v398
      %v642 = vunpack.c.l.b16 %v399
      %v643 = vunpack.c.l.b16 %v400
      %v644 = vunpack.c.l.b16 %v401
      %v645 = vunpack.c.l.b16 %v402
      %v646 = vunpack.c.l.b16 %v403
      %v647 = vunpack.c.l.b16 %v404
      %v648 = vunpack.c.l.b16 %v405
      %v649 = vunpack.c.l.b16 %v406
      %v650 = vunpack.c.l.b16 %v407
      %v651 = vunpack.c.l.b16 %v408
      %v652 = vunpack.c.l.b16 %v409
      %v653 = vunpack.c.l.b16 %v410
      %v654 = vunpack.c.l.b16 %v411
      %v655 = vunpack.c.l.b16 %v412
      %v656 = vunpack.c.l.b16 %v413
      %v657 = vunpack.c.l.b16 %v414
      %v658 = vunpack.c.l.b16 %v415
      %v659 = vunpack.c.l.b16 %v416
      %v660 = vunpack.c.l.b16 %v417
      %v661 = vunpack.c.l.b16 %v418
      %v662 = vunpack.c.l.b16 %v419
      %v663 = vunpack.c.l.b16 %v420
      %v664 = vunpack.c.l.b16 %v421
      %v665 = vunpack.c.l.b16 %v422
      %v666 = vunpack.c.l.b16 %v423
      %v667 = vunpack.c.l.b16 %v424
      %v668 = vunpack.c.l.b16 %v425
      %v669 = vunpack.c.l.b16 %v426
      %v670 = vunpack.c.l.b16 %v427
      %v671 = vunpack.c.l.b16 %v428
      %v672 = vunpack.c.l.b16 %v429
      %v673 = vunpack.c.l.b16 %v430
      %v674 = vunpack.c.l.b16 %v431
      %v675 = vunpack.c.l.b16 %v432
      %v676 = vunpack.c.l.b16 %v433
      %v677 = vpack.c.b16 %v578, %v577
      %v678 = vpack.c.b16 %v580, %v579
      %v679 = vpack.c.b16 %v582, %v581
      %v680 = vpack.c.b16 %v584, %v583
      %v681 = vpack.c.b16 %v586, %v585
      %v682 = vpack.c.b16 %v588, %v587
      %v683 = vpack.c.b16 %v590, %v589
      %v684 = vpack.c.b16 %v592, %v591
      %v685 = vpack.c.b16 %v594, %v593
      %v686 = vpack.c.b16 %v596, %v595
      %v687 = vpack.c.b16 %v598, %v597
      %v688 = vpack.c.b16 %v600, %v599
      %v689 = vpack.c.b16 %v602, %v601
      %v690 = vpack.c.b16 %v604, %v603
      %v691 = vpack.c.b16 %v606, %v605
      %v692 = vpack.c.b16 %v608, %v607
      %v693 = vpack.c.b16 %v610, %v609
      %v694 = vpack.c.b16 %v612, %v611
      %v695 = vpack.c.b16 %v614, %v613
      %v696 = vpack.c.b16 %v616, %v615
      %v697 = vpack.c.b16 %v618, %v617
      %v698 = vpack.c.b16 %v620, %v619
      %v699 = vpack.c.b16 %v622, %v621
      %v700 = vpack.c.b16 %v624, %v623
      %v701 = vpack.c.b16 %v626, %v625
      %v702 = vpack.c.b16 %v628, %v627
      %v703 = vpack.c.b16 %v630, %v629
      %v704 = vpack.c.b16 %v632, %v631
      %v705 = vpack.c.b16 %v634, %v633
      %v706 = vpack.c.b16 %v636, %v635
      %v707 = vpack.c.b16 %v638, %v637
      %v708 = vpack.c.b16 %v640, %v639
      %v709 = vpack.c.b16 %v642, %v641
      %v710 = vpack.c.b16 %v644, %v643
      %v711 = vpack.c.b16 %v646, %v645
      %v712 = vpack.c.b16 %v648, %v647
      %v713 = vpack.c.b16 %v650, %v649
      %v714 = vpack.c.b16 %v652, %v651
      %v715 = vpack.c.b16 %v654, %v653
      %v716 = vpack.c.b16 %v656, %v655
      %v717 = vpack.c.b16 %v658, %v657
      %v718 = vpack.c.b16 %v660, %v659
      %v719 = vpack.c.b16 %v662, %v661
      %v720 = vpack.c.b16 %v664, %v663
      %v721 = vpack.c.b16 %v666, %v665
      %v722 = vpack.c.b16 %v668, %v667
      %v723 = vpack.c.b16 %v670, %v669
      %v724 = vpack.c.b16 %v672, %v671
      %v725 = vpack.c.b16 %v674, %v673
      %v726 = vpack.c.b16 %v676, %v675
      %vm777 = vcmask 261120
      %v779 = vsel %vm777, %v470, 0
      %781 = vmatprep.subr.bf16.mxu0 0
      %782 = vmatpush1.bf16.msra.mxu0 %v677
      %783 = vmatprep.subr.bf16.mxu0 0
      %784 = vmatpush1.bf16.msra.mxu0 %v678
      %785 = vmatprep.subr.bf16.mxu0 0
      %786 = vmatpush1.bf16.msra.mxu0 %v679
      %787 = vmatprep.subr.bf16.mxu0 0
      %788 = vmatpush1.bf16.msra.mxu0 %v680
      %789 = vmatprep.subr.bf16.mxu0 0
      %790 = vmatpush1.bf16.msra.mxu0 %v681
      %791 = vmatprep.subr.bf16.mxu0 0
      %792 = vmatpush1.bf16.msra.mxu0 %v682
      %793 = vmatprep.subr.bf16.mxu0 0
      %794 = vmatpush1.bf16.msra.mxu0 %v683
      %795 = vmatprep.subr.bf16.mxu0 0
      %796 = vmatpush1.bf16.msra.mxu0 %v684
      %797 = vmatprep.subr.bf16.mxu0 0
      %798 = vmatpush1.bf16.msra.mxu0 %v685
      %799 = vmatprep.subr.bf16.mxu0 0
      %800 = vmatpush1.bf16.msra.mxu0 %v686
      %801 = vmatprep.subr.bf16.mxu0 0
      %802 = vmatpush1.bf16.msra.mxu0 %v687
      %803 = vmatprep.subr.bf16.mxu0 0
      %804 = vmatpush1.bf16.msra.mxu0 %v688
      %805 = vmatprep.subr.bf16.mxu0 0
      %806 = vmatpush1.bf16.msra.mxu0 %v689
      %807 = vmatprep.subr.bf16.mxu0 0
      %808 = vmatpush1.bf16.msra.mxu0 %v690
      %809 = vmatprep.subr.bf16.mxu0 0
      %810 = vmatpush1.bf16.msra.mxu0 %v691
      %811 = vmatprep.subr.bf16.mxu0 0
      %812 = vmatpush1.bf16.msra.mxu0 %v692
      %813 = vmatprep.mubr.bf16.mxu0 %v465
      %814 = vmatmul.mubr.bf16.gmra.mrb[0].mxu0 %v464
      %v815 = vpop.f32.mrb[0].mxu0
      %v816 = vadd.f32 0.0, %v815
      %v817 = vpop.f32.mrb[0].mxu0
      %v818 = vpop.f32.mrb[0].mxu0
      %v819 = vadd.f32 0.0, %v818
      %v820 = vpop.f32.mrb[0].mxu0
      %821 = vdwg.mxu0
      %822 = vmatprep.subr.bf16.mxu0 0
      %823 = vmatpush1.bf16.msra.mxu0 %v693
      %824 = vmatprep.subr.bf16.mxu0 0
      %825 = vmatpush1.bf16.msra.mxu0 %v694
      %826 = vmatprep.subr.bf16.mxu0 0
      %827 = vmatpush1.bf16.msra.mxu0 %v695
      %828 = vmatprep.subr.bf16.mxu0 0
      %829 = vmatpush1.bf16.msra.mxu0 %v696
      %830 = vmatprep.subr.bf16.mxu0 0
      %831 = vmatpush1.bf16.msra.mxu0 %v697
      %832 = vmatprep.subr.bf16.mxu0 0
      %833 = vmatpush1.bf16.msra.mxu0 %v698
      %834 = vmatprep.subr.bf16.mxu0 0
      %835 = vmatpush1.bf16.msra.mxu0 %v699
      %836 = vmatprep.subr.bf16.mxu0 0
      %837 = vmatpush1.bf16.msra.mxu0 %v700
      %838 = vmatprep.subr.bf16.mxu0 0
      %839 = vmatpush1.bf16.msra.mxu0 %v701
      %840 = vmatprep.subr.bf16.mxu0 0
      %841 = vmatpush1.bf16.msra.mxu0 %v702
      %842 = vmatprep.subr.bf16.mxu0 0
      %843 = vmatpush1.bf16.msra.mxu0 %v703
      %844 = vmatprep.subr.bf16.mxu0 0
      %845 = vmatpush1.bf16.msra.mxu0 %v704
      %846 = vmatprep.subr.bf16.mxu0 0
      %847 = vmatpush1.bf16.msra.mxu0 %v705
      %848 = vmatprep.subr.bf16.mxu0 0
      %849 = vmatpush1.bf16.msra.mxu0 %v706
      %850 = vmatprep.subr.bf16.mxu0 0
      %851 = vmatpush1.bf16.msra.mxu0 %v707
      %852 = vmatprep.subr.bf16.mxu0 0
      %853 = vmatpush1.bf16.msra.mxu0 %v708
      %854 = vmatprep.mubr.bf16.mxu0 %v467
      %855 = vmatmul.mubr.bf16.gmra.mrb[0].mxu0 %v466
      %v856 = vpop.f32.mrb[0].mxu0
      %v857 = vadd.f32 %v816, %v856
      %v858 = vpop.f32.mrb[0].mxu0
      %v859 = vpop.f32.mrb[0].mxu0
      %v860 = vadd.f32 %v819, %v859
      %v861 = vpop.f32.mrb[0].mxu0
      %862 = vdwg.mxu0
      %863 = vmatprep.subr.bf16.mxu0 0
      %864 = vmatpush1.bf16.msra.mxu0 %v709
      %865 = vmatprep.subr.bf16.mxu0 0
      %866 = vmatpush1.bf16.msra.mxu0 %v710
      %867 = vmatprep.subr.bf16.mxu0 0
      %868 = vmatpush1.bf16.msra.mxu0 %v711
      %869 = vmatprep.subr.bf16.mxu0 0
      %870 = vmatpush1.bf16.msra.mxu0 %v712
      %871 = vmatprep.subr.bf16.mxu0 0
      %872 = vmatpush1.bf16.msra.mxu0 %v713
      %873 = vmatprep.subr.bf16.mxu0 0
      %874 = vmatpush1.bf16.msra.mxu0 %v714
      %875 = vmatprep.subr.bf16.mxu0 0
      %876 = vmatpush1.bf16.msra.mxu0 %v715
      %877 = vmatprep.subr.bf16.mxu0 0
      %878 = vmatpush1.bf16.msra.mxu0 %v716
      %879 = vmatprep.subr.bf16.mxu0 0
      %880 = vmatpush1.bf16.msra.mxu0 %v717
      %881 = vmatprep.subr.bf16.mxu0 0
      %882 = vmatpush1.bf16.msra.mxu0 %v718
      %883 = vmatprep.subr.bf16.mxu0 0
      %884 = vmatpush1.bf16.msra.mxu0 %v719
      %885 = vmatprep.subr.bf16.mxu0 0
      %886 = vmatpush1.bf16.msra.mxu0 %v720
      %887 = vmatprep.subr.bf16.mxu0 0
      %888 = vmatpush1.bf16.msra.mxu0 %v721
      %889 = vmatprep.subr.bf16.mxu0 0
      %890 = vmatpush1.bf16.msra.mxu0 %v722
      %891 = vmatprep.subr.bf16.mxu0 0
      %892 = vmatpush1.bf16.msra.mxu0 %v723
      %893 = vmatprep.subr.bf16.mxu0 0
      %894 = vmatpush1.bf16.msra.mxu0 %v724
      %895 = vmatprep.mubr.bf16.mxu0 %v469
      %896 = vmatmul.mubr.bf16.gmra.mrb[0].mxu0 %v468
      %v897 = vpop.f32.mrb[0].mxu0
      %v898 = vadd.f32 %v857, %v897
      %v899 = vpop.f32.mrb[0].mxu0
      %v900 = vpop.f32.mrb[0].mxu0
      %v901 = vadd.f32 %v860, %v900
      %v902 = vpop.f32.mrb[0].mxu0
      %903 = vdwg.mxu0
      %904 = vmatprep.subr.bf16.mxu0 0
      %905 = vmatpush1.bf16.msra.mxu0 %v725
      %906 = vmatprep.subr.bf16.mxu0 0
      %907 = vmatpush1.bf16.msra.mxu0 %v726
      %908 = vmatprep.subr.bf16.mxu0 0
      %909 = vmatpush1.bf16.msra.mxu0 0
      %910 = vmatprep.subr.bf16.mxu0 0
      %911 = vmatpush1.bf16.msra.mxu0 0
      %912 = vmatprep.subr.bf16.mxu0 0
      %913 = vmatpush1.bf16.msra.mxu0 0
      %914 = vmatprep.subr.bf16.mxu0 0
      %915 = vmatpush1.bf16.msra.mxu0 0
      %916 = vmatprep.subr.bf16.mxu0 0
      %917 = vmatpush1.bf16.msra.mxu0 0
      %918 = vmatprep.subr.bf16.mxu0 0
      %919 = vmatpush1.bf16.msra.mxu0 0
      %920 = vmatprep.subr.bf16.mxu0 0
      %921 = vmatpush1.bf16.msra.mxu0 0
      %922 = vmatprep.subr.bf16.mxu0 0
      %923 = vmatpush1.bf16.msra.mxu0 0
      %924 = vmatprep.subr.bf16.mxu0 0
      %925 = vmatpush1.bf16.msra.mxu0 0
      %926 = vmatprep.subr.bf16.mxu0 0
      %927 = vmatpush1.bf16.msra.mxu0 0
      %928 = vmatprep.subr.bf16.mxu0 0
      %929 = vmatpush1.bf16.msra.mxu0 0
      %930 = vmatprep.subr.bf16.mxu0 0
      %931 = vmatpush1.bf16.msra.mxu0 0
      %932 = vmatprep.subr.bf16.mxu0 0
      %933 = vmatpush1.bf16.msra.mxu0 0
      %934 = vmatprep.subr.bf16.mxu0 0
      %935 = vmatpush1.bf16.msra.mxu0 0
      %936 = vmatprep.mubr.bf16.mxu0 0
      %937 = vmatmul.mubr.bf16.gmra.mrb[0].mxu0 %v779
      %v938 = vpop.f32.mrb[0].mxu0
      %v939 = vadd.f32 %v898, %v938
      %v940 = vpop.f32.mrb[0].mxu0
      %v941 = vpop.f32.mrb[0].mxu0
      %v942 = vadd.f32 %v901, %v941
      %v943 = vpop.f32.mrb[0].mxu0
      %944 = vdwg.mxu0
      %v945 = vld [vmem:[%s311] sm:$0xff]
      %v946 = vld [vmem:[%s311 + $0x8] sm:$0xff]
      %v947 = vld [vmem:[%s311 + $0x10] sm:$0xff]
      %v948 = vld [vmem:[%s311 + $0x18] sm:$0xf]
      %v949 = vld [vmem:[%s311 + $0x1c] sm:$0xff]
      %v950 = vld [vmem:[%s311 + $0x24] sm:$0xff]
      %v951 = vld [vmem:[%s311 + $0x2c] sm:$0xff]
      %v952 = vld [vmem:[%s311 + $0x34] sm:$0xf]
      %v961 = vunpack.c.l.b16 %v945
      %v962 = vunpack.c.h.b16 %v945
      %v963 = vunpack.c.l.b16 %v946
      %v964 = vunpack.c.h.b16 %v946
      %v965 = vunpack.c.l.b16 %v947
      %v966 = vunpack.c.h.b16 %v947
      %v967 = vunpack.c.l.b16 %v948
      %v968 = vunpack.c.l.b16 %v949
      %v969 = vunpack.c.h.b16 %v949
      %v970 = vunpack.c.l.b16 %v950
      %v971 = vunpack.c.h.b16 %v950
      %v972 = vunpack.c.l.b16 %v951
      %v973 = vunpack.c.h.b16 %v951
      %v974 = vunpack.c.l.b16 %v952
      %v975 = vpack.c.b16 %v968, %v961
      %v976 = vpack.c.b16 %v969, %v962
      %v977 = vpack.c.b16 %v970, %v963
      %v978 = vpack.c.b16 %v971, %v964
      %v979 = vpack.c.b16 %v972, %v965
      %v980 = vpack.c.b16 %v973, %v966
      %v981 = vpack.c.b16 %v974, %v967
      %v989 = vsel %vm777, %v981, 0
      %991 = vmatprep.subr.bf16.mxu0 0
      %992 = vmatpush1.bf16.msra.mxu0 %v677
      %993 = vmatprep.subr.bf16.mxu0 0
      %994 = vmatpush1.bf16.msra.mxu0 %v678
      %995 = vmatprep.subr.bf16.mxu0 0
      %996 = vmatpush1.bf16.msra.mxu0 %v679
      %997 = vmatprep.subr.bf16.mxu0 0
      %998 = vmatpush1.bf16.msra.mxu0 %v680
      %999 = vmatprep.subr.bf16.mxu0 0
      %1000 = vmatpush1.bf16.msra.mxu0 %v681
      %1001 = vmatprep.subr.bf16.mxu0 0
      %1002 = vmatpush1.bf16.msra.mxu0 %v682
      %1003 = vmatprep.subr.bf16.mxu0 0
      %1004 = vmatpush1.bf16.msra.mxu0 %v683
      %1005 = vmatprep.subr.bf16.mxu0 0
      %1006 = vmatpush1.bf16.msra.mxu0 %v684
      %1007 = vmatprep.subr.bf16.mxu0 0
      %1008 = vmatpush1.bf16.msra.mxu0 %v685
      %1009 = vmatprep.subr.bf16.mxu0 0
      %1010 = vmatpush1.bf16.msra.mxu0 %v686
      %1011 = vmatprep.subr.bf16.mxu0 0
      %1012 = vmatpush1.bf16.msra.mxu0 %v687
      %1013 = vmatprep.subr.bf16.mxu0 0
      %1014 = vmatpush1.bf16.msra.mxu0 %v688
      %1015 = vmatprep.subr.bf16.mxu0 0
      %1016 = vmatpush1.bf16.msra.mxu0 %v689
      %1017 = vmatprep.subr.bf16.mxu0 0
      %1018 = vmatpush1.bf16.msra.mxu0 %v690
      %1019 = vmatprep.subr.bf16.mxu0 0
      %1020 = vmatpush1.bf16.msra.mxu0 %v691
      %1021 = vmatprep.subr.bf16.mxu0 0
      %1022 = vmatpush1.bf16.msra.mxu0 %v692
      %1023 = vmatprep.mubr.bf16.mxu0 %v976
      %1024 = vmatmul.mubr.bf16.gmra.mrb[0].mxu0 %v975
      %v1025 = vpop.f32.mrb[0].mxu0
      %v1026 = vadd.f32 0.0, %v1025
      %v1027 = vpop.f32.mrb[0].mxu0
      %v1028 = vpop.f32.mrb[0].mxu0
      %v1029 = vadd.f32 0.0, %v1028
      %v1030 = vpop.f32.mrb[0].mxu0
      %1031 = vdwg.mxu0
      %1032 = vmatprep.subr.bf16.mxu0 0
      %1033 = vmatpush1.bf16.msra.mxu0 %v693
      %1034 = vmatprep.subr.bf16.mxu0 0
      %1035 = vmatpush1.bf16.msra.mxu0 %v694
      %1036 = vmatprep.subr.bf16.mxu0 0
      %1037 = vmatpush1.bf16.msra.mxu0 %v695
      %1038 = vmatprep.subr.bf16.mxu0 0
      %1039 = vmatpush1.bf16.msra.mxu0 %v696
      %1040 = vmatprep.subr.bf16.mxu0 0
      %1041 = vmatpush1.bf16.msra.mxu0 %v697
      %1042 = vmatprep.subr.bf16.mxu0 0
      %1043 = vmatpush1.bf16.msra.mxu0 %v698
      %1044 = vmatprep.subr.bf16.mxu0 0
      %1045 = vmatpush1.bf16.msra.mxu0 %v699
      %1046 = vmatprep.subr.bf16.mxu0 0
      %1047 = vmatpush1.bf16.msra.mxu0 %v700
      %1048 = vmatprep.subr.bf16.mxu0 0
      %1049 = vmatpush1.bf16.msra.mxu0 %v701
      %1050 = vmatprep.subr.bf16.mxu0 0
      %1051 = vmatpush1.bf16.msra.mxu0 %v702
      %1052 = vmatprep.subr.bf16.mxu0 0
      %1053 = vmatpush1.bf16.msra.mxu0 %v703
      %1054 = vmatprep.subr.bf16.mxu0 0
      %1055 = vmatpush1.bf16.msra.mxu0 %v704
      %1056 = vmatprep.subr.bf16.mxu0 0
      %1057 = vmatpush1.bf16.msra.mxu0 %v705
      %1058 = vmatprep.subr.bf16.mxu0 0
      %1059 = vmatpush1.bf16.msra.mxu0 %v706
      %1060 = vmatprep.subr.bf16.mxu0 0
      %1061 = vmatpush1.bf16.msra.mxu0 %v707
      %1062 = vmatprep.subr.bf16.mxu0 0
      %1063 = vmatpush1.bf16.msra.mxu0 %v708
      %1064 = vmatprep.mubr.bf16.mxu0 %v978
      %1065 = vmatmul.mubr.bf16.gmra.mrb[0].mxu0 %v977
      %v1066 = vpop.f32.mrb[0].mxu0
      %v1067 = vadd.f32 %v1026, %v1066
      %v1068 = vpop.f32.mrb[0].mxu0
      %v1069 = vpop.f32.mrb[0].mxu0
      %v1070 = vadd.f32 %v1029, %v1069
      %v1071 = vpop.f32.mrb[0].mxu0
      %1072 = vdwg.mxu0
      %1073 = vmatprep.subr.bf16.mxu0 0
      %1074 = vmatpush1.bf16.msra.mxu0 %v709
      %1075 = vmatprep.subr.bf16.mxu0 0
      %1076 = vmatpush1.bf16.msra.mxu0 %v710
      %1077 = vmatprep.subr.bf16.mxu0 0
      %1078 = vmatpush1.bf16.msra.mxu0 %v711
      %1079 = vmatprep.subr.bf16.mxu0 0
      %1080 = vmatpush1.bf16.msra.mxu0 %v712
      %1081 = vmatprep.subr.bf16.mxu0 0
      %1082 = vmatpush1.bf16.msra.mxu0 %v713
      %1083 = vmatprep.subr.bf16.mxu0 0
      %1084 = vmatpush1.bf16.msra.mxu0 %v714
      %1085 = vmatprep.subr.bf16.mxu0 0
      %1086 = vmatpush1.bf16.msra.mxu0 %v715
      %1087 = vmatprep.subr.bf16.mxu0 0
      %1088 = vmatpush1.bf16.msra.mxu0 %v716
      %1089 = vmatprep.subr.bf16.mxu0 0
      %1090 = vmatpush1.bf16.msra.mxu0 %v717
      %1091 = vmatprep.subr.bf16.mxu0 0
      %1092 = vmatpush1.bf16.msra.mxu0 %v718
      %1093 = vmatprep.subr.bf16.mxu0 0
      %1094 = vmatpush1.bf16.msra.mxu0 %v719
      %1095 = vmatprep.subr.bf16.mxu0 0
      %1096 = vmatpush1.bf16.msra.mxu0 %v720
      %1097 = vmatprep.subr.bf16.mxu0 0
      %1098 = vmatpush1.bf16.msra.mxu0 %v721
      %1099 = vmatprep.subr.bf16.mxu0 0
      %1100 = vmatpush1.bf16.msra.mxu0 %v722
      %1101 = vmatprep.subr.bf16.mxu0 0
      %1102 = vmatpush1.bf16.msra.mxu0 %v723
      %1103 = vmatprep.subr.bf16.mxu0 0
      %1104 = vmatpush1.bf16.msra.mxu0 %v724
      %1105 = vmatprep.mubr.bf16.mxu0 %v980
      %1106 = vmatmul.mubr.bf16.gmra.mrb[0].mxu0 %v979
      %v1107 = vpop.f32.mrb[0].mxu0
      %v1108 = vadd.f32 %v1067, %v1107
      %v1109 = vpop.f32.mrb[0].mxu0
      %v1110 = vpop.f32.mrb[0].mxu0
      %v1111 = vadd.f32 %v1070, %v1110
      %v1112 = vpop.f32.mrb[0].mxu0
      %1113 = vdwg.mxu0
      %1114 = vmatprep.subr.bf16.mxu0 0
      %1115 = vmatpush1.bf16.msra.mxu0 %v725
      %1116 = vmatprep.subr.bf16.mxu0 0
      %1117 = vmatpush1.bf16.msra.mxu0 %v726
      %1118 = vmatprep.subr.bf16.mxu0 0
      %1119 = vmatpush1.bf16.msra.mxu0 0
      %1120 = vmatprep.subr.bf16.mxu0 0
      %1121 = vmatpush1.bf16.msra.mxu0 0
      %1122 = vmatprep.subr.bf16.mxu0 0
      %1123 = vmatpush1.bf16.msra.mxu0 0
      %1124 = vmatprep.subr.bf16.mxu0 0
      %1125 = vmatpush1.bf16.msra.mxu0 0
      %1126 = vmatprep.subr.bf16.mxu0 0
      %1127 = vmatpush1.bf16.msra.mxu0 0
      %1128 = vmatprep.subr.bf16.mxu0 0
      %1129 = vmatpush1.bf16.msra.mxu0 0
      %1130 = vmatprep.subr.bf16.mxu0 0
      %1131 = vmatpush1.bf16.msra.mxu0 0
      %1132 = vmatprep.subr.bf16.mxu0 0
      %1133 = vmatpush1.bf16.msra.mxu0 0
      %1134 = vmatprep.subr.bf16.mxu0 0
      %1135 = vmatpush1.bf16.msra.mxu0 0
      %1136 = vmatprep.subr.bf16.mxu0 0
      %1137 = vmatpush1.bf16.msra.mxu0 0
      %1138 = vmatprep.subr.bf16.mxu0 0
      %1139 = vmatpush1.bf16.msra.mxu0 0
      %1140 = vmatprep.subr.bf16.mxu0 0
      %1141 = vmatpush1.bf16.msra.mxu0 0
      %1142 = vmatprep.subr.bf16.mxu0 0
      %1143 = vmatpush1.bf16.msra.mxu0 0
      %1144 = vmatprep.subr.bf16.mxu0 0
      %1145 = vmatpush1.bf16.msra.mxu0 0
      %1146 = vmatprep.mubr.bf16.mxu0 0
      %1147 = vmatmul.mubr.bf16.gmra.mrb[0].mxu0 %v989
      %v1148 = vpop.f32.mrb[0].mxu0
      %v1149 = vadd.f32 %v1108, %v1148
      %v1150 = vpop.f32.mrb[0].mxu0
      %v1151 = vpop.f32.mrb[0].mxu0
      %v1152 = vadd.f32 %v1111, %v1151
      %v1153 = vpop.f32.mrb[0].mxu0
      %1154 = vdwg.mxu0
      %v1155 = vld [vmem:[%s318] sm:$0xff]
      %v1156 = vld [vmem:[%s318 + $0x8] sm:$0xff]
      %v1157 = vld [vmem:[%s318 + $0x10] sm:$0xff]
      %v1158 = vld [vmem:[%s318 + $0x18] sm:$0xf]
      %v1159 = vld [vmem:[%s318 + $0x1c] sm:$0xff]
      %v1160 = vld [vmem:[%s318 + $0x24] sm:$0xff]
      %v1161 = vld [vmem:[%s318 + $0x2c] sm:$0xff]
      %v1162 = vld [vmem:[%s318 + $0x34] sm:$0xf]
      %v1171 = vunpack.c.l.b16 %v1155
      %v1172 = vunpack.c.h.b16 %v1155
      %v1173 = vunpack.c.l.b16 %v1156
      %v1174 = vunpack.c.h.b16 %v1156
      %v1175 = vunpack.c.l.b16 %v1157
      %v1176 = vunpack.c.h.b16 %v1157
      %v1177 = vunpack.c.l.b16 %v1158
      %v1178 = vunpack.c.l.b16 %v1159
      %v1179 = vunpack.c.h.b16 %v1159
      %v1180 = vunpack.c.l.b16 %v1160
      %v1181 = vunpack.c.h.b16 %v1160
      %v1182 = vunpack.c.l.b16 %v1161
      %v1183 = vunpack.c.h.b16 %v1161
      %v1184 = vunpack.c.l.b16 %v1162
      %v1185 = vpack.c.b16 %v1178, %v1171
      %v1186 = vpack.c.b16 %v1179, %v1172
      %v1187 = vpack.c.b16 %v1180, %v1173
      %v1188 = vpack.c.b16 %v1181, %v1174
      %v1189 = vpack.c.b16 %v1182, %v1175
      %v1190 = vpack.c.b16 %v1183, %v1176
      %v1191 = vpack.c.b16 %v1184, %v1177
      %v1199 = vsel %vm777, %v1191, 0
      %1201 = vmatprep.subr.bf16.mxu0 0
      %1202 = vmatpush1.bf16.msra.mxu0 %v677
      %1203 = vmatprep.subr.bf16.mxu0 0
      %1204 = vmatpush1.bf16.msra.mxu0 %v678
      %1205 = vmatprep.subr.bf16.mxu0 0
      %1206 = vmatpush1.bf16.msra.mxu0 %v679
      %1207 = vmatprep.subr.bf16.mxu0 0
      %1208 = vmatpush1.bf16.msra.mxu0 %v680
      %1209 = vmatprep.subr.bf16.mxu0 0
      %1210 = vmatpush1.bf16.msra.mxu0 %v681
      %1211 = vmatprep.subr.bf16.mxu0 0
      %1212 = vmatpush1.bf16.msra.mxu0 %v682
      %1213 = vmatprep.subr.bf16.mxu0 0
      %1214 = vmatpush1.bf16.msra.mxu0 %v683
      %1215 = vmatprep.subr.bf16.mxu0 0
      %1216 = vmatpush1.bf16.msra.mxu0 %v684
      %1217 = vmatprep.subr.bf16.mxu0 0
      %1218 = vmatpush1.bf16.msra.mxu0 %v685
      %1219 = vmatprep.subr.bf16.mxu0 0
      %1220 = vmatpush1.bf16.msra.mxu0 %v686
      %1221 = vmatprep.subr.bf16.mxu0 0
      %1222 = vmatpush1.bf16.msra.mxu0 %v687
      %1223 = vmatprep.subr.bf16.mxu0 0
      %1224 = vmatpush1.bf16.msra.mxu0 %v688
      %1225 = vmatprep.subr.bf16.mxu0 0
      %1226 = vmatpush1.bf16.msra.mxu0 %v689
      %1227 = vmatprep.subr.bf16.mxu0 0
      %1228 = vmatpush1.bf16.msra.mxu0 %v690
      %1229 = vmatprep.subr.bf16.mxu0 0
      %1230 = vmatpush1.bf16.msra.mxu0 %v691
      %1231 = vmatprep.subr.bf16.mxu0 0
      %1232 = vmatpush1.bf16.msra.mxu0 %v692
      %1233 = vmatprep.mubr.bf16.mxu0 %v1186
      %1234 = vmatmul.mubr.bf16.gmra.mrb[0].mxu0 %v1185
      %v1235 = vpop.f32.mrb[0].mxu0
      %v1236 = vadd.f32 0.0, %v1235
      %v1237 = vpop.f32.mrb[0].mxu0
      %v1238 = vpop.f32.mrb[0].mxu0
      %v1239 = vadd.f32 0.0, %v1238
      %v1240 = vpop.f32.mrb[0].mxu0
      %1241 = vdwg.mxu0
      %1242 = vmatprep.subr.bf16.mxu0 0
      %1243 = vmatpush1.bf16.msra.mxu0 %v693
      %1244 = vmatprep.subr.bf16.mxu0 0
      %1245 = vmatpush1.bf16.msra.mxu0 %v694
      %1246 = vmatprep.subr.bf16.mxu0 0
      %1247 = vmatpush1.bf16.msra.mxu0 %v695
      %1248 = vmatprep.subr.bf16.mxu0 0
      %1249 = vmatpush1.bf16.msra.mxu0 %v696
      %1250 = vmatprep.subr.bf16.mxu0 0
      %1251 = vmatpush1.bf16.msra.mxu0 %v697
      %1252 = vmatprep.subr.bf16.mxu0 0
      %1253 = vmatpush1.bf16.msra.mxu0 %v698
      %1254 = vmatprep.subr.bf16.mxu0 0
      %1255 = vmatpush1.bf16.msra.mxu0 %v699
      %1256 = vmatprep.subr.bf16.mxu0 0
      %1257 = vmatpush1.bf16.msra.mxu0 %v700
      %1258 = vmatprep.subr.bf16.mxu0 0
      %1259 = vmatpush1.bf16.msra.mxu0 %v701
      %1260 = vmatprep.subr.bf16.mxu0 0
      %1261 = vmatpush1.bf16.msra.mxu0 %v702
      %1262 = vmatprep.subr.bf16.mxu0 0
      %1263 = vmatpush1.bf16.msra.mxu0 %v703
      %1264 = vmatprep.subr.bf16.mxu0 0
      %1265 = vmatpush1.bf16.msra.mxu0 %v704
      %1266 = vmatprep.subr.bf16.mxu0 0
      %1267 = vmatpush1.bf16.msra.mxu0 %v705
      %1268 = vmatprep.subr.bf16.mxu0 0
      %1269 = vmatpush1.bf16.msra.mxu0 %v706
      %1270 = vmatprep.subr.bf16.mxu0 0
      %1271 = vmatpush1.bf16.msra.mxu0 %v707
      %1272 = vmatprep.subr.bf16.mxu0 0
      %1273 = vmatpush1.bf16.msra.mxu0 %v708
      %1274 = vmatprep.mubr.bf16.mxu0 %v1188
      %1275 = vmatmul.mubr.bf16.gmra.mrb[0].mxu0 %v1187
      %v1276 = vpop.f32.mrb[0].mxu0
      %v1277 = vadd.f32 %v1236, %v1276
      %v1278 = vpop.f32.mrb[0].mxu0
      %v1279 = vpop.f32.mrb[0].mxu0
      %v1280 = vadd.f32 %v1239, %v1279
      %v1281 = vpop.f32.mrb[0].mxu0
      %1282 = vdwg.mxu0
      %1283 = vmatprep.subr.bf16.mxu0 0
      %1284 = vmatpush1.bf16.msra.mxu0 %v709
      %1285 = vmatprep.subr.bf16.mxu0 0
      %1286 = vmatpush1.bf16.msra.mxu0 %v710
      %1287 = vmatprep.subr.bf16.mxu0 0
      %1288 = vmatpush1.bf16.msra.mxu0 %v711
      %1289 = vmatprep.subr.bf16.mxu0 0
      %1290 = vmatpush1.bf16.msra.mxu0 %v712
      %1291 = vmatprep.subr.bf16.mxu0 0
      %1292 = vmatpush1.bf16.msra.mxu0 %v713
      %1293 = vmatprep.subr.bf16.mxu0 0
      %1294 = vmatpush1.bf16.msra.mxu0 %v714
      %1295 = vmatprep.subr.bf16.mxu0 0
      %1296 = vmatpush1.bf16.msra.mxu0 %v715
      %1297 = vmatprep.subr.bf16.mxu0 0
      %1298 = vmatpush1.bf16.msra.mxu0 %v716
      %1299 = vmatprep.subr.bf16.mxu0 0
      %1300 = vmatpush1.bf16.msra.mxu0 %v717
      %1301 = vmatprep.subr.bf16.mxu0 0
      %1302 = vmatpush1.bf16.msra.mxu0 %v718
      %1303 = vmatprep.subr.bf16.mxu0 0
      %1304 = vmatpush1.bf16.msra.mxu0 %v719
      %1305 = vmatprep.subr.bf16.mxu0 0
      %1306 = vmatpush1.bf16.msra.mxu0 %v720
      %1307 = vmatprep.subr.bf16.mxu0 0
      %1308 = vmatpush1.bf16.msra.mxu0 %v721
      %1309 = vmatprep.subr.bf16.mxu0 0
      %1310 = vmatpush1.bf16.msra.mxu0 %v722
      %1311 = vmatprep.subr.bf16.mxu0 0
      %1312 = vmatpush1.bf16.msra.mxu0 %v723
      %1313 = vmatprep.subr.bf16.mxu0 0
      %1314 = vmatpush1.bf16.msra.mxu0 %v724
      %1315 = vmatprep.mubr.bf16.mxu0 %v1190
      %1316 = vmatmul.mubr.bf16.gmra.mrb[0].mxu0 %v1189
      %v1317 = vpop.f32.mrb[0].mxu0
      %v1318 = vadd.f32 %v1277, %v1317
      %v1319 = vpop.f32.mrb[0].mxu0
      %v1320 = vpop.f32.mrb[0].mxu0
      %v1321 = vadd.f32 %v1280, %v1320
      %v1322 = vpop.f32.mrb[0].mxu0
      %1323 = vdwg.mxu0
      %1324 = vmatprep.subr.bf16.mxu0 0
      %1325 = vmatpush1.bf16.msra.mxu0 %v725
      %1326 = vmatprep.subr.bf16.mxu0 0
      %1327 = vmatpush1.bf16.msra.mxu0 %v726
      %1328 = vmatprep.subr.bf16.mxu0 0
      %1329 = vmatpush1.bf16.msra.mxu0 0
      %1330 = vmatprep.subr.bf16.mxu0 0
      %1331 = vmatpush1.bf16.msra.mxu0 0
      %1332 = vmatprep.subr.bf16.mxu0 0
      %1333 = vmatpush1.bf16.msra.mxu0 0
      %1334 = vmatprep.subr.bf16.mxu0 0
      %1335 = vmatpush1.bf16.msra.mxu0 0
      %1336 = vmatprep.subr.bf16.mxu0 0
      %1337 = vmatpush1.bf16.msra.mxu0 0
      %1338 = vmatprep.subr.bf16.mxu0 0
      %1339 = vmatpush1.bf16.msra.mxu0 0
      %1340 = vmatprep.subr.bf16.mxu0 0
      %1341 = vmatpush1.bf16.msra.mxu0 0
      %1342 = vmatprep.subr.bf16.mxu0 0
      %1343 = vmatpush1.bf16.msra.mxu0 0
      %1344 = vmatprep.subr.bf16.mxu0 0
      %1345 = vmatpush1.bf16.msra.mxu0 0
      %1346 = vmatprep.subr.bf16.mxu0 0
      %1347 = vmatpush1.bf16.msra.mxu0 0
      %1348 = vmatprep.subr.bf16.mxu0 0
      %1349 = vmatpush1.bf16.msra.mxu0 0
      %1350 = vmatprep.subr.bf16.mxu0 0
      %1351 = vmatpush1.bf16.msra.mxu0 0
      %1352 = vmatprep.subr.bf16.mxu0 0
      %1353 = vmatpush1.bf16.msra.mxu0 0
      %1354 = vmatprep.subr.bf16.mxu0 0
      %1355 = vmatpush1.bf16.msra.mxu0 0
      %1356 = vmatprep.mubr.bf16.mxu0 0
      %1357 = vmatmul.mubr.bf16.gmra.mrb[0].mxu0 %v1199
      %v1358 = vpop.f32.mrb[0].mxu0
      %v1359 = vadd.f32 %v1318, %v1358
      %v1360 = vpop.f32.mrb[0].mxu0
      %v1361 = vpop.f32.mrb[0].mxu0
      %v1362 = vadd.f32 %v1321, %v1361
      %v1363 = vpop.f32.mrb[0].mxu0
      %1364 = vdwg.mxu0
      %v1365 = vld [vmem:[%s325] sm:$0xff]
      %v1366 = vld [vmem:[%s325 + $0x8] sm:$0xff]
      %v1367 = vld [vmem:[%s325 + $0x10] sm:$0xff]
      %v1368 = vld [vmem:[%s325 + $0x18] sm:$0xf]
      %v1369 = vld [vmem:[%s325 + $0x1c] sm:$0xff]
      %v1370 = vld [vmem:[%s325 + $0x24] sm:$0xff]
      %v1371 = vld [vmem:[%s325 + $0x2c] sm:$0xff]
      %v1372 = vld [vmem:[%s325 + $0x34] sm:$0xf]
      %v1381 = vunpack.c.l.b16 %v1365
      %v1382 = vunpack.c.h.b16 %v1365
      %v1383 = vunpack.c.l.b16 %v1366
      %v1384 = vunpack.c.h.b16 %v1366
      %v1385 = vunpack.c.l.b16 %v1367
      %v1386 = vunpack.c.h.b16 %v1367
      %v1387 = vunpack.c.l.b16 %v1368
      %v1388 = vunpack.c.l.b16 %v1369
      %v1389 = vunpack.c.h.b16 %v1369
      %v1390 = vunpack.c.l.b16 %v1370
      %v1391 = vunpack.c.h.b16 %v1370
      %v1392 = vunpack.c.l.b16 %v1371
      %v1393 = vunpack.c.h.b16 %v1371
      %v1394 = vunpack.c.l.b16 %v1372
      %v1395 = vpack.c.b16 %v1388, %v1381
      %v1396 = vpack.c.b16 %v1389, %v1382
      %v1397 = vpack.c.b16 %v1390, %v1383
      %v1398 = vpack.c.b16 %v1391, %v1384
      %v1399 = vpack.c.b16 %v1392, %v1385
      %v1400 = vpack.c.b16 %v1393, %v1386
      %v1401 = vpack.c.b16 %v1394, %v1387
      %v1409 = vsel %vm777, %v1401, 0
      %1411 = vmatprep.subr.bf16.mxu0 0
      %1412 = vmatpush1.bf16.msra.mxu0 %v677
      %1413 = vmatprep.subr.bf16.mxu0 0
      %1414 = vmatpush1.bf16.msra.mxu0 %v678
      %1415 = vmatprep.subr.bf16.mxu0 0
      %1416 = vmatpush1.bf16.msra.mxu0 %v679
      %1417 = vmatprep.subr.bf16.mxu0 0
      %1418 = vmatpush1.bf16.msra.mxu0 %v680
      %1419 = vmatprep.subr.bf16.mxu0 0
      %1420 = vmatpush1.bf16.msra.mxu0 %v681
      %1421 = vmatprep.subr.bf16.mxu0 0
      %1422 = vmatpush1.bf16.msra.mxu0 %v682
      %1423 = vmatprep.subr.bf16.mxu0 0
      %1424 = vmatpush1.bf16.msra.mxu0 %v683
      %1425 = vmatprep.subr.bf16.mxu0 0
      %1426 = vmatpush1.bf16.msra.mxu0 %v684
      %1427 = vmatprep.subr.bf16.mxu0 0
      %1428 = vmatpush1.bf16.msra.mxu0 %v685
      %1429 = vmatprep.subr.bf16.mxu0 0
      %1430 = vmatpush1.bf16.msra.mxu0 %v686
      %1431 = vmatprep.subr.bf16.mxu0 0
      %1432 = vmatpush1.bf16.msra.mxu0 %v687
      %1433 = vmatprep.subr.bf16.mxu0 0
      %1434 = vmatpush1.bf16.msra.mxu0 %v688
      %1435 = vmatprep.subr.bf16.mxu0 0
      %1436 = vmatpush1.bf16.msra.mxu0 %v689
      %1437 = vmatprep.subr.bf16.mxu0 0
      %1438 = vmatpush1.bf16.msra.mxu0 %v690
      %1439 = vmatprep.subr.bf16.mxu0 0
      %1440 = vmatpush1.bf16.msra.mxu0 %v691
      %1441 = vmatprep.subr.bf16.mxu0 0
      %1442 = vmatpush1.bf16.msra.mxu0 %v692
      %1443 = vmatprep.mubr.bf16.mxu0 %v1396
      %1444 = vmatmul.mubr.bf16.gmra.mrb[0].mxu0 %v1395
      %v1445 = vpop.f32.mrb[0].mxu0
      %v1446 = vadd.f32 0.0, %v1445
      %v1447 = vpop.f32.mrb[0].mxu0
      %v1448 = vpop.f32.mrb[0].mxu0
      %v1449 = vadd.f32 0.0, %v1448
      %v1450 = vpop.f32.mrb[0].mxu0
      %1451 = vdwg.mxu0
      %1452 = vmatprep.subr.bf16.mxu0 0
      %1453 = vmatpush1.bf16.msra.mxu0 %v693
      %1454 = vmatprep.subr.bf16.mxu0 0
      %1455 = vmatpush1.bf16.msra.mxu0 %v694
      %1456 = vmatprep.subr.bf16.mxu0 0
      %1457 = vmatpush1.bf16.msra.mxu0 %v695
      %1458 = vmatprep.subr.bf16.mxu0 0
      %1459 = vmatpush1.bf16.msra.mxu0 %v696
      %1460 = vmatprep.subr.bf16.mxu0 0
      %1461 = vmatpush1.bf16.msra.mxu0 %v697
      %1462 = vmatprep.subr.bf16.mxu0 0
      %1463 = vmatpush1.bf16.msra.mxu0 %v698
      %1464 = vmatprep.subr.bf16.mxu0 0
      %1465 = vmatpush1.bf16.msra.mxu0 %v699
      %1466 = vmatprep.subr.bf16.mxu0 0
      %1467 = vmatpush1.bf16.msra.mxu0 %v700
      %1468 = vmatprep.subr.bf16.mxu0 0
      %1469 = vmatpush1.bf16.msra.mxu0 %v701
      %1470 = vmatprep.subr.bf16.mxu0 0
      %1471 = vmatpush1.bf16.msra.mxu0 %v702
      %1472 = vmatprep.subr.bf16.mxu0 0
      %1473 = vmatpush1.bf16.msra.mxu0 %v703
      %1474 = vmatprep.subr.bf16.mxu0 0
      %1475 = vmatpush1.bf16.msra.mxu0 %v704
      %1476 = vmatprep.subr.bf16.mxu0 0
      %1477 = vmatpush1.bf16.msra.mxu0 %v705
      %1478 = vmatprep.subr.bf16.mxu0 0
      %1479 = vmatpush1.bf16.msra.mxu0 %v706
      %1480 = vmatprep.subr.bf16.mxu0 0
      %1481 = vmatpush1.bf16.msra.mxu0 %v707
      %1482 = vmatprep.subr.bf16.mxu0 0
      %1483 = vmatpush1.bf16.msra.mxu0 %v708
      %1484 = vmatprep.mubr.bf16.mxu0 %v1398
      %1485 = vmatmul.mubr.bf16.gmra.mrb[0].mxu0 %v1397
      %v1486 = vpop.f32.mrb[0].mxu0
      %v1487 = vadd.f32 %v1446, %v1486
      %v1488 = vpop.f32.mrb[0].mxu0
      %v1489 = vpop.f32.mrb[0].mxu0
      %v1490 = vadd.f32 %v1449, %v1489
      %v1491 = vpop.f32.mrb[0].mxu0
      %1492 = vdwg.mxu0
      %1493 = vmatprep.subr.bf16.mxu0 0
      %1494 = vmatpush1.bf16.msra.mxu0 %v709
      %1495 = vmatprep.subr.bf16.mxu0 0
      %1496 = vmatpush1.bf16.msra.mxu0 %v710
      %1497 = vmatprep.subr.bf16.mxu0 0
      %1498 = vmatpush1.bf16.msra.mxu0 %v711
      %1499 = vmatprep.subr.bf16.mxu0 0
      %1500 = vmatpush1.bf16.msra.mxu0 %v712
      %1501 = vmatprep.subr.bf16.mxu0 0
      %1502 = vmatpush1.bf16.msra.mxu0 %v713
      %1503 = vmatprep.subr.bf16.mxu0 0
      %1504 = vmatpush1.bf16.msra.mxu0 %v714
      %1505 = vmatprep.subr.bf16.mxu0 0
      %1506 = vmatpush1.bf16.msra.mxu0 %v715
      %1507 = vmatprep.subr.bf16.mxu0 0
      %1508 = vmatpush1.bf16.msra.mxu0 %v716
      %1509 = vmatprep.subr.bf16.mxu0 0
      %1510 = vmatpush1.bf16.msra.mxu0 %v717
      %1511 = vmatprep.subr.bf16.mxu0 0
      %1512 = vmatpush1.bf16.msra.mxu0 %v718
      %1513 = vmatprep.subr.bf16.mxu0 0
      %1514 = vmatpush1.bf16.msra.mxu0 %v719
      %1515 = vmatprep.subr.bf16.mxu0 0
      %1516 = vmatpush1.bf16.msra.mxu0 %v720
      %1517 = vmatprep.subr.bf16.mxu0 0
      %1518 = vmatpush1.bf16.msra.mxu0 %v721
      %1519 = vmatprep.subr.bf16.mxu0 0
      %1520 = vmatpush1.bf16.msra.mxu0 %v722
      %1521 = vmatprep.subr.bf16.mxu0 0
      %1522 = vmatpush1.bf16.msra.mxu0 %v723
      %1523 = vmatprep.subr.bf16.mxu0 0
      %1524 = vmatpush1.bf16.msra.mxu0 %v724
      %1525 = vmatprep.mubr.bf16.mxu0 %v1400
      %1526 = vmatmul.mubr.bf16.gmra.mrb[0].mxu0 %v1399
      %v1527 = vpop.f32.mrb[0].mxu0
      %v1528 = vadd.f32 %v1487, %v1527
      %v1529 = vpop.f32.mrb[0].mxu0
      %v1530 = vpop.f32.mrb[0].mxu0
      %v1531 = vadd.f32 %v1490, %v1530
      %v1532 = vpop.f32.mrb[0].mxu0
      %1533 = vdwg.mxu0
      %1534 = vmatprep.subr.bf16.mxu0 0
      %1535 = vmatpush1.bf16.msra.mxu0 %v725
      %1536 = vmatprep.subr.bf16.mxu0 0
      %1537 = vmatpush1.bf16.msra.mxu0 %v726
      %1538 = vmatprep.subr.bf16.mxu0 0
      %1539 = vmatpush1.bf16.msra.mxu0 0
      %1540 = vmatprep.subr.bf16.mxu0 0
      %1541 = vmatpush1.bf16.msra.mxu0 0
      %1542 = vmatprep.subr.bf16.mxu0 0
      %1543 = vmatpush1.bf16.msra.mxu0 0
      %1544 = vmatprep.subr.bf16.mxu0 0
      %1545 = vmatpush1.bf16.msra.mxu0 0
      %1546 = vmatprep.subr.bf16.mxu0 0
      %1547 = vmatpush1.bf16.msra.mxu0 0
      %1548 = vmatprep.subr.bf16.mxu0 0
      %1549 = vmatpush1.bf16.msra.mxu0 0
      %1550 = vmatprep.subr.bf16.mxu0 0
      %1551 = vmatpush1.bf16.msra.mxu0 0
      %1552 = vmatprep.subr.bf16.mxu0 0
      %1553 = vmatpush1.bf16.msra.mxu0 0
      %1554 = vmatprep.subr.bf16.mxu0 0
      %1555 = vmatpush1.bf16.msra.mxu0 0
      %1556 = vmatprep.subr.bf16.mxu0 0
      %1557 = vmatpush1.bf16.msra.mxu0 0
      %1558 = vmatprep.subr.bf16.mxu0 0
      %1559 = vmatpush1.bf16.msra.mxu0 0
      %1560 = vmatprep.subr.bf16.mxu0 0
      %1561 = vmatpush1.bf16.msra.mxu0 0
      %1562 = vmatprep.subr.bf16.mxu0 0
      %1563 = vmatpush1.bf16.msra.mxu0 0
      %1564 = vmatprep.subr.bf16.mxu0 0
      %1565 = vmatpush1.bf16.msra.mxu0 0
      %1566 = vmatprep.mubr.bf16.mxu0 0
      %1567 = vmatmul.mubr.bf16.gmra.mrb[0].mxu0 %v1409
      %v1568 = vpop.f32.mrb[0].mxu0
      %v1569 = vadd.f32 %v1528, %v1568
      %v1570 = vpop.f32.mrb[0].mxu0
      %v1571 = vpop.f32.mrb[0].mxu0
      %v1572 = vadd.f32 %v1531, %v1571
      %v1573 = vpop.f32.mrb[0].mxu0
      %1574 = vdwg.mxu0
      %v1575 = vmax.f32 %v939, %v1149
      %v1576 = vmax.f32 %v942, %v1152
      %v1577 = vmax.f32 %v1359, %v1569
      %v1578 = vmax.f32 %v1362, %v1572
      %v1579 = vmax.f32 %v1575, %v1577
      %v1580 = vmax.f32 %v1576, %v1578
      %v1581 = vld [vmem:[%s5] sm:$0x1]
      %v1583 = vlaneseq
      %v1584 = vshrl.u32 %v1583, 7
      %v1585 = vsub.s32 0, %v1584
      %v1586 = vrot.slane %v1581, %v1585
      %v1588 = vadd.f32 %v1579, %v1586
      %v1589 = vadd.f32 %v1580, %v1586
      %v1590 = vpack.c.bf16 %v1589, %v1588
      %v1592 = vunpack.c.l.b16 %v1590
      %v1593 = vunpack.c.h.b16 %v1590
      %v1594 = vpack.c.b16 %v1592, %v1592
      %v1595 = vpack.c.b16 %v1593, %v1593
      %1598 = vst [vmem:[%s331] sm:$0xf] %v1594
      %1599 = vst [vmem:[%s331 + $0x4] sm:$0xf] %v1595
      %s1600 = smul.u32 2, %s17
      %p1601 = scmp.lt.s32.totalorder %s1600, 3
      %s1602 = scalar_select %p1601, %s1600, 3
      %s1603 = smul.addr %s1602, 4
      %s1604 = scalar_lea.vmem %s6, %s1603
      // Predicated region
      $region45: #{nn5_forward.6} parent=43 // pred_check
        %p1605 = pneg %p181
      $region46: #{nn5_forward.6} parent=43 // pred_check_branch
        %1607 = sbr.rel (%p1605) target = $region48
      $region47: #{nn5_forward.6} parent=43 // pred_region
        %s1608 = smul.u32 2, %s17
      $region48: #{nn5_forward.6} parent=43 // pred_fallthru
        _
    $region44: #{nn5_forward.6} parent=5 // pred_fallthru
      _
    %p1609 = scmp.le.s32.totalorder 2, %s12
    // Predicated region
    $region49: #{nn5_forward.6} parent=5 // pred_check
      %p1610 = pneg %p1609
    $region50: #{nn5_forward.6} parent=5 // pred_check_branch
      %1612 = sbr.rel (%p1610) target = $region52
    $region51: #{nn5_forward.6} parent=5 // pred_region
      %s1613 = ssub.s32 %s12, 2
      // Predicated region
      $region53: #{nn5_forward.6} parent=51 // pred_check
        %p1614 = pneg %p187
      $region54: #{nn5_forward.6} parent=51 // pred_check_branch
        %1616 = sbr.rel (%p1614) target = $region56
      $region55: #{nn5_forward.6} parent=51 // pred_region
        %s1617 = smul.u32 2, %s18
        %p1618 = scmp.lt.s32.totalorder %s1617, 3
        %s1619 = scalar_select %p1618, %s1617, 3
        %s1620 = smul.addr %s1619, 4
        %s1621 = scalar_lea.vmem %s6, %s1620
      $region56: #{nn5_forward.6} parent=51 // pred_fallthru
        _
    $region52: #{nn5_forward.6} parent=5 // pred_fallthru
      _
  $region6: #{nn5_forward.6} parent=0 // loop_footer
    %s16 = sadd.s32 1, %s12
  $region7: #{nn5_forward.6} parent=0 // loop_footer_branch
    %11 = sbr.rel target = $region3
  $region8: #{nn5_forward.6} parent=0 // loop_exit
    _

// kernel: nn5_forward.7
$region0: #{nn5_forward.7}
  #allocation0 [shape = 'u32[]', space=smem, size = 0x4, offset = 0x4, fixed_abs, tag = 'smem constant byte address 0x4 - core index']
  #allocation1 [shape = 'u32[144,128]{1,0:T(1,128)}', space=vmem, size = 0x12000, scoped, tag = 'internal scratch']
  %s0 = inlined_call_operand.vmem [shape: bf16[2,1024], index: 0, kind: input, shape index: {}]
  %s1 = inlined_call_operand.vmem [shape: bf16[1024,128], index: 1, kind: input, shape index: {}]
  %s2 = inlined_call_operand.vmem [shape: f32[1,128], index: 2, kind: input, shape index: {}]
  %s3 = inlined_call_operand.vmem [shape: bf16[128,128], index: 3, kind: input, shape index: {}]
  %s4 = inlined_call_operand.vmem [shape: f32[1,128], index: 4, kind: input, shape index: {}]
  %s5 = inlined_call_operand.hbm [shape: f32[2,128], index: 5, kind: output, shape index: {}]
  %s6 = sld [smem:[#allocation0]]
  $region30: #{nn5_forward.7} parent=0
    _
  %s8 = ssub.s32 1, %s6
  %s9 = scalar_select 0, %s8, %s6
  $region1: #{nn5_forward.7} parent=0
    #allocation2 [shape = 'u8[1024]{0}', space=vmem, size = 0x400, scoped, tag = 'output window, operand 0, single buffered']
    #allocation3 [shape = 's32[1]{0}', space=sflag, size = 0x4, scoped, tag = 'scoped memory for nn5_forward.7']
    %10 = vsyncpa [#allocation3], 0
    // Predicated region
    $region2: #{nn5_forward.7} parent=1 // pred_check
      _
    $region3: #{nn5_forward.7} parent=1 // pred_check_branch
      %12 = sbr.rel (0) target = $region5
    $region4: #{nn5_forward.7} parent=1 // pred_region
      _
    $region5: #{nn5_forward.7} parent=1 // pred_fallthru
      _
    // Predicated region
    $region6: #{nn5_forward.7} parent=1 // pred_check
      _
    $region7: #{nn5_forward.7} parent=1 // pred_check_branch
      %14 = sbr.rel (0) target = $region9
    $region8: #{nn5_forward.7} parent=1 // pred_region
      _
    $region9: #{nn5_forward.7} parent=1 // pred_fallthru
      _
    // Predicated region
    $region10: #{nn5_forward.7} parent=1 // pred_check
      _
    $region11: #{nn5_forward.7} parent=1 // pred_check_branch
      %16 = sbr.rel (0) target = $region13
    $region12: #{nn5_forward.7} parent=1 // pred_region
      _
    $region13: #{nn5_forward.7} parent=1 // pred_fallthru
      _
    // Predicated region
    $region14: #{nn5_forward.7} parent=1 // pred_check
      _
    $region15: #{nn5_forward.7} parent=1 // pred_check_branch
      %18 = sbr.rel (0) target = $region17
    $region16: #{nn5_forward.7} parent=1 // pred_region
      _
    $region17: #{nn5_forward.7} parent=1 // pred_fallthru
      _
    // Predicated region
    $region18: #{nn5_forward.7} parent=1 // pred_check
      _
    $region19: #{nn5_forward.7} parent=1 // pred_check_branch
      %20 = sbr.rel (0) target = $region21
    $region20: #{nn5_forward.7} parent=1 // pred_region
      _
    $region21: #{nn5_forward.7} parent=1 // pred_fallthru
      _
    %v22 = vld [vmem:[%s0] sm:$0xff]
    %v23 = vld [vmem:[%s1] sm:$0xf]
    %v24 = vld [vmem:[%s1 + $0x4] sm:$0xf]
    %v25 = vld [vmem:[%s1 + $0x8] sm:$0xf]
    %v26 = vld [vmem:[%s1 + $0xc] sm:$0xf]
    %v27 = vld [vmem:[%s1 + $0x10] sm:$0xf]
    %v28 = vld [vmem:[%s1 + $0x14] sm:$0xf]
    %v29 = vld [vmem:[%s1 + $0x18] sm:$0xf]
    %v30 = vld [vmem:[%s1 + $0x1c] sm:$0xf]
    %v31 = vld [vmem:[%s1 + $0x20] sm:$0xf]
    %v32 = vld [vmem:[%s1 + $0x24] sm:$0xf]
    %v33 = vld [vmem:[%s1 + $0x28] sm:$0xf]
    %v34 = vld [vmem:[%s1 + $0x2c] sm:$0xf]
    %v35 = vld [vmem:[%s1 + $0x30] sm:$0xf]
    %v36 = vld [vmem:[%s1 + $0x34] sm:$0xf]
    %v37 = vld [vmem:[%s1 + $0x38] sm:$0xf]
    %v38 = vld [vmem:[%s1 + $0x3c] sm:$0xf]
    %v39 = vld [vmem:[%s1 + $0x40] sm:$0xf]
    %v40 = vld [vmem:[%s1 + $0x44] sm:$0xf]
    %v41 = vld [vmem:[%s1 + $0x48] sm:$0xf]
    %v42 = vld [vmem:[%s1 + $0x4c] sm:$0xf]
    %v43 = vld [vmem:[%s1 + $0x50] sm:$0xf]
    %v44 = vld [vmem:[%s1 + $0x54] sm:$0xf]
    %v45 = vld [vmem:[%s1 + $0x58] sm:$0xf]
    %v46 = vld [vmem:[%s1 + $0x5c] sm:$0xf]
    %v47 = vld [vmem:[%s1 + $0x60] sm:$0xf]
    %v48 = vld [vmem:[%s1 + $0x64] sm:$0xf]
    %v49 = vld [vmem:[%s1 + $0x68] sm:$0xf]
    %v50 = vld [vmem:[%s1 + $0x6c] sm:$0xf]
    %v51 = vld [vmem:[%s1 + $0x70] sm:$0xf]
    %v52 = vld [vmem:[%s1 + $0x74] sm:$0xf]
    %v53 = vld [vmem:[%s1 + $0x78] sm:$0xf]
    %v54 = vld [vmem:[%s1 + $0x7c] sm:$0xf]
    %v55 = vld [vmem:[%s1 + $0x80] sm:$0xf]
    %v56 = vld [vmem:[%s1 + $0x84] sm:$0xf]
    %v57 = vld [vmem:[%s1 + $0x88] sm:$0xf]
    %v58 = vld [vmem:[%s1 + $0x8c] sm:$0xf]
    %v59 = vld [vmem:[%s1 + $0x90] sm:$0xf]
    %v60 = vld [vmem:[%s1 + $0x94] sm:$0xf]
    %v61 = vld [vmem:[%s1 + $0x98] sm:$0xf]
    %v62 = vld [vmem:[%s1 + $0x9c] sm:$0xf]
    %v63 = vld [vmem:[%s1 + $0xa0] sm:$0xf]
    %v64 = vld [vmem:[%s1 + $0xa4] sm:$0xf]
    %v65 = vld [vmem:[%s1 + $0xa8] sm:$0xf]
    %v66 = vld [vmem:[%s1 + $0xac] sm:$0xf]
    %v67 = vld [vmem:[%s1 + $0xb0] sm:$0xf]
    %v68 = vld [vmem:[%s1 + $0xb4] sm:$0xf]
    %v69 = vld [vmem:[%s1 + $0xb8] sm:$0xf]
    %v70 = vld [vmem:[%s1 + $0xbc] sm:$0xf]
    %v71 = vld [vmem:[%s1 + $0xc0] sm:$0xf]
    %v72 = vld [vmem:[%s1 + $0xc4] sm:$0xf]
    %v73 = vld [vmem:[%s1 + $0xc8] sm:$0xf]
    %v74 = vld [vmem:[%s1 + $0xcc] sm:$0xf]
    %v75 = vld [vmem:[%s1 + $0xd0] sm:$0xf]
    %v76 = vld [vmem:[%s1 + $0xd4] sm:$0xf]
    %v77 = vld [vmem:[%s1 + $0xd8] sm:$0xf]
    %v78 = vld [vmem:[%s1 + $0xdc] sm:$0xf]
    %v79 = vld [vmem:[%s1 + $0xe0] sm:$0xf]
    %v80 = vld [vmem:[%s1 + $0xe4] sm:$0xf]
    %v81 = vld [vmem:[%s1 + $0xe8] sm:$0xf]
    %v82 = vld [vmem:[%s1 + $0xec] sm:$0xf]
    %v83 = vld [vmem:[%s1 + $0xf0] sm:$0xf]
    %v84 = vld [vmem:[%s1 + $0xf4] sm:$0xf]
    %v85 = vld [vmem:[%s1 + $0xf8] sm:$0xf]
    %v86 = vld [vmem:[%s1 + $0xfc] sm:$0xf]
    %v87 = vld [vmem:[%s1 + $0x100] sm:$0xf]
    %v88 = vld [vmem:[%s1 + $0x104] sm:$0xf]
    %v89 = vld [vmem:[%s1 + $0x108] sm:$0xf]
    %v90 = vld [vmem:[%s1 + $0x10c] sm:$0xf]
    %v91 = vld [vmem:[%s1 + $0x110] sm:$0xf]
    %v92 = vld [vmem:[%s1 + $0x114] sm:$0xf]
    %v93 = vld [vmem:[%s1 + $0x118] sm:$0xf]
    %v94 = vld [vmem:[%s1 + $0x11c] sm:$0xf]
    %v95 = vld [vmem:[%s1 + $0x120] sm:$0xf]
    %v96 = vld [vmem:[%s1 + $0x124] sm:$0xf]
    %v97 = vld [vmem:[%s1 + $0x128] sm:$0xf]
    %v98 = vld [vmem:[%s1 + $0x12c] sm:$0xf]
    %v99 = vld [vmem:[%s1 + $0x130] sm:$0xf]
    %v100 = vld [vmem:[%s1 + $0x134] sm:$0xf]
    %v101 = vld [vmem:[%s1 + $0x138] sm:$0xf]
    %v102 = vld [vmem:[%s1 + $0x13c] sm:$0xf]
    %v103 = vld [vmem:[%s1 + $0x140] sm:$0xf]
    %v104 = vld [vmem:[%s1 + $0x144] sm:$0xf]
    %v105 = vld [vmem:[%s1 + $0x148] sm:$0xf]
    %v106 = vld [vmem:[%s1 + $0x14c] sm:$0xf]
    %v107 = vld [vmem:[%s1 + $0x150] sm:$0xf]
    %v108 = vld [vmem:[%s1 + $0x154] sm:$0xf]
    %v109 = vld [vmem:[%s1 + $0x158] sm:$0xf]
    %v110 = vld [vmem:[%s1 + $0x15c] sm:$0xf]
    %v111 = vld [vmem:[%s1 + $0x160] sm:$0xf]
    %v112 = vld [vmem:[%s1 + $0x164] sm:$0xf]
    %v113 = vld [vmem:[%s1 + $0x168] sm:$0xf]
    %v114 = vld [vmem:[%s1 + $0x16c] sm:$0xf]
    %v115 = vld [vmem:[%s1 + $0x170] sm:$0xf]
    %v116 = vld [vmem:[%s1 + $0x174] sm:$0xf]
    %v117 = vld [vmem:[%s1 + $0x178] sm:$0xf]
    %v118 = vld [vmem:[%s1 + $0x17c] sm:$0xf]
    %v119 = vld [vmem:[%s1 + $0x180] sm:$0xf]
    %v120 = vld [vmem:[%s1 + $0x184] sm:$0xf]
    %v121 = vld [vmem:[%s1 + $0x188] sm:$0xf]
    %v122 = vld [vmem:[%s1 + $0x18c] sm:$0xf]
    %v123 = vld [vmem:[%s1 + $0x190] sm:$0xf]
    %v124 = vld [vmem:[%s1 + $0x194] sm:$0xf]
    %v125 = vld [vmem:[%s1 + $0x198] sm:$0xf]
    %v126 = vld [vmem:[%s1 + $0x19c] sm:$0xf]
    %v127 = vld [vmem:[%s1 + $0x1a0] sm:$0xf]
    %v128 = vld [vmem:[%s1 + $0x1a4] sm:$0xf]
    %v129 = vld [vmem:[%s1 + $0x1a8] sm:$0xf]
    %v130 = vld [vmem:[%s1 + $0x1ac] sm:$0xf]
    %v131 = vld [vmem:[%s1 + $0x1b0] sm:$0xf]
    %v132 = vld [vmem:[%s1 + $0x1b4] sm:$0xf]
    %v133 = vld [vmem:[%s1 + $0x1b8] sm:$0xf]
    %v134 = vld [vmem:[%s1 + $0x1bc] sm:$0xf]
    %v135 = vld [vmem:[%s1 + $0x1c0] sm:$0xf]
    %v136 = vld [vmem:[%s1 + $0x1c4] sm:$0xf]
    %v137 = vld [vmem:[%s1 + $0x1c8] sm:$0xf]
    %v138 = vld [vmem:[%s1 + $0x1cc] sm:$0xf]
    %v139 = vld [vmem:[%s1 + $0x1d0] sm:$0xf]
    %v140 = vld [vmem:[%s1 + $0x1d4] sm:$0xf]
    %v141 = vld [vmem:[%s1 + $0x1d8] sm:$0xf]
    %v142 = vld [vmem:[%s1 + $0x1dc] sm:$0xf]
    %v143 = vld [vmem:[%s1 + $0x1e0] sm:$0xf]
    %v144 = vld [vmem:[%s1 + $0x1e4] sm:$0xf]
    %v145 = vld [vmem:[%s1 + $0x1e8] sm:$0xf]
    %v146 = vld [vmem:[%s1 + $0x1ec] sm:$0xf]
    %v147 = vld [vmem:[%s1 + $0x1f0] sm:$0xf]
    %v148 = vld [vmem:[%s1 + $0x1f4] sm:$0xf]
    %v149 = vld [vmem:[%s1 + $0x1f8] sm:$0xf]
    %v150 = vld [vmem:[%s1 + $0x1fc] sm:$0xf]
    %v151 = vld [vmem:[%s2] sm:$0x1]
    %v153 = vlaneseq
    %v154 = vshrl.u32 %v153, 7
    %v155 = vsub.s32 0, %v154
    %v156 = vrot.slane %v151, %v155
    %v159 = vcombine.high %v22, %v22
    %v161 = vunpack.c.l.s4 1966171168
    %v162 = vunpack.c.0.s8 %v161
    %v163 = vlaneseq
    %v164 = vshrl.u32 %v163, 7
    %v165 = vsub.s32 %v162, %v164
    %v166 = vrot.slane %v22, %v165
    %v168 = vunpack.c.l.s4 1966171168
    %v169 = vunpack.c.0.s8 %v168
    %v170 = vlaneseq
    %v171 = vshrl.u32 %v170, 7
    %v172 = vsub.s32 %v169, %v171
    %v173 = vrot.slane %v159, %v172
    %v174 = vcombine.high %v166, %v166
    %v175 = vcombine.high %v173, %v173
    %v177 = vunpack.c.l.s4 1966171168
    %v178 = vunpack.c.0.s8 %v177
    %v179 = vlaneseq
    %v180 = vshrl.u32 %v179, 7
    %v181 = vsub.s32 %v178, %v180
    %v182 = vrot.slane %v166, %v181
    %v184 = vunpack.c.l.s4 1966171168
    %v185 = vunpack.c.0.s8 %v184
    %v186 = vlaneseq
    %v187 = vshrl.u32 %v186, 7
    %v188 = vsub.s32 %v185, %v187
    %v189 = vrot.slane %v173, %v188
    %v191 = vunpack.c.l.s4 1966171168
    %v192 = vunpack.c.0.s8 %v191
    %v193 = vlaneseq
    %v194 = vshrl.u32 %v193, 7
    %v195 = vsub.s32 %v192, %v194
    %v196 = vrot.slane %v174, %v195
    %v198 = vunpack.c.l.s4 1966171168
    %v199 = vunpack.c.0.s8 %v198
    %v200 = vlaneseq
    %v201 = vshrl.u32 %v200, 7
    %v202 = vsub.s32 %v199, %v201
    %v203 = vrot.slane %v175, %v202
    %v204 = vcombine.high %v182, %v182
    %v205 = vcombine.high %v189, %v189
    %v206 = vcombine.high %v196, %v196
    %v207 = vcombine.high %v203, %v203
    %v344 = vunpack.c.l.b16 %v23
    %v345 = vunpack.c.l.b16 %v24
    %v346 = vunpack.c.l.b16 %v25
    %v347 = vunpack.c.l.b16 %v26
    %v348 = vunpack.c.l.b16 %v27
    %v349 = vunpack.c.l.b16 %v28
    %v350 = vunpack.c.l.b16 %v29
    %v351 = vunpack.c.l.b16 %v30
    %v352 = vunpack.c.l.b16 %v31
    %v353 = vunpack.c.l.b16 %v32
    %v354 = vunpack.c.l.b16 %v33
    %v355 = vunpack.c.l.b16 %v34
    %v356 = vunpack.c.l.b16 %v35
    %v357 = vunpack.c.l.b16 %v36
    %v358 = vunpack.c.l.b16 %v37
    %v359 = vunpack.c.l.b16 %v38
    %v360 = vunpack.c.l.b16 %v39
    %v361 = vunpack.c.l.b16 %v40
    %v362 = vunpack.c.l.b16 %v41
    %v363 = vunpack.c.l.b16 %v42
    %v364 = vunpack.c.l.b16 %v43
    %v365 = vunpack.c.l.b16 %v44
    %v366 = vunpack.c.l.b16 %v45
    %v367 = vunpack.c.l.b16 %v46
    %v368 = vunpack.c.l.b16 %v47
    %v369 = vunpack.c.l.b16 %v48
    %v370 = vunpack.c.l.b16 %v49
    %v371 = vunpack.c.l.b16 %v50
    %v372 = vunpack.c.l.b16 %v51
    %v373 = vunpack.c.l.b16 %v52
    %v374 = vunpack.c.l.b16 %v53
    %v375 = vunpack.c.l.b16 %v54
    %v376 = vunpack.c.l.b16 %v55
    %v377 = vunpack.c.l.b16 %v56
    %v378 = vunpack.c.l.b16 %v57
    %v379 = vunpack.c.l.b16 %v58
    %v380 = vunpack.c.l.b16 %v59
    %v381 = vunpack.c.l.b16 %v60
    %v382 = vunpack.c.l.b16 %v61
    %v383 = vunpack.c.l.b16 %v62
    %v384 = vunpack.c.l.b16 %v63
    %v385 = vunpack.c.l.b16 %v64
    %v386 = vunpack.c.l.b16 %v65
    %v387 = vunpack.c.l.b16 %v66
    %v388 = vunpack.c.l.b16 %v67
    %v389 = vunpack.c.l.b16 %v68
    %v390 = vunpack.c.l.b16 %v69
    %v391 = vunpack.c.l.b16 %v70
    %v392 = vunpack.c.l.b16 %v71
    %v393 = vunpack.c.l.b16 %v72
    %v394 = vunpack.c.l.b16 %v73
    %v395 = vunpack.c.l.b16 %v74
    %v396 = vunpack.c.l.b16 %v75
    %v397 = vunpack.c.l.b16 %v76
    %v398 = vunpack.c.l.b16 %v77
    %v399 = vunpack.c.l.b16 %v78
    %v400 = vunpack.c.l.b16 %v79
    %v401 = vunpack.c.l.b16 %v80
    %v402 = vunpack.c.l.b16 %v81
    %v403 = vunpack.c.l.b16 %v82
    %v404 = vunpack.c.l.b16 %v83
    %v405 = vunpack.c.l.b16 %v84
    %v406 = vunpack.c.l.b16 %v85
    %v407 = vunpack.c.l.b16 %v86
    %v408 = vunpack.c.l.b16 %v87
    %v409 = vunpack.c.l.b16 %v88
    %v410 = vunpack.c.l.b16 %v89
    %v411 = vunpack.c.l.b16 %v90
    %v412 = vunpack.c.l.b16 %v91
    %v413 = vunpack.c.l.b16 %v92
    %v414 = vunpack.c.l.b16 %v93
    %v415 = vunpack.c.l.b16 %v94
    %v416 = vunpack.c.l.b16 %v95
    %v417 = vunpack.c.l.b16 %v96
    %v418 = vunpack.c.l.b16 %v97
    %v419 = vunpack.c.l.b16 %v98
    %v420 = vunpack.c.l.b16 %v99
    %v421 = vunpack.c.l.b16 %v100
    %v422 = vunpack.c.l.b16 %v101
    %v423 = vunpack.c.l.b16 %v102
    %v424 = vunpack.c.l.b16 %v103
    %v425 = vunpack.c.l.b16 %v104
    %v426 = vunpack.c.l.b16 %v105
    %v427 = vunpack.c.l.b16 %v106
    %v428 = vunpack.c.l.b16 %v107
    %v429 = vunpack.c.l.b16 %v108
    %v430 = vunpack.c.l.b16 %v109
    %v431 = vunpack.c.l.b16 %v110
    %v432 = vunpack.c.l.b16 %v111
    %v433 = vunpack.c.l.b16 %v112
    %v434 = vunpack.c.l.b16 %v113
    %v435 = vunpack.c.l.b16 %v114
    %v436 = vunpack.c.l.b16 %v115
    %v437 = vunpack.c.l.b16 %v116
    %v438 = vunpack.c.l.b16 %v117
    %v439 = vunpack.c.l.b16 %v118
    %v440 = vunpack.c.l.b16 %v119
    %v441 = vunpack.c.l.b16 %v120
    %v442 = vunpack.c.l.b16 %v121
    %v443 = vunpack.c.l.b16 %v122
    %v444 = vunpack.c.l.b16 %v123
    %v445 = vunpack.c.l.b16 %v124
    %v446 = vunpack.c.l.b16 %v125
    %v447 = vunpack.c.l.b16 %v126
    %v448 = vunpack.c.l.b16 %v127
    %v449 = vunpack.c.l.b16 %v128
    %v450 = vunpack.c.l.b16 %v129
    %v451 = vunpack.c.l.b16 %v130
    %v452 = vunpack.c.l.b16 %v131
    %v453 = vunpack.c.l.b16 %v132
    %v454 = vunpack.c.l.b16 %v133
    %v455 = vunpack.c.l.b16 %v134
    %v456 = vunpack.c.l.b16 %v135
    %v457 = vunpack.c.l.b16 %v136
    %v458 = vunpack.c.l.b16 %v137
    %v459 = vunpack.c.l.b16 %v138
    %v460 = vunpack.c.l.b16 %v139
    %v461 = vunpack.c.l.b16 %v140
    %v462 = vunpack.c.l.b16 %v141
    %v463 = vunpack.c.l.b16 %v142
    %v464 = vunpack.c.l.b16 %v143
    %v465 = vunpack.c.l.b16 %v144
    %v466 = vunpack.c.l.b16 %v145
    %v467 = vunpack.c.l.b16 %v146
    %v468 = vunpack.c.l.b16 %v147
    %v469 = vunpack.c.l.b16 %v148
    %v470 = vunpack.c.l.b16 %v149
    %v471 = vunpack.c.l.b16 %v150
    %v472 = vpack.c.b16 %v345, %v344
    %v473 = vpack.c.b16 %v347, %v346
    %v474 = vpack.c.b16 %v349, %v348
    %v475 = vpack.c.b16 %v351, %v350
    %v476 = vpack.c.b16 %v353, %v352
    %v477 = vpack.c.b16 %v355, %v354
    %v478 = vpack.c.b16 %v357, %v356
    %v479 = vpack.c.b16 %v359, %v358
    %v480 = vpack.c.b16 %v361, %v360
    %v481 = vpack.c.b16 %v363, %v362
    %v482 = vpack.c.b16 %v365, %v364
    %v483 = vpack.c.b16 %v367, %v366
    %v484 = vpack.c.b16 %v369, %v368
    %v485 = vpack.c.b16 %v371, %v370
    %v486 = vpack.c.b16 %v373, %v372
    %v487 = vpack.c.b16 %v375, %v374
    %v488 = vpack.c.b16 %v377, %v376
    %v489 = vpack.c.b16 %v379, %v378
    %v490 = vpack.c.b16 %v381, %v380
    %v491 = vpack.c.b16 %v383, %v382
    %v492 = vpack.c.b16 %v385, %v384
    %v493 = vpack.c.b16 %v387, %v386
    %v494 = vpack.c.b16 %v389, %v388
    %v495 = vpack.c.b16 %v391, %v390
    %v496 = vpack.c.b16 %v393, %v392
    %v497 = vpack.c.b16 %v395, %v394
    %v498 = vpack.c.b16 %v397, %v396
    %v499 = vpack.c.b16 %v399, %v398
    %v500 = vpack.c.b16 %v401, %v400
    %v501 = vpack.c.b16 %v403, %v402
    %v502 = vpack.c.b16 %v405, %v404
    %v503 = vpack.c.b16 %v407, %v406
    %v504 = vpack.c.b16 %v409, %v408
    %v505 = vpack.c.b16 %v411, %v410
    %v506 = vpack.c.b16 %v413, %v412
    %v507 = vpack.c.b16 %v415, %v414
    %v508 = vpack.c.b16 %v417, %v416
    %v509 = vpack.c.b16 %v419, %v418
    %v510 = vpack.c.b16 %v421, %v420
    %v511 = vpack.c.b16 %v423, %v422
    %v512 = vpack.c.b16 %v425, %v424
    %v513 = vpack.c.b16 %v427, %v426
    %v514 = vpack.c.b16 %v429, %v428
    %v515 = vpack.c.b16 %v431, %v430
    %v516 = vpack.c.b16 %v433, %v432
    %v517 = vpack.c.b16 %v435, %v434
    %v518 = vpack.c.b16 %v437, %v436
    %v519 = vpack.c.b16 %v439, %v438
    %v520 = vpack.c.b16 %v441, %v440
    %v521 = vpack.c.b16 %v443, %v442
    %v522 = vpack.c.b16 %v445, %v444
    %v523 = vpack.c.b16 %v447, %v446
    %v524 = vpack.c.b16 %v449, %v448
    %v525 = vpack.c.b16 %v451, %v450
    %v526 = vpack.c.b16 %v453, %v452
    %v527 = vpack.c.b16 %v455, %v454
    %v528 = vpack.c.b16 %v457, %v456
    %v529 = vpack.c.b16 %v459, %v458
    %v530 = vpack.c.b16 %v461, %v460
    %v531 = vpack.c.b16 %v463, %v462
    %v532 = vpack.c.b16 %v465, %v464
    %v533 = vpack.c.b16 %v467, %v466
    %v534 = vpack.c.b16 %v469, %v468
    %v535 = vpack.c.b16 %v471, %v470
    %600 = vmatprep.subr.bf16.mxu0 0
    %601 = vmatpush1.bf16.msra.mxu0 %v472
    %602 = vmatprep.subr.bf16.mxu0 0
    %603 = vmatpush1.bf16.msra.mxu0 %v473
    %604 = vmatprep.subr.bf16.mxu0 0
    %605 = vmatpush1.bf16.msra.mxu0 %v474
    %606 = vmatprep.subr.bf16.mxu0 0
    %607 = vmatpush1.bf16.msra.mxu0 %v475
    %608 = vmatprep.subr.bf16.mxu0 0
    %609 = vmatpush1.bf16.msra.mxu0 %v476
    %610 = vmatprep.subr.bf16.mxu0 0
    %611 = vmatpush1.bf16.msra.mxu0 %v477
    %612 = vmatprep.subr.bf16.mxu0 0
    %613 = vmatpush1.bf16.msra.mxu0 %v478
    %614 = vmatprep.subr.bf16.mxu0 0
    %615 = vmatpush1.bf16.msra.mxu0 %v479
    %616 = vmatprep.subr.bf16.mxu0 0
    %617 = vmatpush1.bf16.msra.mxu0 %v480
    %618 = vmatprep.subr.bf16.mxu0 0
    %619 = vmatpush1.bf16.msra.mxu0 %v481
    %620 = vmatprep.subr.bf16.mxu0 0
    %621 = vmatpush1.bf16.msra.mxu0 %v482
    %622 = vmatprep.subr.bf16.mxu0 0
    %623 = vmatpush1.bf16.msra.mxu0 %v483
    %624 = vmatprep.subr.bf16.mxu0 0
    %625 = vmatpush1.bf16.msra.mxu0 %v484
    %626 = vmatprep.subr.bf16.mxu0 0
    %627 = vmatpush1.bf16.msra.mxu0 %v485
    %628 = vmatprep.subr.bf16.mxu0 0
    %629 = vmatpush1.bf16.msra.mxu0 %v486
    %630 = vmatprep.subr.bf16.mxu0 0
    %631 = vmatpush1.bf16.msra.mxu0 %v487
    %632 = vmatprep.mubr.bf16.mxu0 %v196
    %633 = vmatmul.mubr.bf16.gmra.mrb[0].mxu0 %v182
    %v634 = vpop.f32.mrb[0].mxu0
    %v635 = vadd.f32 %v156, %v634
    %v636 = vpop.f32.mrb[0].mxu0
    %v637 = vpop.f32.mrb[0].mxu0
    %v638 = vpop.f32.mrb[0].mxu0
    %639 = vdwg.mxu0
    %640 = vmatprep.subr.bf16.mxu0 0
    %641 = vmatpush1.bf16.msra.mxu0 %v488
    %642 = vmatprep.subr.bf16.mxu0 0
    %643 = vmatpush1.bf16.msra.mxu0 %v489
    %644 = vmatprep.subr.bf16.mxu0 0
    %645 = vmatpush1.bf16.msra.mxu0 %v490
    %646 = vmatprep.subr.bf16.mxu0 0
    %647 = vmatpush1.bf16.msra.mxu0 %v491
    %648 = vmatprep.subr.bf16.mxu0 0
    %649 = vmatpush1.bf16.msra.mxu0 %v492
    %650 = vmatprep.subr.bf16.mxu0 0
    %651 = vmatpush1.bf16.msra.mxu0 %v493
    %652 = vmatprep.subr.bf16.mxu0 0
    %653 = vmatpush1.bf16.msra.mxu0 %v494
    %654 = vmatprep.subr.bf16.mxu0 0
    %655 = vmatpush1.bf16.msra.mxu0 %v495
    %656 = vmatprep.subr.bf16.mxu0 0
    %657 = vmatpush1.bf16.msra.mxu0 %v496
    %658 = vmatprep.subr.bf16.mxu0 0
    %659 = vmatpush1.bf16.msra.mxu0 %v497
    %660 = vmatprep.subr.bf16.mxu0 0
    %661 = vmatpush1.bf16.msra.mxu0 %v498
    %662 = vmatprep.subr.bf16.mxu0 0
    %663 = vmatpush1.bf16.msra.mxu0 %v499
    %664 = vmatprep.subr.bf16.mxu0 0
    %665 = vmatpush1.bf16.msra.mxu0 %v500
    %666 = vmatprep.subr.bf16.mxu0 0
    %667 = vmatpush1.bf16.msra.mxu0 %v501
    %668 = vmatprep.subr.bf16.mxu0 0
    %669 = vmatpush1.bf16.msra.mxu0 %v502
    %670 = vmatprep.subr.bf16.mxu0 0
    %671 = vmatpush1.bf16.msra.mxu0 %v503
    %672 = vmatprep.mubr.bf16.mxu0 %v206
    %673 = vmatmul.mubr.bf16.gmra.mrb[0].mxu0 %v204
    %v674 = vpop.f32.mrb[0].mxu0
    %v675 = vadd.f32 %v635, %v674
    %v676 = vpop.f32.mrb[0].mxu0
    %v677 = vpop.f32.mrb[0].mxu0
    %v678 = vpop.f32.mrb[0].mxu0
    %679 = vdwg.mxu0
    %680 = vmatprep.subr.bf16.mxu0 0
    %681 = vmatpush1.bf16.msra.mxu0 %v504
    %682 = vmatprep.subr.bf16.mxu0 0
    %683 = vmatpush1.bf16.msra.mxu0 %v505
    %684 = vmatprep.subr.bf16.mxu0 0
    %685 = vmatpush1.bf16.msra.mxu0 %v506
    %686 = vmatprep.subr.bf16.mxu0 0
    %687 = vmatpush1.bf16.msra.mxu0 %v507
    %688 = vmatprep.subr.bf16.mxu0 0
    %689 = vmatpush1.bf16.msra.mxu0 %v508
    %690 = vmatprep.subr.bf16.mxu0 0
    %691 = vmatpush1.bf16.msra.mxu0 %v509
    %692 = vmatprep.subr.bf16.mxu0 0
    %693 = vmatpush1.bf16.msra.mxu0 %v510
    %694 = vmatprep.subr.bf16.mxu0 0
    %695 = vmatpush1.bf16.msra.mxu0 %v511
    %696 = vmatprep.subr.bf16.mxu0 0
    %697 = vmatpush1.bf16.msra.mxu0 %v512
    %698 = vmatprep.subr.bf16.mxu0 0
    %699 = vmatpush1.bf16.msra.mxu0 %v513
    %700 = vmatprep.subr.bf16.mxu0 0
    %701 = vmatpush1.bf16.msra.mxu0 %v514
    %702 = vmatprep.subr.bf16.mxu0 0
    %703 = vmatpush1.bf16.msra.mxu0 %v515
    %704 = vmatprep.subr.bf16.mxu0 0
    %705 = vmatpush1.bf16.msra.mxu0 %v516
    %706 = vmatprep.subr.bf16.mxu0 0
    %707 = vmatpush1.bf16.msra.mxu0 %v517
    %708 = vmatprep.subr.bf16.mxu0 0
    %709 = vmatpush1.bf16.msra.mxu0 %v518
    %710 = vmatprep.subr.bf16.mxu0 0
    %711 = vmatpush1.bf16.msra.mxu0 %v519
    %712 = vmatprep.mubr.bf16.mxu0 %v203
    %713 = vmatmul.mubr.bf16.gmra.mrb[0].mxu0 %v189
    %v714 = vpop.f32.mrb[0].mxu0
    %v715 = vadd.f32 %v675, %v714
    %v716 = vpop.f32.mrb[0].mxu0
    %v717 = vpop.f32.mrb[0].mxu0
    %v718 = vpop.f32.mrb[0].mxu0
    %719 = vdwg.mxu0
    %720 = vmatprep.subr.bf16.mxu0 0
    %721 = vmatpush1.bf16.msra.mxu0 %v520
    %722 = vmatprep.subr.bf16.mxu0 0
    %723 = vmatpush1.bf16.msra.mxu0 %v521
    %724 = vmatprep.subr.bf16.mxu0 0
    %725 = vmatpush1.bf16.msra.mxu0 %v522
    %726 = vmatprep.subr.bf16.mxu0 0
    %727 = vmatpush1.bf16.msra.mxu0 %v523
    %728 = vmatprep.subr.bf16.mxu0 0
    %729 = vmatpush1.bf16.msra.mxu0 %v524
    %730 = vmatprep.subr.bf16.mxu0 0
    %731 = vmatpush1.bf16.msra.mxu0 %v525
    %732 = vmatprep.subr.bf16.mxu0 0
    %733 = vmatpush1.bf16.msra.mxu0 %v526
    %734 = vmatprep.subr.bf16.mxu0 0
    %735 = vmatpush1.bf16.msra.mxu0 %v527
    %736 = vmatprep.subr.bf16.mxu0 0
    %737 = vmatpush1.bf16.msra.mxu0 %v528
    %738 = vmatprep.subr.bf16.mxu0 0
    %739 = vmatpush1.bf16.msra.mxu0 %v529
    %740 = vmatprep.subr.bf16.mxu0 0
    %741 = vmatpush1.bf16.msra.mxu0 %v530
    %742 = vmatprep.subr.bf16.mxu0 0
    %743 = vmatpush1.bf16.msra.mxu0 %v531
    %744 = vmatprep.subr.bf16.mxu0 0
    %745 = vmatpush1.bf16.msra.mxu0 %v532
    %746 = vmatprep.subr.bf16.mxu0 0
    %747 = vmatpush1.bf16.msra.mxu0 %v533
    %748 = vmatprep.subr.bf16.mxu0 0
    %749 = vmatpush1.bf16.msra.mxu0 %v534
    %750 = vmatprep.subr.bf16.mxu0 0
    %751 = vmatpush1.bf16.msra.mxu0 %v535
    %752 = vmatprep.mubr.bf16.mxu0 %v207
    %753 = vmatmul.mubr.bf16.gmra.mrb[0].mxu0 %v205
    %v754 = vpop.f32.mrb[0].mxu0
    %v755 = vadd.f32 %v715, %v754
    %v756 = vpop.f32.mrb[0].mxu0
    %v757 = vpop.f32.mrb[0].mxu0
    %v758 = vpop.f32.mrb[0].mxu0
    %759 = vdwg.mxu0
    %v760 = vpack.c.bf16 %v755, %v755
    %v761 = vld [vmem:[%s3] sm:$0xf]
    %v762 = vld [vmem:[%s3 + $0x4] sm:$0xf]
    %v763 = vld [vmem:[%s3 + $0x8] sm:$0xf]
    %v764 = vld [vmem:[%s3 + $0xc] sm:$0xf]
    %v765 = vld [vmem:[%s3 + $0x10] sm:$0xf]
    %v766 = vld [vmem:[%s3 + $0x14] sm:$0xf]
    %v767 = vld [vmem:[%s3 + $0x18] sm:$0xf]
    %v768 = vld [vmem:[%s3 + $0x1c] sm:$0xf]
    %v769 = vld [vmem:[%s3 + $0x20] sm:$0xf]
    %v770 = vld [vmem:[%s3 + $0x24] sm:$0xf]
    %v771 = vld [vmem:[%s3 + $0x28] sm:$0xf]
    %v772 = vld [vmem:[%s3 + $0x2c] sm:$0xf]
    %v773 = vld [vmem:[%s3 + $0x30] sm:$0xf]
    %v774 = vld [vmem:[%s3 + $0x34] sm:$0xf]
    %v775 = vld [vmem:[%s3 + $0x38] sm:$0xf]
    %v776 = vld [vmem:[%s3 + $0x3c] sm:$0xf]
    %v777 = vld [vmem:[%s4] sm:$0x1]
    %v779 = vlaneseq
    %v780 = vshrl.u32 %v779, 7
    %v781 = vsub.s32 0, %v780
    %v782 = vrot.slane %v777, %v781
    %v800 = vunpack.c.l.b16 %v761
    %v801 = vunpack.c.l.b16 %v762
    %v802 = vunpack.c.l.b16 %v763
    %v803 = vunpack.c.l.b16 %v764
    %v804 = vunpack.c.l.b16 %v765
    %v805 = vunpack.c.l.b16 %v766
    %v806 = vunpack.c.l.b16 %v767
    %v807 = vunpack.c.l.b16 %v768
    %v808 = vunpack.c.l.b16 %v769
    %v809 = vunpack.c.l.b16 %v770
    %v810 = vunpack.c.l.b16 %v771
    %v811 = vunpack.c.l.b16 %v772
    %v812 = vunpack.c.l.b16 %v773
    %v813 = vunpack.c.l.b16 %v774
    %v814 = vunpack.c.l.b16 %v775
    %v815 = vunpack.c.l.b16 %v776
    %v816 = vpack.c.b16 %v801, %v800
    %v817 = vpack.c.b16 %v803, %v802
    %v818 = vpack.c.b16 %v805, %v804
    %v819 = vpack.c.b16 %v807, %v806
    %v820 = vpack.c.b16 %v809, %v808
    %v821 = vpack.c.b16 %v811, %v810
    %v822 = vpack.c.b16 %v813, %v812
    %v823 = vpack.c.b16 %v815, %v814
    %832 = vmatprep.subr.bf16.mxu0 0
    %833 = vmatpush1.bf16.msra.mxu0 %v816
    %834 = vmatprep.subr.bf16.mxu0 0
    %835 = vmatpush1.bf16.msra.mxu0 %v817
    %836 = vmatprep.subr.bf16.mxu0 0
    %837 = vmatpush1.bf16.msra.mxu0 %v818
    %838 = vmatprep.subr.bf16.mxu0 0
    %839 = vmatpush1.bf16.msra.mxu0 %v819
    %840 = vmatprep.subr.bf16.mxu0 0
    %841 = vmatpush1.bf16.msra.mxu0 %v820
    %842 = vmatprep.subr.bf16.mxu0 0
    %843 = vmatpush1.bf16.msra.mxu0 %v821
    %844 = vmatprep.subr.bf16.mxu0 0
    %845 = vmatpush1.bf16.msra.mxu0 %v822
    %846 = vmatprep.subr.bf16.mxu0 0
    %847 = vmatpush1.bf16.msra.mxu0 %v823
    %848 = vmatprep.subr.bf16.mxu0 0
    %849 = vmatpush1.bf16.msra.mxu0 0
    %850 = vmatprep.subr.bf16.mxu0 0
    %851 = vmatpush1.bf16.msra.mxu0 0
    %852 = vmatprep.subr.bf16.mxu0 0
    %853 = vmatpush1.bf16.msra.mxu0 0
    %854 = vmatprep.subr.bf16.mxu0 0
    %855 = vmatpush1.bf16.msra.mxu0 0
    %856 = vmatprep.subr.bf16.mxu0 0
    %857 = vmatpush1.bf16.msra.mxu0 0
    %858 = vmatprep.subr.bf16.mxu0 0
    %859 = vmatpush1.bf16.msra.mxu0 0
    %860 = vmatprep.subr.bf16.mxu0 0
    %861 = vmatpush1.bf16.msra.mxu0 0
    %862 = vmatprep.subr.bf16.mxu0 0
    %863 = vmatpush1.bf16.msra.mxu0 0
    %864 = vmatprep.mubr.bf16.mxu0 0
    %865 = vmatmul.mubr.bf16.gmra.mrb[0].mxu0 %v760
    %v866 = vpop.f32.mrb[0].mxu0
    %v867 = vadd.f32 %v782, %v866
    %v868 = vpop.f32.mrb[0].mxu0
    %v869 = vpop.f32.mrb[0].mxu0
    %v870 = vpop.f32.mrb[0].mxu0
    %871 = vdwg.mxu0
    %872 = vst [vmem:[#allocation2] sm:$0x3] %v867
    // Predicated region
    $region22: #{nn5_forward.7} parent=1 // pred_check
      _
    $region23: #{nn5_forward.7} parent=1 // pred_check_branch
      %874 = sbr.rel (0) target = $region25
    $region24: #{nn5_forward.7} parent=1 // pred_region
      %s876 = ssub.s32 32, 32
      %877 = vsyncadd [#allocation3], %s876
      %s879 = sshll.u32 [#allocation2], 4
      %s880 = int_to_ptr.vmem [resolvable:$true] %s879
      %882 = dma.vmem_to_hbm [thread:$0]  %s880, 32, %s5, [#allocation3]
    $region25: #{nn5_forward.7} parent=1 // pred_fallthru
      _
    // Predicated region
    $region26: #{nn5_forward.7} parent=1 // pred_check
      _
    $region27: #{nn5_forward.7} parent=1 // pred_check_branch
      %884 = sbr.rel (0) target = $region29
    $region28: #{nn5_forward.7} parent=1 // pred_region
      %885 = dma.done [#allocation3], 32
    $region29: #{nn5_forward.7} parent=1 // pred_fallthru
      _
    %886 = vsyncpa [#allocation3], 1

</llo_original>
